<compile_context>
chip_gen: v5e
topology: v5e:2x2
jax: 0.10.0
libtpu: 0.0.40
codegen_flags: <defaults>
</compile_context>

<pallas_src>
import math

import jax
import jax.numpy as jnp
from jax import lax
from jax.experimental import pallas as pl
from jax.experimental.pallas import tpu as pltpu

# ----------------------------- configuration --------------------------------
B, T, N, DIN = 2, 8, 16, 2          # batch, seq_len, num_nodes, input_dim
H = 32                              # rnn_units
ODIM = 2                            # output_dim
ATF = 16                            # at_filter (per-head dim of TimeAttention)
EMB = 8                             # embed_dim
CHEB = 3                            # cheb_k (supports: I, adaptive, adj)
F = 2 * H                           # BiSTFGRN output feature dim
C_IN = DIN + H                      # concat([x, h]) channel dim


# -------------------- fused bidirectional recurrent kernel -------------------
def make_bistfgrn(Bc, Tc, Nc, Hc, Kc, Dm):
    BNc = Bc * Nc
    H2 = 2 * Hc

    def kernel(axg_ref, axu_ref, sup_ref, wgh_ref, wuh_ref, eg_ref, eu_ref,
               out_ref):
        eg = eg_ref[...]                      # (BN, EMB*2H) hoisted loads
        eu = eu_ref[...]                      # (BN, EMB*H)

        def collapse(acc, e_exp, width):
            # sum_d E[n,d] * acc[:, d*width:(d+1)*width]  (VPU; no identity matmul)
            tmp = acc * e_exp
            out = tmp[:, :width]
            for d in range(1, Dm):
                out = out + tmp[:, d * width:(d + 1) * width]
            return out

        def step(t, h):                       # h: (B*N, H) recurrence carry
            # ---- gate (z, r): x-path + bias precomputed in axg, h-path here ----
            sh = jnp.dot(sup_ref[0], h, preferred_element_type=jnp.float32)
            acc_g = jnp.dot(sh, wgh_ref[0], preferred_element_type=jnp.float32)
            for k in range(1, Kc):
                sh = jnp.dot(sup_ref[k], h, preferred_element_type=jnp.float32)
                acc_g = acc_g + jnp.dot(sh, wgh_ref[k],
                                        preferred_element_type=jnp.float32)
            zr = jax.nn.sigmoid(axg_ref[t] + collapse(acc_g, eg, H2))
            z = zr[:, :Hc]
            r = zr[:, Hc:]

            # ---- candidate: x-path precomputed in axu, h-path on z*h ----
            zh = z * h
            szh = jnp.dot(sup_ref[0], zh, preferred_element_type=jnp.float32)
            acc_u = jnp.dot(szh, wuh_ref[0], preferred_element_type=jnp.float32)
            for k in range(1, Kc):
                szh = jnp.dot(sup_ref[k], zh, preferred_element_type=jnp.float32)
                acc_u = acc_u + jnp.dot(szh, wuh_ref[k],
                                        preferred_element_type=jnp.float32)
            hc = jnp.tanh(axu_ref[t] + collapse(acc_u, eu, Hc))

            h_new = r * h + (1.0 - r) * hc
            out_ref[t] = h_new.reshape(Bc, Nc, Hc)    # leading split only (free)
            return h_new

        lax.fori_loop(0, Tc, step, jnp.zeros((BNc, Hc), jnp.float32))

    grid_spec = pltpu.PrefetchScalarGridSpec(
        num_scalar_prefetch=0,
        grid=(2,),                                   # direction only; T in-kernel
        in_specs=[
            pl.BlockSpec((None, Tc, BNc, H2), lambda d: (d, 0, 0, 0)),
            pl.BlockSpec((None, Tc, BNc, Hc), lambda d: (d, 0, 0, 0)),
            pl.BlockSpec((Kc, BNc, BNc), lambda d: (0, 0, 0)),
            pl.BlockSpec((None, Kc, Hc, Dm * H2), lambda d: (d, 0, 0, 0)),
            pl.BlockSpec((None, Kc, Hc, Dm * Hc), lambda d: (d, 0, 0, 0)),
            pl.BlockSpec((BNc, Dm * H2), lambda d: (0, 0)),
            pl.BlockSpec((BNc, Dm * Hc), lambda d: (0, 0)),
        ],
        out_specs=pl.BlockSpec((None, Tc, Bc, Nc, Hc),
                               lambda d: (d, 0, 0, 0, 0)),
    )
    return pl.pallas_call(
        kernel,
        out_shape=jax.ShapeDtypeStruct((2, Tc, Bc, Nc, Hc), jnp.float32),
        grid_spec=grid_spec,
        compiler_params=pltpu.CompilerParams(
            dimension_semantics=("parallel",)),
    )


# ------------------- TimeAttention + output-projection kernel ----------------
def make_timeatt_out(Bc, Tc, Nc, Fc, Dh, Oc):
    nh = Fc // Dh
    Hc = Fc // 2
    scale = 1.0 / math.sqrt(Dh)

    def kernel(xf_ref, xb_ref, wqkv_ref, bqkv_ref, gam_ref, bet_ref,
               wo_ref, bo_ref, out_ref):
        # channel concat [fwd | bwd] straight off two views of the recurrent output
        x = jnp.concatenate([xf_ref[...], xb_ref[...]], axis=-1)      # (T, N, F)
        x2 = x.reshape(Tc * Nc, Fc)

        # fused q/k/v projection: one matmul instead of three
        qkv = jnp.dot(x2, wqkv_ref[...],
                      preferred_element_type=jnp.float32) + bqkv_ref[...]
        qkvr = jnp.transpose(qkv.reshape(Tc, Nc, 3 * Fc), (1, 0, 2))  # (N, T, 3F)

        # single head-split pass over the fused slab (rows = tensor*head*node)
        hs = jnp.concatenate(
            [qkvr[:, :, j * Dh:(j + 1) * Dh] for j in range(3 * nh)], axis=0)
        qh = hs[:nh * Nc]                    # (nh*N, T, Dh), rows = head*N + n
        kh = hs[nh * Nc:2 * nh * Nc]
        vh = hs[2 * nh * Nc:]

        a = jnp.einsum('xtd,xsd->xts', qh, kh,
                       preferred_element_type=jnp.float32) * scale
        a = jax.nn.softmax(a, axis=-1)
        ov = jnp.einsum('xts,xsd->xtd', a, vh,
                        preferred_element_type=jnp.float32)           # (nh*N,T,Dh)
        o = jnp.concatenate([ov[i * Nc:(i + 1) * Nc] for i in range(nh)],
                            axis=-1)                                   # (N, T, F)
        o = jnp.transpose(o, (1, 0, 2)) + x                            # residual

        # LayerNorm over last dim (eps = 1e-5, biased variance like PyTorch)
        mu = jnp.mean(o, axis=-1, keepdims=True)
        var = jnp.mean((o - mu) ** 2, axis=-1, keepdims=True)
        o = (o - mu) * lax.rsqrt(var + 1e-5) * gam_ref[...] + bet_ref[...]

        # out_emd, rows ordered (n, t) so the final (B, N, T*ODIM) flatten is a
        # free metadata reshape in the wrapper (no per-t concat epilogue).
        o_nt = jnp.transpose(o, (1, 0, 2)).reshape(Nc * Tc, Fc)
        y = jnp.dot(o_nt, wo_ref[...],
                    preferred_element_type=jnp.float32) + bo_ref[...]  # (N*T, O)
        out_ref[...] = y                                               # one store

    grid_spec = pltpu.PrefetchScalarGridSpec(
        num_scalar_prefetch=0,
        grid=(Bc,),
        in_specs=[
            pl.BlockSpec((None, Tc, None, Nc, Hc), lambda b: (0, 0, b, 0, 0)),
            pl.BlockSpec((None, Tc, None, Nc, Hc), lambda b: (1, 0, b, 0, 0)),
            pl.BlockSpec((Fc, 3 * Fc), lambda b: (0, 0)),
            pl.BlockSpec((1, 3 * Fc), lambda b: (0, 0)),
            pl.BlockSpec((1, Fc), lambda b: (0, 0)),
            pl.BlockSpec((1, Fc), lambda b: (0, 0)),
            pl.BlockSpec((Fc, Oc), lambda b: (0, 0)),
            pl.BlockSpec((1, Oc), lambda b: (0, 0)),
        ],
        out_specs=pl.BlockSpec((None, Nc * Tc, Oc), lambda b: (b, 0, 0)),
    )
    return pl.pallas_call(
        kernel,
        out_shape=jax.ShapeDtypeStruct((Bc, Nc * Tc, Oc), jnp.float32),
        grid_spec=grid_spec,
        compiler_params=pltpu.CompilerParams(
            dimension_semantics=("parallel",)),
    )


# ------------------------------ parameters -----------------------------------
def init_params(key):
    keys = jax.random.split(key, 16)
    it = iter(keys)

    def rnd(shape, scale=0.1):
        return (scale * jax.random.normal(next(it), shape)).astype(jnp.float32)

    p = {}
    p['node_embeddings'] = rnd((N, EMB), 1.0)
    for d in ('fwd', 'bwd'):
        p[f'{d}_wpool_g'] = rnd((EMB, CHEB, C_IN, 2 * H))
        p[f'{d}_bpool_g'] = rnd((EMB, 2 * H))
        p[f'{d}_wpool_u'] = rnd((EMB, CHEB, C_IN, H))
        p[f'{d}_bpool_u'] = rnd((EMB, H))
    p['wqkv'], p['bqkv'] = rnd((F, 3 * F)), rnd((1, 3 * F))   # fused q|k|v
    p['ln_g'] = jnp.ones((1, F), jnp.float32)
    p['ln_b'] = jnp.zeros((1, F), jnp.float32)
    p['wo'], p['bo'] = rnd((F, ODIM)), rnd((1, ODIM))
    return p


# ------------------------------ forward (glue) --------------------------------
def mstfgrn_forward(source, graph, params):
    # source: (B, N, DIN, T); the PyTorch transpose(1,3).transpose(2,3) is folded
    # into the x-path precompute einsum (no standalone HBM transpose op).
    E = params['node_embeddings']                                   # (N, EMB)
    a_adp = jax.nn.softmax(jax.nn.relu(E @ E.T), axis=1)
    supports = jnp.stack(
        [jnp.eye(N, dtype=jnp.float32), a_adp, graph], axis=0)     # (K, N, N)

    # ---- h-independent x-path hoisted out of the serial recurrence ----
    # gx[k,t,b,n,c] = sum_m S_k[n,m] * source[b,m,c,t]
    gx = jnp.einsum('knm,bmct->ktbnc', supports, source)

    def xpath(pref):
        wg = params[f'{pref}_wpool_g']                              # (EMB,K,C,2H)
        wu = params[f'{pref}_wpool_u']                              # (EMB,K,C,H)
        bg = E @ params[f'{pref}_bpool_g']                          # (N, 2H)
        bu = E @ params[f'{pref}_bpool_u']                          # (N, H)
        axg = jnp.einsum('ktbnc,ne,ekco->tbno', gx, E, wg[:, :, :DIN, :]) + bg
        axu = jnp.einsum('ktbnc,ne,ekco->tbno', gx, E, wu[:, :, :DIN, :]) + bu
        return axg, axu

    axg_f, axu_f = xpath('fwd')
    axg_b, axu_b = xpath('bwd')
    # backward direction consumes time-reversed inputs (outputs NOT re-flipped,
    # matching the reference BiSTFGRN)
    axg = jnp.stack([axg_f, axg_b[::-1]]).reshape(2, T, B * N, 2 * H)
    axu = jnp.stack([axu_f, axu_b[::-1]]).reshape(2, T, B * N, H)

    # ---- per-k h-path weight slabs (EMB collapse done on VPU in-kernel) ----
    def hpath(pref):
        wg = jnp.transpose(params[f'{pref}_wpool_g'][:, :, DIN:, :],
                           (1, 2, 0, 3)).reshape(CHEB, H, EMB * 2 * H)
        wu = jnp.transpose(params[f'{pref}_wpool_u'][:, :, DIN:, :],
                           (1, 2, 0, 3)).reshape(CHEB, H, EMB * H)
        return wg, wu

    fwg, fwu = hpath('fwd')
    bwg, bwu = hpath('bwd')
    wgh = jnp.stack([fwg, bwg])                                     # (2,K,H,EMB*2H)
    wuh = jnp.stack([fwu, bwu])                                     # (2,K,H,EMB*H)

    e_bn = jnp.tile(E, (B, 1))                                      # (B*N, EMB)
    eg = jnp.repeat(e_bn, 2 * H, axis=1)                            # (B*N, EMB*2H)
    eu = jnp.repeat(e_bn, H, axis=1)                                # (B*N, EMB*H)

    # block-diagonal I_B (x) S_k for the in-loop h-path (12 KB at B*N=32).
    # TODO(synk): for large B*N switch to a per-batch contraction to avoid the
    #   O((B*N)^2) operand on v7x's smaller VMEM.
    supbd = jnp.einsum('ij,knm->kinjm', jnp.eye(B, dtype=jnp.float32),
                       supports).reshape(CHEB, B * N, B * N)

    seq_call = make_bistfgrn(B, T, N, H, CHEB, EMB)
    h_seq = seq_call(axg, axu, supbd, wgh, wuh, eg, eu)             # (2,T,B,N,H)

    att_call = make_timeatt_out(B, T, N, F, ATF, ODIM)
    out = att_call(h_seq, h_seq,                                    # fwd/bwd views
                   params['wqkv'], params['bqkv'],
                   params['ln_g'], params['ln_b'],
                   params['wo'], params['bo'])                      # (B, N*T, ODIM)
    return out.reshape(B, N, T * ODIM)                              # free reshape


# ---------------------------------- main --------------------------------------
if __name__ == "__main__":
    key = jax.random.PRNGKey(0)
    k1, k2, k3 = jax.random.split(key, 3)

    source = jax.random.normal(k1, (B, N, DIN, T), jnp.float32)
    adj_raw = jax.random.uniform(k2, (N, N), jnp.float32)
    graph = adj_raw / jnp.sum(adj_raw, axis=1, keepdims=True)      # row-norm adj
    params = init_params(k3)

    fwd = jax.jit(lambda s, g: mstfgrn_forward(s, g, params))
    out = fwd(source, graph)
    jax.block_until_ready(out)

    assert out.shape == (B, N, T * ODIM), out.shape
    assert bool(jnp.all(jnp.isfinite(out)))
    print("KERNEL_OK")
</pallas_src>

<mosaic_0001>
module attributes {stable_mosaic.version = 11 : i64} {
  func.func @kernel(%arg0: i32, %arg1: memref<1x8x32x64xf32, #tpu.memory_space<vmem>>, %arg2: memref<1x8x32x32xf32, #tpu.memory_space<vmem>>, %arg3: memref<3x32x32xf32, #tpu.memory_space<vmem>>, %arg4: memref<1x3x32x512xf32, #tpu.memory_space<vmem>>, %arg5: memref<1x3x32x256xf32, #tpu.memory_space<vmem>>, %arg6: memref<32x512xf32, #tpu.memory_space<vmem>>, %arg7: memref<32x256xf32, #tpu.memory_space<vmem>>, %arg8: memref<1x8x2x16x32xf32, #tpu.memory_space<vmem>>) attributes {dimension_semantics = [#tpu.dimension_semantics<parallel>], iteration_bounds = array<i64: 2>, scalar_prefetch = 0 : i64, scratch_operands = 0 : i64, tpu.core_type = #tpu.core_type<tc>, window_params = [{transform_indices = @transform_0, window_bounds = array<i64: 1, 8, 32, 64>}, {transform_indices = @transform_1, window_bounds = array<i64: 1, 8, 32, 32>}, {pipeline_mode = #tpu.pipeline_mode<synchronous>, transform_indices = @transform_2, window_bounds = array<i64: 3, 32, 32>}, {transform_indices = @transform_3, window_bounds = array<i64: 1, 3, 32, 512>}, {transform_indices = @transform_4, window_bounds = array<i64: 1, 3, 32, 256>}, {pipeline_mode = #tpu.pipeline_mode<synchronous>, transform_indices = @transform_5, window_bounds = array<i64: 32, 512>}, {pipeline_mode = #tpu.pipeline_mode<synchronous>, transform_indices = @transform_6, window_bounds = array<i64: 32, 256>}, {transform_indices = @transform_7, window_bounds = array<i64: 1, 8, 2, 16, 32>}]} {
    %c0 = arith.constant 0 : index
    %c0_0 = arith.constant 0 : index
    %0 = vector.load %arg6[%c0, %c0_0] : memref<32x512xf32, #tpu.memory_space<vmem>>, vector<32x512xf32>
    %c0_1 = arith.constant 0 : index
    %c0_2 = arith.constant 0 : index
    %1 = vector.load %arg7[%c0_1, %c0_2] : memref<32x256xf32, #tpu.memory_space<vmem>>, vector<32x256xf32>
    %cst = arith.constant 0.000000e+00 : f32
    %2 = vector.broadcast %cst : f32 to vector<32x32xf32>
    %c0_i32 = arith.constant 0 : i32
    %c8_i32 = arith.constant 8 : i32
    %3 = arith.addi %c0_i32, %c8_i32 : i32
    %c1_i32 = arith.constant 1 : i32
    %4 = scf.for %arg9 = %c0_i32 to %3 step %c1_i32 iter_args(%arg10 = %2) -> (vector<32x32xf32>)  : i32 {
      %c0_4 = arith.constant 0 : index
      %c0_5 = arith.constant 0 : index
      %c0_6 = arith.constant 0 : index
      %5 = vector.load %arg3[%c0_4, %c0_5, %c0_6] : memref<3x32x32xf32, #tpu.memory_space<vmem>>, vector<1x32x32xf32>
      %6 = vector.shape_cast %5 : vector<1x32x32xf32> to vector<32x32xf32>
      %cst_7 = arith.constant dense<0.000000e+00> : vector<32x32xf32>
      %7 = tpu.matmul %6, %arg10, %cst_7 {dimension_numbers = #tpu.dot_dimension_numbers<[1], [0], [0], [1], [0, 0, 1, 1], [], []>} : vector<32x32xf32>, vector<32x32xf32>, vector<32x32xf32> -> vector<32x32xf32>
      %c0_8 = arith.constant 0 : index
      %c0_9 = arith.constant 0 : index
      %c0_10 = arith.constant 0 : index
      %c0_11 = arith.constant 0 : index
      %8 = vector.load %arg4[%c0_8, %c0_9, %c0_10, %c0_11] : memref<1x3x32x512xf32, #tpu.memory_space<vmem>>, vector<1x1x32x512xf32>
      %9 = vector.shape_cast %8 : vector<1x1x32x512xf32> to vector<32x512xf32>
      %cst_12 = arith.constant dense<0.000000e+00> : vector<32x512xf32>
      %10 = tpu.matmul %7, %9, %cst_12 {dimension_numbers = #tpu.dot_dimension_numbers<[1], [0], [0], [1], [0, 0, 1, 1], [], []>} : vector<32x32xf32>, vector<32x512xf32>, vector<32x512xf32> -> vector<32x512xf32>
      %c1 = arith.constant 1 : index
      %c0_13 = arith.constant 0 : index
      %c0_14 = arith.constant 0 : index
      %11 = vector.load %arg3[%c1, %c0_13, %c0_14] : memref<3x32x32xf32, #tpu.memory_space<vmem>>, vector<1x32x32xf32>
      %12 = vector.shape_cast %11 : vector<1x32x32xf32> to vector<32x32xf32>
      %cst_15 = arith.constant dense<0.000000e+00> : vector<32x32xf32>
      %13 = tpu.matmul %12, %arg10, %cst_15 {dimension_numbers = #tpu.dot_dimension_numbers<[1], [0], [0], [1], [0, 0, 1, 1], [], []>} : vector<32x32xf32>, vector<32x32xf32>, vector<32x32xf32> -> vector<32x32xf32>
      %c0_16 = arith.constant 0 : index
      %c1_17 = arith.constant 1 : index
      %c0_18 = arith.constant 0 : index
      %c0_19 = arith.constant 0 : index
      %14 = vector.load %arg4[%c0_16, %c1_17, %c0_18, %c0_19] : memref<1x3x32x512xf32, #tpu.memory_space<vmem>>, vector<1x1x32x512xf32>
      %15 = vector.shape_cast %14 : vector<1x1x32x512xf32> to vector<32x512xf32>
      %cst_20 = arith.constant dense<0.000000e+00> : vector<32x512xf32>
      %16 = tpu.matmul %13, %15, %cst_20 {dimension_numbers = #tpu.dot_dimension_numbers<[1], [0], [0], [1], [0, 0, 1, 1], [], []>} : vector<32x32xf32>, vector<32x512xf32>, vector<32x512xf32> -> vector<32x512xf32>
      %17 = arith.addf %10, %16 : vector<32x512xf32>
      %c2 = arith.constant 2 : index
      %c0_21 = arith.constant 0 : index
      %c0_22 = arith.constant 0 : index
      %18 = vector.load %arg3[%c2, %c0_21, %c0_22] : memref<3x32x32xf32, #tpu.memory_space<vmem>>, vector<1x32x32xf32>
      %19 = vector.shape_cast %18 : vector<1x32x32xf32> to vector<32x32xf32>
      %cst_23 = arith.constant dense<0.000000e+00> : vector<32x32xf32>
      %20 = tpu.matmul %19, %arg10, %cst_23 {dimension_numbers = #tpu.dot_dimension_numbers<[1], [0], [0], [1], [0, 0, 1, 1], [], []>} : vector<32x32xf32>, vector<32x32xf32>, vector<32x32xf32> -> vector<32x32xf32>
      %c0_24 = arith.constant 0 : index
      %c2_25 = arith.constant 2 : index
      %c0_26 = arith.constant 0 : index
      %c0_27 = arith.constant 0 : index
      %21 = vector.load %arg4[%c0_24, %c2_25, %c0_26, %c0_27] : memref<1x3x32x512xf32, #tpu.memory_space<vmem>>, vector<1x1x32x512xf32>
      %22 = vector.shape_cast %21 : vector<1x1x32x512xf32> to vector<32x512xf32>
      %cst_28 = arith.constant dense<0.000000e+00> : vector<32x512xf32>
      %23 = tpu.matmul %20, %22, %cst_28 {dimension_numbers = #tpu.dot_dimension_numbers<[1], [0], [0], [1], [0, 0, 1, 1], [], []>} : vector<32x32xf32>, vector<32x512xf32>, vector<32x512xf32> -> vector<32x512xf32>
      %24 = arith.addf %17, %23 : vector<32x512xf32>
      %c0_29 = arith.constant 0 : index
      %25 = arith.index_cast %arg9 : i32 to index
      %c0_30 = arith.constant 0 : index
      %c0_31 = arith.constant 0 : index
      %26 = vector.load %arg1[%c0_29, %25, %c0_30, %c0_31] : memref<1x8x32x64xf32, #tpu.memory_space<vmem>>, vector<1x1x32x64xf32>
      %27 = vector.shape_cast %26 : vector<1x1x32x64xf32> to vector<32x64xf32>
      %28 = arith.mulf %24, %0 : vector<32x512xf32>
      %29 = vector.extract_strided_slice %28 {offsets = [0, 0], sizes = [32, 64], strides = [1, 1]} : vector<32x512xf32> to vector<32x64xf32>
      %30 = vector.extract_strided_slice %28 {offsets = [0, 64], sizes = [32, 64], strides = [1, 1]} : vector<32x512xf32> to vector<32x64xf32>
      %31 = arith.addf %29, %30 : vector<32x64xf32>
      %32 = vector.extract_strided_slice %28 {offsets = [0, 128], sizes = [32, 64], strides = [1, 1]} : vector<32x512xf32> to vector<32x64xf32>
      %33 = arith.addf %31, %32 : vector<32x64xf32>
      %34 = vector.extract_strided_slice %28 {offsets = [0, 192], sizes = [32, 64], strides = [1, 1]} : vector<32x512xf32> to vector<32x64xf32>
      %35 = arith.addf %33, %34 : vector<32x64xf32>
      %36 = vector.extract_strided_slice %28 {offsets = [0, 256], sizes = [32, 64], strides = [1, 1]} : vector<32x512xf32> to vector<32x64xf32>
      %37 = arith.addf %35, %36 : vector<32x64xf32>
      %38 = vector.extract_strided_slice %28 {offsets = [0, 320], sizes = [32, 64], strides = [1, 1]} : vector<32x512xf32> to vector<32x64xf32>
      %39 = arith.addf %37, %38 : vector<32x64xf32>
      %40 = vector.extract_strided_slice %28 {offsets = [0, 384], sizes = [32, 64], strides = [1, 1]} : vector<32x512xf32> to vector<32x64xf32>
      %41 = arith.addf %39, %40 : vector<32x64xf32>
      %42 = vector.extract_strided_slice %28 {offsets = [0, 448], sizes = [32, 64], strides = [1, 1]} : vector<32x512xf32> to vector<32x64xf32>
      %43 = arith.addf %41, %42 : vector<32x64xf32>
      %44 = arith.addf %27, %43 : vector<32x64xf32>
      %45 = arith.negf %44 : vector<32x64xf32>
      %46 = math.exp %45 : vector<32x64xf32>
      %cst_32 = arith.constant 1.000000e+00 : f32
      %47 = vector.broadcast %cst_32 : f32 to vector<32x64xf32>
      %48 = arith.addf %47, %46 : vector<32x64xf32>
      %49 = arith.divf %47, %48 : vector<32x64xf32>
      %50 = vector.extract_strided_slice %49 {offsets = [0, 0], sizes = [32, 32], strides = [1, 1]} : vector<32x64xf32> to vector<32x32xf32>
      %51 = vector.extract_strided_slice %49 {offsets = [0, 32], sizes = [32, 32], strides = [1, 1]} : vector<32x64xf32> to vector<32x32xf32>
      %52 = arith.mulf %50, %arg10 : vector<32x32xf32>
      %c0_33 = arith.constant 0 : index
      %c0_34 = arith.constant 0 : index
      %c0_35 = arith.constant 0 : index
      %53 = vector.load %arg3[%c0_33, %c0_34, %c0_35] : memref<3x32x32xf32, #tpu.memory_space<vmem>>, vector<1x32x32xf32>
      %54 = vector.shape_cast %53 : vector<1x32x32xf32> to vector<32x32xf32>
      %cst_36 = arith.constant dense<0.000000e+00> : vector<32x32xf32>
      %55 = tpu.matmul %54, %52, %cst_36 {dimension_numbers = #tpu.dot_dimension_numbers<[1], [0], [0], [1], [0, 0, 1, 1], [], []>} : vector<32x32xf32>, vector<32x32xf32>, vector<32x32xf32> -> vector<32x32xf32>
      %c0_37 = arith.constant 0 : index
      %c0_38 = arith.constant 0 : index
      %c0_39 = arith.constant 0 : index
      %c0_40 = arith.constant 0 : index
      %56 = vector.load %arg5[%c0_37, %c0_38, %c0_39, %c0_40] : memref<1x3x32x256xf32, #tpu.memory_space<vmem>>, vector<1x1x32x256xf32>
      %57 = vector.shape_cast %56 : vector<1x1x32x256xf32> to vector<32x256xf32>
      %cst_41 = arith.constant dense<0.000000e+00> : vector<32x256xf32>
      %58 = tpu.matmul %55, %57, %cst_41 {dimension_numbers = #tpu.dot_dimension_numbers<[1], [0], [0], [1], [0, 0, 1, 1], [], []>} : vector<32x32xf32>, vector<32x256xf32>, vector<32x256xf32> -> vector<32x256xf32>
      %c1_42 = arith.constant 1 : index
      %c0_43 = arith.constant 0 : index
      %c0_44 = arith.constant 0 : index
      %59 = vector.load %arg3[%c1_42, %c0_43, %c0_44] : memref<3x32x32xf32, #tpu.memory_space<vmem>>, vector<1x32x32xf32>
      %60 = vector.shape_cast %59 : vector<1x32x32xf32> to vector<32x32xf32>
      %cst_45 = arith.constant dense<0.000000e+00> : vector<32x32xf32>
      %61 = tpu.matmul %60, %52, %cst_45 {dimension_numbers = #tpu.dot_dimension_numbers<[1], [0], [0], [1], [0, 0, 1, 1], [], []>} : vector<32x32xf32>, vector<32x32xf32>, vector<32x32xf32> -> vector<32x32xf32>
      %c0_46 = arith.constant 0 : index
      %c1_47 = arith.constant 1 : index
      %c0_48 = arith.constant 0 : index
      %c0_49 = arith.constant 0 : index
      %62 = vector.load %arg5[%c0_46, %c1_47, %c0_48, %c0_49] : memref<1x3x32x256xf32, #tpu.memory_space<vmem>>, vector<1x1x32x256xf32>
      %63 = vector.shape_cast %62 : vector<1x1x32x256xf32> to vector<32x256xf32>
      %cst_50 = arith.constant dense<0.000000e+00> : vector<32x256xf32>
      %64 = tpu.matmul %61, %63, %cst_50 {dimension_numbers = #tpu.dot_dimension_numbers<[1], [0], [0], [1], [0, 0, 1, 1], [], []>} : vector<32x32xf32>, vector<32x256xf32>, vector<32x256xf32> -> vector<32x256xf32>
      %65 = arith.addf %58, %64 : vector<32x256xf32>
      %c2_51 = arith.constant 2 : index
      %c0_52 = arith.constant 0 : index
      %c0_53 = arith.constant 0 : index
      %66 = vector.load %arg3[%c2_51, %c0_52, %c0_53] : memref<3x32x32xf32, #tpu.memory_space<vmem>>, vector<1x32x32xf32>
      %67 = vector.shape_cast %66 : vector<1x32x32xf32> to vector<32x32xf32>
      %cst_54 = arith.constant dense<0.000000e+00> : vector<32x32xf32>
      %68 = tpu.matmul %67, %52, %cst_54 {dimension_numbers = #tpu.dot_dimension_numbers<[1], [0], [0], [1], [0, 0, 1, 1], [], []>} : vector<32x32xf32>, vector<32x32xf32>, vector<32x32xf32> -> vector<32x32xf32>
      %c0_55 = arith.constant 0 : index
      %c2_56 = arith.constant 2 : index
      %c0_57 = arith.constant 0 : index
      %c0_58 = arith.constant 0 : index
      %69 = vector.load %arg5[%c0_55, %c2_56, %c0_57, %c0_58] : memref<1x3x32x256xf32, #tpu.memory_space<vmem>>, vector<1x1x32x256xf32>
      %70 = vector.shape_cast %69 : vector<1x1x32x256xf32> to vector<32x256xf32>
      %cst_59 = arith.constant dense<0.000000e+00> : vector<32x256xf32>
      %71 = tpu.matmul %68, %70, %cst_59 {dimension_numbers = #tpu.dot_dimension_numbers<[1], [0], [0], [1], [0, 0, 1, 1], [], []>} : vector<32x32xf32>, vector<32x256xf32>, vector<32x256xf32> -> vector<32x256xf32>
      %72 = arith.addf %65, %71 : vector<32x256xf32>
      %c0_60 = arith.constant 0 : index
      %73 = arith.index_cast %arg9 : i32 to index
      %c0_61 = arith.constant 0 : index
      %c0_62 = arith.constant 0 : index
      %74 = vector.load %arg2[%c0_60, %73, %c0_61, %c0_62] : memref<1x8x32x32xf32, #tpu.memory_space<vmem>>, vector<1x1x32x32xf32>
      %75 = vector.shape_cast %74 : vector<1x1x32x32xf32> to vector<32x32xf32>
      %76 = arith.mulf %72, %1 : vector<32x256xf32>
      %77 = vector.extract_strided_slice %76 {offsets = [0, 0], sizes = [32, 32], strides = [1, 1]} : vector<32x256xf32> to vector<32x32xf32>
      %78 = vector.extract_strided_slice %76 {offsets = [0, 32], sizes = [32, 32], strides = [1, 1]} : vector<32x256xf32> to vector<32x32xf32>
      %79 = arith.addf %77, %78 : vector<32x32xf32>
      %80 = vector.extract_strided_slice %76 {offsets = [0, 64], sizes = [32, 32], strides = [1, 1]} : vector<32x256xf32> to vector<32x32xf32>
      %81 = arith.addf %79, %80 : vector<32x32xf32>
      %82 = vector.extract_strided_slice %76 {offsets = [0, 96], sizes = [32, 32], strides = [1, 1]} : vector<32x256xf32> to vector<32x32xf32>
      %83 = arith.addf %81, %82 : vector<32x32xf32>
      %84 = vector.extract_strided_slice %76 {offsets = [0, 128], sizes = [32, 32], strides = [1, 1]} : vector<32x256xf32> to vector<32x32xf32>
      %85 = arith.addf %83, %84 : vector<32x32xf32>
      %86 = vector.extract_strided_slice %76 {offsets = [0, 160], sizes = [32, 32], strides = [1, 1]} : vector<32x256xf32> to vector<32x32xf32>
      %87 = arith.addf %85, %86 : vector<32x32xf32>
      %88 = vector.extract_strided_slice %76 {offsets = [0, 192], sizes = [32, 32], strides = [1, 1]} : vector<32x256xf32> to vector<32x32xf32>
      %89 = arith.addf %87, %88 : vector<32x32xf32>
      %90 = vector.extract_strided_slice %76 {offsets = [0, 224], sizes = [32, 32], strides = [1, 1]} : vector<32x256xf32> to vector<32x32xf32>
      %91 = arith.addf %89, %90 : vector<32x32xf32>
      %92 = arith.addf %75, %91 : vector<32x32xf32>
      %93 = math.tanh %92 : vector<32x32xf32>
      %94 = arith.mulf %51, %arg10 : vector<32x32xf32>
      %cst_63 = arith.constant 1.000000e+00 : f32
      %95 = vector.broadcast %cst_63 : f32 to vector<32x32xf32>
      %96 = arith.subf %95, %51 : vector<32x32xf32>
      %97 = arith.mulf %96, %93 : vector<32x32xf32>
      %98 = arith.addf %94, %97 : vector<32x32xf32>
      %99 = vector.shape_cast %98 : vector<32x32xf32> to vector<2x16x32xf32>
      %c0_64 = arith.constant 0 : index
      %100 = arith.index_cast %arg9 : i32 to index
      %c0_65 = arith.constant 0 : index
      %c0_66 = arith.constant 0 : index
      %c0_67 = arith.constant 0 : index
      %101 = vector.load %arg8[%c0_64, %100, %c0_65, %c0_66, %c0_67] : memref<1x8x2x16x32xf32, #tpu.memory_space<vmem>>, vector<1x1x2x16x32xf32>
      %102 = vector.shape_cast %101 : vector<1x1x2x16x32xf32> to vector<2x16x32xf32>
      %103 = vector.shape_cast %99 : vector<2x16x32xf32> to vector<1x1x2x16x32xf32>
      tpu.vector_store %arg8[%c0_64, %100, %c0_65, %c0_66, %c0_67], %103 {strides = array<i32>} : memref<1x8x2x16x32xf32, #tpu.memory_space<vmem>>, vector<1x1x2x16x32xf32>,
      scf.yield %98 : vector<32x32xf32>
    }
    %c8_i32_3 = arith.constant 8 : i32
    return
  }
  func.func @transform_0(%arg0: i32) -> (i32, i32, i32, i32) {
    %c0_i32 = arith.constant 0 : i32
    %c0_i32_0 = arith.constant 0 : i32
    %c0_i32_1 = arith.constant 0 : i32
    %c0_i32_2 = arith.constant 0 : i32
    return %arg0, %c0_i32, %c0_i32_0, %c0_i32_1 : i32, i32, i32, i32
  }
  func.func @transform_1(%arg0: i32) -> (i32, i32, i32, i32) {
    %c0_i32 = arith.constant 0 : i32
    %c0_i32_0 = arith.constant 0 : i32
    %c0_i32_1 = arith.constant 0 : i32
    %c0_i32_2 = arith.constant 0 : i32
    return %arg0, %c0_i32, %c0_i32_0, %c0_i32_1 : i32, i32, i32, i32
  }
  func.func @transform_2(%arg0: i32) -> (i32, i32, i32) {
    %c0_i32 = arith.constant 0 : i32
    %c0_i32_0 = arith.constant 0 : i32
    %c0_i32_1 = arith.constant 0 : i32
    %c0_i32_2 = arith.constant 0 : i32
    return %c0_i32, %c0_i32_0, %c0_i32_1 : i32, i32, i32
  }
  func.func @transform_3(%arg0: i32) -> (i32, i32, i32, i32) {
    %c0_i32 = arith.constant 0 : i32
    %c0_i32_0 = arith.constant 0 : i32
    %c0_i32_1 = arith.constant 0 : i32
    %c0_i32_2 = arith.constant 0 : i32
    return %arg0, %c0_i32, %c0_i32_0, %c0_i32_1 : i32, i32, i32, i32
  }
  func.func @transform_4(%arg0: i32) -> (i32, i32, i32, i32) {
    %c0_i32 = arith.constant 0 : i32
    %c0_i32_0 = arith.constant 0 : i32
    %c0_i32_1 = arith.constant 0 : i32
    %c0_i32_2 = arith.constant 0 : i32
    return %arg0, %c0_i32, %c0_i32_0, %c0_i32_1 : i32, i32, i32, i32
  }
  func.func @transform_5(%arg0: i32) -> (i32, i32) {
    %c0_i32 = arith.constant 0 : i32
    %c0_i32_0 = arith.constant 0 : i32
    %c0_i32_1 = arith.constant 0 : i32
    return %c0_i32, %c0_i32_0 : i32, i32
  }
  func.func @transform_6(%arg0: i32) -> (i32, i32) {
    %c0_i32 = arith.constant 0 : i32
    %c0_i32_0 = arith.constant 0 : i32
    %c0_i32_1 = arith.constant 0 : i32
    return %c0_i32, %c0_i32_0 : i32, i32
  }
  func.func @transform_7(%arg0: i32) -> (i32, i32, i32, i32, i32) {
    %c0_i32 = arith.constant 0 : i32
    %c0_i32_0 = arith.constant 0 : i32
    %c0_i32_1 = arith.constant 0 : i32
    %c0_i32_2 = arith.constant 0 : i32
    %c0_i32_3 = arith.constant 0 : i32
    return %arg0, %c0_i32, %c0_i32_0, %c0_i32_1, %c0_i32_2 : i32, i32, i32, i32, i32
  }
}

module attributes {stable_mosaic.version = 11 : i64} {
  func.func @kernel(%arg0: i32, %arg1: memref<1x8x1x16x32xf32, #tpu.memory_space<vmem>>, %arg2: memref<1x8x1x16x32xf32, #tpu.memory_space<vmem>>, %arg3: memref<64x192xf32, #tpu.memory_space<vmem>>, %arg4: memref<1x192xf32, #tpu.memory_space<vmem>>, %arg5: memref<1x64xf32, #tpu.memory_space<vmem>>, %arg6: memref<1x64xf32, #tpu.memory_space<vmem>>, %arg7: memref<64x2xf32, #tpu.memory_space<vmem>>, %arg8: memref<1x2xf32, #tpu.memory_space<vmem>>, %arg9: memref<1x128x2xf32, #tpu.memory_space<vmem>>) attributes {dimension_semantics = [#tpu.dimension_semantics<parallel>], iteration_bounds = array<i64: 2>, scalar_prefetch = 0 : i64, scratch_operands = 0 : i64, tpu.core_type = #tpu.core_type<tc>, window_params = [{transform_indices = @transform_0, window_bounds = array<i64: 1, 8, 1, 16, 32>}, {transform_indices = @transform_1, window_bounds = array<i64: 1, 8, 1, 16, 32>}, {pipeline_mode = #tpu.pipeline_mode<synchronous>, transform_indices = @transform_2, window_bounds = array<i64: 64, 192>}, {pipeline_mode = #tpu.pipeline_mode<synchronous>, transform_indices = @transform_3, window_bounds = array<i64: 1, 192>}, {pipeline_mode = #tpu.pipeline_mode<synchronous>, transform_indices = @transform_4, window_bounds = array<i64: 1, 64>}, {pipeline_mode = #tpu.pipeline_mode<synchronous>, transform_indices = @transform_5, window_bounds = array<i64: 1, 64>}, {pipeline_mode = #tpu.pipeline_mode<synchronous>, transform_indices = @transform_6, window_bounds = array<i64: 64, 2>}, {pipeline_mode = #tpu.pipeline_mode<synchronous>, transform_indices = @transform_7, window_bounds = array<i64: 1, 2>}, {transform_indices = @transform_8, window_bounds = array<i64: 1, 128, 2>}]} {
    %c0 = arith.constant 0 : index
    %c0_0 = arith.constant 0 : index
    %c0_1 = arith.constant 0 : index
    %c0_2 = arith.constant 0 : index
    %c0_3 = arith.constant 0 : index
    %0 = vector.load %arg1[%c0, %c0_0, %c0_1, %c0_2, %c0_3] : memref<1x8x1x16x32xf32, #tpu.memory_space<vmem>>, vector<1x8x1x16x32xf32>
    %1 = vector.shape_cast %0 : vector<1x8x1x16x32xf32> to vector<8x16x32xf32>
    %c0_4 = arith.constant 0 : index
    %c0_5 = arith.constant 0 : index
    %c0_6 = arith.constant 0 : index
    %c0_7 = arith.constant 0 : index
    %c0_8 = arith.constant 0 : index
    %2 = vector.load %arg2[%c0_4, %c0_5, %c0_6, %c0_7, %c0_8] : memref<1x8x1x16x32xf32, #tpu.memory_space<vmem>>, vector<1x8x1x16x32xf32>
    %3 = vector.shape_cast %2 : vector<1x8x1x16x32xf32> to vector<8x16x32xf32>
    %4 = tpu.concatenate %1, %3 in 2 : vector<8x16x32xf32>, vector<8x16x32xf32> -> vector<8x16x64xf32>
    %5 = vector.shape_cast %4 : vector<8x16x64xf32> to vector<128x64xf32>
    %c0_9 = arith.constant 0 : index
    %c0_10 = arith.constant 0 : index
    %6 = vector.load %arg3[%c0_9, %c0_10] : memref<64x192xf32, #tpu.memory_space<vmem>>, vector<64x192xf32>
    %cst = arith.constant dense<0.000000e+00> : vector<128x192xf32>
    %7 = tpu.matmul %5, %6, %cst {dimension_numbers = #tpu.dot_dimension_numbers<[1], [0], [0], [1], [0, 0, 1, 1], [], []>} : vector<128x64xf32>, vector<64x192xf32>, vector<128x192xf32> -> vector<128x192xf32>
    %c0_11 = arith.constant 0 : index
    %c0_12 = arith.constant 0 : index
    %8 = vector.load %arg4[%c0_11, %c0_12] : memref<1x192xf32, #tpu.memory_space<vmem>>, vector<1x192xf32>
    %9 = vector.broadcast %8 : vector<1x192xf32> to vector<128x192xf32>
    %10 = arith.addf %7, %9 : vector<128x192xf32>
    %11 = vector.shape_cast %10 : vector<128x192xf32> to vector<8x16x192xf32>
    %12 = tpu.transpose %11, [1, 0, 2] : vector<8x16x192xf32> -> vector<16x8x192xf32>
    %13 = vector.extract_strided_slice %12 {offsets = [0, 0, 0], sizes = [16, 8, 16], strides = [1, 1, 1]} : vector<16x8x192xf32> to vector<16x8x16xf32>
    %14 = vector.extract_strided_slice %12 {offsets = [0, 0, 16], sizes = [16, 8, 16], strides = [1, 1, 1]} : vector<16x8x192xf32> to vector<16x8x16xf32>
    %15 = vector.extract_strided_slice %12 {offsets = [0, 0, 32], sizes = [16, 8, 16], strides = [1, 1, 1]} : vector<16x8x192xf32> to vector<16x8x16xf32>
    %16 = vector.extract_strided_slice %12 {offsets = [0, 0, 48], sizes = [16, 8, 16], strides = [1, 1, 1]} : vector<16x8x192xf32> to vector<16x8x16xf32>
    %17 = vector.extract_strided_slice %12 {offsets = [0, 0, 64], sizes = [16, 8, 16], strides = [1, 1, 1]} : vector<16x8x192xf32> to vector<16x8x16xf32>
    %18 = vector.extract_strided_slice %12 {offsets = [0, 0, 80], sizes = [16, 8, 16], strides = [1, 1, 1]} : vector<16x8x192xf32> to vector<16x8x16xf32>
    %19 = vector.extract_strided_slice %12 {offsets = [0, 0, 96], sizes = [16, 8, 16], strides = [1, 1, 1]} : vector<16x8x192xf32> to vector<16x8x16xf32>
    %20 = vector.extract_strided_slice %12 {offsets = [0, 0, 112], sizes = [16, 8, 16], strides = [1, 1, 1]} : vector<16x8x192xf32> to vector<16x8x16xf32>
    %21 = vector.extract_strided_slice %12 {offsets = [0, 0, 128], sizes = [16, 8, 16], strides = [1, 1, 1]} : vector<16x8x192xf32> to vector<16x8x16xf32>
    %22 = vector.extract_strided_slice %12 {offsets = [0, 0, 144], sizes = [16, 8, 16], strides = [1, 1, 1]} : vector<16x8x192xf32> to vector<16x8x16xf32>
    %23 = vector.extract_strided_slice %12 {offsets = [0, 0, 160], sizes = [16, 8, 16], strides = [1, 1, 1]} : vector<16x8x192xf32> to vector<16x8x16xf32>
    %24 = vector.extract_strided_slice %12 {offsets = [0, 0, 176], sizes = [16, 8, 16], strides = [1, 1, 1]} : vector<16x8x192xf32> to vector<16x8x16xf32>
    %25 = tpu.concatenate %13, %14, %15, %16, %17, %18, %19, %20, %21, %22, %23, %24 in 0 : vector<16x8x16xf32>, vector<16x8x16xf32>, vector<16x8x16xf32>, vector<16x8x16xf32>, vector<16x8x16xf32>, vector<16x8x16xf32>, vector<16x8x16xf32>, vector<16x8x16xf32>, vector<16x8x16xf32>, vector<16x8x16xf32>, vector<16x8x16xf32>, vector<16x8x16xf32> -> vector<192x8x16xf32>
    %26 = vector.extract_strided_slice %25 {offsets = [0, 0, 0], sizes = [64, 8, 16], strides = [1, 1, 1]} : vector<192x8x16xf32> to vector<64x8x16xf32>
    %27 = vector.extract_strided_slice %25 {offsets = [64, 0, 0], sizes = [64, 8, 16], strides = [1, 1, 1]} : vector<192x8x16xf32> to vector<64x8x16xf32>
    %28 = vector.extract_strided_slice %25 {offsets = [128, 0, 0], sizes = [64, 8, 16], strides = [1, 1, 1]} : vector<192x8x16xf32> to vector<64x8x16xf32>
    "tpu.trace_start"() <{level = 10 : i32, message = "xtd,xsd->xts"}> : () -> ()
    %cst_13 = arith.constant dense<0.000000e+00> : vector<64x8x8xf32>
    %29 = tpu.matmul %26, %27, %cst_13 {dimension_numbers = #tpu.dot_dimension_numbers<[2], [2], [1], [1], [0, 0, 0, 1, 1, 1], [0], [0]>} : vector<64x8x16xf32>, vector<64x8x16xf32>, vector<64x8x8xf32> -> vector<64x8x8xf32>
    "tpu.trace_stop"() : () -> ()
    %cst_14 = arith.constant 2.500000e-01 : f32
    %30 = vector.broadcast %cst_14 : f32 to vector<64x8x8xf32>
    %31 = arith.mulf %29, %30 : vector<64x8x8xf32>
    %cst_15 = arith.constant dense<0xFF800000> : vector<64x8xf32>
    %32 = vector.multi_reduction <maximumf>, %31, %cst_15 [2] : vector<64x8x8xf32> to vector<64x8xf32>
    %cst_16 = arith.constant 0xFF800000 : f32
    %33 = vector.broadcast %cst_16 : f32 to vector<64x8xf32>
    %34 = arith.maximumf %33, %32 : vector<64x8xf32>
    %35 = vector.shape_cast %34 : vector<64x8xf32> to vector<64x8x1xf32>
    %36 = vector.broadcast %35 : vector<64x8x1xf32> to vector<64x8x8xf32>
    %37 = arith.subf %31, %36 : vector<64x8x8xf32>
    %38 = math.exp %37 : vector<64x8x8xf32>
    %cst_17 = arith.constant dense<0.000000e+00> : vector<64x8xf32>
    %39 = vector.multi_reduction <add>, %38, %cst_17 [2] : vector<64x8x8xf32> to vector<64x8xf32>
    %40 = vector.shape_cast %39 : vector<64x8xf32> to vector<64x8x1xf32>
    %41 = vector.broadcast %40 : vector<64x8x1xf32> to vector<64x8x8xf32>
    %42 = arith.divf %38, %41 : vector<64x8x8xf32>
    "tpu.trace_start"() <{level = 10 : i32, message = "xts,xsd->xtd"}> : () -> ()
    %cst_18 = arith.constant dense<0.000000e+00> : vector<64x8x16xf32>
    %43 = tpu.matmul %42, %28, %cst_18 {dimension_numbers = #tpu.dot_dimension_numbers<[2], [1], [1], [2], [0, 0, 0, 1, 1, 2], [0], [0]>} : vector<64x8x8xf32>, vector<64x8x16xf32>, vector<64x8x16xf32> -> vector<64x8x16xf32>
    "tpu.trace_stop"() : () -> ()
    %44 = vector.extract_strided_slice %43 {offsets = [0, 0, 0], sizes = [16, 8, 16], strides = [1, 1, 1]} : vector<64x8x16xf32> to vector<16x8x16xf32>
    %45 = vector.extract_strided_slice %43 {offsets = [16, 0, 0], sizes = [16, 8, 16], strides = [1, 1, 1]} : vector<64x8x16xf32> to vector<16x8x16xf32>
    %46 = vector.extract_strided_slice %43 {offsets = [32, 0, 0], sizes = [16, 8, 16], strides = [1, 1, 1]} : vector<64x8x16xf32> to vector<16x8x16xf32>
    %47 = vector.extract_strided_slice %43 {offsets = [48, 0, 0], sizes = [16, 8, 16], strides = [1, 1, 1]} : vector<64x8x16xf32> to vector<16x8x16xf32>
    %48 = tpu.concatenate %44, %45, %46, %47 in 2 : vector<16x8x16xf32>, vector<16x8x16xf32>, vector<16x8x16xf32>, vector<16x8x16xf32> -> vector<16x8x64xf32>
    %49 = tpu.transpose %48, [1, 0, 2] : vector<16x8x64xf32> -> vector<8x16x64xf32>
    %50 = arith.addf %49, %4 : vector<8x16x64xf32>
    %cst_19 = arith.constant dense<0.000000e+00> : vector<8x16xf32>
    %51 = vector.multi_reduction <add>, %50, %cst_19 [2] : vector<8x16x64xf32> to vector<8x16xf32>
    %52 = vector.shape_cast %51 : vector<8x16xf32> to vector<8x16x1xf32>
    %cst_20 = arith.constant 6.400000e+01 : f32
    %53 = vector.broadcast %cst_20 : f32 to vector<8x16x1xf32>
    %54 = arith.divf %52, %53 : vector<8x16x1xf32>
    %55 = vector.broadcast %54 : vector<8x16x1xf32> to vector<8x16x64xf32>
    %56 = arith.subf %50, %55 : vector<8x16x64xf32>
    %57 = arith.mulf %56, %56 : vector<8x16x64xf32>
    %cst_21 = arith.constant dense<0.000000e+00> : vector<8x16xf32>
    %58 = vector.multi_reduction <add>, %57, %cst_21 [2] : vector<8x16x64xf32> to vector<8x16xf32>
    %59 = vector.shape_cast %58 : vector<8x16xf32> to vector<8x16x1xf32>
    %cst_22 = arith.constant 6.400000e+01 : f32
    %60 = vector.broadcast %cst_22 : f32 to vector<8x16x1xf32>
    %61 = arith.divf %59, %60 : vector<8x16x1xf32>
    %62 = vector.broadcast %54 : vector<8x16x1xf32> to vector<8x16x64xf32>
    %63 = arith.subf %50, %62 : vector<8x16x64xf32>
    %cst_23 = arith.constant 9.99999974E-6 : f32
    %64 = vector.broadcast %cst_23 : f32 to vector<8x16x1xf32>
    %65 = arith.addf %61, %64 : vector<8x16x1xf32>
    %66 = math.rsqrt %65 : vector<8x16x1xf32>
    %67 = vector.broadcast %66 : vector<8x16x1xf32> to vector<8x16x64xf32>
    %68 = arith.mulf %63, %67 : vector<8x16x64xf32>
    %c0_24 = arith.constant 0 : index
    %c0_25 = arith.constant 0 : index
    %69 = vector.load %arg5[%c0_24, %c0_25] : memref<1x64xf32, #tpu.memory_space<vmem>>, vector<1x64xf32>
    %70 = vector.shape_cast %69 : vector<1x64xf32> to vector<1x1x64xf32>
    %71 = vector.broadcast %70 : vector<1x1x64xf32> to vector<8x16x64xf32>
    %72 = arith.mulf %68, %71 : vector<8x16x64xf32>
    %c0_26 = arith.constant 0 : index
    %c0_27 = arith.constant 0 : index
    %73 = vector.load %arg6[%c0_26, %c0_27] : memref<1x64xf32, #tpu.memory_space<vmem>>, vector<1x64xf32>
    %74 = vector.shape_cast %73 : vector<1x64xf32> to vector<1x1x64xf32>
    %75 = vector.broadcast %74 : vector<1x1x64xf32> to vector<8x16x64xf32>
    %76 = arith.addf %72, %75 : vector<8x16x64xf32>
    %77 = tpu.transpose %76, [1, 0, 2] : vector<8x16x64xf32> -> vector<16x8x64xf32>
    %78 = vector.shape_cast %77 : vector<16x8x64xf32> to vector<128x64xf32>
    %c0_28 = arith.constant 0 : index
    %c0_29 = arith.constant 0 : index
    %79 = vector.load %arg7[%c0_28, %c0_29] : memref<64x2xf32, #tpu.memory_space<vmem>>, vector<64x2xf32>
    %cst_30 = arith.constant dense<0.000000e+00> : vector<128x2xf32>
    %80 = tpu.matmul %78, %79, %cst_30 {dimension_numbers = #tpu.dot_dimension_numbers<[1], [0], [0], [1], [0, 0, 1, 1], [], []>} : vector<128x64xf32>, vector<64x2xf32>, vector<128x2xf32> -> vector<128x2xf32>
    %c0_31 = arith.constant 0 : index
    %c0_32 = arith.constant 0 : index
    %81 = vector.load %arg8[%c0_31, %c0_32] : memref<1x2xf32, #tpu.memory_space<vmem>>, vector<1x2xf32>
    %82 = vector.broadcast %81 : vector<1x2xf32> to vector<128x2xf32>
    %83 = arith.addf %80, %82 : vector<128x2xf32>
    %c0_33 = arith.constant 0 : index
    %c0_34 = arith.constant 0 : index
    %c0_35 = arith.constant 0 : index
    %84 = vector.load %arg9[%c0_33, %c0_34, %c0_35] : memref<1x128x2xf32, #tpu.memory_space<vmem>>, vector<1x128x2xf32>
    %85 = vector.shape_cast %84 : vector<1x128x2xf32> to vector<128x2xf32>
    %86 = vector.shape_cast %83 : vector<128x2xf32> to vector<1x128x2xf32>
    tpu.vector_store %arg9[%c0_33, %c0_34, %c0_35], %86 {strides = array<i32>} : memref<1x128x2xf32, #tpu.memory_space<vmem>>, vector<1x128x2xf32>,
    return
  }
  func.func @transform_0(%arg0: i32) -> (i32, i32, i32, i32, i32) {
    %c0_i32 = arith.constant 0 : i32
    %c0_i32_0 = arith.constant 0 : i32
    %c0_i32_1 = arith.constant 0 : i32
    %c0_i32_2 = arith.constant 0 : i32
    %c0_i32_3 = arith.constant 0 : i32
    return %c0_i32, %c0_i32_0, %arg0, %c0_i32_1, %c0_i32_2 : i32, i32, i32, i32, i32
  }
  func.func @transform_1(%arg0: i32) -> (i32, i32, i32, i32, i32) {
    %c1_i32 = arith.constant 1 : i32
    %c0_i32 = arith.constant 0 : i32
    %c0_i32_0 = arith.constant 0 : i32
    %c0_i32_1 = arith.constant 0 : i32
    %c0_i32_2 = arith.constant 0 : i32
    return %c1_i32, %c0_i32, %arg0, %c0_i32_0, %c0_i32_1 : i32, i32, i32, i32, i32
  }
  func.func @transform_2(%arg0: i32) -> (i32, i32) {
    %c0_i32 = arith.constant 0 : i32
    %c0_i32_0 = arith.constant 0 : i32
    %c0_i32_1 = arith.constant 0 : i32
    return %c0_i32, %c0_i32_0 : i32, i32
  }
  func.func @transform_3(%arg0: i32) -> (i32, i32) {
    %c0_i32 = arith.constant 0 : i32
    %c0_i32_0 = arith.constant 0 : i32
    %c0_i32_1 = arith.constant 0 : i32
    return %c0_i32, %c0_i32_0 : i32, i32
  }
  func.func @transform_4(%arg0: i32) -> (i32, i32) {
    %c0_i32 = arith.constant 0 : i32
    %c0_i32_0 = arith.constant 0 : i32
    %c0_i32_1 = arith.constant 0 : i32
    return %c0_i32, %c0_i32_0 : i32, i32
  }
  func.func @transform_5(%arg0: i32) -> (i32, i32) {
    %c0_i32 = arith.constant 0 : i32
    %c0_i32_0 = arith.constant 0 : i32
    %c0_i32_1 = arith.constant 0 : i32
    return %c0_i32, %c0_i32_0 : i32, i32
  }
  func.func @transform_6(%arg0: i32) -> (i32, i32) {
    %c0_i32 = arith.constant 0 : i32
    %c0_i32_0 = arith.constant 0 : i32
    %c0_i32_1 = arith.constant 0 : i32
    return %c0_i32, %c0_i32_0 : i32, i32
  }
  func.func @transform_7(%arg0: i32) -> (i32, i32) {
    %c0_i32 = arith.constant 0 : i32
    %c0_i32_0 = arith.constant 0 : i32
    %c0_i32_1 = arith.constant 0 : i32
    return %c0_i32, %c0_i32_0 : i32, i32
  }
  func.func @transform_8(%arg0: i32) -> (i32, i32, i32) {
    %c0_i32 = arith.constant 0 : i32
    %c0_i32_0 = arith.constant 0 : i32
    %c0_i32_1 = arith.constant 0 : i32
    return %arg0, %c0_i32, %c0_i32_0 : i32, i32, i32
  }
}

</mosaic_0001>

<llo_original>
// kernel: _lambda_.2
$region0: #{_lambda_.2}
  #allocation0 [shape = 'u32[]', space=smem, size = 0x4, offset = 0x4, fixed_abs, tag = 'smem constant byte address 0x4 - core index']
  #allocation1 [shape = 'u32[72,128]{1,0:T(1,128)}', space=vmem, size = 0x9000, scoped, tag = 'internal scratch']
  %s0 = inlined_call_operand.vmem [shape: f32[2,8,32,64], index: 0, kind: input, shape index: {}]
  %s1 = inlined_call_operand.vmem [shape: f32[2,8,32,32], index: 1, kind: input, shape index: {}]
  %s2 = inlined_call_operand.vmem [shape: f32[3,32,32], index: 2, kind: input, shape index: {}]
  %s3 = inlined_call_operand.vmem [shape: f32[2,3,32,512], index: 3, kind: input, shape index: {}]
  %s4 = inlined_call_operand.vmem [shape: f32[2,3,32,256], index: 4, kind: input, shape index: {}]
  %s5 = inlined_call_operand.vmem [shape: f32[32,512], index: 5, kind: input, shape index: {}]
  %s6 = inlined_call_operand.vmem [shape: f32[32,256], index: 6, kind: input, shape index: {}]
  %s7 = inlined_call_operand.vmem [shape: f32[2,8,2,16,32], index: 7, kind: output, shape index: {}]
  %s8 = sld [smem:[#allocation0]]
  $region68: #{_lambda_.2} parent=0
    _
  %s10 = ssub.s32 1, %s8
  %s11 = scalar_select 0, %s10, %s8
  loop: start=0, step=1, limit=4
  $region2: #{_lambda_.2} parent=0 // loop_pre_header
    _
  $region3: #{_lambda_.2} parent=0 // loop_header
    %s13 = sphi 0, %s17
    %p14 = scmp.ge.s32.totalorder %s13, 4
    %s23 = sphi 0, %s25
    %s26 = sphi 0, %s23
    %s27 = sphi 0, %s26
    %s43 = sphi 0, %s27
    %s49 = sphi 0, %s51
    %s52 = sphi 0, %s49
    %s53 = sphi 0, %s52
    %s69 = sphi 0, %s53
    %s73 = sphi 0, %s73
    %s75 = sphi 0, %s73
    %s76 = sphi 0, %s75
    %s90 = sphi 0, %s76
    %s96 = sphi 0, %s98
    %s99 = sphi 0, %s96
    %s100 = sphi 0, %s99
    %s116 = sphi 0, %s100
    %s122 = sphi 0, %s124
    %s125 = sphi 0, %s122
    %s126 = sphi 0, %s125
    %s142 = sphi 0, %s126
    %s146 = sphi 0, %s146
    %s148 = sphi 0, %s146
    %s149 = sphi 0, %s148
    %s163 = sphi 0, %s149
    %s167 = sphi 0, %s167
    %s169 = sphi 0, %s167
    %s170 = sphi 0, %s169
    %s184 = sphi 0, %s170
    %s190 = sphi 0, %s192
    %s193 = sphi 0, %s190
    %s194 = sphi 0, %s193
    %s210 = sphi 0, %s194
  $region4: #{_lambda_.2} parent=0 // loop_header_branch
    %16 = sbr.rel (%p14) target = $region8
  $region5: #{_lambda_.2} parent=0 // loop_body
    %s18 = ssub.s32 %s13, 1
    %s19 = ssub.s32 %s13, 2
    %s20 = sadd.s32 %s13, 1
    %s21 = ssub.s32 %s13, %s20
    %p22 = scmp.eq.s32.totalorder %s21, 0
    %s24 = sadd.s32 %s23, 1
    %s25 = scalar_select %p22, %s23, %s24
    %p28 = pneg %p22
    %p29 = scmp.eq.s32.totalorder %s13, 1
    %p30 = por %p28, %p29
    %p31 = scmp.ne.s32.totalorder %s23, %s26
    %p32 = scmp.eq.s32.totalorder %s13, 0
    %p33 = por %p31, %p32
    %p34 = scmp.ne.s32.totalorder %s23, %s26
    %p35 = scmp.eq.s32.totalorder %s18, 1
    %p36 = por %p34, %p35
    %p37 = scmp.ne.s32.totalorder %s26, %s27
    %p38 = scmp.eq.s32.totalorder %s18, 0
    %p39 = por %p37, %p38
    %p40 = scmp.ne.s32.totalorder %s26, %s27
    %p41 = scmp.eq.s32.totalorder %s19, 1
    %p42 = por %p40, %p41
    %p44 = scmp.ne.s32.totalorder %s27, %s43
    %p45 = scmp.eq.s32.totalorder %s19, 0
    %p46 = por %p44, %p45
    %s47 = ssub.s32 %s13, %s20
    %p48 = scmp.eq.s32.totalorder %s47, 0
    %s50 = sadd.s32 %s49, 1
    %s51 = scalar_select %p48, %s49, %s50
    %p54 = pneg %p48
    %p55 = scmp.eq.s32.totalorder %s13, 1
    %p56 = por %p54, %p55
    %p57 = scmp.ne.s32.totalorder %s49, %s52
    %p58 = scmp.eq.s32.totalorder %s13, 0
    %p59 = por %p57, %p58
    %p60 = scmp.ne.s32.totalorder %s49, %s52
    %p61 = scmp.eq.s32.totalorder %s18, 1
    %p62 = por %p60, %p61
    %p63 = scmp.ne.s32.totalorder %s52, %s53
    %p64 = scmp.eq.s32.totalorder %s18, 0
    %p65 = por %p63, %p64
    %p66 = scmp.ne.s32.totalorder %s52, %s53
    %p67 = scmp.eq.s32.totalorder %s19, 1
    %p68 = por %p66, %p67
    %p70 = scmp.ne.s32.totalorder %s53, %s69
    %p71 = scmp.eq.s32.totalorder %s19, 0
    %p72 = por %p70, %p71
    %s74 = sadd.s32 %s73, 1
    %p77 = scmp.eq.s32.totalorder %s13, 1
    %p78 = scmp.ne.s32.totalorder %s73, %s75
    %p79 = scmp.eq.s32.totalorder %s13, 0
    %p80 = por %p78, %p79
    %p81 = scmp.ne.s32.totalorder %s73, %s75
    %p82 = scmp.eq.s32.totalorder %s18, 1
    %p83 = por %p81, %p82
    %p84 = scmp.ne.s32.totalorder %s75, %s76
    %p85 = scmp.eq.s32.totalorder %s18, 0
    %p86 = por %p84, %p85
    %p87 = scmp.ne.s32.totalorder %s75, %s76
    %p88 = scmp.eq.s32.totalorder %s19, 1
    %p89 = por %p87, %p88
    %p91 = scmp.ne.s32.totalorder %s76, %s90
    %p92 = scmp.eq.s32.totalorder %s19, 0
    %p93 = por %p91, %p92
    %s94 = ssub.s32 %s13, %s20
    %p95 = scmp.eq.s32.totalorder %s94, 0
    %s97 = sadd.s32 %s96, 1
    %s98 = scalar_select %p95, %s96, %s97
    %p101 = pneg %p95
    %p102 = scmp.eq.s32.totalorder %s13, 1
    %p103 = por %p101, %p102
    %p104 = scmp.ne.s32.totalorder %s96, %s99
    %p105 = scmp.eq.s32.totalorder %s13, 0
    %p106 = por %p104, %p105
    %p107 = scmp.ne.s32.totalorder %s96, %s99
    %p108 = scmp.eq.s32.totalorder %s18, 1
    %p109 = por %p107, %p108
    %p110 = scmp.ne.s32.totalorder %s99, %s100
    %p111 = scmp.eq.s32.totalorder %s18, 0
    %p112 = por %p110, %p111
    %p113 = scmp.ne.s32.totalorder %s99, %s100
    %p114 = scmp.eq.s32.totalorder %s19, 1
    %p115 = por %p113, %p114
    %p117 = scmp.ne.s32.totalorder %s100, %s116
    %p118 = scmp.eq.s32.totalorder %s19, 0
    %p119 = por %p117, %p118
    %s120 = ssub.s32 %s13, %s20
    %p121 = scmp.eq.s32.totalorder %s120, 0
    %s123 = sadd.s32 %s122, 1
    %s124 = scalar_select %p121, %s122, %s123
    %p127 = pneg %p121
    %p128 = scmp.eq.s32.totalorder %s13, 1
    %p129 = por %p127, %p128
    %p130 = scmp.ne.s32.totalorder %s122, %s125
    %p131 = scmp.eq.s32.totalorder %s13, 0
    %p132 = por %p130, %p131
    %p133 = scmp.ne.s32.totalorder %s122, %s125
    %p134 = scmp.eq.s32.totalorder %s18, 1
    %p135 = por %p133, %p134
    %p136 = scmp.ne.s32.totalorder %s125, %s126
    %p137 = scmp.eq.s32.totalorder %s18, 0
    %p138 = por %p136, %p137
    %p139 = scmp.ne.s32.totalorder %s125, %s126
    %p140 = scmp.eq.s32.totalorder %s19, 1
    %p141 = por %p139, %p140
    %p143 = scmp.ne.s32.totalorder %s126, %s142
    %p144 = scmp.eq.s32.totalorder %s19, 0
    %p145 = por %p143, %p144
    %s147 = sadd.s32 %s146, 1
    %p150 = scmp.eq.s32.totalorder %s13, 1
    %p151 = scmp.ne.s32.totalorder %s146, %s148
    %p152 = scmp.eq.s32.totalorder %s13, 0
    %p153 = por %p151, %p152
    %p154 = scmp.ne.s32.totalorder %s146, %s148
    %p155 = scmp.eq.s32.totalorder %s18, 1
    %p156 = por %p154, %p155
    %p157 = scmp.ne.s32.totalorder %s148, %s149
    %p158 = scmp.eq.s32.totalorder %s18, 0
    %p159 = por %p157, %p158
    %p160 = scmp.ne.s32.totalorder %s148, %s149
    %p161 = scmp.eq.s32.totalorder %s19, 1
    %p162 = por %p160, %p161
    %p164 = scmp.ne.s32.totalorder %s149, %s163
    %p165 = scmp.eq.s32.totalorder %s19, 0
    %p166 = por %p164, %p165
    %s168 = sadd.s32 %s167, 1
    %p171 = scmp.eq.s32.totalorder %s13, 1
    %p172 = scmp.ne.s32.totalorder %s167, %s169
    %p173 = scmp.eq.s32.totalorder %s13, 0
    %p174 = por %p172, %p173
    %p175 = scmp.ne.s32.totalorder %s167, %s169
    %p176 = scmp.eq.s32.totalorder %s18, 1
    %p177 = por %p175, %p176
    %p178 = scmp.ne.s32.totalorder %s169, %s170
    %p179 = scmp.eq.s32.totalorder %s18, 0
    %p180 = por %p178, %p179
    %p181 = scmp.ne.s32.totalorder %s169, %s170
    %p182 = scmp.eq.s32.totalorder %s19, 1
    %p183 = por %p181, %p182
    %p185 = scmp.ne.s32.totalorder %s170, %s184
    %p186 = scmp.eq.s32.totalorder %s19, 0
    %p187 = por %p185, %p186
    %s188 = ssub.s32 %s13, %s20
    %p189 = scmp.eq.s32.totalorder %s188, 0
    %s191 = sadd.s32 %s190, 1
    %s192 = scalar_select %p189, %s190, %s191
    %p195 = pneg %p189
    %p196 = scmp.eq.s32.totalorder %s13, 1
    %p197 = por %p195, %p196
    %p198 = scmp.ne.s32.totalorder %s190, %s193
    %p199 = scmp.eq.s32.totalorder %s13, 0
    %p200 = por %p198, %p199
    %p201 = scmp.ne.s32.totalorder %s190, %s193
    %p202 = scmp.eq.s32.totalorder %s18, 1
    %p203 = por %p201, %p202
    %p204 = scmp.ne.s32.totalorder %s193, %s194
    %p205 = scmp.eq.s32.totalorder %s18, 0
    %p206 = por %p204, %p205
    %p207 = scmp.ne.s32.totalorder %s193, %s194
    %p208 = scmp.eq.s32.totalorder %s19, 1
    %p209 = por %p207, %p208
    %p211 = scmp.ne.s32.totalorder %s194, %s210
    %p212 = scmp.eq.s32.totalorder %s19, 0
    %p213 = por %p211, %p212
    %p214 = scmp.le.s32.totalorder 1, %s13
    %p215 = scmp.lt.s32.totalorder %s13, 3
    %p216 = pnand %p214, %p215
    %p217 = pneg %p216
    // Predicated region
    $region9: #{_lambda_.2} parent=5 // pred_check
      _
    $region10: #{_lambda_.2} parent=5 // pred_check_branch
      %219 = sbr.rel (%p216) target = $region12
    $region11: #{_lambda_.2} parent=5 // pred_region
      %s220 = ssub.s32 %s13, 1
      // Predicated region
      $region13: #{_lambda_.2} parent=11 // pred_check
        %p221 = pneg %p86
      $region14: #{_lambda_.2} parent=11 // pred_check_branch
        %223 = sbr.rel (%p221) target = $region16
      $region15: #{_lambda_.2} parent=11 // pred_region
        _
      $region16: #{_lambda_.2} parent=11 // pred_fallthru
        _
      // Predicated region
      $region17: #{_lambda_.2} parent=11 // pred_check
        %p224 = pneg %p159
      $region18: #{_lambda_.2} parent=11 // pred_check_branch
        %226 = sbr.rel (%p224) target = $region20
      $region19: #{_lambda_.2} parent=11 // pred_region
        _
      $region20: #{_lambda_.2} parent=11 // pred_fallthru
        _
      // Predicated region
      $region21: #{_lambda_.2} parent=11 // pred_check
        %p227 = pneg %p180
      $region22: #{_lambda_.2} parent=11 // pred_check_branch
        %229 = sbr.rel (%p227) target = $region24
      $region23: #{_lambda_.2} parent=11 // pred_region
        _
      $region24: #{_lambda_.2} parent=11 // pred_fallthru
        _
    $region12: #{_lambda_.2} parent=5 // pred_fallthru
      _
    %p230 = scmp.lt.s32.totalorder %s13, 2
    // Predicated region
    $region25: #{_lambda_.2} parent=5 // pred_check
      %p231 = pneg %p230
    $region26: #{_lambda_.2} parent=5 // pred_check_branch
      %233 = sbr.rel (%p231) target = $region28
    $region27: #{_lambda_.2} parent=5 // pred_region
      // Predicated region
      $region29: #{_lambda_.2} parent=27 // pred_check
        %p234 = pneg %p33
      $region30: #{_lambda_.2} parent=27 // pred_check_branch
        %236 = sbr.rel (%p234) target = $region32
      $region31: #{_lambda_.2} parent=27 // pred_region
        %p237 = scmp.lt.s32.totalorder %s13, 1
        %s238 = scalar_select %p237, %s13, 1
        %s239 = smul.addr %s238, 32
        %s240 = smul.addr %s239, 8
        %s241 = scalar_lea.vmem %s0, %s240
      $region32: #{_lambda_.2} parent=27 // pred_fallthru
        _
      // Predicated region
      $region33: #{_lambda_.2} parent=27 // pred_check
        %p242 = pneg %p59
      $region34: #{_lambda_.2} parent=27 // pred_check_branch
        %244 = sbr.rel (%p242) target = $region36
      $region35: #{_lambda_.2} parent=27 // pred_region
        %p245 = scmp.lt.s32.totalorder %s13, 1
        %s246 = scalar_select %p245, %s13, 1
        %s247 = smul.addr %s246, 32
        %s248 = smul.addr %s247, 8
        %s249 = scalar_lea.vmem %s1, %s248
      $region36: #{_lambda_.2} parent=27 // pred_fallthru
        _
      // Predicated region
      $region37: #{_lambda_.2} parent=27 // pred_check
        %p250 = pneg %p106
      $region38: #{_lambda_.2} parent=27 // pred_check_branch
        %252 = sbr.rel (%p250) target = $region40
      $region39: #{_lambda_.2} parent=27 // pred_region
        %p253 = scmp.lt.s32.totalorder %s13, 1
        %s254 = scalar_select %p253, %s13, 1
        %s255 = smul.addr %s254, 48
        %s256 = smul.addr %s255, 8
        %s257 = scalar_lea.vmem %s3, %s256
      $region40: #{_lambda_.2} parent=27 // pred_fallthru
        _
      // Predicated region
      $region41: #{_lambda_.2} parent=27 // pred_check
        %p258 = pneg %p132
      $region42: #{_lambda_.2} parent=27 // pred_check_branch
        %260 = sbr.rel (%p258) target = $region44
      $region43: #{_lambda_.2} parent=27 // pred_region
        %p261 = scmp.lt.s32.totalorder %s13, 1
        %s262 = scalar_select %p261, %s13, 1
        %s263 = smul.addr %s262, 24
        %s264 = smul.addr %s263, 8
        %s265 = scalar_lea.vmem %s4, %s264
      $region44: #{_lambda_.2} parent=27 // pred_fallthru
        _
    $region28: #{_lambda_.2} parent=5 // pred_fallthru
      _
    %p266 = scmp.le.s32.totalorder 1, %s13
    %p267 = scmp.lt.s32.totalorder %s13, 3
    %p268 = pnand %p266, %p267
    %p269 = pneg %p268
    // Predicated region
    $region45: #{_lambda_.2} parent=5 // pred_check
      _
    $region46: #{_lambda_.2} parent=5 // pred_check_branch
      %271 = sbr.rel (%p268) target = $region48
    $region47: #{_lambda_.2} parent=5 // pred_region
      %s272 = ssub.s32 %s13, 1
      %p273 = scmp.lt.s32.totalorder %s18, 1
      %s274 = scalar_select %p273, %s18, 1
      %s275 = smul.addr %s274, 32
      %s276 = smul.addr %s275, 8
      %s277 = scalar_lea.vmem %s0, %s276
      %p278 = pneg %p39
      %p279 = pneg %p36
      %p280 = scmp.lt.s32.totalorder %s18, 1
      %s281 = scalar_select %p280, %s18, 1
      %s282 = smul.addr %s281, 32
      %s283 = smul.addr %s282, 8
      %s284 = scalar_lea.vmem %s1, %s283
      %p285 = pneg %p65
      %p286 = pneg %p62
      %p287 = pneg %p86
      %p288 = pneg %p83
      %p289 = scmp.lt.s32.totalorder %s18, 1
      %s290 = scalar_select %p289, %s18, 1
      %s291 = smul.addr %s290, 48
      %s292 = smul.addr %s291, 8
      %s293 = scalar_lea.vmem %s3, %s292
      %p294 = pneg %p112
      %p295 = pneg %p109
      %p296 = scmp.lt.s32.totalorder %s18, 1
      %s297 = scalar_select %p296, %s18, 1
      %s298 = smul.addr %s297, 24
      %s299 = smul.addr %s298, 8
      %s300 = scalar_lea.vmem %s4, %s299
      %p301 = pneg %p138
      %p302 = pneg %p135
      %p303 = pneg %p159
      %p304 = pneg %p156
      %p305 = pneg %p180
      %p306 = pneg %p177
      %p307 = pneg %p206
      %p308 = pneg %p203
      %p309 = scmp.lt.s32.totalorder %s18, 1
      %s310 = scalar_select %p309, %s18, 1
      %s311 = smul.addr %s310, 32
      %s312 = smul.addr %s311, 8
      %s313 = scalar_lea.vmem %s7, %s312
      %p314 = scmp.lt.s32.totalorder %s18, 1
      %s315 = scalar_select %p314, %s18, 1
      %s316 = smul.addr %s315, 32
      %s317 = smul.addr %s316, 8
      %s318 = scalar_lea.vmem %s0, %s317
      %p319 = scmp.lt.s32.totalorder %s18, 1
      %s320 = scalar_select %p319, %s18, 1
      %s321 = smul.addr %s320, 32
      %s322 = smul.addr %s321, 8
      %s323 = scalar_lea.vmem %s1, %s322
      %p324 = scmp.lt.s32.totalorder %s18, 1
      %s325 = scalar_select %p324, %s18, 1
      %s326 = smul.addr %s325, 48
      %s327 = smul.addr %s326, 8
      %s328 = scalar_lea.vmem %s3, %s327
      %p329 = scmp.lt.s32.totalorder %s18, 1
      %s330 = scalar_select %p329, %s18, 1
      %s331 = smul.addr %s330, 24
      %s332 = smul.addr %s331, 8
      %s333 = scalar_lea.vmem %s4, %s332
      %p334 = scmp.lt.s32.totalorder %s18, 1
      %s335 = scalar_select %p334, %s18, 1
      %s336 = smul.addr %s335, 32
      %s337 = smul.addr %s336, 8
      %s338 = scalar_lea.vmem %s7, %s337
      %v339 = vld [vmem:[%s5] sm:$0xff]
      %v340 = vld [vmem:[%s5 + $0x8] sm:$0xff]
      %v341 = vld [vmem:[%s5 + $0x10] sm:$0xff]
      %v342 = vld [vmem:[%s5 + $0x18] sm:$0xff]
      %v343 = vld [vmem:[%s5 + $0x20] sm:$0xff]
      %v344 = vld [vmem:[%s5 + $0x28] sm:$0xff]
      %v345 = vld [vmem:[%s5 + $0x30] sm:$0xff]
      %v346 = vld [vmem:[%s5 + $0x38] sm:$0xff]
      %v347 = vld [vmem:[%s5 + $0x40] sm:$0xff]
      %v348 = vld [vmem:[%s5 + $0x48] sm:$0xff]
      %v349 = vld [vmem:[%s5 + $0x50] sm:$0xff]
      %v350 = vld [vmem:[%s5 + $0x58] sm:$0xff]
      %v351 = vld [vmem:[%s5 + $0x60] sm:$0xff]
      %v352 = vld [vmem:[%s5 + $0x68] sm:$0xff]
      %v353 = vld [vmem:[%s5 + $0x70] sm:$0xff]
      %v354 = vld [vmem:[%s5 + $0x78] sm:$0xff]
      %v355 = vld [vmem:[%s6] sm:$0xff]
      %v356 = vld [vmem:[%s6 + $0x8] sm:$0xff]
      %v357 = vld [vmem:[%s6 + $0x10] sm:$0xff]
      %v358 = vld [vmem:[%s6 + $0x18] sm:$0xff]
      %v359 = vld [vmem:[%s6 + $0x20] sm:$0xff]
      %v360 = vld [vmem:[%s6 + $0x28] sm:$0xff]
      %v361 = vld [vmem:[%s6 + $0x30] sm:$0xff]
      %v362 = vld [vmem:[%s6 + $0x38] sm:$0xff]
      loop: start=0, step=1, limit=8
      $region49: #{_lambda_.2} parent=47 // loop_pre_header
        _
      $region50: #{_lambda_.2} parent=47 // loop_header
        %s364 = sphi 0, %s368
        %p365 = scmp.ge.s32.totalorder %s364, 8
        %v369 = vphi 0.0, %v1663
        %v370 = vphi 0.0, %v1664
        %v371 = vphi 0.0, %v1665
        %v372 = vphi 0.0, %v1666
      $region51: #{_lambda_.2} parent=47 // loop_header_branch
        %367 = sbr.rel (%p365) target = $region55
      $region52: #{_lambda_.2} parent=47 // loop_body
        %v373 = vld [vmem:[%s2] sm:$0xff]
        %v374 = vld [vmem:[%s2 + $0x8] sm:$0xff]
        %v375 = vld [vmem:[%s2 + $0x10] sm:$0xff]
        %v376 = vld [vmem:[%s2 + $0x18] sm:$0xff]
        %381 = vrot.lane.b32.xlu0 %v369, 96
        %v382 = vpop.permute.xlu0 %381
        %383 = vrot.lane.b32.xlu0 %v370, 96
        %v384 = vpop.permute.xlu0 %383
        %385 = vrot.lane.b32.xlu0 %v371, 96
        %v386 = vpop.permute.xlu0 %385
        %387 = vrot.lane.b32.xlu0 %v372, 96
        %v388 = vpop.permute.xlu0 %387
        %vm393 = vcmask 261120
        %v395 = vsel %vm393, %v373, 0
        %v398 = vsel %vm393, %v374, 0
        %v401 = vsel %vm393, %v375, 0
        %v404 = vsel %vm393, %v376, 0
        %406 = vmatpush.msra.mxu0 0.0
        %407 = vmatpush.msra.mxu0 0.0
        %408 = vmatpush.msra.mxu0 0.0
        %409 = vmatpush.msra.mxu0 0.0
        %410 = vmatpush.msra.mxu0 0.0
        %411 = vmatpush.msra.mxu0 0.0
        %412 = vmatpush.msra.mxu0 0.0
        %413 = vmatpush.msra.mxu0 0.0
        %414 = vmatpush.msra.mxu0 0.0
        %415 = vmatpush.msra.mxu0 0.0
        %416 = vmatpush.msra.mxu0 0.0
        %417 = vmatpush.msra.mxu0 0.0
        %418 = vmatpush.msra.mxu0 %v388
        %419 = vmatpush.msra.mxu0 %v386
        %420 = vmatpush.msra.mxu0 %v384
        %421 = vmatpush.msra.mxu0 %v382
        %422 = vmatmul.f32.gmra.mxu0 %v395
        %v423 = vpop.f32.mrf.mxu0
        %v424 = vadd.f32 0.0, %v423
        %425 = vmatmul.f32.gmra.mxu0 %v398
        %v426 = vpop.f32.mrf.mxu0
        %v427 = vadd.f32 0.0, %v426
        %428 = vmatmul.f32.gmra.mxu0 %v401
        %v429 = vpop.f32.mrf.mxu0
        %v430 = vadd.f32 0.0, %v429
        %431 = vmatmul.f32.gmra.mxu0 %v404
        %v432 = vpop.f32.mrf.mxu0
        %v433 = vadd.f32 0.0, %v432
        %434 = vdwg.mxu0
        %v435 = vld [vmem:[%s328] sm:$0xff]
        %v436 = vld [vmem:[%s328 + $0x8] sm:$0xff]
        %v437 = vld [vmem:[%s328 + $0x10] sm:$0xff]
        %v438 = vld [vmem:[%s328 + $0x18] sm:$0xff]
        %v439 = vld [vmem:[%s328 + $0x20] sm:$0xff]
        %v440 = vld [vmem:[%s328 + $0x28] sm:$0xff]
        %v441 = vld [vmem:[%s328 + $0x30] sm:$0xff]
        %v442 = vld [vmem:[%s328 + $0x38] sm:$0xff]
        %v443 = vld [vmem:[%s328 + $0x40] sm:$0xff]
        %v444 = vld [vmem:[%s328 + $0x48] sm:$0xff]
        %v445 = vld [vmem:[%s328 + $0x50] sm:$0xff]
        %v446 = vld [vmem:[%s328 + $0x58] sm:$0xff]
        %v447 = vld [vmem:[%s328 + $0x60] sm:$0xff]
        %v448 = vld [vmem:[%s328 + $0x68] sm:$0xff]
        %v449 = vld [vmem:[%s328 + $0x70] sm:$0xff]
        %v450 = vld [vmem:[%s328 + $0x78] sm:$0xff]
        %s451 = scalar_lea.vmem %s2, 32
        %v452 = vld [vmem:[%s451] sm:$0xff]
        %v453 = vld [vmem:[%s451 + $0x8] sm:$0xff]
        %v454 = vld [vmem:[%s451 + $0x10] sm:$0xff]
        %v455 = vld [vmem:[%s451 + $0x18] sm:$0xff]
        %v457 = vsel %vm393, %v452, 0
        %v460 = vsel %vm393, %v453, 0
        %v463 = vsel %vm393, %v454, 0
        %v466 = vsel %vm393, %v455, 0
        %468 = vmatpush.msra.mxu0 0.0
        %469 = vmatpush.msra.mxu0 0.0
        %470 = vmatpush.msra.mxu0 0.0
        %471 = vmatpush.msra.mxu0 0.0
        %472 = vmatpush.msra.mxu0 0.0
        %473 = vmatpush.msra.mxu0 0.0
        %474 = vmatpush.msra.mxu0 0.0
        %475 = vmatpush.msra.mxu0 0.0
        %476 = vmatpush.msra.mxu0 0.0
        %477 = vmatpush.msra.mxu0 0.0
        %478 = vmatpush.msra.mxu0 0.0
        %479 = vmatpush.msra.mxu0 0.0
        %480 = vmatpush.msra.mxu0 %v388
        %481 = vmatpush.msra.mxu0 %v386
        %482 = vmatpush.msra.mxu0 %v384
        %483 = vmatpush.msra.mxu0 %v382
        %484 = vmatmul.f32.gmra.mxu0 %v457
        %v485 = vpop.f32.mrf.mxu0
        %v486 = vadd.f32 0.0, %v485
        %487 = vmatmul.f32.gmra.mxu0 %v460
        %v488 = vpop.f32.mrf.mxu0
        %v489 = vadd.f32 0.0, %v488
        %490 = vmatmul.f32.gmra.mxu0 %v463
        %v491 = vpop.f32.mrf.mxu0
        %v492 = vadd.f32 0.0, %v491
        %493 = vmatmul.f32.gmra.mxu0 %v466
        %v494 = vpop.f32.mrf.mxu0
        %v495 = vadd.f32 0.0, %v494
        %496 = vdwg.mxu0
        %s497 = scalar_lea.vmem %s328, 128
        %v498 = vld [vmem:[%s497] sm:$0xff]
        %v499 = vld [vmem:[%s497 + $0x8] sm:$0xff]
        %v500 = vld [vmem:[%s497 + $0x10] sm:$0xff]
        %v501 = vld [vmem:[%s497 + $0x18] sm:$0xff]
        %v502 = vld [vmem:[%s497 + $0x20] sm:$0xff]
        %v503 = vld [vmem:[%s497 + $0x28] sm:$0xff]
        %v504 = vld [vmem:[%s497 + $0x30] sm:$0xff]
        %v505 = vld [vmem:[%s497 + $0x38] sm:$0xff]
        %v506 = vld [vmem:[%s497 + $0x40] sm:$0xff]
        %v507 = vld [vmem:[%s497 + $0x48] sm:$0xff]
        %v508 = vld [vmem:[%s497 + $0x50] sm:$0xff]
        %v509 = vld [vmem:[%s497 + $0x58] sm:$0xff]
        %v510 = vld [vmem:[%s497 + $0x60] sm:$0xff]
        %v511 = vld [vmem:[%s497 + $0x68] sm:$0xff]
        %v512 = vld [vmem:[%s497 + $0x70] sm:$0xff]
        %v513 = vld [vmem:[%s497 + $0x78] sm:$0xff]
        %v515 = vsel %vm393, %v486, 0
        %v518 = vsel %vm393, %v489, 0
        %v521 = vsel %vm393, %v492, 0
        %v524 = vsel %vm393, %v495, 0
        %526 = vmatpush.msra.mxu0 0.0
        %527 = vmatpush.msra.mxu0 0.0
        %528 = vmatpush.msra.mxu0 0.0
        %529 = vmatpush.msra.mxu0 0.0
        %530 = vmatpush.msra.mxu0 0.0
        %531 = vmatpush.msra.mxu0 0.0
        %532 = vmatpush.msra.mxu0 0.0
        %533 = vmatpush.msra.mxu0 0.0
        %534 = vmatpush.msra.mxu0 0.0
        %535 = vmatpush.msra.mxu0 0.0
        %536 = vmatpush.msra.mxu0 0.0
        %537 = vmatpush.msra.mxu0 0.0
        %538 = vmatpush.msra.mxu0 %v510
        %539 = vmatpush.msra.mxu0 %v506
        %540 = vmatpush.msra.mxu0 %v502
        %541 = vmatpush.msra.mxu0 %v498
        %542 = vmatmul.f32.gmra.mxu0 %v515
        %v543 = vpop.f32.mrf.mxu0
        %v544 = vadd.f32 0.0, %v543
        %545 = vmatmul.f32.gmra.mxu0 %v518
        %v546 = vpop.f32.mrf.mxu0
        %v547 = vadd.f32 0.0, %v546
        %548 = vmatmul.f32.gmra.mxu0 %v521
        %v549 = vpop.f32.mrf.mxu0
        %v550 = vadd.f32 0.0, %v549
        %551 = vmatmul.f32.gmra.mxu0 %v524
        %v552 = vpop.f32.mrf.mxu0
        %v553 = vadd.f32 0.0, %v552
        %554 = vdwg.mxu0
        %555 = vmatpush.msra.mxu0 0.0
        %556 = vmatpush.msra.mxu0 0.0
        %557 = vmatpush.msra.mxu0 0.0
        %558 = vmatpush.msra.mxu0 0.0
        %559 = vmatpush.msra.mxu0 0.0
        %560 = vmatpush.msra.mxu0 0.0
        %561 = vmatpush.msra.mxu0 0.0
        %562 = vmatpush.msra.mxu0 0.0
        %563 = vmatpush.msra.mxu0 0.0
        %564 = vmatpush.msra.mxu0 0.0
        %565 = vmatpush.msra.mxu0 0.0
        %566 = vmatpush.msra.mxu0 0.0
        %567 = vmatpush.msra.mxu0 %v511
        %568 = vmatpush.msra.mxu0 %v507
        %569 = vmatpush.msra.mxu0 %v503
        %570 = vmatpush.msra.mxu0 %v499
        %571 = vmatmul.f32.gmra.mxu0 %v515
        %v572 = vpop.f32.mrf.mxu0
        %v573 = vadd.f32 0.0, %v572
        %574 = vmatmul.f32.gmra.mxu0 %v518
        %v575 = vpop.f32.mrf.mxu0
        %v576 = vadd.f32 0.0, %v575
        %577 = vmatmul.f32.gmra.mxu0 %v521
        %v578 = vpop.f32.mrf.mxu0
        %v579 = vadd.f32 0.0, %v578
        %580 = vmatmul.f32.gmra.mxu0 %v524
        %v581 = vpop.f32.mrf.mxu0
        %v582 = vadd.f32 0.0, %v581
        %583 = vdwg.mxu0
        %584 = vmatpush.msra.mxu0 0.0
        %585 = vmatpush.msra.mxu0 0.0
        %586 = vmatpush.msra.mxu0 0.0
        %587 = vmatpush.msra.mxu0 0.0
        %588 = vmatpush.msra.mxu0 0.0
        %589 = vmatpush.msra.mxu0 0.0
        %590 = vmatpush.msra.mxu0 0.0
        %591 = vmatpush.msra.mxu0 0.0
        %592 = vmatpush.msra.mxu0 0.0
        %593 = vmatpush.msra.mxu0 0.0
        %594 = vmatpush.msra.mxu0 0.0
        %595 = vmatpush.msra.mxu0 0.0
        %596 = vmatpush.msra.mxu0 %v512
        %597 = vmatpush.msra.mxu0 %v508
        %598 = vmatpush.msra.mxu0 %v504
        %599 = vmatpush.msra.mxu0 %v500
        %600 = vmatmul.f32.gmra.mxu0 %v515
        %v601 = vpop.f32.mrf.mxu0
        %v602 = vadd.f32 0.0, %v601
        %603 = vmatmul.f32.gmra.mxu0 %v518
        %v604 = vpop.f32.mrf.mxu0
        %v605 = vadd.f32 0.0, %v604
        %606 = vmatmul.f32.gmra.mxu0 %v521
        %v607 = vpop.f32.mrf.mxu0
        %v608 = vadd.f32 0.0, %v607
        %609 = vmatmul.f32.gmra.mxu0 %v524
        %v610 = vpop.f32.mrf.mxu0
        %v611 = vadd.f32 0.0, %v610
        %612 = vdwg.mxu0
        %613 = vmatpush.msra.mxu0 0.0
        %614 = vmatpush.msra.mxu0 0.0
        %615 = vmatpush.msra.mxu0 0.0
        %616 = vmatpush.msra.mxu0 0.0
        %617 = vmatpush.msra.mxu0 0.0
        %618 = vmatpush.msra.mxu0 0.0
        %619 = vmatpush.msra.mxu0 0.0
        %620 = vmatpush.msra.mxu0 0.0
        %621 = vmatpush.msra.mxu0 0.0
        %622 = vmatpush.msra.mxu0 0.0
        %623 = vmatpush.msra.mxu0 0.0
        %624 = vmatpush.msra.mxu0 0.0
        %625 = vmatpush.msra.mxu0 %v513
        %626 = vmatpush.msra.mxu0 %v509
        %627 = vmatpush.msra.mxu0 %v505
        %628 = vmatpush.msra.mxu0 %v501
        %629 = vmatmul.f32.gmra.mxu0 %v515
        %v630 = vpop.f32.mrf.mxu0
        %v631 = vadd.f32 0.0, %v630
        %632 = vmatmul.f32.gmra.mxu0 %v518
        %v633 = vpop.f32.mrf.mxu0
        %v634 = vadd.f32 0.0, %v633
        %635 = vmatmul.f32.gmra.mxu0 %v521
        %v636 = vpop.f32.mrf.mxu0
        %v637 = vadd.f32 0.0, %v636
        %638 = vmatmul.f32.gmra.mxu0 %v524
        %v639 = vpop.f32.mrf.mxu0
        %v640 = vadd.f32 0.0, %v639
        %641 = vdwg.mxu0
        %v643 = vsel %vm393, %v424, 0
        %v646 = vsel %vm393, %v427, 0
        %v649 = vsel %vm393, %v430, 0
        %v652 = vsel %vm393, %v433, 0
        %654 = vmatpush.msra.mxu0 0.0
        %655 = vmatpush.msra.mxu0 0.0
        %656 = vmatpush.msra.mxu0 0.0
        %657 = vmatpush.msra.mxu0 0.0
        %658 = vmatpush.msra.mxu0 0.0
        %659 = vmatpush.msra.mxu0 0.0
        %660 = vmatpush.msra.mxu0 0.0
        %661 = vmatpush.msra.mxu0 0.0
        %662 = vmatpush.msra.mxu0 0.0
        %663 = vmatpush.msra.mxu0 0.0
        %664 = vmatpush.msra.mxu0 0.0
        %665 = vmatpush.msra.mxu0 0.0
        %666 = vmatpush.msra.mxu0 %v447
        %667 = vmatpush.msra.mxu0 %v443
        %668 = vmatpush.msra.mxu0 %v439
        %669 = vmatpush.msra.mxu0 %v435
        %670 = vmatmul.f32.gmra.mxu0 %v643
        %v671 = vpop.f32.mrf.mxu0
        %v672 = vadd.f32 %v544, %v671
        %673 = vmatmul.f32.gmra.mxu0 %v646
        %v674 = vpop.f32.mrf.mxu0
        %v675 = vadd.f32 %v547, %v674
        %676 = vmatmul.f32.gmra.mxu0 %v649
        %v677 = vpop.f32.mrf.mxu0
        %v678 = vadd.f32 %v550, %v677
        %679 = vmatmul.f32.gmra.mxu0 %v652
        %v680 = vpop.f32.mrf.mxu0
        %v681 = vadd.f32 %v553, %v680
        %682 = vdwg.mxu0
        %683 = vmatpush.msra.mxu0 0.0
        %684 = vmatpush.msra.mxu0 0.0
        %685 = vmatpush.msra.mxu0 0.0
        %686 = vmatpush.msra.mxu0 0.0
        %687 = vmatpush.msra.mxu0 0.0
        %688 = vmatpush.msra.mxu0 0.0
        %689 = vmatpush.msra.mxu0 0.0
        %690 = vmatpush.msra.mxu0 0.0
        %691 = vmatpush.msra.mxu0 0.0
        %692 = vmatpush.msra.mxu0 0.0
        %693 = vmatpush.msra.mxu0 0.0
        %694 = vmatpush.msra.mxu0 0.0
        %695 = vmatpush.msra.mxu0 %v448
        %696 = vmatpush.msra.mxu0 %v444
        %697 = vmatpush.msra.mxu0 %v440
        %698 = vmatpush.msra.mxu0 %v436
        %699 = vmatmul.f32.gmra.mxu0 %v643
        %v700 = vpop.f32.mrf.mxu0
        %v701 = vadd.f32 %v573, %v700
        %702 = vmatmul.f32.gmra.mxu0 %v646
        %v703 = vpop.f32.mrf.mxu0
        %v704 = vadd.f32 %v576, %v703
        %705 = vmatmul.f32.gmra.mxu0 %v649
        %v706 = vpop.f32.mrf.mxu0
        %v707 = vadd.f32 %v579, %v706
        %708 = vmatmul.f32.gmra.mxu0 %v652
        %v709 = vpop.f32.mrf.mxu0
        %v710 = vadd.f32 %v582, %v709
        %711 = vdwg.mxu0
        %712 = vmatpush.msra.mxu0 0.0
        %713 = vmatpush.msra.mxu0 0.0
        %714 = vmatpush.msra.mxu0 0.0
        %715 = vmatpush.msra.mxu0 0.0
        %716 = vmatpush.msra.mxu0 0.0
        %717 = vmatpush.msra.mxu0 0.0
        %718 = vmatpush.msra.mxu0 0.0
        %719 = vmatpush.msra.mxu0 0.0
        %720 = vmatpush.msra.mxu0 0.0
        %721 = vmatpush.msra.mxu0 0.0
        %722 = vmatpush.msra.mxu0 0.0
        %723 = vmatpush.msra.mxu0 0.0
        %724 = vmatpush.msra.mxu0 %v449
        %725 = vmatpush.msra.mxu0 %v445
        %726 = vmatpush.msra.mxu0 %v441
        %727 = vmatpush.msra.mxu0 %v437
        %728 = vmatmul.f32.gmra.mxu0 %v643
        %v729 = vpop.f32.mrf.mxu0
        %v730 = vadd.f32 %v602, %v729
        %731 = vmatmul.f32.gmra.mxu0 %v646
        %v732 = vpop.f32.mrf.mxu0
        %v733 = vadd.f32 %v605, %v732
        %734 = vmatmul.f32.gmra.mxu0 %v649
        %v735 = vpop.f32.mrf.mxu0
        %v736 = vadd.f32 %v608, %v735
        %737 = vmatmul.f32.gmra.mxu0 %v652
        %v738 = vpop.f32.mrf.mxu0
        %v739 = vadd.f32 %v611, %v738
        %740 = vdwg.mxu0
        %741 = vmatpush.msra.mxu0 0.0
        %742 = vmatpush.msra.mxu0 0.0
        %743 = vmatpush.msra.mxu0 0.0
        %744 = vmatpush.msra.mxu0 0.0
        %745 = vmatpush.msra.mxu0 0.0
        %746 = vmatpush.msra.mxu0 0.0
        %747 = vmatpush.msra.mxu0 0.0
        %748 = vmatpush.msra.mxu0 0.0
        %749 = vmatpush.msra.mxu0 0.0
        %750 = vmatpush.msra.mxu0 0.0
        %751 = vmatpush.msra.mxu0 0.0
        %752 = vmatpush.msra.mxu0 0.0
        %753 = vmatpush.msra.mxu0 %v450
        %754 = vmatpush.msra.mxu0 %v446
        %755 = vmatpush.msra.mxu0 %v442
        %756 = vmatpush.msra.mxu0 %v438
        %757 = vmatmul.f32.gmra.mxu0 %v643
        %v758 = vpop.f32.mrf.mxu0
        %v759 = vadd.f32 %v631, %v758
        %760 = vmatmul.f32.gmra.mxu0 %v646
        %v761 = vpop.f32.mrf.mxu0
        %v762 = vadd.f32 %v634, %v761
        %763 = vmatmul.f32.gmra.mxu0 %v649
        %v764 = vpop.f32.mrf.mxu0
        %v765 = vadd.f32 %v637, %v764
        %766 = vmatmul.f32.gmra.mxu0 %v652
        %v767 = vpop.f32.mrf.mxu0
        %v768 = vadd.f32 %v640, %v767
        %769 = vdwg.mxu0
        %s770 = scalar_lea.vmem %s2, 64
        %v771 = vld [vmem:[%s770] sm:$0xff]
        %v772 = vld [vmem:[%s770 + $0x8] sm:$0xff]
        %v773 = vld [vmem:[%s770 + $0x10] sm:$0xff]
        %v774 = vld [vmem:[%s770 + $0x18] sm:$0xff]
        %v776 = vsel %vm393, %v771, 0
        %v779 = vsel %vm393, %v772, 0
        %v782 = vsel %vm393, %v773, 0
        %v785 = vsel %vm393, %v774, 0
        %787 = vmatpush.msra.mxu0 0.0
        %788 = vmatpush.msra.mxu0 0.0
        %789 = vmatpush.msra.mxu0 0.0
        %790 = vmatpush.msra.mxu0 0.0
        %791 = vmatpush.msra.mxu0 0.0
        %792 = vmatpush.msra.mxu0 0.0
        %793 = vmatpush.msra.mxu0 0.0
        %794 = vmatpush.msra.mxu0 0.0
        %795 = vmatpush.msra.mxu0 0.0
        %796 = vmatpush.msra.mxu0 0.0
        %797 = vmatpush.msra.mxu0 0.0
        %798 = vmatpush.msra.mxu0 0.0
        %799 = vmatpush.msra.mxu0 %v388
        %800 = vmatpush.msra.mxu0 %v386
        %801 = vmatpush.msra.mxu0 %v384
        %802 = vmatpush.msra.mxu0 %v382
        %803 = vmatmul.f32.gmra.mxu0 %v776
        %v804 = vpop.f32.mrf.mxu0
        %v805 = vadd.f32 0.0, %v804
        %806 = vmatmul.f32.gmra.mxu0 %v779
        %v807 = vpop.f32.mrf.mxu0
        %v808 = vadd.f32 0.0, %v807
        %809 = vmatmul.f32.gmra.mxu0 %v782
        %v810 = vpop.f32.mrf.mxu0
        %v811 = vadd.f32 0.0, %v810
        %812 = vmatmul.f32.gmra.mxu0 %v785
        %v813 = vpop.f32.mrf.mxu0
        %v814 = vadd.f32 0.0, %v813
        %815 = vdwg.mxu0
        %s816 = scalar_lea.vmem %s328, 256
        %v817 = vld [vmem:[%s816] sm:$0xff]
        %v818 = vld [vmem:[%s816 + $0x8] sm:$0xff]
        %v819 = vld [vmem:[%s816 + $0x10] sm:$0xff]
        %v820 = vld [vmem:[%s816 + $0x18] sm:$0xff]
        %v821 = vld [vmem:[%s816 + $0x20] sm:$0xff]
        %v822 = vld [vmem:[%s816 + $0x28] sm:$0xff]
        %v823 = vld [vmem:[%s816 + $0x30] sm:$0xff]
        %v824 = vld [vmem:[%s816 + $0x38] sm:$0xff]
        %v825 = vld [vmem:[%s816 + $0x40] sm:$0xff]
        %v826 = vld [vmem:[%s816 + $0x48] sm:$0xff]
        %v827 = vld [vmem:[%s816 + $0x50] sm:$0xff]
        %v828 = vld [vmem:[%s816 + $0x58] sm:$0xff]
        %v829 = vld [vmem:[%s816 + $0x60] sm:$0xff]
        %v830 = vld [vmem:[%s816 + $0x68] sm:$0xff]
        %v831 = vld [vmem:[%s816 + $0x70] sm:$0xff]
        %v832 = vld [vmem:[%s816 + $0x78] sm:$0xff]
        %v834 = vsel %vm393, %v805, 0
        %v837 = vsel %vm393, %v808, 0
        %v840 = vsel %vm393, %v811, 0
        %v843 = vsel %vm393, %v814, 0
        %845 = vmatpush.msra.mxu0 0.0
        %846 = vmatpush.msra.mxu0 0.0
        %847 = vmatpush.msra.mxu0 0.0
        %848 = vmatpush.msra.mxu0 0.0
        %849 = vmatpush.msra.mxu0 0.0
        %850 = vmatpush.msra.mxu0 0.0
        %851 = vmatpush.msra.mxu0 0.0
        %852 = vmatpush.msra.mxu0 0.0
        %853 = vmatpush.msra.mxu0 0.0
        %854 = vmatpush.msra.mxu0 0.0
        %855 = vmatpush.msra.mxu0 0.0
        %856 = vmatpush.msra.mxu0 0.0
        %857 = vmatpush.msra.mxu0 %v829
        %858 = vmatpush.msra.mxu0 %v825
        %859 = vmatpush.msra.mxu0 %v821
        %860 = vmatpush.msra.mxu0 %v817
        %861 = vmatmul.f32.gmra.mxu0 %v834
        %v862 = vpop.f32.mrf.mxu0
        %v863 = vadd.f32 0.0, %v862
        %864 = vmatmul.f32.gmra.mxu0 %v837
        %v865 = vpop.f32.mrf.mxu0
        %v866 = vadd.f32 0.0, %v865
        %867 = vmatmul.f32.gmra.mxu0 %v840
        %v868 = vpop.f32.mrf.mxu0
        %v869 = vadd.f32 0.0, %v868
        %870 = vmatmul.f32.gmra.mxu0 %v843
        %v871 = vpop.f32.mrf.mxu0
        %v872 = vadd.f32 0.0, %v871
        %873 = vdwg.mxu0
        %874 = vmatpush.msra.mxu0 0.0
        %875 = vmatpush.msra.mxu0 0.0
        %876 = vmatpush.msra.mxu0 0.0
        %877 = vmatpush.msra.mxu0 0.0
        %878 = vmatpush.msra.mxu0 0.0
        %879 = vmatpush.msra.mxu0 0.0
        %880 = vmatpush.msra.mxu0 0.0
        %881 = vmatpush.msra.mxu0 0.0
        %882 = vmatpush.msra.mxu0 0.0
        %883 = vmatpush.msra.mxu0 0.0
        %884 = vmatpush.msra.mxu0 0.0
        %885 = vmatpush.msra.mxu0 0.0
        %886 = vmatpush.msra.mxu0 %v830
        %887 = vmatpush.msra.mxu0 %v826
        %888 = vmatpush.msra.mxu0 %v822
        %889 = vmatpush.msra.mxu0 %v818
        %890 = vmatmul.f32.gmra.mxu0 %v834
        %v891 = vpop.f32.mrf.mxu0
        %v892 = vadd.f32 0.0, %v891
        %893 = vmatmul.f32.gmra.mxu0 %v837
        %v894 = vpop.f32.mrf.mxu0
        %v895 = vadd.f32 0.0, %v894
        %896 = vmatmul.f32.gmra.mxu0 %v840
        %v897 = vpop.f32.mrf.mxu0
        %v898 = vadd.f32 0.0, %v897
        %899 = vmatmul.f32.gmra.mxu0 %v843
        %v900 = vpop.f32.mrf.mxu0
        %v901 = vadd.f32 0.0, %v900
        %902 = vdwg.mxu0
        %903 = vmatpush.msra.mxu0 0.0
        %904 = vmatpush.msra.mxu0 0.0
        %905 = vmatpush.msra.mxu0 0.0
        %906 = vmatpush.msra.mxu0 0.0
        %907 = vmatpush.msra.mxu0 0.0
        %908 = vmatpush.msra.mxu0 0.0
        %909 = vmatpush.msra.mxu0 0.0
        %910 = vmatpush.msra.mxu0 0.0
        %911 = vmatpush.msra.mxu0 0.0
        %912 = vmatpush.msra.mxu0 0.0
        %913 = vmatpush.msra.mxu0 0.0
        %914 = vmatpush.msra.mxu0 0.0
        %915 = vmatpush.msra.mxu0 %v831
        %916 = vmatpush.msra.mxu0 %v827
        %917 = vmatpush.msra.mxu0 %v823
        %918 = vmatpush.msra.mxu0 %v819
        %919 = vmatmul.f32.gmra.mxu0 %v834
        %v920 = vpop.f32.mrf.mxu0
        %v921 = vadd.f32 0.0, %v920
        %922 = vmatmul.f32.gmra.mxu0 %v837
        %v923 = vpop.f32.mrf.mxu0
        %v924 = vadd.f32 0.0, %v923
        %925 = vmatmul.f32.gmra.mxu0 %v840
        %v926 = vpop.f32.mrf.mxu0
        %v927 = vadd.f32 0.0, %v926
        %928 = vmatmul.f32.gmra.mxu0 %v843
        %v929 = vpop.f32.mrf.mxu0
        %v930 = vadd.f32 0.0, %v929
        %931 = vdwg.mxu0
        %932 = vmatpush.msra.mxu0 0.0
        %933 = vmatpush.msra.mxu0 0.0
        %934 = vmatpush.msra.mxu0 0.0
        %935 = vmatpush.msra.mxu0 0.0
        %936 = vmatpush.msra.mxu0 0.0
        %937 = vmatpush.msra.mxu0 0.0
        %938 = vmatpush.msra.mxu0 0.0
        %939 = vmatpush.msra.mxu0 0.0
        %940 = vmatpush.msra.mxu0 0.0
        %941 = vmatpush.msra.mxu0 0.0
        %942 = vmatpush.msra.mxu0 0.0
        %943 = vmatpush.msra.mxu0 0.0
        %944 = vmatpush.msra.mxu0 %v832
        %945 = vmatpush.msra.mxu0 %v828
        %946 = vmatpush.msra.mxu0 %v824
        %947 = vmatpush.msra.mxu0 %v820
        %948 = vmatmul.f32.gmra.mxu0 %v834
        %v949 = vpop.f32.mrf.mxu0
        %v950 = vadd.f32 0.0, %v949
        %951 = vmatmul.f32.gmra.mxu0 %v837
        %v952 = vpop.f32.mrf.mxu0
        %v953 = vadd.f32 0.0, %v952
        %954 = vmatmul.f32.gmra.mxu0 %v840
        %v955 = vpop.f32.mrf.mxu0
        %v956 = vadd.f32 0.0, %v955
        %957 = vmatmul.f32.gmra.mxu0 %v843
        %v958 = vpop.f32.mrf.mxu0
        %v959 = vadd.f32 0.0, %v958
        %960 = vdwg.mxu0
        %v961 = vadd.f32 %v672, %v863
        %v962 = vadd.f32 %v701, %v892
        %v963 = vadd.f32 %v730, %v921
        %v964 = vadd.f32 %v759, %v950
        %v965 = vadd.f32 %v675, %v866
        %v966 = vadd.f32 %v704, %v895
        %v967 = vadd.f32 %v733, %v924
        %v968 = vadd.f32 %v762, %v953
        %v969 = vadd.f32 %v678, %v869
        %v970 = vadd.f32 %v707, %v898
        %v971 = vadd.f32 %v736, %v927
        %v972 = vadd.f32 %v765, %v956
        %v973 = vadd.f32 %v681, %v872
        %v974 = vadd.f32 %v710, %v901
        %v975 = vadd.f32 %v739, %v930
        %v976 = vadd.f32 %v768, %v959
        %s977 = smul.u32 %s364, 32
        %s978 = scalar_lea.vmem %s318, %s977
        %v979 = vld [vmem:[%s978] sm:$0xff]
        %v980 = vld [vmem:[%s978 + $0x8] sm:$0xff]
        %v981 = vld [vmem:[%s978 + $0x10] sm:$0xff]
        %v982 = vld [vmem:[%s978 + $0x18] sm:$0xff]
        %v983 = vmul.f32 %v961, %v339
        %v984 = vmul.f32 %v962, %v340
        %v985 = vmul.f32 %v963, %v341
        %v986 = vmul.f32 %v964, %v342
        %v987 = vmul.f32 %v965, %v343
        %v988 = vmul.f32 %v966, %v344
        %v989 = vmul.f32 %v967, %v345
        %v990 = vmul.f32 %v968, %v346
        %v991 = vmul.f32 %v969, %v347
        %v992 = vmul.f32 %v970, %v348
        %v993 = vmul.f32 %v971, %v349
        %v994 = vmul.f32 %v972, %v350
        %v995 = vmul.f32 %v973, %v351
        %v996 = vmul.f32 %v974, %v352
        %v997 = vmul.f32 %v975, %v353
        %v998 = vmul.f32 %v976, %v354
        %1003 = vrot.lane.b32.xlu0 %v983, 64
        %v1004 = vpop.permute.xlu0 %1003
        %1005 = vrot.lane.b32.xlu0 %v987, 64
        %v1006 = vpop.permute.xlu0 %1005
        %1007 = vrot.lane.b32.xlu0 %v991, 64
        %v1008 = vpop.permute.xlu0 %1007
        %1009 = vrot.lane.b32.xlu0 %v995, 64
        %v1010 = vpop.permute.xlu0 %1009
        %v1015 = vadd.f32 %v983, %v1004
        %v1016 = vadd.f32 %v987, %v1006
        %v1017 = vadd.f32 %v991, %v1008
        %v1018 = vadd.f32 %v995, %v1010
        %v1019 = vadd.f32 %v1015, %v984
        %v1020 = vadd.f32 %v1016, %v988
        %v1021 = vadd.f32 %v1017, %v992
        %v1022 = vadd.f32 %v1018, %v996
        %1027 = vrot.lane.b32.xlu0 %v984, 64
        %v1028 = vpop.permute.xlu0 %1027
        %1029 = vrot.lane.b32.xlu0 %v988, 64
        %v1030 = vpop.permute.xlu0 %1029
        %1031 = vrot.lane.b32.xlu0 %v992, 64
        %v1032 = vpop.permute.xlu0 %1031
        %1033 = vrot.lane.b32.xlu0 %v996, 64
        %v1034 = vpop.permute.xlu0 %1033
        %v1039 = vadd.f32 %v1019, %v1028
        %v1040 = vadd.f32 %v1020, %v1030
        %v1041 = vadd.f32 %v1021, %v1032
        %v1042 = vadd.f32 %v1022, %v1034
        %v1043 = vadd.f32 %v1039, %v985
        %v1044 = vadd.f32 %v1040, %v989
        %v1045 = vadd.f32 %v1041, %v993
        %v1046 = vadd.f32 %v1042, %v997
        %1051 = vrot.lane.b32.xlu0 %v985, 64
        %v1052 = vpop.permute.xlu0 %1051
        %1053 = vrot.lane.b32.xlu0 %v989, 64
        %v1054 = vpop.permute.xlu0 %1053
        %1055 = vrot.lane.b32.xlu0 %v993, 64
        %v1056 = vpop.permute.xlu0 %1055
        %1057 = vrot.lane.b32.xlu0 %v997, 64
        %v1058 = vpop.permute.xlu0 %1057
        %v1063 = vadd.f32 %v1043, %v1052
        %v1064 = vadd.f32 %v1044, %v1054
        %v1065 = vadd.f32 %v1045, %v1056
        %v1066 = vadd.f32 %v1046, %v1058
        %v1067 = vadd.f32 %v1063, %v986
        %v1068 = vadd.f32 %v1064, %v990
        %v1069 = vadd.f32 %v1065, %v994
        %v1070 = vadd.f32 %v1066, %v998
        %1075 = vrot.lane.b32.xlu0 %v986, 64
        %v1076 = vpop.permute.xlu0 %1075
        %1077 = vrot.lane.b32.xlu0 %v990, 64
        %v1078 = vpop.permute.xlu0 %1077
        %1079 = vrot.lane.b32.xlu0 %v994, 64
        %v1080 = vpop.permute.xlu0 %1079
        %1081 = vrot.lane.b32.xlu0 %v998, 64
        %v1082 = vpop.permute.xlu0 %1081
        %v1087 = vadd.f32 %v1067, %v1076
        %v1088 = vadd.f32 %v1068, %v1078
        %v1089 = vadd.f32 %v1069, %v1080
        %v1090 = vadd.f32 %v1070, %v1082
        %v1091 = vadd.f32 %v979, %v1087
        %v1092 = vadd.f32 %v980, %v1088
        %v1093 = vadd.f32 %v981, %v1089
        %v1094 = vadd.f32 %v982, %v1090
        %v1095 = vxor.u32 %v1091, 2147483648
        %v1096 = vxor.u32 %v1092, 2147483648
        %v1097 = vxor.u32 %v1093, 2147483648
        %v1098 = vxor.u32 %v1094, 2147483648
        %v1099 = vmul.f32 %v1095, 1.442695
        %v1100 = vpow.pop %v1099
        %v1101 = vmul.f32 %v1096, 1.442695
        %v1102 = vpow.pop %v1101
        %v1103 = vmul.f32 %v1097, 1.442695
        %v1104 = vpow.pop %v1103
        %v1105 = vmul.f32 %v1098, 1.442695
        %v1106 = vpow.pop %v1105
        %v1107 = vadd.f32 %v1100, 1.0
        %v1108 = vadd.f32 %v1102, 1.0
        %v1109 = vadd.f32 %v1104, 1.0
        %v1110 = vadd.f32 %v1106, 1.0
        %v1111 = vrcp.pop %v1107
        %v1112 = vmul.f32 %v1107, %v1111
        %v1113 = vsub.f32 1.0, %v1112
        %v1114 = vmul.f32 %v1111, %v1113
        %v1115 = vadd.f32 %v1111, %v1114
        %vm1116 = vweird.f32 %v1107
        %vm1117 = vweird.f32 %v1111
        %vm1118 = vmor %vm1116, %vm1117
        %v1119 = vsel %vm1118, %v1111, %v1115
        %v1120 = vand.u32 2147483647, %v1107
        %vm1121 = vcmp.eq.f32.partialorder %v1120, 8.507059e+37
        %v1122 = vand.u32 %v1107, 2147483648
        %v1123 = vor.u32 1.1754944e-38, %v1122
        %v1124 = vsel %vm1121, %v1123, %v1119
        %v1125 = vmul.f32 1.0, %v1124
        %v1126 = vrcp.pop %v1108
        %v1127 = vmul.f32 %v1108, %v1126
        %v1128 = vsub.f32 1.0, %v1127
        %v1129 = vmul.f32 %v1126, %v1128
        %v1130 = vadd.f32 %v1126, %v1129
        %vm1131 = vweird.f32 %v1108
        %vm1132 = vweird.f32 %v1126
        %vm1133 = vmor %vm1131, %vm1132
        %v1134 = vsel %vm1133, %v1126, %v1130
        %v1135 = vand.u32 2147483647, %v1108
        %vm1136 = vcmp.eq.f32.partialorder %v1135, 8.507059e+37
        %v1137 = vand.u32 %v1108, 2147483648
        %v1138 = vor.u32 1.1754944e-38, %v1137
        %v1139 = vsel %vm1136, %v1138, %v1134
        %v1140 = vmul.f32 1.0, %v1139
        %v1141 = vrcp.pop %v1109
        %v1142 = vmul.f32 %v1109, %v1141
        %v1143 = vsub.f32 1.0, %v1142
        %v1144 = vmul.f32 %v1141, %v1143
        %v1145 = vadd.f32 %v1141, %v1144
        %vm1146 = vweird.f32 %v1109
        %vm1147 = vweird.f32 %v1141
        %vm1148 = vmor %vm1146, %vm1147
        %v1149 = vsel %vm1148, %v1141, %v1145
        %v1150 = vand.u32 2147483647, %v1109
        %vm1151 = vcmp.eq.f32.partialorder %v1150, 8.507059e+37
        %v1152 = vand.u32 %v1109, 2147483648
        %v1153 = vor.u32 1.1754944e-38, %v1152
        %v1154 = vsel %vm1151, %v1153, %v1149
        %v1155 = vmul.f32 1.0, %v1154
        %v1156 = vrcp.pop %v1110
        %v1157 = vmul.f32 %v1110, %v1156
        %v1158 = vsub.f32 1.0, %v1157
        %v1159 = vmul.f32 %v1156, %v1158
        %v1160 = vadd.f32 %v1156, %v1159
        %vm1161 = vweird.f32 %v1110
        %vm1162 = vweird.f32 %v1156
        %vm1163 = vmor %vm1161, %vm1162
        %v1164 = vsel %vm1163, %v1156, %v1160
        %v1165 = vand.u32 2147483647, %v1110
        %vm1166 = vcmp.eq.f32.partialorder %v1165, 8.507059e+37
        %v1167 = vand.u32 %v1110, 2147483648
        %v1168 = vor.u32 1.1754944e-38, %v1167
        %v1169 = vsel %vm1166, %v1168, %v1164
        %v1170 = vmul.f32 1.0, %v1169
        %v1171 = vmul.f32 %v1125, %v382
        %v1172 = vmul.f32 %v1140, %v384
        %v1173 = vmul.f32 %v1155, %v386
        %v1174 = vmul.f32 %v1170, %v388
        %1175 = vmatpush.msra.mxu0 0.0
        %1176 = vmatpush.msra.mxu0 0.0
        %1177 = vmatpush.msra.mxu0 0.0
        %1178 = vmatpush.msra.mxu0 0.0
        %1179 = vmatpush.msra.mxu0 0.0
        %1180 = vmatpush.msra.mxu0 0.0
        %1181 = vmatpush.msra.mxu0 0.0
        %1182 = vmatpush.msra.mxu0 0.0
        %1183 = vmatpush.msra.mxu0 0.0
        %1184 = vmatpush.msra.mxu0 0.0
        %1185 = vmatpush.msra.mxu0 0.0
        %1186 = vmatpush.msra.mxu0 0.0
        %1187 = vmatpush.msra.mxu0 %v1174
        %1188 = vmatpush.msra.mxu0 %v1173
        %1189 = vmatpush.msra.mxu0 %v1172
        %1190 = vmatpush.msra.mxu0 %v1171
        %1191 = vmatmul.f32.gmra.mxu0 %v395
        %v1192 = vpop.f32.mrf.mxu0
        %v1193 = vadd.f32 0.0, %v1192
        %1194 = vmatmul.f32.gmra.mxu0 %v398
        %v1195 = vpop.f32.mrf.mxu0
        %v1196 = vadd.f32 0.0, %v1195
        %1197 = vmatmul.f32.gmra.mxu0 %v401
        %v1198 = vpop.f32.mrf.mxu0
        %v1199 = vadd.f32 0.0, %v1198
        %1200 = vmatmul.f32.gmra.mxu0 %v404
        %v1201 = vpop.f32.mrf.mxu0
        %v1202 = vadd.f32 0.0, %v1201
        %1203 = vdwg.mxu0
        %v1204 = vld [vmem:[%s333] sm:$0xff]
        %v1205 = vld [vmem:[%s333 + $0x8] sm:$0xff]
        %v1206 = vld [vmem:[%s333 + $0x10] sm:$0xff]
        %v1207 = vld [vmem:[%s333 + $0x18] sm:$0xff]
        %v1208 = vld [vmem:[%s333 + $0x20] sm:$0xff]
        %v1209 = vld [vmem:[%s333 + $0x28] sm:$0xff]
        %v1210 = vld [vmem:[%s333 + $0x30] sm:$0xff]
        %v1211 = vld [vmem:[%s333 + $0x38] sm:$0xff]
        %1212 = vmatpush.msra.mxu0 0.0
        %1213 = vmatpush.msra.mxu0 0.0
        %1214 = vmatpush.msra.mxu0 0.0
        %1215 = vmatpush.msra.mxu0 0.0
        %1216 = vmatpush.msra.mxu0 0.0
        %1217 = vmatpush.msra.mxu0 0.0
        %1218 = vmatpush.msra.mxu0 0.0
        %1219 = vmatpush.msra.mxu0 0.0
        %1220 = vmatpush.msra.mxu0 0.0
        %1221 = vmatpush.msra.mxu0 0.0
        %1222 = vmatpush.msra.mxu0 0.0
        %1223 = vmatpush.msra.mxu0 0.0
        %1224 = vmatpush.msra.mxu0 %v1174
        %1225 = vmatpush.msra.mxu0 %v1173
        %1226 = vmatpush.msra.mxu0 %v1172
        %1227 = vmatpush.msra.mxu0 %v1171
        %1228 = vmatmul.f32.gmra.mxu0 %v457
        %v1229 = vpop.f32.mrf.mxu0
        %v1230 = vadd.f32 0.0, %v1229
        %1231 = vmatmul.f32.gmra.mxu0 %v460
        %v1232 = vpop.f32.mrf.mxu0
        %v1233 = vadd.f32 0.0, %v1232
        %1234 = vmatmul.f32.gmra.mxu0 %v463
        %v1235 = vpop.f32.mrf.mxu0
        %v1236 = vadd.f32 0.0, %v1235
        %1237 = vmatmul.f32.gmra.mxu0 %v466
        %v1238 = vpop.f32.mrf.mxu0
        %v1239 = vadd.f32 0.0, %v1238
        %1240 = vdwg.mxu0
        %s1241 = scalar_lea.vmem %s333, 64
        %v1242 = vld [vmem:[%s1241] sm:$0xff]
        %v1243 = vld [vmem:[%s1241 + $0x8] sm:$0xff]
        %v1244 = vld [vmem:[%s1241 + $0x10] sm:$0xff]
        %v1245 = vld [vmem:[%s1241 + $0x18] sm:$0xff]
        %v1246 = vld [vmem:[%s1241 + $0x20] sm:$0xff]
        %v1247 = vld [vmem:[%s1241 + $0x28] sm:$0xff]
        %v1248 = vld [vmem:[%s1241 + $0x30] sm:$0xff]
        %v1249 = vld [vmem:[%s1241 + $0x38] sm:$0xff]
        %v1251 = vsel %vm393, %v1230, 0
        %v1254 = vsel %vm393, %v1233, 0
        %v1257 = vsel %vm393, %v1236, 0
        %v1260 = vsel %vm393, %v1239, 0
        %1262 = vmatpush.msra.mxu0 0.0
        %1263 = vmatpush.msra.mxu0 0.0
        %1264 = vmatpush.msra.mxu0 0.0
        %1265 = vmatpush.msra.mxu0 0.0
        %1266 = vmatpush.msra.mxu0 0.0
        %1267 = vmatpush.msra.mxu0 0.0
        %1268 = vmatpush.msra.mxu0 0.0
        %1269 = vmatpush.msra.mxu0 0.0
        %1270 = vmatpush.msra.mxu0 0.0
        %1271 = vmatpush.msra.mxu0 0.0
        %1272 = vmatpush.msra.mxu0 0.0
        %1273 = vmatpush.msra.mxu0 0.0
        %1274 = vmatpush.msra.mxu0 %v1248
        %1275 = vmatpush.msra.mxu0 %v1246
        %1276 = vmatpush.msra.mxu0 %v1244
        %1277 = vmatpush.msra.mxu0 %v1242
        %1278 = vmatmul.f32.gmra.mxu0 %v1251
        %v1279 = vpop.f32.mrf.mxu0
        %v1280 = vadd.f32 0.0, %v1279
        %1281 = vmatmul.f32.gmra.mxu0 %v1254
        %v1282 = vpop.f32.mrf.mxu0
        %v1283 = vadd.f32 0.0, %v1282
        %1284 = vmatmul.f32.gmra.mxu0 %v1257
        %v1285 = vpop.f32.mrf.mxu0
        %v1286 = vadd.f32 0.0, %v1285
        %1287 = vmatmul.f32.gmra.mxu0 %v1260
        %v1288 = vpop.f32.mrf.mxu0
        %v1289 = vadd.f32 0.0, %v1288
        %1290 = vdwg.mxu0
        %1291 = vmatpush.msra.mxu0 0.0
        %1292 = vmatpush.msra.mxu0 0.0
        %1293 = vmatpush.msra.mxu0 0.0
        %1294 = vmatpush.msra.mxu0 0.0
        %1295 = vmatpush.msra.mxu0 0.0
        %1296 = vmatpush.msra.mxu0 0.0
        %1297 = vmatpush.msra.mxu0 0.0
        %1298 = vmatpush.msra.mxu0 0.0
        %1299 = vmatpush.msra.mxu0 0.0
        %1300 = vmatpush.msra.mxu0 0.0
        %1301 = vmatpush.msra.mxu0 0.0
        %1302 = vmatpush.msra.mxu0 0.0
        %1303 = vmatpush.msra.mxu0 %v1249
        %1304 = vmatpush.msra.mxu0 %v1247
        %1305 = vmatpush.msra.mxu0 %v1245
        %1306 = vmatpush.msra.mxu0 %v1243
        %1307 = vmatmul.f32.gmra.mxu0 %v1251
        %v1308 = vpop.f32.mrf.mxu0
        %v1309 = vadd.f32 0.0, %v1308
        %1310 = vmatmul.f32.gmra.mxu0 %v1254
        %v1311 = vpop.f32.mrf.mxu0
        %v1312 = vadd.f32 0.0, %v1311
        %1313 = vmatmul.f32.gmra.mxu0 %v1257
        %v1314 = vpop.f32.mrf.mxu0
        %v1315 = vadd.f32 0.0, %v1314
        %1316 = vmatmul.f32.gmra.mxu0 %v1260
        %v1317 = vpop.f32.mrf.mxu0
        %v1318 = vadd.f32 0.0, %v1317
        %1319 = vdwg.mxu0
        %v1321 = vsel %vm393, %v1193, 0
        %v1324 = vsel %vm393, %v1196, 0
        %v1327 = vsel %vm393, %v1199, 0
        %v1330 = vsel %vm393, %v1202, 0
        %1332 = vmatpush.msra.mxu0 0.0
        %1333 = vmatpush.msra.mxu0 0.0
        %1334 = vmatpush.msra.mxu0 0.0
        %1335 = vmatpush.msra.mxu0 0.0
        %1336 = vmatpush.msra.mxu0 0.0
        %1337 = vmatpush.msra.mxu0 0.0
        %1338 = vmatpush.msra.mxu0 0.0
        %1339 = vmatpush.msra.mxu0 0.0
        %1340 = vmatpush.msra.mxu0 0.0
        %1341 = vmatpush.msra.mxu0 0.0
        %1342 = vmatpush.msra.mxu0 0.0
        %1343 = vmatpush.msra.mxu0 0.0
        %1344 = vmatpush.msra.mxu0 %v1210
        %1345 = vmatpush.msra.mxu0 %v1208
        %1346 = vmatpush.msra.mxu0 %v1206
        %1347 = vmatpush.msra.mxu0 %v1204
        %1348 = vmatmul.f32.gmra.mxu0 %v1321
        %v1349 = vpop.f32.mrf.mxu0
        %v1350 = vadd.f32 %v1280, %v1349
        %1351 = vmatmul.f32.gmra.mxu0 %v1324
        %v1352 = vpop.f32.mrf.mxu0
        %v1353 = vadd.f32 %v1283, %v1352
        %1354 = vmatmul.f32.gmra.mxu0 %v1327
        %v1355 = vpop.f32.mrf.mxu0
        %v1356 = vadd.f32 %v1286, %v1355
        %1357 = vmatmul.f32.gmra.mxu0 %v1330
        %v1358 = vpop.f32.mrf.mxu0
        %v1359 = vadd.f32 %v1289, %v1358
        %1360 = vdwg.mxu0
        %1361 = vmatpush.msra.mxu0 0.0
        %1362 = vmatpush.msra.mxu0 0.0
        %1363 = vmatpush.msra.mxu0 0.0
        %1364 = vmatpush.msra.mxu0 0.0
        %1365 = vmatpush.msra.mxu0 0.0
        %1366 = vmatpush.msra.mxu0 0.0
        %1367 = vmatpush.msra.mxu0 0.0
        %1368 = vmatpush.msra.mxu0 0.0
        %1369 = vmatpush.msra.mxu0 0.0
        %1370 = vmatpush.msra.mxu0 0.0
        %1371 = vmatpush.msra.mxu0 0.0
        %1372 = vmatpush.msra.mxu0 0.0
        %1373 = vmatpush.msra.mxu0 %v1211
        %1374 = vmatpush.msra.mxu0 %v1209
        %1375 = vmatpush.msra.mxu0 %v1207
        %1376 = vmatpush.msra.mxu0 %v1205
        %1377 = vmatmul.f32.gmra.mxu0 %v1321
        %v1378 = vpop.f32.mrf.mxu0
        %v1379 = vadd.f32 %v1309, %v1378
        %1380 = vmatmul.f32.gmra.mxu0 %v1324
        %v1381 = vpop.f32.mrf.mxu0
        %v1382 = vadd.f32 %v1312, %v1381
        %1383 = vmatmul.f32.gmra.mxu0 %v1327
        %v1384 = vpop.f32.mrf.mxu0
        %v1385 = vadd.f32 %v1315, %v1384
        %1386 = vmatmul.f32.gmra.mxu0 %v1330
        %v1387 = vpop.f32.mrf.mxu0
        %v1388 = vadd.f32 %v1318, %v1387
        %1389 = vdwg.mxu0
        %1390 = vmatpush.msra.mxu0 0.0
        %1391 = vmatpush.msra.mxu0 0.0
        %1392 = vmatpush.msra.mxu0 0.0
        %1393 = vmatpush.msra.mxu0 0.0
        %1394 = vmatpush.msra.mxu0 0.0
        %1395 = vmatpush.msra.mxu0 0.0
        %1396 = vmatpush.msra.mxu0 0.0
        %1397 = vmatpush.msra.mxu0 0.0
        %1398 = vmatpush.msra.mxu0 0.0
        %1399 = vmatpush.msra.mxu0 0.0
        %1400 = vmatpush.msra.mxu0 0.0
        %1401 = vmatpush.msra.mxu0 0.0
        %1402 = vmatpush.msra.mxu0 %v1174
        %1403 = vmatpush.msra.mxu0 %v1173
        %1404 = vmatpush.msra.mxu0 %v1172
        %1405 = vmatpush.msra.mxu0 %v1171
        %1406 = vmatmul.f32.gmra.mxu0 %v776
        %v1407 = vpop.f32.mrf.mxu0
        %v1408 = vadd.f32 0.0, %v1407
        %1409 = vmatmul.f32.gmra.mxu0 %v779
        %v1410 = vpop.f32.mrf.mxu0
        %v1411 = vadd.f32 0.0, %v1410
        %1412 = vmatmul.f32.gmra.mxu0 %v782
        %v1413 = vpop.f32.mrf.mxu0
        %v1414 = vadd.f32 0.0, %v1413
        %1415 = vmatmul.f32.gmra.mxu0 %v785
        %v1416 = vpop.f32.mrf.mxu0
        %v1417 = vadd.f32 0.0, %v1416
        %1418 = vdwg.mxu0
        %s1419 = scalar_lea.vmem %s333, 128
        %v1420 = vld [vmem:[%s1419] sm:$0xff]
        %v1421 = vld [vmem:[%s1419 + $0x8] sm:$0xff]
        %v1422 = vld [vmem:[%s1419 + $0x10] sm:$0xff]
        %v1423 = vld [vmem:[%s1419 + $0x18] sm:$0xff]
        %v1424 = vld [vmem:[%s1419 + $0x20] sm:$0xff]
        %v1425 = vld [vmem:[%s1419 + $0x28] sm:$0xff]
        %v1426 = vld [vmem:[%s1419 + $0x30] sm:$0xff]
        %v1427 = vld [vmem:[%s1419 + $0x38] sm:$0xff]
        %v1429 = vsel %vm393, %v1408, 0
        %v1432 = vsel %vm393, %v1411, 0
        %v1435 = vsel %vm393, %v1414, 0
        %v1438 = vsel %vm393, %v1417, 0
        %1440 = vmatpush.msra.mxu0 0.0
        %1441 = vmatpush.msra.mxu0 0.0
        %1442 = vmatpush.msra.mxu0 0.0
        %1443 = vmatpush.msra.mxu0 0.0
        %1444 = vmatpush.msra.mxu0 0.0
        %1445 = vmatpush.msra.mxu0 0.0
        %1446 = vmatpush.msra.mxu0 0.0
        %1447 = vmatpush.msra.mxu0 0.0
        %1448 = vmatpush.msra.mxu0 0.0
        %1449 = vmatpush.msra.mxu0 0.0
        %1450 = vmatpush.msra.mxu0 0.0
        %1451 = vmatpush.msra.mxu0 0.0
        %1452 = vmatpush.msra.mxu0 %v1426
        %1453 = vmatpush.msra.mxu0 %v1424
        %1454 = vmatpush.msra.mxu0 %v1422
        %1455 = vmatpush.msra.mxu0 %v1420
        %1456 = vmatmul.f32.gmra.mxu0 %v1429
        %v1457 = vpop.f32.mrf.mxu0
        %v1458 = vadd.f32 0.0, %v1457
        %1459 = vmatmul.f32.gmra.mxu0 %v1432
        %v1460 = vpop.f32.mrf.mxu0
        %v1461 = vadd.f32 0.0, %v1460
        %1462 = vmatmul.f32.gmra.mxu0 %v1435
        %v1463 = vpop.f32.mrf.mxu0
        %v1464 = vadd.f32 0.0, %v1463
        %1465 = vmatmul.f32.gmra.mxu0 %v1438
        %v1466 = vpop.f32.mrf.mxu0
        %v1467 = vadd.f32 0.0, %v1466
        %1468 = vdwg.mxu0
        %1469 = vmatpush.msra.mxu0 0.0
        %1470 = vmatpush.msra.mxu0 0.0
        %1471 = vmatpush.msra.mxu0 0.0
        %1472 = vmatpush.msra.mxu0 0.0
        %1473 = vmatpush.msra.mxu0 0.0
        %1474 = vmatpush.msra.mxu0 0.0
        %1475 = vmatpush.msra.mxu0 0.0
        %1476 = vmatpush.msra.mxu0 0.0
        %1477 = vmatpush.msra.mxu0 0.0
        %1478 = vmatpush.msra.mxu0 0.0
        %1479 = vmatpush.msra.mxu0 0.0
        %1480 = vmatpush.msra.mxu0 0.0
        %1481 = vmatpush.msra.mxu0 %v1427
        %1482 = vmatpush.msra.mxu0 %v1425
        %1483 = vmatpush.msra.mxu0 %v1423
        %1484 = vmatpush.msra.mxu0 %v1421
        %1485 = vmatmul.f32.gmra.mxu0 %v1429
        %v1486 = vpop.f32.mrf.mxu0
        %v1487 = vadd.f32 0.0, %v1486
        %1488 = vmatmul.f32.gmra.mxu0 %v1432
        %v1489 = vpop.f32.mrf.mxu0
        %v1490 = vadd.f32 0.0, %v1489
        %1491 = vmatmul.f32.gmra.mxu0 %v1435
        %v1492 = vpop.f32.mrf.mxu0
        %v1493 = vadd.f32 0.0, %v1492
        %1494 = vmatmul.f32.gmra.mxu0 %v1438
        %v1495 = vpop.f32.mrf.mxu0
        %v1496 = vadd.f32 0.0, %v1495
        %1497 = vdwg.mxu0
        %v1498 = vadd.f32 %v1350, %v1458
        %v1499 = vadd.f32 %v1379, %v1487
        %v1500 = vadd.f32 %v1353, %v1461
        %v1501 = vadd.f32 %v1382, %v1490
        %v1502 = vadd.f32 %v1356, %v1464
        %v1503 = vadd.f32 %v1385, %v1493
        %v1504 = vadd.f32 %v1359, %v1467
        %v1505 = vadd.f32 %v1388, %v1496
        %s1506 = scalar_lea.vmem %s323, %s977
        %v1507 = vld [vmem:[%s1506] sm:$0xff]
        %v1508 = vld [vmem:[%s1506 + $0x8] sm:$0xff]
        %v1509 = vld [vmem:[%s1506 + $0x10] sm:$0xff]
        %v1510 = vld [vmem:[%s1506 + $0x18] sm:$0xff]
        %v1511 = vmul.f32 %v1498, %v355
        %v1512 = vmul.f32 %v1499, %v356
        %v1513 = vmul.f32 %v1500, %v357
        %v1514 = vmul.f32 %v1501, %v358
        %v1515 = vmul.f32 %v1502, %v359
        %v1516 = vmul.f32 %v1503, %v360
        %v1517 = vmul.f32 %v1504, %v361
        %v1518 = vmul.f32 %v1505, %v362
        %1523 = vrot.lane.b32.xlu0 %v1511, 96
        %v1524 = vpop.permute.xlu0 %1523
        %1525 = vrot.lane.b32.xlu0 %v1513, 96
        %v1526 = vpop.permute.xlu0 %1525
        %1527 = vrot.lane.b32.xlu0 %v1515, 96
        %v1528 = vpop.permute.xlu0 %1527
        %1529 = vrot.lane.b32.xlu0 %v1517, 96
        %v1530 = vpop.permute.xlu0 %1529
        %v1535 = vadd.f32 %v1511, %v1524
        %v1536 = vadd.f32 %v1513, %v1526
        %v1537 = vadd.f32 %v1515, %v1528
        %v1538 = vadd.f32 %v1517, %v1530
        %1539 = vrot.lane.b32.xlu0 %v1511, 64
        %v1540 = vpop.permute.xlu0 %1539
        %1541 = vrot.lane.b32.xlu0 %v1513, 64
        %v1542 = vpop.permute.xlu0 %1541
        %1543 = vrot.lane.b32.xlu0 %v1515, 64
        %v1544 = vpop.permute.xlu0 %1543
        %1545 = vrot.lane.b32.xlu0 %v1517, 64
        %v1546 = vpop.permute.xlu0 %1545
        %v1551 = vadd.f32 %v1535, %v1540
        %v1552 = vadd.f32 %v1536, %v1542
        %v1553 = vadd.f32 %v1537, %v1544
        %v1554 = vadd.f32 %v1538, %v1546
        %1555 = vrot.lane.b32.xlu0 %v1511, 32
        %v1556 = vpop.permute.xlu0 %1555
        %1557 = vrot.lane.b32.xlu0 %v1513, 32
        %v1558 = vpop.permute.xlu0 %1557
        %1559 = vrot.lane.b32.xlu0 %v1515, 32
        %v1560 = vpop.permute.xlu0 %1559
        %1561 = vrot.lane.b32.xlu0 %v1517, 32
        %v1562 = vpop.permute.xlu0 %1561
        %v1567 = vadd.f32 %v1551, %v1556
        %v1568 = vadd.f32 %v1552, %v1558
        %v1569 = vadd.f32 %v1553, %v1560
        %v1570 = vadd.f32 %v1554, %v1562
        %v1571 = vadd.f32 %v1567, %v1512
        %v1572 = vadd.f32 %v1568, %v1514
        %v1573 = vadd.f32 %v1569, %v1516
        %v1574 = vadd.f32 %v1570, %v1518
        %1579 = vrot.lane.b32.xlu0 %v1512, 96
        %v1580 = vpop.permute.xlu0 %1579
        %1581 = vrot.lane.b32.xlu0 %v1514, 96
        %v1582 = vpop.permute.xlu0 %1581
        %1583 = vrot.lane.b32.xlu0 %v1516, 96
        %v1584 = vpop.permute.xlu0 %1583
        %1585 = vrot.lane.b32.xlu0 %v1518, 96
        %v1586 = vpop.permute.xlu0 %1585
        %v1591 = vadd.f32 %v1571, %v1580
        %v1592 = vadd.f32 %v1572, %v1582
        %v1593 = vadd.f32 %v1573, %v1584
        %v1594 = vadd.f32 %v1574, %v1586
        %1595 = vrot.lane.b32.xlu0 %v1512, 64
        %v1596 = vpop.permute.xlu0 %1595
        %1597 = vrot.lane.b32.xlu0 %v1514, 64
        %v1598 = vpop.permute.xlu0 %1597
        %1599 = vrot.lane.b32.xlu0 %v1516, 64
        %v1600 = vpop.permute.xlu0 %1599
        %1601 = vrot.lane.b32.xlu0 %v1518, 64
        %v1602 = vpop.permute.xlu0 %1601
        %v1607 = vadd.f32 %v1591, %v1596
        %v1608 = vadd.f32 %v1592, %v1598
        %v1609 = vadd.f32 %v1593, %v1600
        %v1610 = vadd.f32 %v1594, %v1602
        %1611 = vrot.lane.b32.xlu0 %v1512, 32
        %v1612 = vpop.permute.xlu0 %1611
        %1613 = vrot.lane.b32.xlu0 %v1514, 32
        %v1614 = vpop.permute.xlu0 %1613
        %1615 = vrot.lane.b32.xlu0 %v1516, 32
        %v1616 = vpop.permute.xlu0 %1615
        %1617 = vrot.lane.b32.xlu0 %v1518, 32
        %v1618 = vpop.permute.xlu0 %1617
        %v1623 = vadd.f32 %v1607, %v1612
        %v1624 = vadd.f32 %v1608, %v1614
        %v1625 = vadd.f32 %v1609, %v1616
        %v1626 = vadd.f32 %v1610, %v1618
        %v1627 = vadd.f32 %v1507, %v1623
        %v1628 = vadd.f32 %v1508, %v1624
        %v1629 = vadd.f32 %v1509, %v1625
        %v1630 = vadd.f32 %v1510, %v1626
        %v1631 = vtanh.pop %v1627
        %v1632 = vtanh.pop %v1628
        %v1633 = vtanh.pop %v1629
        %v1634 = vtanh.pop %v1630
        %v1635 = vmul.f32 %v1125, %v369
        %v1636 = vmul.f32 %v1140, %v370
        %v1637 = vmul.f32 %v1155, %v371
        %v1638 = vmul.f32 %v1170, %v372
        %v1639 = vsub.f32 1.0, %v1125
        %v1640 = vsub.f32 1.0, %v1140
        %v1641 = vsub.f32 1.0, %v1155
        %v1642 = vsub.f32 1.0, %v1170
        %1647 = vrot.lane.b32.xlu0 %v1631, 32
        %v1648 = vpop.permute.xlu0 %1647
        %1649 = vrot.lane.b32.xlu0 %v1632, 32
        %v1650 = vpop.permute.xlu0 %1649
        %1651 = vrot.lane.b32.xlu0 %v1633, 32
        %v1652 = vpop.permute.xlu0 %1651
        %1653 = vrot.lane.b32.xlu0 %v1634, 32
        %v1654 = vpop.permute.xlu0 %1653
        %v1659 = vmul.f32 %v1639, %v1648
        %v1660 = vmul.f32 %v1640, %v1650
        %v1661 = vmul.f32 %v1641, %v1652
        %v1662 = vmul.f32 %v1642, %v1654
        %v1663 = vadd.f32 %v1635, %v1659
        %v1664 = vadd.f32 %v1636, %v1660
        %v1665 = vadd.f32 %v1637, %v1661
        %v1666 = vadd.f32 %v1638, %v1662
        %1671 = vrot.lane.b32.xlu0 %v1663, 96
        %v1672 = vpop.permute.xlu0 %1671
        %1673 = vrot.lane.b32.xlu0 %v1664, 96
        %v1674 = vpop.permute.xlu0 %1673
        %1675 = vrot.lane.b32.xlu0 %v1665, 96
        %v1676 = vpop.permute.xlu0 %1675
        %1677 = vrot.lane.b32.xlu0 %v1666, 96
        %v1678 = vpop.permute.xlu0 %1677
        %s1683 = scalar_lea.vmem %s338, %s977
        %1684 = vst.msk [vmem:[%s1683] sm:$0xff] %vm393, %v1672
        %1685 = vst.msk [vmem:[%s1683 + $0x8] sm:$0xff] %vm393, %v1674
        %1686 = vst.msk [vmem:[%s1683 + $0x10] sm:$0xff] %vm393, %v1676
        %1687 = vst.msk [vmem:[%s1683 + $0x18] sm:$0xff] %vm393, %v1678
      $region53: #{_lambda_.2} parent=47 // loop_footer
        %s368 = sadd.s32 1, %s364
      $region54: #{_lambda_.2} parent=47 // loop_footer_branch
        %363 = sbr.rel target = $region50
      $region55: #{_lambda_.2} parent=47 // loop_exit
        _
      %p1688 = scmp.lt.s32.totalorder %s18, 1
      %s1689 = scalar_select %p1688, %s18, 1
      %s1690 = smul.addr %s1689, 32
      %s1691 = smul.addr %s1690, 8
      %s1692 = scalar_lea.vmem %s7, %s1691
      // Predicated region
      $region56: #{_lambda_.2} parent=47 // pred_check
        %p1693 = pneg %p203
      $region57: #{_lambda_.2} parent=47 // pred_check_branch
        %1695 = sbr.rel (%p1693) target = $region59
      $region58: #{_lambda_.2} parent=47 // pred_region
        _
      $region59: #{_lambda_.2} parent=47 // pred_fallthru
        _
    $region48: #{_lambda_.2} parent=5 // pred_fallthru
      _
    %p1696 = scmp.le.s32.totalorder 2, %s13
    // Predicated region
    $region60: #{_lambda_.2} parent=5 // pred_check
      %p1697 = pneg %p1696
    $region61: #{_lambda_.2} parent=5 // pred_check_branch
      %1699 = sbr.rel (%p1697) target = $region63
    $region62: #{_lambda_.2} parent=5 // pred_region
      %s1700 = ssub.s32 %s13, 2
      // Predicated region
      $region64: #{_lambda_.2} parent=62 // pred_check
        %p1701 = pneg %p209
      $region65: #{_lambda_.2} parent=62 // pred_check_branch
        %1703 = sbr.rel (%p1701) target = $region67
      $region66: #{_lambda_.2} parent=62 // pred_region
        %p1704 = scmp.lt.s32.totalorder %s19, 1
        %s1705 = scalar_select %p1704, %s19, 1
        %s1706 = smul.addr %s1705, 32
        %s1707 = smul.addr %s1706, 8
        %s1708 = scalar_lea.vmem %s7, %s1707
      $region67: #{_lambda_.2} parent=62 // pred_fallthru
        _
    $region63: #{_lambda_.2} parent=5 // pred_fallthru
      _
  $region6: #{_lambda_.2} parent=0 // loop_footer
    %s17 = sadd.s32 1, %s13
  $region7: #{_lambda_.2} parent=0 // loop_footer_branch
    %12 = sbr.rel target = $region3
  $region8: #{_lambda_.2} parent=0 // loop_exit
    _

// kernel: _lambda_.3
$region0: #{_lambda_.3}
  #allocation0 [shape = 'u32[]', space=smem, size = 0x4, offset = 0x4, fixed_abs, tag = 'smem constant byte address 0x4 - core index']
  #allocation1 [shape = 'u32[72,128]{1,0:T(1,128)}', space=vmem, size = 0x9000, scoped, tag = 'internal scratch']
  %s0 = inlined_call_operand.vmem [shape: f32[2,8,2,16,32], index: 0, kind: input, shape index: {}, may-alias: {0,1}]
  %s1 = inlined_call_operand.vmem [shape: f32[2,8,2,16,32], index: 1, kind: input, shape index: {}, may-alias: {0,1}]
  %s2 = inlined_call_operand.vmem [shape: f32[64,192], index: 2, kind: input, shape index: {}]
  %s3 = inlined_call_operand.vmem [shape: f32[1,192], index: 3, kind: input, shape index: {}]
  %s4 = inlined_call_operand.vmem [shape: f32[1,64], index: 4, kind: input, shape index: {}]
  %s5 = inlined_call_operand.vmem [shape: f32[1,64], index: 5, kind: input, shape index: {}]
  %s6 = inlined_call_operand.vmem [shape: f32[64,2], index: 6, kind: input, shape index: {}]
  %s7 = inlined_call_operand.vmem [shape: f32[1,2], index: 7, kind: input, shape index: {}]
  %s8 = inlined_call_operand.vmem [shape: f32[2,128,2], index: 8, kind: output, shape index: {}]
  %s9 = sld [smem:[#allocation0]]
  $region141: #{_lambda_.3} parent=0
    _
  %s11 = ssub.s32 1, %s9
  %s12 = scalar_select 0, %s11, %s9
  $region1: #{_lambda_.3} parent=0
    #allocation2 [shape = 'u8[131072]{0}', space=vmem, size = 0x20000, scoped, tag = 'input window, operand 0']
    #allocation3 [shape = 'u8[131072]{0}', space=vmem, size = 0x20000, scoped, tag = 'input window, operand 1']
    loop: start=0, step=1, limit=4
    $region2: #{_lambda_.3} parent=1 // loop_pre_header
      _
    $region3: #{_lambda_.3} parent=1 // loop_header
      %s14 = sphi 0, %s18
      %p15 = scmp.ge.s32.totalorder %s14, 4
      %s24 = sphi 0, %s26
      %s27 = sphi 0, %s24
      %s28 = sphi 0, %s27
      %s44 = sphi 0, %s28
      %s50 = sphi 0, %s52
      %s53 = sphi 0, %s50
      %s54 = sphi 0, %s53
      %s70 = sphi 0, %s54
      %s74 = sphi 0, %s74
      %s76 = sphi 0, %s74
      %s77 = sphi 0, %s76
      %s91 = sphi 0, %s77
      %s95 = sphi 0, %s95
      %s97 = sphi 0, %s95
      %s98 = sphi 0, %s97
      %s112 = sphi 0, %s98
      %s116 = sphi 0, %s116
      %s118 = sphi 0, %s116
      %s119 = sphi 0, %s118
      %s133 = sphi 0, %s119
      %s137 = sphi 0, %s137
      %s139 = sphi 0, %s137
      %s140 = sphi 0, %s139
      %s154 = sphi 0, %s140
      %s158 = sphi 0, %s158
      %s160 = sphi 0, %s158
      %s161 = sphi 0, %s160
      %s175 = sphi 0, %s161
      %s179 = sphi 0, %s179
      %s181 = sphi 0, %s179
      %s182 = sphi 0, %s181
      %s196 = sphi 0, %s182
      %s202 = sphi 0, %s204
      %s205 = sphi 0, %s202
      %s206 = sphi 0, %s205
      %s222 = sphi 0, %s206
    $region4: #{_lambda_.3} parent=1 // loop_header_branch
      %17 = sbr.rel (%p15) target = $region8
    $region5: #{_lambda_.3} parent=1 // loop_body
      %s19 = ssub.s32 %s14, 1
      %s20 = ssub.s32 %s14, 2
      %s21 = sadd.s32 %s14, 1
      %s22 = ssub.s32 %s14, %s21
      %p23 = scmp.eq.s32.totalorder %s22, 0
      %s25 = sadd.s32 %s24, 1
      %s26 = scalar_select %p23, %s24, %s25
      %p29 = pneg %p23
      %p30 = scmp.eq.s32.totalorder %s14, 1
      %p31 = por %p29, %p30
      %p32 = scmp.ne.s32.totalorder %s24, %s27
      %p33 = scmp.eq.s32.totalorder %s14, 0
      %p34 = por %p32, %p33
      %p35 = scmp.ne.s32.totalorder %s24, %s27
      %p36 = scmp.eq.s32.totalorder %s19, 1
      %p37 = por %p35, %p36
      %p38 = scmp.ne.s32.totalorder %s27, %s28
      %p39 = scmp.eq.s32.totalorder %s19, 0
      %p40 = por %p38, %p39
      %p41 = scmp.ne.s32.totalorder %s27, %s28
      %p42 = scmp.eq.s32.totalorder %s20, 1
      %p43 = por %p41, %p42
      %p45 = scmp.ne.s32.totalorder %s28, %s44
      %p46 = scmp.eq.s32.totalorder %s20, 0
      %p47 = por %p45, %p46
      %s48 = ssub.s32 %s14, %s21
      %p49 = scmp.eq.s32.totalorder %s48, 0
      %s51 = sadd.s32 %s50, 1
      %s52 = scalar_select %p49, %s50, %s51
      %p55 = pneg %p49
      %p56 = scmp.eq.s32.totalorder %s14, 1
      %p57 = por %p55, %p56
      %p58 = scmp.ne.s32.totalorder %s50, %s53
      %p59 = scmp.eq.s32.totalorder %s14, 0
      %p60 = por %p58, %p59
      %p61 = scmp.ne.s32.totalorder %s50, %s53
      %p62 = scmp.eq.s32.totalorder %s19, 1
      %p63 = por %p61, %p62
      %p64 = scmp.ne.s32.totalorder %s53, %s54
      %p65 = scmp.eq.s32.totalorder %s19, 0
      %p66 = por %p64, %p65
      %p67 = scmp.ne.s32.totalorder %s53, %s54
      %p68 = scmp.eq.s32.totalorder %s20, 1
      %p69 = por %p67, %p68
      %p71 = scmp.ne.s32.totalorder %s54, %s70
      %p72 = scmp.eq.s32.totalorder %s20, 0
      %p73 = por %p71, %p72
      %s75 = sadd.s32 %s74, 1
      %p78 = scmp.eq.s32.totalorder %s14, 1
      %p79 = scmp.ne.s32.totalorder %s74, %s76
      %p80 = scmp.eq.s32.totalorder %s14, 0
      %p81 = por %p79, %p80
      %p82 = scmp.ne.s32.totalorder %s74, %s76
      %p83 = scmp.eq.s32.totalorder %s19, 1
      %p84 = por %p82, %p83
      %p85 = scmp.ne.s32.totalorder %s76, %s77
      %p86 = scmp.eq.s32.totalorder %s19, 0
      %p87 = por %p85, %p86
      %p88 = scmp.ne.s32.totalorder %s76, %s77
      %p89 = scmp.eq.s32.totalorder %s20, 1
      %p90 = por %p88, %p89
      %p92 = scmp.ne.s32.totalorder %s77, %s91
      %p93 = scmp.eq.s32.totalorder %s20, 0
      %p94 = por %p92, %p93
      %s96 = sadd.s32 %s95, 1
      %p99 = scmp.eq.s32.totalorder %s14, 1
      %p100 = scmp.ne.s32.totalorder %s95, %s97
      %p101 = scmp.eq.s32.totalorder %s14, 0
      %p102 = por %p100, %p101
      %p103 = scmp.ne.s32.totalorder %s95, %s97
      %p104 = scmp.eq.s32.totalorder %s19, 1
      %p105 = por %p103, %p104
      %p106 = scmp.ne.s32.totalorder %s97, %s98
      %p107 = scmp.eq.s32.totalorder %s19, 0
      %p108 = por %p106, %p107
      %p109 = scmp.ne.s32.totalorder %s97, %s98
      %p110 = scmp.eq.s32.totalorder %s20, 1
      %p111 = por %p109, %p110
      %p113 = scmp.ne.s32.totalorder %s98, %s112
      %p114 = scmp.eq.s32.totalorder %s20, 0
      %p115 = por %p113, %p114
      %s117 = sadd.s32 %s116, 1
      %p120 = scmp.eq.s32.totalorder %s14, 1
      %p121 = scmp.ne.s32.totalorder %s116, %s118
      %p122 = scmp.eq.s32.totalorder %s14, 0
      %p123 = por %p121, %p122
      %p124 = scmp.ne.s32.totalorder %s116, %s118
      %p125 = scmp.eq.s32.totalorder %s19, 1
      %p126 = por %p124, %p125
      %p127 = scmp.ne.s32.totalorder %s118, %s119
      %p128 = scmp.eq.s32.totalorder %s19, 0
      %p129 = por %p127, %p128
      %p130 = scmp.ne.s32.totalorder %s118, %s119
      %p131 = scmp.eq.s32.totalorder %s20, 1
      %p132 = por %p130, %p131
      %p134 = scmp.ne.s32.totalorder %s119, %s133
      %p135 = scmp.eq.s32.totalorder %s20, 0
      %p136 = por %p134, %p135
      %s138 = sadd.s32 %s137, 1
      %p141 = scmp.eq.s32.totalorder %s14, 1
      %p142 = scmp.ne.s32.totalorder %s137, %s139
      %p143 = scmp.eq.s32.totalorder %s14, 0
      %p144 = por %p142, %p143
      %p145 = scmp.ne.s32.totalorder %s137, %s139
      %p146 = scmp.eq.s32.totalorder %s19, 1
      %p147 = por %p145, %p146
      %p148 = scmp.ne.s32.totalorder %s139, %s140
      %p149 = scmp.eq.s32.totalorder %s19, 0
      %p150 = por %p148, %p149
      %p151 = scmp.ne.s32.totalorder %s139, %s140
      %p152 = scmp.eq.s32.totalorder %s20, 1
      %p153 = por %p151, %p152
      %p155 = scmp.ne.s32.totalorder %s140, %s154
      %p156 = scmp.eq.s32.totalorder %s20, 0
      %p157 = por %p155, %p156
      %s159 = sadd.s32 %s158, 1
      %p162 = scmp.eq.s32.totalorder %s14, 1
      %p163 = scmp.ne.s32.totalorder %s158, %s160
      %p164 = scmp.eq.s32.totalorder %s14, 0
      %p165 = por %p163, %p164
      %p166 = scmp.ne.s32.totalorder %s158, %s160
      %p167 = scmp.eq.s32.totalorder %s19, 1
      %p168 = por %p166, %p167
      %p169 = scmp.ne.s32.totalorder %s160, %s161
      %p170 = scmp.eq.s32.totalorder %s19, 0
      %p171 = por %p169, %p170
      %p172 = scmp.ne.s32.totalorder %s160, %s161
      %p173 = scmp.eq.s32.totalorder %s20, 1
      %p174 = por %p172, %p173
      %p176 = scmp.ne.s32.totalorder %s161, %s175
      %p177 = scmp.eq.s32.totalorder %s20, 0
      %p178 = por %p176, %p177
      %s180 = sadd.s32 %s179, 1
      %p183 = scmp.eq.s32.totalorder %s14, 1
      %p184 = scmp.ne.s32.totalorder %s179, %s181
      %p185 = scmp.eq.s32.totalorder %s14, 0
      %p186 = por %p184, %p185
      %p187 = scmp.ne.s32.totalorder %s179, %s181
      %p188 = scmp.eq.s32.totalorder %s19, 1
      %p189 = por %p187, %p188
      %p190 = scmp.ne.s32.totalorder %s181, %s182
      %p191 = scmp.eq.s32.totalorder %s19, 0
      %p192 = por %p190, %p191
      %p193 = scmp.ne.s32.totalorder %s181, %s182
      %p194 = scmp.eq.s32.totalorder %s20, 1
      %p195 = por %p193, %p194
      %p197 = scmp.ne.s32.totalorder %s182, %s196
      %p198 = scmp.eq.s32.totalorder %s20, 0
      %p199 = por %p197, %p198
      %s200 = ssub.s32 %s14, %s21
      %p201 = scmp.eq.s32.totalorder %s200, 0
      %s203 = sadd.s32 %s202, 1
      %s204 = scalar_select %p201, %s202, %s203
      %p207 = pneg %p201
      %p208 = scmp.eq.s32.totalorder %s14, 1
      %p209 = por %p207, %p208
      %p210 = scmp.ne.s32.totalorder %s202, %s205
      %p211 = scmp.eq.s32.totalorder %s14, 0
      %p212 = por %p210, %p211
      %p213 = scmp.ne.s32.totalorder %s202, %s205
      %p214 = scmp.eq.s32.totalorder %s19, 1
      %p215 = por %p213, %p214
      %p216 = scmp.ne.s32.totalorder %s205, %s206
      %p217 = scmp.eq.s32.totalorder %s19, 0
      %p218 = por %p216, %p217
      %p219 = scmp.ne.s32.totalorder %s205, %s206
      %p220 = scmp.eq.s32.totalorder %s20, 1
      %p221 = por %p219, %p220
      %p223 = scmp.ne.s32.totalorder %s206, %s222
      %p224 = scmp.eq.s32.totalorder %s20, 0
      %p225 = por %p223, %p224
      %p226 = scmp.le.s32.totalorder 1, %s14
      %p227 = scmp.lt.s32.totalorder %s14, 3
      %p228 = pnand %p226, %p227
      %p229 = pneg %p228
      // Predicated region
      $region9: #{_lambda_.3} parent=5 // pred_check
        _
      $region10: #{_lambda_.3} parent=5 // pred_check_branch
        %231 = sbr.rel (%p228) target = $region12
      $region11: #{_lambda_.3} parent=5 // pred_region
        %s232 = ssub.s32 %s14, 1
        // Predicated region
        $region13: #{_lambda_.3} parent=11 // pred_check
          %p233 = pneg %p87
        $region14: #{_lambda_.3} parent=11 // pred_check_branch
          %235 = sbr.rel (%p233) target = $region16
        $region15: #{_lambda_.3} parent=11 // pred_region
          _
        $region16: #{_lambda_.3} parent=11 // pred_fallthru
          _
        // Predicated region
        $region17: #{_lambda_.3} parent=11 // pred_check
          %p236 = pneg %p108
        $region18: #{_lambda_.3} parent=11 // pred_check_branch
          %238 = sbr.rel (%p236) target = $region20
        $region19: #{_lambda_.3} parent=11 // pred_region
          _
        $region20: #{_lambda_.3} parent=11 // pred_fallthru
          _
        // Predicated region
        $region21: #{_lambda_.3} parent=11 // pred_check
          %p239 = pneg %p129
        $region22: #{_lambda_.3} parent=11 // pred_check_branch
          %241 = sbr.rel (%p239) target = $region24
        $region23: #{_lambda_.3} parent=11 // pred_region
          _
        $region24: #{_lambda_.3} parent=11 // pred_fallthru
          _
        // Predicated region
        $region25: #{_lambda_.3} parent=11 // pred_check
          %p242 = pneg %p150
        $region26: #{_lambda_.3} parent=11 // pred_check_branch
          %244 = sbr.rel (%p242) target = $region28
        $region27: #{_lambda_.3} parent=11 // pred_region
          _
        $region28: #{_lambda_.3} parent=11 // pred_fallthru
          _
        // Predicated region
        $region29: #{_lambda_.3} parent=11 // pred_check
          %p245 = pneg %p171
        $region30: #{_lambda_.3} parent=11 // pred_check_branch
          %247 = sbr.rel (%p245) target = $region32
        $region31: #{_lambda_.3} parent=11 // pred_region
          _
        $region32: #{_lambda_.3} parent=11 // pred_fallthru
          _
        // Predicated region
        $region33: #{_lambda_.3} parent=11 // pred_check
          %p248 = pneg %p192
        $region34: #{_lambda_.3} parent=11 // pred_check_branch
          %250 = sbr.rel (%p248) target = $region36
        $region35: #{_lambda_.3} parent=11 // pred_region
          _
        $region36: #{_lambda_.3} parent=11 // pred_fallthru
          _
      $region12: #{_lambda_.3} parent=5 // pred_fallthru
        _
      %p251 = scmp.lt.s32.totalorder %s14, 2
      // Predicated region
      $region37: #{_lambda_.3} parent=5 // pred_check
        %p252 = pneg %p251
      $region38: #{_lambda_.3} parent=5 // pred_check_branch
        %254 = sbr.rel (%p252) target = $region40
      $region39: #{_lambda_.3} parent=5 // pred_region
        // Predicated region
        $region41: #{_lambda_.3} parent=39 // pred_check
          %p255 = pneg %p34
        $region42: #{_lambda_.3} parent=39 // pred_check_branch
          %257 = sbr.rel (%p255) target = $region44
        $region43: #{_lambda_.3} parent=39 // pred_region
          %s258 = sand.u32 %s24, 1
          %s259 = sand.u32 %s24, 1
          %s260 = smul.addr %s259, 128
          %s261 = scalar_lea.vmem [#allocation2], %s260
          %s262 = smul.addr %s14, 2
          %s263 = smul.addr %s262, 8
          %s264 = scalar_lea.vmem %s0, %s263
          // Predicated region
          $region45: #{_lambda_.3} parent=43 // pred_check
            _
          $region46: #{_lambda_.3} parent=43 // pred_check_branch
            %266 = sbr.rel (0) target = $region48
          $region47: #{_lambda_.3} parent=43 // pred_region
            // Predicated region
            $region49: #{_lambda_.3} parent=47 // pred_check
              _
            $region50: #{_lambda_.3} parent=47 // pred_check_branch
              %268 = sbr.rel (0) target = $region52
            $region51: #{_lambda_.3} parent=47 // pred_region
              // Predicated region
              $region64: #{_lambda_.3} parent=51 // pred_check
                _
              $region65: #{_lambda_.3} parent=51 // pred_check_branch
                %314 = sbr.rel (0) target = $region67
              $region66: #{_lambda_.3} parent=51 // pred_region
                loop: start=0, step=1, limit=1
                $region68: #{_lambda_.3} parent=66 // loop_pre_header
                  _
                $region69: #{_lambda_.3} parent=66 // loop_header
                  %s316 = sphi 0, %s320
                  %p317 = scmp.ge.s32.totalorder %s316, 1
                  %s321 = sphi %s264, %s264
                  %s322 = sphi %s261, %s261
                $region70: #{_lambda_.3} parent=66 // loop_header_branch
                  %319 = sbr.rel (%p317) target = $region74
                $region71: #{_lambda_.3} parent=66 // loop_body
                  %v323 = vld [vmem:[%s321] sm:$0xff]
                  %324 = vst [vmem:[%s322] sm:$0xff] %v323
                  %v325 = vld [vmem:[%s321 + $0x8] sm:$0xff]
                  %326 = vst [vmem:[%s322 + $0x8] sm:$0xff] %v325
                  %v327 = vld [vmem:[%s321 + $0x20] sm:$0xff]
                  %328 = vst [vmem:[%s322 + $0x10] sm:$0xff] %v327
                  %v329 = vld [vmem:[%s321 + $0x28] sm:$0xff]
                  %330 = vst [vmem:[%s322 + $0x18] sm:$0xff] %v329
                  %v331 = vld [vmem:[%s321 + $0x40] sm:$0xff]
                  %332 = vst [vmem:[%s322 + $0x20] sm:$0xff] %v331
                  %v333 = vld [vmem:[%s321 + $0x48] sm:$0xff]
                  %334 = vst [vmem:[%s322 + $0x28] sm:$0xff] %v333
                  %v335 = vld [vmem:[%s321 + $0x60] sm:$0xff]
                  %336 = vst [vmem:[%s322 + $0x30] sm:$0xff] %v335
                  %v337 = vld [vmem:[%s321 + $0x68] sm:$0xff]
                  %338 = vst [vmem:[%s322 + $0x38] sm:$0xff] %v337
                  %v339 = vld [vmem:[%s321 + $0x80] sm:$0xff]
                  %340 = vst [vmem:[%s322 + $0x40] sm:$0xff] %v339
                  %v341 = vld [vmem:[%s321 + $0x88] sm:$0xff]
                  %342 = vst [vmem:[%s322 + $0x48] sm:$0xff] %v341
                  %v343 = vld [vmem:[%s321 + $0xa0] sm:$0xff]
                  %344 = vst [vmem:[%s322 + $0x50] sm:$0xff] %v343
                  %v345 = vld [vmem:[%s321 + $0xa8] sm:$0xff]
                  %346 = vst [vmem:[%s322 + $0x58] sm:$0xff] %v345
                  %v347 = vld [vmem:[%s321 + $0xc0] sm:$0xff]
                  %348 = vst [vmem:[%s322 + $0x60] sm:$0xff] %v347
                  %v349 = vld [vmem:[%s321 + $0xc8] sm:$0xff]
                  %350 = vst [vmem:[%s322 + $0x68] sm:$0xff] %v349
                  %v351 = vld [vmem:[%s321 + $0xe0] sm:$0xff]
                  %352 = vst [vmem:[%s322 + $0x70] sm:$0xff] %v351
                  %v353 = vld [vmem:[%s321 + $0xe8] sm:$0xff]
                  %354 = vst [vmem:[%s322 + $0x78] sm:$0xff] %v353
                $region72: #{_lambda_.3} parent=66 // loop_footer
                  %s320 = sadd.s32 1, %s316
                $region73: #{_lambda_.3} parent=66 // loop_footer_branch
                  %315 = sbr.rel target = $region69
                $region74: #{_lambda_.3} parent=66 // loop_exit
                  _
              $region67: #{_lambda_.3} parent=51 // pred_fallthru
                _
              // Predicated region
              $region75: #{_lambda_.3} parent=51 // pred_check
                _
              $region76: #{_lambda_.3} parent=51 // pred_check_branch
                %356 = sbr.rel target = $region78
              $region77: #{_lambda_.3} parent=51 // pred_region
                _
              $region78: #{_lambda_.3} parent=51 // pred_fallthru
                _
            $region52: #{_lambda_.3} parent=47 // pred_fallthru
              _
            // Predicated region
            $region53: #{_lambda_.3} parent=47 // pred_check
              _
            $region54: #{_lambda_.3} parent=47 // pred_check_branch
              %270 = sbr.rel target = $region56
            $region55: #{_lambda_.3} parent=47 // pred_region
              %s272 = ssub.s32 256, 1
              loop: start=0, step=1, limit=1
              $region57: #{_lambda_.3} parent=55 // loop_pre_header
                _
              $region58: #{_lambda_.3} parent=55 // loop_header
                %s274 = sphi 0, %s278
                %p275 = scmp.ge.s32.totalorder %s274, 1
                %s279 = sphi %s264, %s264
                %s280 = sphi %s261, %s261
              $region59: #{_lambda_.3} parent=55 // loop_header_branch
                %277 = sbr.rel (%p275) target = $region63
              $region60: #{_lambda_.3} parent=55 // loop_body
                %v281 = vld [vmem:[%s279] sm:%s272]
                %282 = vst [vmem:[%s280] sm:%s272] %v281
                %v283 = vld [vmem:[%s279 + $0x8] sm:%s272]
                %284 = vst [vmem:[%s280 + $0x8] sm:%s272] %v283
                %v285 = vld [vmem:[%s279 + $0x20] sm:%s272]
                %286 = vst [vmem:[%s280 + $0x10] sm:%s272] %v285
                %v287 = vld [vmem:[%s279 + $0x28] sm:%s272]
                %288 = vst [vmem:[%s280 + $0x18] sm:%s272] %v287
                %v289 = vld [vmem:[%s279 + $0x40] sm:%s272]
                %290 = vst [vmem:[%s280 + $0x20] sm:%s272] %v289
                %v291 = vld [vmem:[%s279 + $0x48] sm:%s272]
                %292 = vst [vmem:[%s280 + $0x28] sm:%s272] %v291
                %v293 = vld [vmem:[%s279 + $0x60] sm:%s272]
                %294 = vst [vmem:[%s280 + $0x30] sm:%s272] %v293
                %v295 = vld [vmem:[%s279 + $0x68] sm:%s272]
                %296 = vst [vmem:[%s280 + $0x38] sm:%s272] %v295
                %v297 = vld [vmem:[%s279 + $0x80] sm:%s272]
                %298 = vst [vmem:[%s280 + $0x40] sm:%s272] %v297
                %v299 = vld [vmem:[%s279 + $0x88] sm:%s272]
                %300 = vst [vmem:[%s280 + $0x48] sm:%s272] %v299
                %v301 = vld [vmem:[%s279 + $0xa0] sm:%s272]
                %302 = vst [vmem:[%s280 + $0x50] sm:%s272] %v301
                %v303 = vld [vmem:[%s279 + $0xa8] sm:%s272]
                %304 = vst [vmem:[%s280 + $0x58] sm:%s272] %v303
                %v305 = vld [vmem:[%s279 + $0xc0] sm:%s272]
                %306 = vst [vmem:[%s280 + $0x60] sm:%s272] %v305
                %v307 = vld [vmem:[%s279 + $0xc8] sm:%s272]
                %308 = vst [vmem:[%s280 + $0x68] sm:%s272] %v307
                %v309 = vld [vmem:[%s279 + $0xe0] sm:%s272]
                %310 = vst [vmem:[%s280 + $0x70] sm:%s272] %v309
                %v311 = vld [vmem:[%s279 + $0xe8] sm:%s272]
                %312 = vst [vmem:[%s280 + $0x78] sm:%s272] %v311
              $region61: #{_lambda_.3} parent=55 // loop_footer
                %s278 = sadd.s32 1, %s274
              $region62: #{_lambda_.3} parent=55 // loop_footer_branch
                %273 = sbr.rel target = $region58
              $region63: #{_lambda_.3} parent=55 // loop_exit
                _
            $region56: #{_lambda_.3} parent=47 // pred_fallthru
              _
          $region48: #{_lambda_.3} parent=43 // pred_fallthru
            _
          %357 = vnop
        $region44: #{_lambda_.3} parent=39 // pred_fallthru
          _
        // Predicated region
        $region79: #{_lambda_.3} parent=39 // pred_check
          %p358 = pneg %p60
        $region80: #{_lambda_.3} parent=39 // pred_check_branch
          %360 = sbr.rel (%p358) target = $region82
        $region81: #{_lambda_.3} parent=39 // pred_region
          %s361 = sand.u32 %s50, 1
          %s362 = sand.u32 %s50, 1
          %s363 = smul.addr %s362, 128
          %s364 = scalar_lea.vmem [#allocation3], %s363
          %s365 = smul.addr %s14, 2
          %s366 = sadd.s32 %s365, 32
          %s367 = smul.addr %s366, 8
          %s368 = scalar_lea.vmem %s1, %s367
          // Predicated region
          $region83: #{_lambda_.3} parent=81 // pred_check
            _
          $region84: #{_lambda_.3} parent=81 // pred_check_branch
            %370 = sbr.rel (0) target = $region86
          $region85: #{_lambda_.3} parent=81 // pred_region
            // Predicated region
            $region87: #{_lambda_.3} parent=85 // pred_check
              _
            $region88: #{_lambda_.3} parent=85 // pred_check_branch
              %372 = sbr.rel (0) target = $region90
            $region89: #{_lambda_.3} parent=85 // pred_region
              // Predicated region
              $region102: #{_lambda_.3} parent=89 // pred_check
                _
              $region103: #{_lambda_.3} parent=89 // pred_check_branch
                %418 = sbr.rel (0) target = $region105
              $region104: #{_lambda_.3} parent=89 // pred_region
                loop: start=0, step=1, limit=1
                $region106: #{_lambda_.3} parent=104 // loop_pre_header
                  _
                $region107: #{_lambda_.3} parent=104 // loop_header
                  %s420 = sphi 0, %s424
                  %p421 = scmp.ge.s32.totalorder %s420, 1
                  %s425 = sphi %s368, %s368
                  %s426 = sphi %s364, %s364
                $region108: #{_lambda_.3} parent=104 // loop_header_branch
                  %423 = sbr.rel (%p421) target = $region112
                $region109: #{_lambda_.3} parent=104 // loop_body
                  %v427 = vld [vmem:[%s425] sm:$0xff]
                  %428 = vst [vmem:[%s426] sm:$0xff] %v427
                  %v429 = vld [vmem:[%s425 + $0x8] sm:$0xff]
                  %430 = vst [vmem:[%s426 + $0x8] sm:$0xff] %v429
                  %v431 = vld [vmem:[%s425 + $0x20] sm:$0xff]
                  %432 = vst [vmem:[%s426 + $0x10] sm:$0xff] %v431
                  %v433 = vld [vmem:[%s425 + $0x28] sm:$0xff]
                  %434 = vst [vmem:[%s426 + $0x18] sm:$0xff] %v433
                  %v435 = vld [vmem:[%s425 + $0x40] sm:$0xff]
                  %436 = vst [vmem:[%s426 + $0x20] sm:$0xff] %v435
                  %v437 = vld [vmem:[%s425 + $0x48] sm:$0xff]
                  %438 = vst [vmem:[%s426 + $0x28] sm:$0xff] %v437
                  %v439 = vld [vmem:[%s425 + $0x60] sm:$0xff]
                  %440 = vst [vmem:[%s426 + $0x30] sm:$0xff] %v439
                  %v441 = vld [vmem:[%s425 + $0x68] sm:$0xff]
                  %442 = vst [vmem:[%s426 + $0x38] sm:$0xff] %v441
                  %v443 = vld [vmem:[%s425 + $0x80] sm:$0xff]
                  %444 = vst [vmem:[%s426 + $0x40] sm:$0xff] %v443
                  %v445 = vld [vmem:[%s425 + $0x88] sm:$0xff]
                  %446 = vst [vmem:[%s426 + $0x48] sm:$0xff] %v445
                  %v447 = vld [vmem:[%s425 + $0xa0] sm:$0xff]
                  %448 = vst [vmem:[%s426 + $0x50] sm:$0xff] %v447
                  %v449 = vld [vmem:[%s425 + $0xa8] sm:$0xff]
                  %450 = vst [vmem:[%s426 + $0x58] sm:$0xff] %v449
                  %v451 = vld [vmem:[%s425 + $0xc0] sm:$0xff]
                  %452 = vst [vmem:[%s426 + $0x60] sm:$0xff] %v451
                  %v453 = vld [vmem:[%s425 + $0xc8] sm:$0xff]
                  %454 = vst [vmem:[%s426 + $0x68] sm:$0xff] %v453
                  %v455 = vld [vmem:[%s425 + $0xe0] sm:$0xff]
                  %456 = vst [vmem:[%s426 + $0x70] sm:$0xff] %v455
                  %v457 = vld [vmem:[%s425 + $0xe8] sm:$0xff]
                  %458 = vst [vmem:[%s426 + $0x78] sm:$0xff] %v457
                $region110: #{_lambda_.3} parent=104 // loop_footer
                  %s424 = sadd.s32 1, %s420
                $region111: #{_lambda_.3} parent=104 // loop_footer_branch
                  %419 = sbr.rel target = $region107
                $region112: #{_lambda_.3} parent=104 // loop_exit
                  _
              $region105: #{_lambda_.3} parent=89 // pred_fallthru
                _
              // Predicated region
              $region113: #{_lambda_.3} parent=89 // pred_check
                _
              $region114: #{_lambda_.3} parent=89 // pred_check_branch
                %460 = sbr.rel target = $region116
              $region115: #{_lambda_.3} parent=89 // pred_region
                _
              $region116: #{_lambda_.3} parent=89 // pred_fallthru
                _
            $region90: #{_lambda_.3} parent=85 // pred_fallthru
              _
            // Predicated region
            $region91: #{_lambda_.3} parent=85 // pred_check
              _
            $region92: #{_lambda_.3} parent=85 // pred_check_branch
              %374 = sbr.rel target = $region94
            $region93: #{_lambda_.3} parent=85 // pred_region
              %s376 = ssub.s32 256, 1
              loop: start=0, step=1, limit=1
              $region95: #{_lambda_.3} parent=93 // loop_pre_header
                _
              $region96: #{_lambda_.3} parent=93 // loop_header
                %s378 = sphi 0, %s382
                %p379 = scmp.ge.s32.totalorder %s378, 1
                %s383 = sphi %s368, %s368
                %s384 = sphi %s364, %s364
              $region97: #{_lambda_.3} parent=93 // loop_header_branch
                %381 = sbr.rel (%p379) target = $region101
              $region98: #{_lambda_.3} parent=93 // loop_body
                %v385 = vld [vmem:[%s383] sm:%s376]
                %386 = vst [vmem:[%s384] sm:%s376] %v385
                %v387 = vld [vmem:[%s383 + $0x8] sm:%s376]
                %388 = vst [vmem:[%s384 + $0x8] sm:%s376] %v387
                %v389 = vld [vmem:[%s383 + $0x20] sm:%s376]
                %390 = vst [vmem:[%s384 + $0x10] sm:%s376] %v389
                %v391 = vld [vmem:[%s383 + $0x28] sm:%s376]
                %392 = vst [vmem:[%s384 + $0x18] sm:%s376] %v391
                %v393 = vld [vmem:[%s383 + $0x40] sm:%s376]
                %394 = vst [vmem:[%s384 + $0x20] sm:%s376] %v393
                %v395 = vld [vmem:[%s383 + $0x48] sm:%s376]
                %396 = vst [vmem:[%s384 + $0x28] sm:%s376] %v395
                %v397 = vld [vmem:[%s383 + $0x60] sm:%s376]
                %398 = vst [vmem:[%s384 + $0x30] sm:%s376] %v397
                %v399 = vld [vmem:[%s383 + $0x68] sm:%s376]
                %400 = vst [vmem:[%s384 + $0x38] sm:%s376] %v399
                %v401 = vld [vmem:[%s383 + $0x80] sm:%s376]
                %402 = vst [vmem:[%s384 + $0x40] sm:%s376] %v401
                %v403 = vld [vmem:[%s383 + $0x88] sm:%s376]
                %404 = vst [vmem:[%s384 + $0x48] sm:%s376] %v403
                %v405 = vld [vmem:[%s383 + $0xa0] sm:%s376]
                %406 = vst [vmem:[%s384 + $0x50] sm:%s376] %v405
                %v407 = vld [vmem:[%s383 + $0xa8] sm:%s376]
                %408 = vst [vmem:[%s384 + $0x58] sm:%s376] %v407
                %v409 = vld [vmem:[%s383 + $0xc0] sm:%s376]
                %410 = vst [vmem:[%s384 + $0x60] sm:%s376] %v409
                %v411 = vld [vmem:[%s383 + $0xc8] sm:%s376]
                %412 = vst [vmem:[%s384 + $0x68] sm:%s376] %v411
                %v413 = vld [vmem:[%s383 + $0xe0] sm:%s376]
                %414 = vst [vmem:[%s384 + $0x70] sm:%s376] %v413
                %v415 = vld [vmem:[%s383 + $0xe8] sm:%s376]
                %416 = vst [vmem:[%s384 + $0x78] sm:%s376] %v415
              $region99: #{_lambda_.3} parent=93 // loop_footer
                %s382 = sadd.s32 1, %s378
              $region100: #{_lambda_.3} parent=93 // loop_footer_branch
                %377 = sbr.rel target = $region96
              $region101: #{_lambda_.3} parent=93 // loop_exit
                _
            $region94: #{_lambda_.3} parent=85 // pred_fallthru
              _
          $region86: #{_lambda_.3} parent=81 // pred_fallthru
            _
          %461 = vnop
        $region82: #{_lambda_.3} parent=39 // pred_fallthru
          _
      $region40: #{_lambda_.3} parent=5 // pred_fallthru
        _
      %p462 = scmp.le.s32.totalorder 1, %s14
      %p463 = scmp.lt.s32.totalorder %s14, 3
      %p464 = pnand %p462, %p463
      %p465 = pneg %p464
      // Predicated region
      $region117: #{_lambda_.3} parent=5 // pred_check
        _
      $region118: #{_lambda_.3} parent=5 // pred_check_branch
        %467 = sbr.rel (%p464) target = $region120
      $region119: #{_lambda_.3} parent=5 // pred_region
        %s468 = ssub.s32 %s14, 1
        %s469 = sand.u32 %s27, 1
        %s470 = sand.u32 %s27, 1
        %s471 = smul.addr %s470, 128
        %s472 = scalar_lea.vmem [#allocation2], %s471
        // Predicated region
        $region121: #{_lambda_.3} parent=119 // pred_check
          %p473 = pneg %p40
        $region122: #{_lambda_.3} parent=119 // pred_check_branch
          %475 = sbr.rel (%p473) target = $region124
        $region123: #{_lambda_.3} parent=119 // pred_region
          _
        $region124: #{_lambda_.3} parent=119 // pred_fallthru
          _
        %s476 = sand.u32 %s53, 1
        %s477 = sand.u32 %s53, 1
        %s478 = smul.addr %s477, 128
        %s479 = scalar_lea.vmem [#allocation3], %s478
        // Predicated region
        $region125: #{_lambda_.3} parent=119 // pred_check
          %p480 = pneg %p66
        $region126: #{_lambda_.3} parent=119 // pred_check_branch
          %482 = sbr.rel (%p480) target = $region128
        $region127: #{_lambda_.3} parent=119 // pred_region
          _
        $region128: #{_lambda_.3} parent=119 // pred_fallthru
          _
        %s483 = sand.u32 %s27, 1
        %s484 = sand.u32 %s27, 1
        %s485 = smul.addr %s484, 128
        %s486 = scalar_lea.vmem [#allocation2], %s485
        %p487 = pneg %p40
        %p488 = pneg %p37
        %s489 = sand.u32 %s53, 1
        %s490 = sand.u32 %s53, 1
        %s491 = smul.addr %s490, 128
        %s492 = scalar_lea.vmem [#allocation3], %s491
        %p493 = pneg %p66
        %p494 = pneg %p63
        %p495 = pneg %p87
        %p496 = pneg %p84
        %p497 = pneg %p108
        %p498 = pneg %p105
        %p499 = pneg %p129
        %p500 = pneg %p126
        %p501 = pneg %p150
        %p502 = pneg %p147
        %p503 = pneg %p171
        %p504 = pneg %p168
        %p505 = pneg %p192
        %p506 = pneg %p189
        %p507 = pneg %p218
        %p508 = pneg %p215
        %p509 = scmp.lt.s32.totalorder %s19, 1
        %s510 = scalar_select %p509, %s19, 1
        %s511 = smul.addr %s510, 16
        %s512 = smul.addr %s511, 8
        %s513 = scalar_lea.vmem %s8, %s512
        %p514 = scmp.lt.s32.totalorder %s19, 1
        %s515 = scalar_select %p514, %s19, 1
        %s516 = smul.addr %s515, 16
        %s517 = smul.addr %s516, 8
        %s518 = scalar_lea.vmem %s8, %s517
        %v519 = vld [vmem:[%s472] sm:$0xff]
        %v520 = vld [vmem:[%s472 + $0x8] sm:$0xff]
        %v521 = vld [vmem:[%s472 + $0x10] sm:$0xff]
        %v522 = vld [vmem:[%s472 + $0x18] sm:$0xff]
        %v523 = vld [vmem:[%s472 + $0x20] sm:$0xff]
        %v524 = vld [vmem:[%s472 + $0x28] sm:$0xff]
        %v525 = vld [vmem:[%s472 + $0x30] sm:$0xff]
        %v526 = vld [vmem:[%s472 + $0x38] sm:$0xff]
        %v527 = vld [vmem:[%s472 + $0x40] sm:$0xff]
        %v528 = vld [vmem:[%s472 + $0x48] sm:$0xff]
        %v529 = vld [vmem:[%s472 + $0x50] sm:$0xff]
        %v530 = vld [vmem:[%s472 + $0x58] sm:$0xff]
        %v531 = vld [vmem:[%s472 + $0x60] sm:$0xff]
        %v532 = vld [vmem:[%s472 + $0x68] sm:$0xff]
        %v533 = vld [vmem:[%s472 + $0x70] sm:$0xff]
        %v534 = vld [vmem:[%s472 + $0x78] sm:$0xff]
        %v535 = vld [vmem:[%s479] sm:$0xff]
        %v536 = vld [vmem:[%s479 + $0x8] sm:$0xff]
        %v537 = vld [vmem:[%s479 + $0x10] sm:$0xff]
        %v538 = vld [vmem:[%s479 + $0x18] sm:$0xff]
        %v539 = vld [vmem:[%s479 + $0x20] sm:$0xff]
        %v540 = vld [vmem:[%s479 + $0x28] sm:$0xff]
        %v541 = vld [vmem:[%s479 + $0x30] sm:$0xff]
        %v542 = vld [vmem:[%s479 + $0x38] sm:$0xff]
        %v543 = vld [vmem:[%s479 + $0x40] sm:$0xff]
        %v544 = vld [vmem:[%s479 + $0x48] sm:$0xff]
        %v545 = vld [vmem:[%s479 + $0x50] sm:$0xff]
        %v546 = vld [vmem:[%s479 + $0x58] sm:$0xff]
        %v547 = vld [vmem:[%s479 + $0x60] sm:$0xff]
        %v548 = vld [vmem:[%s479 + $0x68] sm:$0xff]
        %v549 = vld [vmem:[%s479 + $0x70] sm:$0xff]
        %v550 = vld [vmem:[%s479 + $0x78] sm:$0xff]
        %567 = vrot.lane.b32.xlu0 %v535, 32
        %v568 = vpop.permute.xlu0 %567
        %569 = vrot.lane.b32.xlu0 %v536, 32
        %v570 = vpop.permute.xlu0 %569
        %571 = vrot.lane.b32.xlu0 %v537, 32
        %v572 = vpop.permute.xlu0 %571
        %573 = vrot.lane.b32.xlu0 %v538, 32
        %v574 = vpop.permute.xlu0 %573
        %575 = vrot.lane.b32.xlu0 %v539, 32
        %v576 = vpop.permute.xlu0 %575
        %577 = vrot.lane.b32.xlu0 %v540, 32
        %v578 = vpop.permute.xlu0 %577
        %579 = vrot.lane.b32.xlu0 %v541, 32
        %v580 = vpop.permute.xlu0 %579
        %581 = vrot.lane.b32.xlu0 %v542, 32
        %v582 = vpop.permute.xlu0 %581
        %583 = vrot.lane.b32.xlu0 %v543, 32
        %v584 = vpop.permute.xlu0 %583
        %585 = vrot.lane.b32.xlu0 %v544, 32
        %v586 = vpop.permute.xlu0 %585
        %587 = vrot.lane.b32.xlu0 %v545, 32
        %v588 = vpop.permute.xlu0 %587
        %589 = vrot.lane.b32.xlu0 %v546, 32
        %v590 = vpop.permute.xlu0 %589
        %591 = vrot.lane.b32.xlu0 %v547, 32
        %v592 = vpop.permute.xlu0 %591
        %593 = vrot.lane.b32.xlu0 %v548, 32
        %v594 = vpop.permute.xlu0 %593
        %595 = vrot.lane.b32.xlu0 %v549, 32
        %v596 = vpop.permute.xlu0 %595
        %597 = vrot.lane.b32.xlu0 %v550, 32
        %v598 = vpop.permute.xlu0 %597
        %vm615 = vcmask 261120
        %v616 = vsel %vm615, %v519, %v568
        %v617 = vsel %vm615, %v520, %v570
        %v618 = vsel %vm615, %v521, %v572
        %v619 = vsel %vm615, %v522, %v574
        %v620 = vsel %vm615, %v523, %v576
        %v621 = vsel %vm615, %v524, %v578
        %v622 = vsel %vm615, %v525, %v580
        %v623 = vsel %vm615, %v526, %v582
        %v624 = vsel %vm615, %v527, %v584
        %v625 = vsel %vm615, %v528, %v586
        %v626 = vsel %vm615, %v529, %v588
        %v627 = vsel %vm615, %v530, %v590
        %v628 = vsel %vm615, %v531, %v592
        %v629 = vsel %vm615, %v532, %v594
        %v630 = vsel %vm615, %v533, %v596
        %v631 = vsel %vm615, %v534, %v598
        %v632 = vld [vmem:[%s2] sm:$0xff]
        %v633 = vld [vmem:[%s2 + $0x8] sm:$0xff]
        %v634 = vld [vmem:[%s2 + $0x10] sm:$0xff]
        %v635 = vld [vmem:[%s2 + $0x18] sm:$0xff]
        %v636 = vld [vmem:[%s2 + $0x20] sm:$0xff]
        %v637 = vld [vmem:[%s2 + $0x28] sm:$0xff]
        %v638 = vld [vmem:[%s2 + $0x30] sm:$0xff]
        %v639 = vld [vmem:[%s2 + $0x38] sm:$0xff]
        %v640 = vld [vmem:[%s2 + $0x40] sm:$0xff]
        %v641 = vld [vmem:[%s2 + $0x48] sm:$0xff]
        %v642 = vld [vmem:[%s2 + $0x50] sm:$0xff]
        %v643 = vld [vmem:[%s2 + $0x58] sm:$0xff]
        %v644 = vld [vmem:[%s2 + $0x60] sm:$0xff]
        %v645 = vld [vmem:[%s2 + $0x68] sm:$0xff]
        %v646 = vld [vmem:[%s2 + $0x70] sm:$0xff]
        %v647 = vld [vmem:[%s2 + $0x78] sm:$0xff]
        %v648 = vld [vmem:[%s3] sm:$0x3]
        %v650 = vperm.slane %v648, 0
        %v651 = vperm.slane %v648, 1
        %vm654 = vcmask 523264
        %v656 = vsel %vm654, %v616, 0
        %v659 = vsel %vm654, %v617, 0
        %v662 = vsel %vm654, %v618, 0
        %v665 = vsel %vm654, %v619, 0
        %v668 = vsel %vm654, %v620, 0
        %v671 = vsel %vm654, %v621, 0
        %v674 = vsel %vm654, %v622, 0
        %v677 = vsel %vm654, %v623, 0
        %v680 = vsel %vm654, %v624, 0
        %v683 = vsel %vm654, %v625, 0
        %v686 = vsel %vm654, %v626, 0
        %v689 = vsel %vm654, %v627, 0
        %v692 = vsel %vm654, %v628, 0
        %v695 = vsel %vm654, %v629, 0
        %v698 = vsel %vm654, %v630, 0
        %v701 = vsel %vm654, %v631, 0
        %703 = vmatpush.msra.mxu0 0.0
        %704 = vmatpush.msra.mxu0 0.0
        %705 = vmatpush.msra.mxu0 0.0
        %706 = vmatpush.msra.mxu0 0.0
        %707 = vmatpush.msra.mxu0 0.0
        %708 = vmatpush.msra.mxu0 0.0
        %709 = vmatpush.msra.mxu0 0.0
        %710 = vmatpush.msra.mxu0 0.0
        %711 = vmatpush.msra.mxu0 %v646
        %712 = vmatpush.msra.mxu0 %v644
        %713 = vmatpush.msra.mxu0 %v642
        %714 = vmatpush.msra.mxu0 %v640
        %715 = vmatpush.msra.mxu0 %v638
        %716 = vmatpush.msra.mxu0 %v636
        %717 = vmatpush.msra.mxu0 %v634
        %718 = vmatpush.msra.mxu0 %v632
        %719 = vmatmul.f32.gmra.mxu0 %v656
        %v720 = vpop.f32.mrf.mxu0
        %v721 = vadd.f32 %v650, %v720
        %722 = vmatmul.f32.gmra.mxu0 %v659
        %v723 = vpop.f32.mrf.mxu0
        %v724 = vadd.f32 %v650, %v723
        %725 = vmatmul.f32.gmra.mxu0 %v662
        %v726 = vpop.f32.mrf.mxu0
        %v727 = vadd.f32 %v650, %v726
        %728 = vmatmul.f32.gmra.mxu0 %v665
        %v729 = vpop.f32.mrf.mxu0
        %v730 = vadd.f32 %v650, %v729
        %731 = vmatmul.f32.gmra.mxu0 %v668
        %v732 = vpop.f32.mrf.mxu0
        %v733 = vadd.f32 %v650, %v732
        %734 = vmatmul.f32.gmra.mxu0 %v671
        %v735 = vpop.f32.mrf.mxu0
        %v736 = vadd.f32 %v650, %v735
        %737 = vmatmul.f32.gmra.mxu0 %v674
        %v738 = vpop.f32.mrf.mxu0
        %v739 = vadd.f32 %v650, %v738
        %740 = vmatmul.f32.gmra.mxu0 %v677
        %v741 = vpop.f32.mrf.mxu0
        %v742 = vadd.f32 %v650, %v741
        %743 = vmatmul.f32.gmra.mxu0 %v680
        %v744 = vpop.f32.mrf.mxu0
        %v745 = vadd.f32 %v650, %v744
        %746 = vmatmul.f32.gmra.mxu0 %v683
        %v747 = vpop.f32.mrf.mxu0
        %v748 = vadd.f32 %v650, %v747
        %749 = vmatmul.f32.gmra.mxu0 %v686
        %v750 = vpop.f32.mrf.mxu0
        %v751 = vadd.f32 %v650, %v750
        %752 = vmatmul.f32.gmra.mxu0 %v689
        %v753 = vpop.f32.mrf.mxu0
        %v754 = vadd.f32 %v650, %v753
        %755 = vmatmul.f32.gmra.mxu0 %v692
        %v756 = vpop.f32.mrf.mxu0
        %v757 = vadd.f32 %v650, %v756
        %758 = vmatmul.f32.gmra.mxu0 %v695
        %v759 = vpop.f32.mrf.mxu0
        %v760 = vadd.f32 %v650, %v759
        %761 = vmatmul.f32.gmra.mxu0 %v698
        %v762 = vpop.f32.mrf.mxu0
        %v763 = vadd.f32 %v650, %v762
        %764 = vmatmul.f32.gmra.mxu0 %v701
        %v765 = vpop.f32.mrf.mxu0
        %v766 = vadd.f32 %v650, %v765
        %767 = vdwg.mxu0
        %768 = vmatpush.msra.mxu0 0.0
        %769 = vmatpush.msra.mxu0 0.0
        %770 = vmatpush.msra.mxu0 0.0
        %771 = vmatpush.msra.mxu0 0.0
        %772 = vmatpush.msra.mxu0 0.0
        %773 = vmatpush.msra.mxu0 0.0
        %774 = vmatpush.msra.mxu0 0.0
        %775 = vmatpush.msra.mxu0 0.0
        %776 = vmatpush.msra.mxu0 %v647
        %777 = vmatpush.msra.mxu0 %v645
        %778 = vmatpush.msra.mxu0 %v643
        %779 = vmatpush.msra.mxu0 %v641
        %780 = vmatpush.msra.mxu0 %v639
        %781 = vmatpush.msra.mxu0 %v637
        %782 = vmatpush.msra.mxu0 %v635
        %783 = vmatpush.msra.mxu0 %v633
        %784 = vmatmul.f32.gmra.mxu0 %v656
        %v785 = vpop.f32.mrf.mxu0
        %v786 = vadd.f32 %v651, %v785
        %787 = vmatmul.f32.gmra.mxu0 %v659
        %v788 = vpop.f32.mrf.mxu0
        %v789 = vadd.f32 %v651, %v788
        %790 = vmatmul.f32.gmra.mxu0 %v662
        %v791 = vpop.f32.mrf.mxu0
        %v792 = vadd.f32 %v651, %v791
        %793 = vmatmul.f32.gmra.mxu0 %v665
        %v794 = vpop.f32.mrf.mxu0
        %v795 = vadd.f32 %v651, %v794
        %796 = vmatmul.f32.gmra.mxu0 %v668
        %v797 = vpop.f32.mrf.mxu0
        %v798 = vadd.f32 %v651, %v797
        %799 = vmatmul.f32.gmra.mxu0 %v671
        %v800 = vpop.f32.mrf.mxu0
        %v801 = vadd.f32 %v651, %v800
        %802 = vmatmul.f32.gmra.mxu0 %v674
        %v803 = vpop.f32.mrf.mxu0
        %v804 = vadd.f32 %v651, %v803
        %805 = vmatmul.f32.gmra.mxu0 %v677
        %v806 = vpop.f32.mrf.mxu0
        %v807 = vadd.f32 %v651, %v806
        %808 = vmatmul.f32.gmra.mxu0 %v680
        %v809 = vpop.f32.mrf.mxu0
        %v810 = vadd.f32 %v651, %v809
        %811 = vmatmul.f32.gmra.mxu0 %v683
        %v812 = vpop.f32.mrf.mxu0
        %v813 = vadd.f32 %v651, %v812
        %814 = vmatmul.f32.gmra.mxu0 %v686
        %v815 = vpop.f32.mrf.mxu0
        %v816 = vadd.f32 %v651, %v815
        %817 = vmatmul.f32.gmra.mxu0 %v689
        %v818 = vpop.f32.mrf.mxu0
        %v819 = vadd.f32 %v651, %v818
        %820 = vmatmul.f32.gmra.mxu0 %v692
        %v821 = vpop.f32.mrf.mxu0
        %v822 = vadd.f32 %v651, %v821
        %823 = vmatmul.f32.gmra.mxu0 %v695
        %v824 = vpop.f32.mrf.mxu0
        %v825 = vadd.f32 %v651, %v824
        %826 = vmatmul.f32.gmra.mxu0 %v698
        %v827 = vpop.f32.mrf.mxu0
        %v828 = vadd.f32 %v651, %v827
        %829 = vmatmul.f32.gmra.mxu0 %v701
        %v830 = vpop.f32.mrf.mxu0
        %v831 = vadd.f32 %v651, %v830
        %832 = vdwg.mxu0
        %v833 = vrot.slane %v733, 4
        %vm834 = vcmask 1047556
        %v835 = vsel %vm834, %v833, %v721
        %v836 = vrot.slane %v721, 4
        %v837 = vsel %vm834, %v733, %v836
        %v839 = vunpack.c.l.s4 1983009808
        %v840 = vunpack.c.0.s8 %v839
        %v841 = vperm.slane %v835, %v840
        %v843 = vunpack.c.l.s4 1983009808
        %v844 = vunpack.c.0.s8 %v843
        %v845 = vperm.slane %v837, %v844
        %v846 = vrot.slane %v739, 4
        %v847 = vsel %vm834, %v846, %v727
        %v848 = vrot.slane %v727, 4
        %v849 = vsel %vm834, %v739, %v848
        %v851 = vunpack.c.l.s4 1983009808
        %v852 = vunpack.c.0.s8 %v851
        %v853 = vperm.slane %v847, %v852
        %v855 = vunpack.c.l.s4 1983009808
        %v856 = vunpack.c.0.s8 %v855
        %v857 = vperm.slane %v849, %v856
        %v858 = vrot.slane %v757, 4
        %v859 = vsel %vm834, %v858, %v745
        %v860 = vrot.slane %v745, 4
        %v861 = vsel %vm834, %v757, %v860
        %v863 = vunpack.c.l.s4 1983009808
        %v864 = vunpack.c.0.s8 %v863
        %v865 = vperm.slane %v859, %v864
        %v867 = vunpack.c.l.s4 1983009808
        %v868 = vunpack.c.0.s8 %v867
        %v869 = vperm.slane %v861, %v868
        %v870 = vrot.slane %v763, 4
        %v871 = vsel %vm834, %v870, %v751
        %v872 = vrot.slane %v751, 4
        %v873 = vsel %vm834, %v763, %v872
        %v875 = vunpack.c.l.s4 1983009808
        %v876 = vunpack.c.0.s8 %v875
        %v877 = vperm.slane %v871, %v876
        %v879 = vunpack.c.l.s4 1983009808
        %v880 = vunpack.c.0.s8 %v879
        %v881 = vperm.slane %v873, %v880
        %v882 = vrot.slane %v853, 4
        %v883 = vsel %vm834, %v882, %v841
        %v884 = vrot.slane %v841, 4
        %v885 = vsel %vm834, %v853, %v884
        %v887 = vunpack.c.l.s4 1934713408
        %v888 = vunpack.c.0.s8 %v887
        %v889 = vperm.slane %v883, %v888
        %v891 = vunpack.c.l.s4 1934713408
        %v892 = vunpack.c.0.s8 %v891
        %v893 = vperm.slane %v885, %v892
        %v894 = vrot.slane %v857, 4
        %v895 = vsel %vm834, %v894, %v845
        %v896 = vrot.slane %v845, 4
        %v897 = vsel %vm834, %v857, %v896
        %v899 = vunpack.c.l.s4 1934713408
        %v900 = vunpack.c.0.s8 %v899
        %v901 = vperm.slane %v895, %v900
        %v903 = vunpack.c.l.s4 1934713408
        %v904 = vunpack.c.0.s8 %v903
        %v905 = vperm.slane %v897, %v904
        %v906 = vrot.slane %v877, 4
        %v907 = vsel %vm834, %v906, %v865
        %v908 = vrot.slane %v865, 4
        %v909 = vsel %vm834, %v877, %v908
        %v911 = vunpack.c.l.s4 1934713408
        %v912 = vunpack.c.0.s8 %v911
        %v913 = vperm.slane %v907, %v912
        %v915 = vunpack.c.l.s4 1934713408
        %v916 = vunpack.c.0.s8 %v915
        %v917 = vperm.slane %v909, %v916
        %v918 = vrot.slane %v881, 4
        %v919 = vsel %vm834, %v918, %v869
        %v920 = vrot.slane %v869, 4
        %v921 = vsel %vm834, %v881, %v920
        %v923 = vunpack.c.l.s4 1934713408
        %v924 = vunpack.c.0.s8 %v923
        %v925 = vperm.slane %v919, %v924
        %v927 = vunpack.c.l.s4 1934713408
        %v928 = vunpack.c.0.s8 %v927
        %v929 = vperm.slane %v921, %v928
        %v930 = vrot.slane %v913, 4
        %v931 = vsel %vm834, %v930, %v889
        %v932 = vrot.slane %v889, 4
        %v933 = vsel %vm834, %v913, %v932
        %v934 = vrot.slane %v917, 4
        %v935 = vsel %vm834, %v934, %v893
        %v936 = vrot.slane %v893, 4
        %v937 = vsel %vm834, %v917, %v936
        %v938 = vrot.slane %v925, 4
        %v939 = vsel %vm834, %v938, %v901
        %v940 = vrot.slane %v901, 4
        %v941 = vsel %vm834, %v925, %v940
        %v942 = vrot.slane %v929, 4
        %v943 = vsel %vm834, %v942, %v905
        %v944 = vrot.slane %v905, 4
        %v945 = vsel %vm834, %v929, %v944
        %v946 = vrot.slane %v736, 4
        %v947 = vsel %vm834, %v946, %v724
        %v948 = vrot.slane %v724, 4
        %v949 = vsel %vm834, %v736, %v948
        %v951 = vunpack.c.l.s4 1983009808
        %v952 = vunpack.c.0.s8 %v951
        %v953 = vperm.slane %v947, %v952
        %v955 = vunpack.c.l.s4 1983009808
        %v956 = vunpack.c.0.s8 %v955
        %v957 = vperm.slane %v949, %v956
        %v958 = vrot.slane %v742, 4
        %v959 = vsel %vm834, %v958, %v730
        %v960 = vrot.slane %v730, 4
        %v961 = vsel %vm834, %v742, %v960
        %v963 = vunpack.c.l.s4 1983009808
        %v964 = vunpack.c.0.s8 %v963
        %v965 = vperm.slane %v959, %v964
        %v967 = vunpack.c.l.s4 1983009808
        %v968 = vunpack.c.0.s8 %v967
        %v969 = vperm.slane %v961, %v968
        %v970 = vrot.slane %v760, 4
        %v971 = vsel %vm834, %v970, %v748
        %v972 = vrot.slane %v748, 4
        %v973 = vsel %vm834, %v760, %v972
        %v975 = vunpack.c.l.s4 1983009808
        %v976 = vunpack.c.0.s8 %v975
        %v977 = vperm.slane %v971, %v976
        %v979 = vunpack.c.l.s4 1983009808
        %v980 = vunpack.c.0.s8 %v979
        %v981 = vperm.slane %v973, %v980
        %v982 = vrot.slane %v766, 4
        %v983 = vsel %vm834, %v982, %v754
        %v984 = vrot.slane %v754, 4
        %v985 = vsel %vm834, %v766, %v984
        %v987 = vunpack.c.l.s4 1983009808
        %v988 = vunpack.c.0.s8 %v987
        %v989 = vperm.slane %v983, %v988
        %v991 = vunpack.c.l.s4 1983009808
        %v992 = vunpack.c.0.s8 %v991
        %v993 = vperm.slane %v985, %v992
        %v994 = vrot.slane %v965, 4
        %v995 = vsel %vm834, %v994, %v953
        %v996 = vrot.slane %v953, 4
        %v997 = vsel %vm834, %v965, %v996
        %v999 = vunpack.c.l.s4 1934713408
        %v1000 = vunpack.c.0.s8 %v999
        %v1001 = vperm.slane %v995, %v1000
        %v1003 = vunpack.c.l.s4 1934713408
        %v1004 = vunpack.c.0.s8 %v1003
        %v1005 = vperm.slane %v997, %v1004
        %v1006 = vrot.slane %v969, 4
        %v1007 = vsel %vm834, %v1006, %v957
        %v1008 = vrot.slane %v957, 4
        %v1009 = vsel %vm834, %v969, %v1008
        %v1011 = vunpack.c.l.s4 1934713408
        %v1012 = vunpack.c.0.s8 %v1011
        %v1013 = vperm.slane %v1007, %v1012
        %v1015 = vunpack.c.l.s4 1934713408
        %v1016 = vunpack.c.0.s8 %v1015
        %v1017 = vperm.slane %v1009, %v1016
        %v1018 = vrot.slane %v989, 4
        %v1019 = vsel %vm834, %v1018, %v977
        %v1020 = vrot.slane %v977, 4
        %v1021 = vsel %vm834, %v989, %v1020
        %v1023 = vunpack.c.l.s4 1934713408
        %v1024 = vunpack.c.0.s8 %v1023
        %v1025 = vperm.slane %v1019, %v1024
        %v1027 = vunpack.c.l.s4 1934713408
        %v1028 = vunpack.c.0.s8 %v1027
        %v1029 = vperm.slane %v1021, %v1028
        %v1030 = vrot.slane %v993, 4
        %v1031 = vsel %vm834, %v1030, %v981
        %v1032 = vrot.slane %v981, 4
        %v1033 = vsel %vm834, %v993, %v1032
        %v1035 = vunpack.c.l.s4 1934713408
        %v1036 = vunpack.c.0.s8 %v1035
        %v1037 = vperm.slane %v1031, %v1036
        %v1039 = vunpack.c.l.s4 1934713408
        %v1040 = vunpack.c.0.s8 %v1039
        %v1041 = vperm.slane %v1033, %v1040
        %v1042 = vrot.slane %v1025, 4
        %v1043 = vsel %vm834, %v1042, %v1001
        %v1044 = vrot.slane %v1001, 4
        %v1045 = vsel %vm834, %v1025, %v1044
        %v1046 = vrot.slane %v1029, 4
        %v1047 = vsel %vm834, %v1046, %v1005
        %v1048 = vrot.slane %v1005, 4
        %v1049 = vsel %vm834, %v1029, %v1048
        %v1050 = vrot.slane %v1037, 4
        %v1051 = vsel %vm834, %v1050, %v1013
        %v1052 = vrot.slane %v1013, 4
        %v1053 = vsel %vm834, %v1037, %v1052
        %v1054 = vrot.slane %v1041, 4
        %v1055 = vsel %vm834, %v1054, %v1017
        %v1056 = vrot.slane %v1017, 4
        %v1057 = vsel %vm834, %v1041, %v1056
        %v1058 = vrot.slane %v798, 4
        %v1059 = vsel %vm834, %v1058, %v786
        %v1060 = vrot.slane %v786, 4
        %v1061 = vsel %vm834, %v798, %v1060
        %v1063 = vunpack.c.l.s4 1983009808
        %v1064 = vunpack.c.0.s8 %v1063
        %v1065 = vperm.slane %v1059, %v1064
        %v1067 = vunpack.c.l.s4 1983009808
        %v1068 = vunpack.c.0.s8 %v1067
        %v1069 = vperm.slane %v1061, %v1068
        %v1070 = vrot.slane %v804, 4
        %v1071 = vsel %vm834, %v1070, %v792
        %v1072 = vrot.slane %v792, 4
        %v1073 = vsel %vm834, %v804, %v1072
        %v1075 = vunpack.c.l.s4 1983009808
        %v1076 = vunpack.c.0.s8 %v1075
        %v1077 = vperm.slane %v1071, %v1076
        %v1079 = vunpack.c.l.s4 1983009808
        %v1080 = vunpack.c.0.s8 %v1079
        %v1081 = vperm.slane %v1073, %v1080
        %v1082 = vrot.slane %v822, 4
        %v1083 = vsel %vm834, %v1082, %v810
        %v1084 = vrot.slane %v810, 4
        %v1085 = vsel %vm834, %v822, %v1084
        %v1087 = vunpack.c.l.s4 1983009808
        %v1088 = vunpack.c.0.s8 %v1087
        %v1089 = vperm.slane %v1083, %v1088
        %v1091 = vunpack.c.l.s4 1983009808
        %v1092 = vunpack.c.0.s8 %v1091
        %v1093 = vperm.slane %v1085, %v1092
        %v1094 = vrot.slane %v828, 4
        %v1095 = vsel %vm834, %v1094, %v816
        %v1096 = vrot.slane %v816, 4
        %v1097 = vsel %vm834, %v828, %v1096
        %v1099 = vunpack.c.l.s4 1983009808
        %v1100 = vunpack.c.0.s8 %v1099
        %v1101 = vperm.slane %v1095, %v1100
        %v1103 = vunpack.c.l.s4 1983009808
        %v1104 = vunpack.c.0.s8 %v1103
        %v1105 = vperm.slane %v1097, %v1104
        %v1106 = vrot.slane %v1077, 4
        %v1107 = vsel %vm834, %v1106, %v1065
        %v1108 = vrot.slane %v1065, 4
        %v1109 = vsel %vm834, %v1077, %v1108
        %v1111 = vunpack.c.l.s4 1934713408
        %v1112 = vunpack.c.0.s8 %v1111
        %v1113 = vperm.slane %v1107, %v1112
        %v1115 = vunpack.c.l.s4 1934713408
        %v1116 = vunpack.c.0.s8 %v1115
        %v1117 = vperm.slane %v1109, %v1116
        %v1118 = vrot.slane %v1081, 4
        %v1119 = vsel %vm834, %v1118, %v1069
        %v1120 = vrot.slane %v1069, 4
        %v1121 = vsel %vm834, %v1081, %v1120
        %v1123 = vunpack.c.l.s4 1934713408
        %v1124 = vunpack.c.0.s8 %v1123
        %v1125 = vperm.slane %v1119, %v1124
        %v1127 = vunpack.c.l.s4 1934713408
        %v1128 = vunpack.c.0.s8 %v1127
        %v1129 = vperm.slane %v1121, %v1128
        %v1130 = vrot.slane %v1101, 4
        %v1131 = vsel %vm834, %v1130, %v1089
        %v1132 = vrot.slane %v1089, 4
        %v1133 = vsel %vm834, %v1101, %v1132
        %v1135 = vunpack.c.l.s4 1934713408
        %v1136 = vunpack.c.0.s8 %v1135
        %v1137 = vperm.slane %v1131, %v1136
        %v1139 = vunpack.c.l.s4 1934713408
        %v1140 = vunpack.c.0.s8 %v1139
        %v1141 = vperm.slane %v1133, %v1140
        %v1142 = vrot.slane %v1105, 4
        %v1143 = vsel %vm834, %v1142, %v1093
        %v1144 = vrot.slane %v1093, 4
        %v1145 = vsel %vm834, %v1105, %v1144
        %v1147 = vunpack.c.l.s4 1934713408
        %v1148 = vunpack.c.0.s8 %v1147
        %v1149 = vperm.slane %v1143, %v1148
        %v1151 = vunpack.c.l.s4 1934713408
        %v1152 = vunpack.c.0.s8 %v1151
        %v1153 = vperm.slane %v1145, %v1152
        %v1154 = vrot.slane %v1137, 4
        %v1155 = vsel %vm834, %v1154, %v1113
        %v1156 = vrot.slane %v1113, 4
        %v1157 = vsel %vm834, %v1137, %v1156
        %v1158 = vrot.slane %v1141, 4
        %v1159 = vsel %vm834, %v1158, %v1117
        %v1160 = vrot.slane %v1117, 4
        %v1161 = vsel %vm834, %v1141, %v1160
        %v1162 = vrot.slane %v1149, 4
        %v1163 = vsel %vm834, %v1162, %v1125
        %v1164 = vrot.slane %v1125, 4
        %v1165 = vsel %vm834, %v1149, %v1164
        %v1166 = vrot.slane %v1153, 4
        %v1167 = vsel %vm834, %v1166, %v1129
        %v1168 = vrot.slane %v1129, 4
        %v1169 = vsel %vm834, %v1153, %v1168
        %v1170 = vrot.slane %v801, 4
        %v1171 = vsel %vm834, %v1170, %v789
        %v1172 = vrot.slane %v789, 4
        %v1173 = vsel %vm834, %v801, %v1172
        %v1175 = vunpack.c.l.s4 1983009808
        %v1176 = vunpack.c.0.s8 %v1175
        %v1177 = vperm.slane %v1171, %v1176
        %v1179 = vunpack.c.l.s4 1983009808
        %v1180 = vunpack.c.0.s8 %v1179
        %v1181 = vperm.slane %v1173, %v1180
        %v1182 = vrot.slane %v807, 4
        %v1183 = vsel %vm834, %v1182, %v795
        %v1184 = vrot.slane %v795, 4
        %v1185 = vsel %vm834, %v807, %v1184
        %v1187 = vunpack.c.l.s4 1983009808
        %v1188 = vunpack.c.0.s8 %v1187
        %v1189 = vperm.slane %v1183, %v1188
        %v1191 = vunpack.c.l.s4 1983009808
        %v1192 = vunpack.c.0.s8 %v1191
        %v1193 = vperm.slane %v1185, %v1192
        %v1194 = vrot.slane %v825, 4
        %v1195 = vsel %vm834, %v1194, %v813
        %v1196 = vrot.slane %v813, 4
        %v1197 = vsel %vm834, %v825, %v1196
        %v1199 = vunpack.c.l.s4 1983009808
        %v1200 = vunpack.c.0.s8 %v1199
        %v1201 = vperm.slane %v1195, %v1200
        %v1203 = vunpack.c.l.s4 1983009808
        %v1204 = vunpack.c.0.s8 %v1203
        %v1205 = vperm.slane %v1197, %v1204
        %v1206 = vrot.slane %v831, 4
        %v1207 = vsel %vm834, %v1206, %v819
        %v1208 = vrot.slane %v819, 4
        %v1209 = vsel %vm834, %v831, %v1208
        %v1211 = vunpack.c.l.s4 1983009808
        %v1212 = vunpack.c.0.s8 %v1211
        %v1213 = vperm.slane %v1207, %v1212
        %v1215 = vunpack.c.l.s4 1983009808
        %v1216 = vunpack.c.0.s8 %v1215
        %v1217 = vperm.slane %v1209, %v1216
        %v1218 = vrot.slane %v1189, 4
        %v1219 = vsel %vm834, %v1218, %v1177
        %v1220 = vrot.slane %v1177, 4
        %v1221 = vsel %vm834, %v1189, %v1220
        %v1223 = vunpack.c.l.s4 1934713408
        %v1224 = vunpack.c.0.s8 %v1223
        %v1225 = vperm.slane %v1219, %v1224
        %v1227 = vunpack.c.l.s4 1934713408
        %v1228 = vunpack.c.0.s8 %v1227
        %v1229 = vperm.slane %v1221, %v1228
        %v1230 = vrot.slane %v1193, 4
        %v1231 = vsel %vm834, %v1230, %v1181
        %v1232 = vrot.slane %v1181, 4
        %v1233 = vsel %vm834, %v1193, %v1232
        %v1235 = vunpack.c.l.s4 1934713408
        %v1236 = vunpack.c.0.s8 %v1235
        %v1237 = vperm.slane %v1231, %v1236
        %v1239 = vunpack.c.l.s4 1934713408
        %v1240 = vunpack.c.0.s8 %v1239
        %v1241 = vperm.slane %v1233, %v1240
        %v1242 = vrot.slane %v1213, 4
        %v1243 = vsel %vm834, %v1242, %v1201
        %v1244 = vrot.slane %v1201, 4
        %v1245 = vsel %vm834, %v1213, %v1244
        %v1247 = vunpack.c.l.s4 1934713408
        %v1248 = vunpack.c.0.s8 %v1247
        %v1249 = vperm.slane %v1243, %v1248
        %v1251 = vunpack.c.l.s4 1934713408
        %v1252 = vunpack.c.0.s8 %v1251
        %v1253 = vperm.slane %v1245, %v1252
        %v1254 = vrot.slane %v1217, 4
        %v1255 = vsel %vm834, %v1254, %v1205
        %v1256 = vrot.slane %v1205, 4
        %v1257 = vsel %vm834, %v1217, %v1256
        %v1259 = vunpack.c.l.s4 1934713408
        %v1260 = vunpack.c.0.s8 %v1259
        %v1261 = vperm.slane %v1255, %v1260
        %v1263 = vunpack.c.l.s4 1934713408
        %v1264 = vunpack.c.0.s8 %v1263
        %v1265 = vperm.slane %v1257, %v1264
        %v1266 = vrot.slane %v1249, 4
        %v1267 = vsel %vm834, %v1266, %v1225
        %v1268 = vrot.slane %v1225, 4
        %v1269 = vsel %vm834, %v1249, %v1268
        %v1270 = vrot.slane %v1253, 4
        %v1271 = vsel %vm834, %v1270, %v1229
        %v1272 = vrot.slane %v1229, 4
        %v1273 = vsel %vm834, %v1253, %v1272
        %v1274 = vrot.slane %v1261, 4
        %v1275 = vsel %vm834, %v1274, %v1237
        %v1276 = vrot.slane %v1237, 4
        %v1277 = vsel %vm834, %v1261, %v1276
        %v1278 = vrot.slane %v1265, 4
        %v1279 = vsel %vm834, %v1278, %v1241
        %v1280 = vrot.slane %v1241, 4
        %v1281 = vsel %vm834, %v1265, %v1280
        %1298 = vrot.lane.b32.xlu0 %v931, 112
        %v1299 = vpop.permute.xlu0 %1298
        %1300 = vrot.lane.b32.xlu0 %v933, 112
        %v1301 = vpop.permute.xlu0 %1300
        %1302 = vrot.lane.b32.xlu0 %v935, 112
        %v1303 = vpop.permute.xlu0 %1302
        %1304 = vrot.lane.b32.xlu0 %v937, 112
        %v1305 = vpop.permute.xlu0 %1304
        %1306 = vrot.lane.b32.xlu0 %v939, 112
        %v1307 = vpop.permute.xlu0 %1306
        %1308 = vrot.lane.b32.xlu0 %v941, 112
        %v1309 = vpop.permute.xlu0 %1308
        %1310 = vrot.lane.b32.xlu0 %v943, 112
        %v1311 = vpop.permute.xlu0 %1310
        %1312 = vrot.lane.b32.xlu0 %v945, 112
        %v1313 = vpop.permute.xlu0 %1312
        %1314 = vrot.lane.b32.xlu0 %v1043, 112
        %v1315 = vpop.permute.xlu0 %1314
        %1316 = vrot.lane.b32.xlu0 %v1045, 112
        %v1317 = vpop.permute.xlu0 %1316
        %1318 = vrot.lane.b32.xlu0 %v1047, 112
        %v1319 = vpop.permute.xlu0 %1318
        %1320 = vrot.lane.b32.xlu0 %v1049, 112
        %v1321 = vpop.permute.xlu0 %1320
        %1322 = vrot.lane.b32.xlu0 %v1051, 112
        %v1323 = vpop.permute.xlu0 %1322
        %1324 = vrot.lane.b32.xlu0 %v1053, 112
        %v1325 = vpop.permute.xlu0 %1324
        %1326 = vrot.lane.b32.xlu0 %v1055, 112
        %v1327 = vpop.permute.xlu0 %1326
        %1328 = vrot.lane.b32.xlu0 %v1057, 112
        %v1329 = vpop.permute.xlu0 %1328
        %1330 = vrot.lane.b32.xlu0 %v931, 96
        %v1331 = vpop.permute.xlu0 %1330
        %1332 = vrot.lane.b32.xlu0 %v933, 96
        %v1333 = vpop.permute.xlu0 %1332
        %1334 = vrot.lane.b32.xlu0 %v935, 96
        %v1335 = vpop.permute.xlu0 %1334
        %1336 = vrot.lane.b32.xlu0 %v937, 96
        %v1337 = vpop.permute.xlu0 %1336
        %1338 = vrot.lane.b32.xlu0 %v939, 96
        %v1339 = vpop.permute.xlu0 %1338
        %1340 = vrot.lane.b32.xlu0 %v941, 96
        %v1341 = vpop.permute.xlu0 %1340
        %1342 = vrot.lane.b32.xlu0 %v943, 96
        %v1343 = vpop.permute.xlu0 %1342
        %1344 = vrot.lane.b32.xlu0 %v945, 96
        %v1345 = vpop.permute.xlu0 %1344
        %1346 = vrot.lane.b32.xlu0 %v1043, 96
        %v1347 = vpop.permute.xlu0 %1346
        %1348 = vrot.lane.b32.xlu0 %v1045, 96
        %v1349 = vpop.permute.xlu0 %1348
        %1350 = vrot.lane.b32.xlu0 %v1047, 96
        %v1351 = vpop.permute.xlu0 %1350
        %1352 = vrot.lane.b32.xlu0 %v1049, 96
        %v1353 = vpop.permute.xlu0 %1352
        %1354 = vrot.lane.b32.xlu0 %v1051, 96
        %v1355 = vpop.permute.xlu0 %1354
        %1356 = vrot.lane.b32.xlu0 %v1053, 96
        %v1357 = vpop.permute.xlu0 %1356
        %1358 = vrot.lane.b32.xlu0 %v1055, 96
        %v1359 = vpop.permute.xlu0 %1358
        %1360 = vrot.lane.b32.xlu0 %v1057, 96
        %v1361 = vpop.permute.xlu0 %1360
        %1362 = vrot.lane.b32.xlu0 %v931, 80
        %v1363 = vpop.permute.xlu0 %1362
        %1364 = vrot.lane.b32.xlu0 %v933, 80
        %v1365 = vpop.permute.xlu0 %1364
        %1366 = vrot.lane.b32.xlu0 %v935, 80
        %v1367 = vpop.permute.xlu0 %1366
        %1368 = vrot.lane.b32.xlu0 %v937, 80
        %v1369 = vpop.permute.xlu0 %1368
        %1370 = vrot.lane.b32.xlu0 %v939, 80
        %v1371 = vpop.permute.xlu0 %1370
        %1372 = vrot.lane.b32.xlu0 %v941, 80
        %v1373 = vpop.permute.xlu0 %1372
        %1374 = vrot.lane.b32.xlu0 %v943, 80
        %v1375 = vpop.permute.xlu0 %1374
        %1376 = vrot.lane.b32.xlu0 %v945, 80
        %v1377 = vpop.permute.xlu0 %1376
        %1378 = vrot.lane.b32.xlu0 %v1043, 80
        %v1379 = vpop.permute.xlu0 %1378
        %1380 = vrot.lane.b32.xlu0 %v1045, 80
        %v1381 = vpop.permute.xlu0 %1380
        %1382 = vrot.lane.b32.xlu0 %v1047, 80
        %v1383 = vpop.permute.xlu0 %1382
        %1384 = vrot.lane.b32.xlu0 %v1049, 80
        %v1385 = vpop.permute.xlu0 %1384
        %1386 = vrot.lane.b32.xlu0 %v1051, 80
        %v1387 = vpop.permute.xlu0 %1386
        %1388 = vrot.lane.b32.xlu0 %v1053, 80
        %v1389 = vpop.permute.xlu0 %1388
        %1390 = vrot.lane.b32.xlu0 %v1055, 80
        %v1391 = vpop.permute.xlu0 %1390
        %1392 = vrot.lane.b32.xlu0 %v1057, 80
        %v1393 = vpop.permute.xlu0 %1392
        %1394 = vrot.lane.b32.xlu0 %v931, 64
        %v1395 = vpop.permute.xlu0 %1394
        %1396 = vrot.lane.b32.xlu0 %v933, 64
        %v1397 = vpop.permute.xlu0 %1396
        %1398 = vrot.lane.b32.xlu0 %v935, 64
        %v1399 = vpop.permute.xlu0 %1398
        %1400 = vrot.lane.b32.xlu0 %v937, 64
        %v1401 = vpop.permute.xlu0 %1400
        %1402 = vrot.lane.b32.xlu0 %v939, 64
        %v1403 = vpop.permute.xlu0 %1402
        %1404 = vrot.lane.b32.xlu0 %v941, 64
        %v1405 = vpop.permute.xlu0 %1404
        %1406 = vrot.lane.b32.xlu0 %v943, 64
        %v1407 = vpop.permute.xlu0 %1406
        %1408 = vrot.lane.b32.xlu0 %v945, 64
        %v1409 = vpop.permute.xlu0 %1408
        %1410 = vrot.lane.b32.xlu0 %v1043, 64
        %v1411 = vpop.permute.xlu0 %1410
        %1412 = vrot.lane.b32.xlu0 %v1045, 64
        %v1413 = vpop.permute.xlu0 %1412
        %1414 = vrot.lane.b32.xlu0 %v1047, 64
        %v1415 = vpop.permute.xlu0 %1414
        %1416 = vrot.lane.b32.xlu0 %v1049, 64
        %v1417 = vpop.permute.xlu0 %1416
        %1418 = vrot.lane.b32.xlu0 %v1051, 64
        %v1419 = vpop.permute.xlu0 %1418
        %1420 = vrot.lane.b32.xlu0 %v1053, 64
        %v1421 = vpop.permute.xlu0 %1420
        %1422 = vrot.lane.b32.xlu0 %v1055, 64
        %v1423 = vpop.permute.xlu0 %1422
        %1424 = vrot.lane.b32.xlu0 %v1057, 64
        %v1425 = vpop.permute.xlu0 %1424
        %1426 = vrot.lane.b32.xlu0 %v931, 48
        %v1427 = vpop.permute.xlu0 %1426
        %1428 = vrot.lane.b32.xlu0 %v933, 48
        %v1429 = vpop.permute.xlu0 %1428
        %1430 = vrot.lane.b32.xlu0 %v935, 48
        %v1431 = vpop.permute.xlu0 %1430
        %1432 = vrot.lane.b32.xlu0 %v937, 48
        %v1433 = vpop.permute.xlu0 %1432
        %1434 = vrot.lane.b32.xlu0 %v939, 48
        %v1435 = vpop.permute.xlu0 %1434
        %1436 = vrot.lane.b32.xlu0 %v941, 48
        %v1437 = vpop.permute.xlu0 %1436
        %1438 = vrot.lane.b32.xlu0 %v943, 48
        %v1439 = vpop.permute.xlu0 %1438
        %1440 = vrot.lane.b32.xlu0 %v945, 48
        %v1441 = vpop.permute.xlu0 %1440
        %1442 = vrot.lane.b32.xlu0 %v1043, 48
        %v1443 = vpop.permute.xlu0 %1442
        %1444 = vrot.lane.b32.xlu0 %v1045, 48
        %v1445 = vpop.permute.xlu0 %1444
        %1446 = vrot.lane.b32.xlu0 %v1047, 48
        %v1447 = vpop.permute.xlu0 %1446
        %1448 = vrot.lane.b32.xlu0 %v1049, 48
        %v1449 = vpop.permute.xlu0 %1448
        %1450 = vrot.lane.b32.xlu0 %v1051, 48
        %v1451 = vpop.permute.xlu0 %1450
        %1452 = vrot.lane.b32.xlu0 %v1053, 48
        %v1453 = vpop.permute.xlu0 %1452
        %1454 = vrot.lane.b32.xlu0 %v1055, 48
        %v1455 = vpop.permute.xlu0 %1454
        %1456 = vrot.lane.b32.xlu0 %v1057, 48
        %v1457 = vpop.permute.xlu0 %1456
        %1458 = vrot.lane.b32.xlu0 %v931, 32
        %v1459 = vpop.permute.xlu0 %1458
        %1460 = vrot.lane.b32.xlu0 %v933, 32
        %v1461 = vpop.permute.xlu0 %1460
        %1462 = vrot.lane.b32.xlu0 %v935, 32
        %v1463 = vpop.permute.xlu0 %1462
        %1464 = vrot.lane.b32.xlu0 %v937, 32
        %v1465 = vpop.permute.xlu0 %1464
        %1466 = vrot.lane.b32.xlu0 %v939, 32
        %v1467 = vpop.permute.xlu0 %1466
        %1468 = vrot.lane.b32.xlu0 %v941, 32
        %v1469 = vpop.permute.xlu0 %1468
        %1470 = vrot.lane.b32.xlu0 %v943, 32
        %v1471 = vpop.permute.xlu0 %1470
        %1472 = vrot.lane.b32.xlu0 %v945, 32
        %v1473 = vpop.permute.xlu0 %1472
        %1474 = vrot.lane.b32.xlu0 %v1043, 32
        %v1475 = vpop.permute.xlu0 %1474
        %1476 = vrot.lane.b32.xlu0 %v1045, 32
        %v1477 = vpop.permute.xlu0 %1476
        %1478 = vrot.lane.b32.xlu0 %v1047, 32
        %v1479 = vpop.permute.xlu0 %1478
        %1480 = vrot.lane.b32.xlu0 %v1049, 32
        %v1481 = vpop.permute.xlu0 %1480
        %1482 = vrot.lane.b32.xlu0 %v1051, 32
        %v1483 = vpop.permute.xlu0 %1482
        %1484 = vrot.lane.b32.xlu0 %v1053, 32
        %v1485 = vpop.permute.xlu0 %1484
        %1486 = vrot.lane.b32.xlu0 %v1055, 32
        %v1487 = vpop.permute.xlu0 %1486
        %1488 = vrot.lane.b32.xlu0 %v1057, 32
        %v1489 = vpop.permute.xlu0 %1488
        %1490 = vrot.lane.b32.xlu0 %v931, 16
        %v1491 = vpop.permute.xlu0 %1490
        %1492 = vrot.lane.b32.xlu0 %v933, 16
        %v1493 = vpop.permute.xlu0 %1492
        %1494 = vrot.lane.b32.xlu0 %v935, 16
        %v1495 = vpop.permute.xlu0 %1494
        %1496 = vrot.lane.b32.xlu0 %v937, 16
        %v1497 = vpop.permute.xlu0 %1496
        %1498 = vrot.lane.b32.xlu0 %v939, 16
        %v1499 = vpop.permute.xlu0 %1498
        %1500 = vrot.lane.b32.xlu0 %v941, 16
        %v1501 = vpop.permute.xlu0 %1500
        %1502 = vrot.lane.b32.xlu0 %v943, 16
        %v1503 = vpop.permute.xlu0 %1502
        %1504 = vrot.lane.b32.xlu0 %v945, 16
        %v1505 = vpop.permute.xlu0 %1504
        %1506 = vrot.lane.b32.xlu0 %v1043, 16
        %v1507 = vpop.permute.xlu0 %1506
        %1508 = vrot.lane.b32.xlu0 %v1045, 16
        %v1509 = vpop.permute.xlu0 %1508
        %1510 = vrot.lane.b32.xlu0 %v1047, 16
        %v1511 = vpop.permute.xlu0 %1510
        %1512 = vrot.lane.b32.xlu0 %v1049, 16
        %v1513 = vpop.permute.xlu0 %1512
        %1514 = vrot.lane.b32.xlu0 %v1051, 16
        %v1515 = vpop.permute.xlu0 %1514
        %1516 = vrot.lane.b32.xlu0 %v1053, 16
        %v1517 = vpop.permute.xlu0 %1516
        %1518 = vrot.lane.b32.xlu0 %v1055, 16
        %v1519 = vpop.permute.xlu0 %1518
        %1520 = vrot.lane.b32.xlu0 %v1057, 16
        %v1521 = vpop.permute.xlu0 %1520
        %1538 = vrot.lane.b32.xlu0 %v1155, 112
        %v1539 = vpop.permute.xlu0 %1538
        %1540 = vrot.lane.b32.xlu0 %v1157, 112
        %v1541 = vpop.permute.xlu0 %1540
        %1542 = vrot.lane.b32.xlu0 %v1159, 112
        %v1543 = vpop.permute.xlu0 %1542
        %1544 = vrot.lane.b32.xlu0 %v1161, 112
        %v1545 = vpop.permute.xlu0 %1544
        %1546 = vrot.lane.b32.xlu0 %v1163, 112
        %v1547 = vpop.permute.xlu0 %1546
        %1548 = vrot.lane.b32.xlu0 %v1165, 112
        %v1549 = vpop.permute.xlu0 %1548
        %1550 = vrot.lane.b32.xlu0 %v1167, 112
        %v1551 = vpop.permute.xlu0 %1550
        %1552 = vrot.lane.b32.xlu0 %v1169, 112
        %v1553 = vpop.permute.xlu0 %1552
        %1554 = vrot.lane.b32.xlu0 %v1267, 112
        %v1555 = vpop.permute.xlu0 %1554
        %1556 = vrot.lane.b32.xlu0 %v1269, 112
        %v1557 = vpop.permute.xlu0 %1556
        %1558 = vrot.lane.b32.xlu0 %v1271, 112
        %v1559 = vpop.permute.xlu0 %1558
        %1560 = vrot.lane.b32.xlu0 %v1273, 112
        %v1561 = vpop.permute.xlu0 %1560
        %1562 = vrot.lane.b32.xlu0 %v1275, 112
        %v1563 = vpop.permute.xlu0 %1562
        %1564 = vrot.lane.b32.xlu0 %v1277, 112
        %v1565 = vpop.permute.xlu0 %1564
        %1566 = vrot.lane.b32.xlu0 %v1279, 112
        %v1567 = vpop.permute.xlu0 %1566
        %1568 = vrot.lane.b32.xlu0 %v1281, 112
        %v1569 = vpop.permute.xlu0 %1568
        %1586 = vrot.lane.b32.xlu0 %v1155, 96
        %v1587 = vpop.permute.xlu0 %1586
        %1588 = vrot.lane.b32.xlu0 %v1157, 96
        %v1589 = vpop.permute.xlu0 %1588
        %1590 = vrot.lane.b32.xlu0 %v1159, 96
        %v1591 = vpop.permute.xlu0 %1590
        %1592 = vrot.lane.b32.xlu0 %v1161, 96
        %v1593 = vpop.permute.xlu0 %1592
        %1594 = vrot.lane.b32.xlu0 %v1163, 96
        %v1595 = vpop.permute.xlu0 %1594
        %1596 = vrot.lane.b32.xlu0 %v1165, 96
        %v1597 = vpop.permute.xlu0 %1596
        %1598 = vrot.lane.b32.xlu0 %v1167, 96
        %v1599 = vpop.permute.xlu0 %1598
        %1600 = vrot.lane.b32.xlu0 %v1169, 96
        %v1601 = vpop.permute.xlu0 %1600
        %1602 = vrot.lane.b32.xlu0 %v1267, 96
        %v1603 = vpop.permute.xlu0 %1602
        %1604 = vrot.lane.b32.xlu0 %v1269, 96
        %v1605 = vpop.permute.xlu0 %1604
        %1606 = vrot.lane.b32.xlu0 %v1271, 96
        %v1607 = vpop.permute.xlu0 %1606
        %1608 = vrot.lane.b32.xlu0 %v1273, 96
        %v1609 = vpop.permute.xlu0 %1608
        %1610 = vrot.lane.b32.xlu0 %v1275, 96
        %v1611 = vpop.permute.xlu0 %1610
        %1612 = vrot.lane.b32.xlu0 %v1277, 96
        %v1613 = vpop.permute.xlu0 %1612
        %1614 = vrot.lane.b32.xlu0 %v1279, 96
        %v1615 = vpop.permute.xlu0 %1614
        %1616 = vrot.lane.b32.xlu0 %v1281, 96
        %v1617 = vpop.permute.xlu0 %1616
        %1634 = vrot.lane.b32.xlu0 %v1155, 80
        %v1635 = vpop.permute.xlu0 %1634
        %1636 = vrot.lane.b32.xlu0 %v1157, 80
        %v1637 = vpop.permute.xlu0 %1636
        %1638 = vrot.lane.b32.xlu0 %v1159, 80
        %v1639 = vpop.permute.xlu0 %1638
        %1640 = vrot.lane.b32.xlu0 %v1161, 80
        %v1641 = vpop.permute.xlu0 %1640
        %1642 = vrot.lane.b32.xlu0 %v1163, 80
        %v1643 = vpop.permute.xlu0 %1642
        %1644 = vrot.lane.b32.xlu0 %v1165, 80
        %v1645 = vpop.permute.xlu0 %1644
        %1646 = vrot.lane.b32.xlu0 %v1167, 80
        %v1647 = vpop.permute.xlu0 %1646
        %1648 = vrot.lane.b32.xlu0 %v1169, 80
        %v1649 = vpop.permute.xlu0 %1648
        %1650 = vrot.lane.b32.xlu0 %v1267, 80
        %v1651 = vpop.permute.xlu0 %1650
        %1652 = vrot.lane.b32.xlu0 %v1269, 80
        %v1653 = vpop.permute.xlu0 %1652
        %1654 = vrot.lane.b32.xlu0 %v1271, 80
        %v1655 = vpop.permute.xlu0 %1654
        %1656 = vrot.lane.b32.xlu0 %v1273, 80
        %v1657 = vpop.permute.xlu0 %1656
        %1658 = vrot.lane.b32.xlu0 %v1275, 80
        %v1659 = vpop.permute.xlu0 %1658
        %1660 = vrot.lane.b32.xlu0 %v1277, 80
        %v1661 = vpop.permute.xlu0 %1660
        %1662 = vrot.lane.b32.xlu0 %v1279, 80
        %v1663 = vpop.permute.xlu0 %1662
        %1664 = vrot.lane.b32.xlu0 %v1281, 80
        %v1665 = vpop.permute.xlu0 %1664
        %vm1682 = vcmask 130048
        %v1683 = vsel %vm1682, %v931, 0
        %v1685 = vsel %vm1682, %v1395, 0
        %1687 = vmatpush.xpose.msra.mxu0 0.0
        %1688 = vmatpush.xpose.msra.mxu0 0.0
        %1689 = vmatpush.xpose.msra.mxu0 0.0
        %1690 = vmatpush.xpose.msra.mxu0 0.0
        %1691 = vmatpush.xpose.msra.mxu0 0.0
        %1692 = vmatpush.xpose.msra.mxu0 0.0
        %1693 = vmatpush.xpose.msra.mxu0 0.0
        %1694 = vmatpush.xpose.msra.mxu0 0.0
        %1695 = vmatpush.xpose.msra.mxu0 0.0
        %1696 = vmatpush.xpose.msra.mxu0 0.0
        %1697 = vmatpush.xpose.msra.mxu0 0.0
        %1698 = vmatpush.xpose.msra.mxu0 0.0
        %1699 = vmatpush.xpose.msra.mxu0 0.0
        %1700 = vmatpush.xpose.msra.mxu0 0.0
        %1701 = vmatpush.xpose.msra.mxu0 0.0
        %1702 = vmatpush.xpose.msra.mxu0 %v1685
        %1703 = vmatmul.f32.gmra.mxu0 %v1683
        %v1704 = vpop.f32.mrf.mxu0
        %v1705 = vadd.f32 0.0, %v1704
        %1706 = vdwg.mxu0
        %v1707 = vsel %vm1682, %v933, 0
        %v1709 = vsel %vm1682, %v1397, 0
        %1711 = vmatpush.xpose.msra.mxu0 0.0
        %1712 = vmatpush.xpose.msra.mxu0 0.0
        %1713 = vmatpush.xpose.msra.mxu0 0.0
        %1714 = vmatpush.xpose.msra.mxu0 0.0
        %1715 = vmatpush.xpose.msra.mxu0 0.0
        %1716 = vmatpush.xpose.msra.mxu0 0.0
        %1717 = vmatpush.xpose.msra.mxu0 0.0
        %1718 = vmatpush.xpose.msra.mxu0 0.0
        %1719 = vmatpush.xpose.msra.mxu0 0.0
        %1720 = vmatpush.xpose.msra.mxu0 0.0
        %1721 = vmatpush.xpose.msra.mxu0 0.0
        %1722 = vmatpush.xpose.msra.mxu0 0.0
        %1723 = vmatpush.xpose.msra.mxu0 0.0
        %1724 = vmatpush.xpose.msra.mxu0 0.0
        %1725 = vmatpush.xpose.msra.mxu0 0.0
        %1726 = vmatpush.xpose.msra.mxu0 %v1709
        %1727 = vmatmul.f32.gmra.mxu0 %v1707
        %v1728 = vpop.f32.mrf.mxu0
        %v1729 = vadd.f32 0.0, %v1728
        %1730 = vdwg.mxu0
        %v1731 = vsel %vm1682, %v935, 0
        %v1733 = vsel %vm1682, %v1399, 0
        %1735 = vmatpush.xpose.msra.mxu0 0.0
        %1736 = vmatpush.xpose.msra.mxu0 0.0
        %1737 = vmatpush.xpose.msra.mxu0 0.0
        %1738 = vmatpush.xpose.msra.mxu0 0.0
        %1739 = vmatpush.xpose.msra.mxu0 0.0
        %1740 = vmatpush.xpose.msra.mxu0 0.0
        %1741 = vmatpush.xpose.msra.mxu0 0.0
        %1742 = vmatpush.xpose.msra.mxu0 0.0
        %1743 = vmatpush.xpose.msra.mxu0 0.0
        %1744 = vmatpush.xpose.msra.mxu0 0.0
        %1745 = vmatpush.xpose.msra.mxu0 0.0
        %1746 = vmatpush.xpose.msra.mxu0 0.0
        %1747 = vmatpush.xpose.msra.mxu0 0.0
        %1748 = vmatpush.xpose.msra.mxu0 0.0
        %1749 = vmatpush.xpose.msra.mxu0 0.0
        %1750 = vmatpush.xpose.msra.mxu0 %v1733
        %1751 = vmatmul.f32.gmra.mxu0 %v1731
        %v1752 = vpop.f32.mrf.mxu0
        %v1753 = vadd.f32 0.0, %v1752
        %1754 = vdwg.mxu0
        %v1755 = vsel %vm1682, %v937, 0
        %v1757 = vsel %vm1682, %v1401, 0
        %1759 = vmatpush.xpose.msra.mxu0 0.0
        %1760 = vmatpush.xpose.msra.mxu0 0.0
        %1761 = vmatpush.xpose.msra.mxu0 0.0
        %1762 = vmatpush.xpose.msra.mxu0 0.0
        %1763 = vmatpush.xpose.msra.mxu0 0.0
        %1764 = vmatpush.xpose.msra.mxu0 0.0
        %1765 = vmatpush.xpose.msra.mxu0 0.0
        %1766 = vmatpush.xpose.msra.mxu0 0.0
        %1767 = vmatpush.xpose.msra.mxu0 0.0
        %1768 = vmatpush.xpose.msra.mxu0 0.0
        %1769 = vmatpush.xpose.msra.mxu0 0.0
        %1770 = vmatpush.xpose.msra.mxu0 0.0
        %1771 = vmatpush.xpose.msra.mxu0 0.0
        %1772 = vmatpush.xpose.msra.mxu0 0.0
        %1773 = vmatpush.xpose.msra.mxu0 0.0
        %1774 = vmatpush.xpose.msra.mxu0 %v1757
        %1775 = vmatmul.f32.gmra.mxu0 %v1755
        %v1776 = vpop.f32.mrf.mxu0
        %v1777 = vadd.f32 0.0, %v1776
        %1778 = vdwg.mxu0
        %v1779 = vsel %vm1682, %v939, 0
        %v1781 = vsel %vm1682, %v1403, 0
        %1783 = vmatpush.xpose.msra.mxu0 0.0
        %1784 = vmatpush.xpose.msra.mxu0 0.0
        %1785 = vmatpush.xpose.msra.mxu0 0.0
        %1786 = vmatpush.xpose.msra.mxu0 0.0
        %1787 = vmatpush.xpose.msra.mxu0 0.0
        %1788 = vmatpush.xpose.msra.mxu0 0.0
        %1789 = vmatpush.xpose.msra.mxu0 0.0
        %1790 = vmatpush.xpose.msra.mxu0 0.0
        %1791 = vmatpush.xpose.msra.mxu0 0.0
        %1792 = vmatpush.xpose.msra.mxu0 0.0
        %1793 = vmatpush.xpose.msra.mxu0 0.0
        %1794 = vmatpush.xpose.msra.mxu0 0.0
        %1795 = vmatpush.xpose.msra.mxu0 0.0
        %1796 = vmatpush.xpose.msra.mxu0 0.0
        %1797 = vmatpush.xpose.msra.mxu0 0.0
        %1798 = vmatpush.xpose.msra.mxu0 %v1781
        %1799 = vmatmul.f32.gmra.mxu0 %v1779
        %v1800 = vpop.f32.mrf.mxu0
        %v1801 = vadd.f32 0.0, %v1800
        %1802 = vdwg.mxu0
        %v1803 = vsel %vm1682, %v941, 0
        %v1805 = vsel %vm1682, %v1405, 0
        %1807 = vmatpush.xpose.msra.mxu0 0.0
        %1808 = vmatpush.xpose.msra.mxu0 0.0
        %1809 = vmatpush.xpose.msra.mxu0 0.0
        %1810 = vmatpush.xpose.msra.mxu0 0.0
        %1811 = vmatpush.xpose.msra.mxu0 0.0
        %1812 = vmatpush.xpose.msra.mxu0 0.0
        %1813 = vmatpush.xpose.msra.mxu0 0.0
        %1814 = vmatpush.xpose.msra.mxu0 0.0
        %1815 = vmatpush.xpose.msra.mxu0 0.0
        %1816 = vmatpush.xpose.msra.mxu0 0.0
        %1817 = vmatpush.xpose.msra.mxu0 0.0
        %1818 = vmatpush.xpose.msra.mxu0 0.0
        %1819 = vmatpush.xpose.msra.mxu0 0.0
        %1820 = vmatpush.xpose.msra.mxu0 0.0
        %1821 = vmatpush.xpose.msra.mxu0 0.0
        %1822 = vmatpush.xpose.msra.mxu0 %v1805
        %1823 = vmatmul.f32.gmra.mxu0 %v1803
        %v1824 = vpop.f32.mrf.mxu0
        %v1825 = vadd.f32 0.0, %v1824
        %1826 = vdwg.mxu0
        %v1827 = vsel %vm1682, %v943, 0
        %v1829 = vsel %vm1682, %v1407, 0
        %1831 = vmatpush.xpose.msra.mxu0 0.0
        %1832 = vmatpush.xpose.msra.mxu0 0.0
        %1833 = vmatpush.xpose.msra.mxu0 0.0
        %1834 = vmatpush.xpose.msra.mxu0 0.0
        %1835 = vmatpush.xpose.msra.mxu0 0.0
        %1836 = vmatpush.xpose.msra.mxu0 0.0
        %1837 = vmatpush.xpose.msra.mxu0 0.0
        %1838 = vmatpush.xpose.msra.mxu0 0.0
        %1839 = vmatpush.xpose.msra.mxu0 0.0
        %1840 = vmatpush.xpose.msra.mxu0 0.0
        %1841 = vmatpush.xpose.msra.mxu0 0.0
        %1842 = vmatpush.xpose.msra.mxu0 0.0
        %1843 = vmatpush.xpose.msra.mxu0 0.0
        %1844 = vmatpush.xpose.msra.mxu0 0.0
        %1845 = vmatpush.xpose.msra.mxu0 0.0
        %1846 = vmatpush.xpose.msra.mxu0 %v1829
        %1847 = vmatmul.f32.gmra.mxu0 %v1827
        %v1848 = vpop.f32.mrf.mxu0
        %v1849 = vadd.f32 0.0, %v1848
        %1850 = vdwg.mxu0
        %v1851 = vsel %vm1682, %v945, 0
        %v1853 = vsel %vm1682, %v1409, 0
        %1855 = vmatpush.xpose.msra.mxu0 0.0
        %1856 = vmatpush.xpose.msra.mxu0 0.0
        %1857 = vmatpush.xpose.msra.mxu0 0.0
        %1858 = vmatpush.xpose.msra.mxu0 0.0
        %1859 = vmatpush.xpose.msra.mxu0 0.0
        %1860 = vmatpush.xpose.msra.mxu0 0.0
        %1861 = vmatpush.xpose.msra.mxu0 0.0
        %1862 = vmatpush.xpose.msra.mxu0 0.0
        %1863 = vmatpush.xpose.msra.mxu0 0.0
        %1864 = vmatpush.xpose.msra.mxu0 0.0
        %1865 = vmatpush.xpose.msra.mxu0 0.0
        %1866 = vmatpush.xpose.msra.mxu0 0.0
        %1867 = vmatpush.xpose.msra.mxu0 0.0
        %1868 = vmatpush.xpose.msra.mxu0 0.0
        %1869 = vmatpush.xpose.msra.mxu0 0.0
        %1870 = vmatpush.xpose.msra.mxu0 %v1853
        %1871 = vmatmul.f32.gmra.mxu0 %v1851
        %v1872 = vpop.f32.mrf.mxu0
        %v1873 = vadd.f32 0.0, %v1872
        %1874 = vdwg.mxu0
        %v1875 = vsel %vm1682, %v1043, 0
        %v1877 = vsel %vm1682, %v1411, 0
        %1879 = vmatpush.xpose.msra.mxu0 0.0
        %1880 = vmatpush.xpose.msra.mxu0 0.0
        %1881 = vmatpush.xpose.msra.mxu0 0.0
        %1882 = vmatpush.xpose.msra.mxu0 0.0
        %1883 = vmatpush.xpose.msra.mxu0 0.0
        %1884 = vmatpush.xpose.msra.mxu0 0.0
        %1885 = vmatpush.xpose.msra.mxu0 0.0
        %1886 = vmatpush.xpose.msra.mxu0 0.0
        %1887 = vmatpush.xpose.msra.mxu0 0.0
        %1888 = vmatpush.xpose.msra.mxu0 0.0
        %1889 = vmatpush.xpose.msra.mxu0 0.0
        %1890 = vmatpush.xpose.msra.mxu0 0.0
        %1891 = vmatpush.xpose.msra.mxu0 0.0
        %1892 = vmatpush.xpose.msra.mxu0 0.0
        %1893 = vmatpush.xpose.msra.mxu0 0.0
        %1894 = vmatpush.xpose.msra.mxu0 %v1877
        %1895 = vmatmul.f32.gmra.mxu0 %v1875
        %v1896 = vpop.f32.mrf.mxu0
        %v1897 = vadd.f32 0.0, %v1896
        %1898 = vdwg.mxu0
        %v1899 = vsel %vm1682, %v1045, 0
        %v1901 = vsel %vm1682, %v1413, 0
        %1903 = vmatpush.xpose.msra.mxu0 0.0
        %1904 = vmatpush.xpose.msra.mxu0 0.0
        %1905 = vmatpush.xpose.msra.mxu0 0.0
        %1906 = vmatpush.xpose.msra.mxu0 0.0
        %1907 = vmatpush.xpose.msra.mxu0 0.0
        %1908 = vmatpush.xpose.msra.mxu0 0.0
        %1909 = vmatpush.xpose.msra.mxu0 0.0
        %1910 = vmatpush.xpose.msra.mxu0 0.0
        %1911 = vmatpush.xpose.msra.mxu0 0.0
        %1912 = vmatpush.xpose.msra.mxu0 0.0
        %1913 = vmatpush.xpose.msra.mxu0 0.0
        %1914 = vmatpush.xpose.msra.mxu0 0.0
        %1915 = vmatpush.xpose.msra.mxu0 0.0
        %1916 = vmatpush.xpose.msra.mxu0 0.0
        %1917 = vmatpush.xpose.msra.mxu0 0.0
        %1918 = vmatpush.xpose.msra.mxu0 %v1901
        %1919 = vmatmul.f32.gmra.mxu0 %v1899
        %v1920 = vpop.f32.mrf.mxu0
        %v1921 = vadd.f32 0.0, %v1920
        %1922 = vdwg.mxu0
        %v1923 = vsel %vm1682, %v1047, 0
        %v1925 = vsel %vm1682, %v1415, 0
        %1927 = vmatpush.xpose.msra.mxu0 0.0
        %1928 = vmatpush.xpose.msra.mxu0 0.0
        %1929 = vmatpush.xpose.msra.mxu0 0.0
        %1930 = vmatpush.xpose.msra.mxu0 0.0
        %1931 = vmatpush.xpose.msra.mxu0 0.0
        %1932 = vmatpush.xpose.msra.mxu0 0.0
        %1933 = vmatpush.xpose.msra.mxu0 0.0
        %1934 = vmatpush.xpose.msra.mxu0 0.0
        %1935 = vmatpush.xpose.msra.mxu0 0.0
        %1936 = vmatpush.xpose.msra.mxu0 0.0
        %1937 = vmatpush.xpose.msra.mxu0 0.0
        %1938 = vmatpush.xpose.msra.mxu0 0.0
        %1939 = vmatpush.xpose.msra.mxu0 0.0
        %1940 = vmatpush.xpose.msra.mxu0 0.0
        %1941 = vmatpush.xpose.msra.mxu0 0.0
        %1942 = vmatpush.xpose.msra.mxu0 %v1925
        %1943 = vmatmul.f32.gmra.mxu0 %v1923
        %v1944 = vpop.f32.mrf.mxu0
        %v1945 = vadd.f32 0.0, %v1944
        %1946 = vdwg.mxu0
        %v1947 = vsel %vm1682, %v1049, 0
        %v1949 = vsel %vm1682, %v1417, 0
        %1951 = vmatpush.xpose.msra.mxu0 0.0
        %1952 = vmatpush.xpose.msra.mxu0 0.0
        %1953 = vmatpush.xpose.msra.mxu0 0.0
        %1954 = vmatpush.xpose.msra.mxu0 0.0
        %1955 = vmatpush.xpose.msra.mxu0 0.0
        %1956 = vmatpush.xpose.msra.mxu0 0.0
        %1957 = vmatpush.xpose.msra.mxu0 0.0
        %1958 = vmatpush.xpose.msra.mxu0 0.0
        %1959 = vmatpush.xpose.msra.mxu0 0.0
        %1960 = vmatpush.xpose.msra.mxu0 0.0
        %1961 = vmatpush.xpose.msra.mxu0 0.0
        %1962 = vmatpush.xpose.msra.mxu0 0.0
        %1963 = vmatpush.xpose.msra.mxu0 0.0
        %1964 = vmatpush.xpose.msra.mxu0 0.0
        %1965 = vmatpush.xpose.msra.mxu0 0.0
        %1966 = vmatpush.xpose.msra.mxu0 %v1949
        %1967 = vmatmul.f32.gmra.mxu0 %v1947
        %v1968 = vpop.f32.mrf.mxu0
        %v1969 = vadd.f32 0.0, %v1968
        %1970 = vdwg.mxu0
        %v1971 = vsel %vm1682, %v1051, 0
        %v1973 = vsel %vm1682, %v1419, 0
        %1975 = vmatpush.xpose.msra.mxu0 0.0
        %1976 = vmatpush.xpose.msra.mxu0 0.0
        %1977 = vmatpush.xpose.msra.mxu0 0.0
        %1978 = vmatpush.xpose.msra.mxu0 0.0
        %1979 = vmatpush.xpose.msra.mxu0 0.0
        %1980 = vmatpush.xpose.msra.mxu0 0.0
        %1981 = vmatpush.xpose.msra.mxu0 0.0
        %1982 = vmatpush.xpose.msra.mxu0 0.0
        %1983 = vmatpush.xpose.msra.mxu0 0.0
        %1984 = vmatpush.xpose.msra.mxu0 0.0
        %1985 = vmatpush.xpose.msra.mxu0 0.0
        %1986 = vmatpush.xpose.msra.mxu0 0.0
        %1987 = vmatpush.xpose.msra.mxu0 0.0
        %1988 = vmatpush.xpose.msra.mxu0 0.0
        %1989 = vmatpush.xpose.msra.mxu0 0.0
        %1990 = vmatpush.xpose.msra.mxu0 %v1973
        %1991 = vmatmul.f32.gmra.mxu0 %v1971
        %v1992 = vpop.f32.mrf.mxu0
        %v1993 = vadd.f32 0.0, %v1992
        %1994 = vdwg.mxu0
        %v1995 = vsel %vm1682, %v1053, 0
        %v1997 = vsel %vm1682, %v1421, 0
        %1999 = vmatpush.xpose.msra.mxu0 0.0
        %2000 = vmatpush.xpose.msra.mxu0 0.0
        %2001 = vmatpush.xpose.msra.mxu0 0.0
        %2002 = vmatpush.xpose.msra.mxu0 0.0
        %2003 = vmatpush.xpose.msra.mxu0 0.0
        %2004 = vmatpush.xpose.msra.mxu0 0.0
        %2005 = vmatpush.xpose.msra.mxu0 0.0
        %2006 = vmatpush.xpose.msra.mxu0 0.0
        %2007 = vmatpush.xpose.msra.mxu0 0.0
        %2008 = vmatpush.xpose.msra.mxu0 0.0
        %2009 = vmatpush.xpose.msra.mxu0 0.0
        %2010 = vmatpush.xpose.msra.mxu0 0.0
        %2011 = vmatpush.xpose.msra.mxu0 0.0
        %2012 = vmatpush.xpose.msra.mxu0 0.0
        %2013 = vmatpush.xpose.msra.mxu0 0.0
        %2014 = vmatpush.xpose.msra.mxu0 %v1997
        %2015 = vmatmul.f32.gmra.mxu0 %v1995
        %v2016 = vpop.f32.mrf.mxu0
        %v2017 = vadd.f32 0.0, %v2016
        %2018 = vdwg.mxu0
        %v2019 = vsel %vm1682, %v1055, 0
        %v2021 = vsel %vm1682, %v1423, 0
        %2023 = vmatpush.xpose.msra.mxu0 0.0
        %2024 = vmatpush.xpose.msra.mxu0 0.0
        %2025 = vmatpush.xpose.msra.mxu0 0.0
        %2026 = vmatpush.xpose.msra.mxu0 0.0
        %2027 = vmatpush.xpose.msra.mxu0 0.0
        %2028 = vmatpush.xpose.msra.mxu0 0.0
        %2029 = vmatpush.xpose.msra.mxu0 0.0
        %2030 = vmatpush.xpose.msra.mxu0 0.0
        %2031 = vmatpush.xpose.msra.mxu0 0.0
        %2032 = vmatpush.xpose.msra.mxu0 0.0
        %2033 = vmatpush.xpose.msra.mxu0 0.0
        %2034 = vmatpush.xpose.msra.mxu0 0.0
        %2035 = vmatpush.xpose.msra.mxu0 0.0
        %2036 = vmatpush.xpose.msra.mxu0 0.0
        %2037 = vmatpush.xpose.msra.mxu0 0.0
        %2038 = vmatpush.xpose.msra.mxu0 %v2021
        %2039 = vmatmul.f32.gmra.mxu0 %v2019
        %v2040 = vpop.f32.mrf.mxu0
        %v2041 = vadd.f32 0.0, %v2040
        %2042 = vdwg.mxu0
        %v2043 = vsel %vm1682, %v1057, 0
        %v2045 = vsel %vm1682, %v1425, 0
        %2047 = vmatpush.xpose.msra.mxu0 0.0
        %2048 = vmatpush.xpose.msra.mxu0 0.0
        %2049 = vmatpush.xpose.msra.mxu0 0.0
        %2050 = vmatpush.xpose.msra.mxu0 0.0
        %2051 = vmatpush.xpose.msra.mxu0 0.0
        %2052 = vmatpush.xpose.msra.mxu0 0.0
        %2053 = vmatpush.xpose.msra.mxu0 0.0
        %2054 = vmatpush.xpose.msra.mxu0 0.0
        %2055 = vmatpush.xpose.msra.mxu0 0.0
        %2056 = vmatpush.xpose.msra.mxu0 0.0
        %2057 = vmatpush.xpose.msra.mxu0 0.0
        %2058 = vmatpush.xpose.msra.mxu0 0.0
        %2059 = vmatpush.xpose.msra.mxu0 0.0
        %2060 = vmatpush.xpose.msra.mxu0 0.0
        %2061 = vmatpush.xpose.msra.mxu0 0.0
        %2062 = vmatpush.xpose.msra.mxu0 %v2045
        %2063 = vmatmul.f32.gmra.mxu0 %v2043
        %v2064 = vpop.f32.mrf.mxu0
        %v2065 = vadd.f32 0.0, %v2064
        %2066 = vdwg.mxu0
        %v2067 = vsel %vm1682, %v1299, 0
        %v2069 = vsel %vm1682, %v1427, 0
        %2071 = vmatpush.xpose.msra.mxu0 0.0
        %2072 = vmatpush.xpose.msra.mxu0 0.0
        %2073 = vmatpush.xpose.msra.mxu0 0.0
        %2074 = vmatpush.xpose.msra.mxu0 0.0
        %2075 = vmatpush.xpose.msra.mxu0 0.0
        %2076 = vmatpush.xpose.msra.mxu0 0.0
        %2077 = vmatpush.xpose.msra.mxu0 0.0
        %2078 = vmatpush.xpose.msra.mxu0 0.0
        %2079 = vmatpush.xpose.msra.mxu0 0.0
        %2080 = vmatpush.xpose.msra.mxu0 0.0
        %2081 = vmatpush.xpose.msra.mxu0 0.0
        %2082 = vmatpush.xpose.msra.mxu0 0.0
        %2083 = vmatpush.xpose.msra.mxu0 0.0
        %2084 = vmatpush.xpose.msra.mxu0 0.0
        %2085 = vmatpush.xpose.msra.mxu0 0.0
        %2086 = vmatpush.xpose.msra.mxu0 %v2069
        %2087 = vmatmul.f32.gmra.mxu0 %v2067
        %v2088 = vpop.f32.mrf.mxu0
        %v2089 = vadd.f32 0.0, %v2088
        %2090 = vdwg.mxu0
        %v2091 = vsel %vm1682, %v1301, 0
        %v2093 = vsel %vm1682, %v1429, 0
        %2095 = vmatpush.xpose.msra.mxu0 0.0
        %2096 = vmatpush.xpose.msra.mxu0 0.0
        %2097 = vmatpush.xpose.msra.mxu0 0.0
        %2098 = vmatpush.xpose.msra.mxu0 0.0
        %2099 = vmatpush.xpose.msra.mxu0 0.0
        %2100 = vmatpush.xpose.msra.mxu0 0.0
        %2101 = vmatpush.xpose.msra.mxu0 0.0
        %2102 = vmatpush.xpose.msra.mxu0 0.0
        %2103 = vmatpush.xpose.msra.mxu0 0.0
        %2104 = vmatpush.xpose.msra.mxu0 0.0
        %2105 = vmatpush.xpose.msra.mxu0 0.0
        %2106 = vmatpush.xpose.msra.mxu0 0.0
        %2107 = vmatpush.xpose.msra.mxu0 0.0
        %2108 = vmatpush.xpose.msra.mxu0 0.0
        %2109 = vmatpush.xpose.msra.mxu0 0.0
        %2110 = vmatpush.xpose.msra.mxu0 %v2093
        %2111 = vmatmul.f32.gmra.mxu0 %v2091
        %v2112 = vpop.f32.mrf.mxu0
        %v2113 = vadd.f32 0.0, %v2112
        %2114 = vdwg.mxu0
        %v2115 = vsel %vm1682, %v1303, 0
        %v2117 = vsel %vm1682, %v1431, 0
        %2119 = vmatpush.xpose.msra.mxu0 0.0
        %2120 = vmatpush.xpose.msra.mxu0 0.0
        %2121 = vmatpush.xpose.msra.mxu0 0.0
        %2122 = vmatpush.xpose.msra.mxu0 0.0
        %2123 = vmatpush.xpose.msra.mxu0 0.0
        %2124 = vmatpush.xpose.msra.mxu0 0.0
        %2125 = vmatpush.xpose.msra.mxu0 0.0
        %2126 = vmatpush.xpose.msra.mxu0 0.0
        %2127 = vmatpush.xpose.msra.mxu0 0.0
        %2128 = vmatpush.xpose.msra.mxu0 0.0
        %2129 = vmatpush.xpose.msra.mxu0 0.0
        %2130 = vmatpush.xpose.msra.mxu0 0.0
        %2131 = vmatpush.xpose.msra.mxu0 0.0
        %2132 = vmatpush.xpose.msra.mxu0 0.0
        %2133 = vmatpush.xpose.msra.mxu0 0.0
        %2134 = vmatpush.xpose.msra.mxu0 %v2117
        %2135 = vmatmul.f32.gmra.mxu0 %v2115
        %v2136 = vpop.f32.mrf.mxu0
        %v2137 = vadd.f32 0.0, %v2136
        %2138 = vdwg.mxu0
        %v2139 = vsel %vm1682, %v1305, 0
        %v2141 = vsel %vm1682, %v1433, 0
        %2143 = vmatpush.xpose.msra.mxu0 0.0
        %2144 = vmatpush.xpose.msra.mxu0 0.0
        %2145 = vmatpush.xpose.msra.mxu0 0.0
        %2146 = vmatpush.xpose.msra.mxu0 0.0
        %2147 = vmatpush.xpose.msra.mxu0 0.0
        %2148 = vmatpush.xpose.msra.mxu0 0.0
        %2149 = vmatpush.xpose.msra.mxu0 0.0
        %2150 = vmatpush.xpose.msra.mxu0 0.0
        %2151 = vmatpush.xpose.msra.mxu0 0.0
        %2152 = vmatpush.xpose.msra.mxu0 0.0
        %2153 = vmatpush.xpose.msra.mxu0 0.0
        %2154 = vmatpush.xpose.msra.mxu0 0.0
        %2155 = vmatpush.xpose.msra.mxu0 0.0
        %2156 = vmatpush.xpose.msra.mxu0 0.0
        %2157 = vmatpush.xpose.msra.mxu0 0.0
        %2158 = vmatpush.xpose.msra.mxu0 %v2141
        %2159 = vmatmul.f32.gmra.mxu0 %v2139
        %v2160 = vpop.f32.mrf.mxu0
        %v2161 = vadd.f32 0.0, %v2160
        %2162 = vdwg.mxu0
        %v2163 = vsel %vm1682, %v1307, 0
        %v2165 = vsel %vm1682, %v1435, 0
        %2167 = vmatpush.xpose.msra.mxu0 0.0
        %2168 = vmatpush.xpose.msra.mxu0 0.0
        %2169 = vmatpush.xpose.msra.mxu0 0.0
        %2170 = vmatpush.xpose.msra.mxu0 0.0
        %2171 = vmatpush.xpose.msra.mxu0 0.0
        %2172 = vmatpush.xpose.msra.mxu0 0.0
        %2173 = vmatpush.xpose.msra.mxu0 0.0
        %2174 = vmatpush.xpose.msra.mxu0 0.0
        %2175 = vmatpush.xpose.msra.mxu0 0.0
        %2176 = vmatpush.xpose.msra.mxu0 0.0
        %2177 = vmatpush.xpose.msra.mxu0 0.0
        %2178 = vmatpush.xpose.msra.mxu0 0.0
        %2179 = vmatpush.xpose.msra.mxu0 0.0
        %2180 = vmatpush.xpose.msra.mxu0 0.0
        %2181 = vmatpush.xpose.msra.mxu0 0.0
        %2182 = vmatpush.xpose.msra.mxu0 %v2165
        %2183 = vmatmul.f32.gmra.mxu0 %v2163
        %v2184 = vpop.f32.mrf.mxu0
        %v2185 = vadd.f32 0.0, %v2184
        %2186 = vdwg.mxu0
        %v2187 = vsel %vm1682, %v1309, 0
        %v2189 = vsel %vm1682, %v1437, 0
        %2191 = vmatpush.xpose.msra.mxu0 0.0
        %2192 = vmatpush.xpose.msra.mxu0 0.0
        %2193 = vmatpush.xpose.msra.mxu0 0.0
        %2194 = vmatpush.xpose.msra.mxu0 0.0
        %2195 = vmatpush.xpose.msra.mxu0 0.0
        %2196 = vmatpush.xpose.msra.mxu0 0.0
        %2197 = vmatpush.xpose.msra.mxu0 0.0
        %2198 = vmatpush.xpose.msra.mxu0 0.0
        %2199 = vmatpush.xpose.msra.mxu0 0.0
        %2200 = vmatpush.xpose.msra.mxu0 0.0
        %2201 = vmatpush.xpose.msra.mxu0 0.0
        %2202 = vmatpush.xpose.msra.mxu0 0.0
        %2203 = vmatpush.xpose.msra.mxu0 0.0
        %2204 = vmatpush.xpose.msra.mxu0 0.0
        %2205 = vmatpush.xpose.msra.mxu0 0.0
        %2206 = vmatpush.xpose.msra.mxu0 %v2189
        %2207 = vmatmul.f32.gmra.mxu0 %v2187
        %v2208 = vpop.f32.mrf.mxu0
        %v2209 = vadd.f32 0.0, %v2208
        %2210 = vdwg.mxu0
        %v2211 = vsel %vm1682, %v1311, 0
        %v2213 = vsel %vm1682, %v1439, 0
        %2215 = vmatpush.xpose.msra.mxu0 0.0
        %2216 = vmatpush.xpose.msra.mxu0 0.0
        %2217 = vmatpush.xpose.msra.mxu0 0.0
        %2218 = vmatpush.xpose.msra.mxu0 0.0
        %2219 = vmatpush.xpose.msra.mxu0 0.0
        %2220 = vmatpush.xpose.msra.mxu0 0.0
        %2221 = vmatpush.xpose.msra.mxu0 0.0
        %2222 = vmatpush.xpose.msra.mxu0 0.0
        %2223 = vmatpush.xpose.msra.mxu0 0.0
        %2224 = vmatpush.xpose.msra.mxu0 0.0
        %2225 = vmatpush.xpose.msra.mxu0 0.0
        %2226 = vmatpush.xpose.msra.mxu0 0.0
        %2227 = vmatpush.xpose.msra.mxu0 0.0
        %2228 = vmatpush.xpose.msra.mxu0 0.0
        %2229 = vmatpush.xpose.msra.mxu0 0.0
        %2230 = vmatpush.xpose.msra.mxu0 %v2213
        %2231 = vmatmul.f32.gmra.mxu0 %v2211
        %v2232 = vpop.f32.mrf.mxu0
        %v2233 = vadd.f32 0.0, %v2232
        %2234 = vdwg.mxu0
        %v2235 = vsel %vm1682, %v1313, 0
        %v2237 = vsel %vm1682, %v1441, 0
        %2239 = vmatpush.xpose.msra.mxu0 0.0
        %2240 = vmatpush.xpose.msra.mxu0 0.0
        %2241 = vmatpush.xpose.msra.mxu0 0.0
        %2242 = vmatpush.xpose.msra.mxu0 0.0
        %2243 = vmatpush.xpose.msra.mxu0 0.0
        %2244 = vmatpush.xpose.msra.mxu0 0.0
        %2245 = vmatpush.xpose.msra.mxu0 0.0
        %2246 = vmatpush.xpose.msra.mxu0 0.0
        %2247 = vmatpush.xpose.msra.mxu0 0.0
        %2248 = vmatpush.xpose.msra.mxu0 0.0
        %2249 = vmatpush.xpose.msra.mxu0 0.0
        %2250 = vmatpush.xpose.msra.mxu0 0.0
        %2251 = vmatpush.xpose.msra.mxu0 0.0
        %2252 = vmatpush.xpose.msra.mxu0 0.0
        %2253 = vmatpush.xpose.msra.mxu0 0.0
        %2254 = vmatpush.xpose.msra.mxu0 %v2237
        %2255 = vmatmul.f32.gmra.mxu0 %v2235
        %v2256 = vpop.f32.mrf.mxu0
        %v2257 = vadd.f32 0.0, %v2256
        %2258 = vdwg.mxu0
        %v2259 = vsel %vm1682, %v1315, 0
        %v2261 = vsel %vm1682, %v1443, 0
        %2263 = vmatpush.xpose.msra.mxu0 0.0
        %2264 = vmatpush.xpose.msra.mxu0 0.0
        %2265 = vmatpush.xpose.msra.mxu0 0.0
        %2266 = vmatpush.xpose.msra.mxu0 0.0
        %2267 = vmatpush.xpose.msra.mxu0 0.0
        %2268 = vmatpush.xpose.msra.mxu0 0.0
        %2269 = vmatpush.xpose.msra.mxu0 0.0
        %2270 = vmatpush.xpose.msra.mxu0 0.0
        %2271 = vmatpush.xpose.msra.mxu0 0.0
        %2272 = vmatpush.xpose.msra.mxu0 0.0
        %2273 = vmatpush.xpose.msra.mxu0 0.0
        %2274 = vmatpush.xpose.msra.mxu0 0.0
        %2275 = vmatpush.xpose.msra.mxu0 0.0
        %2276 = vmatpush.xpose.msra.mxu0 0.0
        %2277 = vmatpush.xpose.msra.mxu0 0.0
        %2278 = vmatpush.xpose.msra.mxu0 %v2261
        %2279 = vmatmul.f32.gmra.mxu0 %v2259
        %v2280 = vpop.f32.mrf.mxu0
        %v2281 = vadd.f32 0.0, %v2280
        %2282 = vdwg.mxu0
        %v2283 = vsel %vm1682, %v1317, 0
        %v2285 = vsel %vm1682, %v1445, 0
        %2287 = vmatpush.xpose.msra.mxu0 0.0
        %2288 = vmatpush.xpose.msra.mxu0 0.0
        %2289 = vmatpush.xpose.msra.mxu0 0.0
        %2290 = vmatpush.xpose.msra.mxu0 0.0
        %2291 = vmatpush.xpose.msra.mxu0 0.0
        %2292 = vmatpush.xpose.msra.mxu0 0.0
        %2293 = vmatpush.xpose.msra.mxu0 0.0
        %2294 = vmatpush.xpose.msra.mxu0 0.0
        %2295 = vmatpush.xpose.msra.mxu0 0.0
        %2296 = vmatpush.xpose.msra.mxu0 0.0
        %2297 = vmatpush.xpose.msra.mxu0 0.0
        %2298 = vmatpush.xpose.msra.mxu0 0.0
        %2299 = vmatpush.xpose.msra.mxu0 0.0
        %2300 = vmatpush.xpose.msra.mxu0 0.0
        %2301 = vmatpush.xpose.msra.mxu0 0.0
        %2302 = vmatpush.xpose.msra.mxu0 %v2285
        %2303 = vmatmul.f32.gmra.mxu0 %v2283
        %v2304 = vpop.f32.mrf.mxu0
        %v2305 = vadd.f32 0.0, %v2304
        %2306 = vdwg.mxu0
        %v2307 = vsel %vm1682, %v1319, 0
        %v2309 = vsel %vm1682, %v1447, 0
        %2311 = vmatpush.xpose.msra.mxu0 0.0
        %2312 = vmatpush.xpose.msra.mxu0 0.0
        %2313 = vmatpush.xpose.msra.mxu0 0.0
        %2314 = vmatpush.xpose.msra.mxu0 0.0
        %2315 = vmatpush.xpose.msra.mxu0 0.0
        %2316 = vmatpush.xpose.msra.mxu0 0.0
        %2317 = vmatpush.xpose.msra.mxu0 0.0
        %2318 = vmatpush.xpose.msra.mxu0 0.0
        %2319 = vmatpush.xpose.msra.mxu0 0.0
        %2320 = vmatpush.xpose.msra.mxu0 0.0
        %2321 = vmatpush.xpose.msra.mxu0 0.0
        %2322 = vmatpush.xpose.msra.mxu0 0.0
        %2323 = vmatpush.xpose.msra.mxu0 0.0
        %2324 = vmatpush.xpose.msra.mxu0 0.0
        %2325 = vmatpush.xpose.msra.mxu0 0.0
        %2326 = vmatpush.xpose.msra.mxu0 %v2309
        %2327 = vmatmul.f32.gmra.mxu0 %v2307
        %v2328 = vpop.f32.mrf.mxu0
        %v2329 = vadd.f32 0.0, %v2328
        %2330 = vdwg.mxu0
        %v2331 = vsel %vm1682, %v1321, 0
        %v2333 = vsel %vm1682, %v1449, 0
        %2335 = vmatpush.xpose.msra.mxu0 0.0
        %2336 = vmatpush.xpose.msra.mxu0 0.0
        %2337 = vmatpush.xpose.msra.mxu0 0.0
        %2338 = vmatpush.xpose.msra.mxu0 0.0
        %2339 = vmatpush.xpose.msra.mxu0 0.0
        %2340 = vmatpush.xpose.msra.mxu0 0.0
        %2341 = vmatpush.xpose.msra.mxu0 0.0
        %2342 = vmatpush.xpose.msra.mxu0 0.0
        %2343 = vmatpush.xpose.msra.mxu0 0.0
        %2344 = vmatpush.xpose.msra.mxu0 0.0
        %2345 = vmatpush.xpose.msra.mxu0 0.0
        %2346 = vmatpush.xpose.msra.mxu0 0.0
        %2347 = vmatpush.xpose.msra.mxu0 0.0
        %2348 = vmatpush.xpose.msra.mxu0 0.0
        %2349 = vmatpush.xpose.msra.mxu0 0.0
        %2350 = vmatpush.xpose.msra.mxu0 %v2333
        %2351 = vmatmul.f32.gmra.mxu0 %v2331
        %v2352 = vpop.f32.mrf.mxu0
        %v2353 = vadd.f32 0.0, %v2352
        %2354 = vdwg.mxu0
        %v2355 = vsel %vm1682, %v1323, 0
        %v2357 = vsel %vm1682, %v1451, 0
        %2359 = vmatpush.xpose.msra.mxu0 0.0
        %2360 = vmatpush.xpose.msra.mxu0 0.0
        %2361 = vmatpush.xpose.msra.mxu0 0.0
        %2362 = vmatpush.xpose.msra.mxu0 0.0
        %2363 = vmatpush.xpose.msra.mxu0 0.0
        %2364 = vmatpush.xpose.msra.mxu0 0.0
        %2365 = vmatpush.xpose.msra.mxu0 0.0
        %2366 = vmatpush.xpose.msra.mxu0 0.0
        %2367 = vmatpush.xpose.msra.mxu0 0.0
        %2368 = vmatpush.xpose.msra.mxu0 0.0
        %2369 = vmatpush.xpose.msra.mxu0 0.0
        %2370 = vmatpush.xpose.msra.mxu0 0.0
        %2371 = vmatpush.xpose.msra.mxu0 0.0
        %2372 = vmatpush.xpose.msra.mxu0 0.0
        %2373 = vmatpush.xpose.msra.mxu0 0.0
        %2374 = vmatpush.xpose.msra.mxu0 %v2357
        %2375 = vmatmul.f32.gmra.mxu0 %v2355
        %v2376 = vpop.f32.mrf.mxu0
        %v2377 = vadd.f32 0.0, %v2376
        %2378 = vdwg.mxu0
        %v2379 = vsel %vm1682, %v1325, 0
        %v2381 = vsel %vm1682, %v1453, 0
        %2383 = vmatpush.xpose.msra.mxu0 0.0
        %2384 = vmatpush.xpose.msra.mxu0 0.0
        %2385 = vmatpush.xpose.msra.mxu0 0.0
        %2386 = vmatpush.xpose.msra.mxu0 0.0
        %2387 = vmatpush.xpose.msra.mxu0 0.0
        %2388 = vmatpush.xpose.msra.mxu0 0.0
        %2389 = vmatpush.xpose.msra.mxu0 0.0
        %2390 = vmatpush.xpose.msra.mxu0 0.0
        %2391 = vmatpush.xpose.msra.mxu0 0.0
        %2392 = vmatpush.xpose.msra.mxu0 0.0
        %2393 = vmatpush.xpose.msra.mxu0 0.0
        %2394 = vmatpush.xpose.msra.mxu0 0.0
        %2395 = vmatpush.xpose.msra.mxu0 0.0
        %2396 = vmatpush.xpose.msra.mxu0 0.0
        %2397 = vmatpush.xpose.msra.mxu0 0.0
        %2398 = vmatpush.xpose.msra.mxu0 %v2381
        %2399 = vmatmul.f32.gmra.mxu0 %v2379
        %v2400 = vpop.f32.mrf.mxu0
        %v2401 = vadd.f32 0.0, %v2400
        %2402 = vdwg.mxu0
        %v2403 = vsel %vm1682, %v1327, 0
        %v2405 = vsel %vm1682, %v1455, 0
        %2407 = vmatpush.xpose.msra.mxu0 0.0
        %2408 = vmatpush.xpose.msra.mxu0 0.0
        %2409 = vmatpush.xpose.msra.mxu0 0.0
        %2410 = vmatpush.xpose.msra.mxu0 0.0
        %2411 = vmatpush.xpose.msra.mxu0 0.0
        %2412 = vmatpush.xpose.msra.mxu0 0.0
        %2413 = vmatpush.xpose.msra.mxu0 0.0
        %2414 = vmatpush.xpose.msra.mxu0 0.0
        %2415 = vmatpush.xpose.msra.mxu0 0.0
        %2416 = vmatpush.xpose.msra.mxu0 0.0
        %2417 = vmatpush.xpose.msra.mxu0 0.0
        %2418 = vmatpush.xpose.msra.mxu0 0.0
        %2419 = vmatpush.xpose.msra.mxu0 0.0
        %2420 = vmatpush.xpose.msra.mxu0 0.0
        %2421 = vmatpush.xpose.msra.mxu0 0.0
        %2422 = vmatpush.xpose.msra.mxu0 %v2405
        %2423 = vmatmul.f32.gmra.mxu0 %v2403
        %v2424 = vpop.f32.mrf.mxu0
        %v2425 = vadd.f32 0.0, %v2424
        %2426 = vdwg.mxu0
        %v2427 = vsel %vm1682, %v1329, 0
        %v2429 = vsel %vm1682, %v1457, 0
        %2431 = vmatpush.xpose.msra.mxu0 0.0
        %2432 = vmatpush.xpose.msra.mxu0 0.0
        %2433 = vmatpush.xpose.msra.mxu0 0.0
        %2434 = vmatpush.xpose.msra.mxu0 0.0
        %2435 = vmatpush.xpose.msra.mxu0 0.0
        %2436 = vmatpush.xpose.msra.mxu0 0.0
        %2437 = vmatpush.xpose.msra.mxu0 0.0
        %2438 = vmatpush.xpose.msra.mxu0 0.0
        %2439 = vmatpush.xpose.msra.mxu0 0.0
        %2440 = vmatpush.xpose.msra.mxu0 0.0
        %2441 = vmatpush.xpose.msra.mxu0 0.0
        %2442 = vmatpush.xpose.msra.mxu0 0.0
        %2443 = vmatpush.xpose.msra.mxu0 0.0
        %2444 = vmatpush.xpose.msra.mxu0 0.0
        %2445 = vmatpush.xpose.msra.mxu0 0.0
        %2446 = vmatpush.xpose.msra.mxu0 %v2429
        %2447 = vmatmul.f32.gmra.mxu0 %v2427
        %v2448 = vpop.f32.mrf.mxu0
        %v2449 = vadd.f32 0.0, %v2448
        %2450 = vdwg.mxu0
        %v2451 = vsel %vm1682, %v1331, 0
        %v2453 = vsel %vm1682, %v1459, 0
        %2455 = vmatpush.xpose.msra.mxu0 0.0
        %2456 = vmatpush.xpose.msra.mxu0 0.0
        %2457 = vmatpush.xpose.msra.mxu0 0.0
        %2458 = vmatpush.xpose.msra.mxu0 0.0
        %2459 = vmatpush.xpose.msra.mxu0 0.0
        %2460 = vmatpush.xpose.msra.mxu0 0.0
        %2461 = vmatpush.xpose.msra.mxu0 0.0
        %2462 = vmatpush.xpose.msra.mxu0 0.0
        %2463 = vmatpush.xpose.msra.mxu0 0.0
        %2464 = vmatpush.xpose.msra.mxu0 0.0
        %2465 = vmatpush.xpose.msra.mxu0 0.0
        %2466 = vmatpush.xpose.msra.mxu0 0.0
        %2467 = vmatpush.xpose.msra.mxu0 0.0
        %2468 = vmatpush.xpose.msra.mxu0 0.0
        %2469 = vmatpush.xpose.msra.mxu0 0.0
        %2470 = vmatpush.xpose.msra.mxu0 %v2453
        %2471 = vmatmul.f32.gmra.mxu0 %v2451
        %v2472 = vpop.f32.mrf.mxu0
        %v2473 = vadd.f32 0.0, %v2472
        %2474 = vdwg.mxu0
        %v2475 = vsel %vm1682, %v1333, 0
        %v2477 = vsel %vm1682, %v1461, 0
        %2479 = vmatpush.xpose.msra.mxu0 0.0
        %2480 = vmatpush.xpose.msra.mxu0 0.0
        %2481 = vmatpush.xpose.msra.mxu0 0.0
        %2482 = vmatpush.xpose.msra.mxu0 0.0
        %2483 = vmatpush.xpose.msra.mxu0 0.0
        %2484 = vmatpush.xpose.msra.mxu0 0.0
        %2485 = vmatpush.xpose.msra.mxu0 0.0
        %2486 = vmatpush.xpose.msra.mxu0 0.0
        %2487 = vmatpush.xpose.msra.mxu0 0.0
        %2488 = vmatpush.xpose.msra.mxu0 0.0
        %2489 = vmatpush.xpose.msra.mxu0 0.0
        %2490 = vmatpush.xpose.msra.mxu0 0.0
        %2491 = vmatpush.xpose.msra.mxu0 0.0
        %2492 = vmatpush.xpose.msra.mxu0 0.0
        %2493 = vmatpush.xpose.msra.mxu0 0.0
        %2494 = vmatpush.xpose.msra.mxu0 %v2477
        %2495 = vmatmul.f32.gmra.mxu0 %v2475
        %v2496 = vpop.f32.mrf.mxu0
        %v2497 = vadd.f32 0.0, %v2496
        %2498 = vdwg.mxu0
        %v2499 = vsel %vm1682, %v1335, 0
        %v2501 = vsel %vm1682, %v1463, 0
        %2503 = vmatpush.xpose.msra.mxu0 0.0
        %2504 = vmatpush.xpose.msra.mxu0 0.0
        %2505 = vmatpush.xpose.msra.mxu0 0.0
        %2506 = vmatpush.xpose.msra.mxu0 0.0
        %2507 = vmatpush.xpose.msra.mxu0 0.0
        %2508 = vmatpush.xpose.msra.mxu0 0.0
        %2509 = vmatpush.xpose.msra.mxu0 0.0
        %2510 = vmatpush.xpose.msra.mxu0 0.0
        %2511 = vmatpush.xpose.msra.mxu0 0.0
        %2512 = vmatpush.xpose.msra.mxu0 0.0
        %2513 = vmatpush.xpose.msra.mxu0 0.0
        %2514 = vmatpush.xpose.msra.mxu0 0.0
        %2515 = vmatpush.xpose.msra.mxu0 0.0
        %2516 = vmatpush.xpose.msra.mxu0 0.0
        %2517 = vmatpush.xpose.msra.mxu0 0.0
        %2518 = vmatpush.xpose.msra.mxu0 %v2501
        %2519 = vmatmul.f32.gmra.mxu0 %v2499
        %v2520 = vpop.f32.mrf.mxu0
        %v2521 = vadd.f32 0.0, %v2520
        %2522 = vdwg.mxu0
        %v2523 = vsel %vm1682, %v1337, 0
        %v2525 = vsel %vm1682, %v1465, 0
        %2527 = vmatpush.xpose.msra.mxu0 0.0
        %2528 = vmatpush.xpose.msra.mxu0 0.0
        %2529 = vmatpush.xpose.msra.mxu0 0.0
        %2530 = vmatpush.xpose.msra.mxu0 0.0
        %2531 = vmatpush.xpose.msra.mxu0 0.0
        %2532 = vmatpush.xpose.msra.mxu0 0.0
        %2533 = vmatpush.xpose.msra.mxu0 0.0
        %2534 = vmatpush.xpose.msra.mxu0 0.0
        %2535 = vmatpush.xpose.msra.mxu0 0.0
        %2536 = vmatpush.xpose.msra.mxu0 0.0
        %2537 = vmatpush.xpose.msra.mxu0 0.0
        %2538 = vmatpush.xpose.msra.mxu0 0.0
        %2539 = vmatpush.xpose.msra.mxu0 0.0
        %2540 = vmatpush.xpose.msra.mxu0 0.0
        %2541 = vmatpush.xpose.msra.mxu0 0.0
        %2542 = vmatpush.xpose.msra.mxu0 %v2525
        %2543 = vmatmul.f32.gmra.mxu0 %v2523
        %v2544 = vpop.f32.mrf.mxu0
        %v2545 = vadd.f32 0.0, %v2544
        %2546 = vdwg.mxu0
        %v2547 = vsel %vm1682, %v1339, 0
        %v2549 = vsel %vm1682, %v1467, 0
        %2551 = vmatpush.xpose.msra.mxu0 0.0
        %2552 = vmatpush.xpose.msra.mxu0 0.0
        %2553 = vmatpush.xpose.msra.mxu0 0.0
        %2554 = vmatpush.xpose.msra.mxu0 0.0
        %2555 = vmatpush.xpose.msra.mxu0 0.0
        %2556 = vmatpush.xpose.msra.mxu0 0.0
        %2557 = vmatpush.xpose.msra.mxu0 0.0
        %2558 = vmatpush.xpose.msra.mxu0 0.0
        %2559 = vmatpush.xpose.msra.mxu0 0.0
        %2560 = vmatpush.xpose.msra.mxu0 0.0
        %2561 = vmatpush.xpose.msra.mxu0 0.0
        %2562 = vmatpush.xpose.msra.mxu0 0.0
        %2563 = vmatpush.xpose.msra.mxu0 0.0
        %2564 = vmatpush.xpose.msra.mxu0 0.0
        %2565 = vmatpush.xpose.msra.mxu0 0.0
        %2566 = vmatpush.xpose.msra.mxu0 %v2549
        %2567 = vmatmul.f32.gmra.mxu0 %v2547
        %v2568 = vpop.f32.mrf.mxu0
        %v2569 = vadd.f32 0.0, %v2568
        %2570 = vdwg.mxu0
        %v2571 = vsel %vm1682, %v1341, 0
        %v2573 = vsel %vm1682, %v1469, 0
        %2575 = vmatpush.xpose.msra.mxu0 0.0
        %2576 = vmatpush.xpose.msra.mxu0 0.0
        %2577 = vmatpush.xpose.msra.mxu0 0.0
        %2578 = vmatpush.xpose.msra.mxu0 0.0
        %2579 = vmatpush.xpose.msra.mxu0 0.0
        %2580 = vmatpush.xpose.msra.mxu0 0.0
        %2581 = vmatpush.xpose.msra.mxu0 0.0
        %2582 = vmatpush.xpose.msra.mxu0 0.0
        %2583 = vmatpush.xpose.msra.mxu0 0.0
        %2584 = vmatpush.xpose.msra.mxu0 0.0
        %2585 = vmatpush.xpose.msra.mxu0 0.0
        %2586 = vmatpush.xpose.msra.mxu0 0.0
        %2587 = vmatpush.xpose.msra.mxu0 0.0
        %2588 = vmatpush.xpose.msra.mxu0 0.0
        %2589 = vmatpush.xpose.msra.mxu0 0.0
        %2590 = vmatpush.xpose.msra.mxu0 %v2573
        %2591 = vmatmul.f32.gmra.mxu0 %v2571
        %v2592 = vpop.f32.mrf.mxu0
        %v2593 = vadd.f32 0.0, %v2592
        %2594 = vdwg.mxu0
        %v2595 = vsel %vm1682, %v1343, 0
        %v2597 = vsel %vm1682, %v1471, 0
        %2599 = vmatpush.xpose.msra.mxu0 0.0
        %2600 = vmatpush.xpose.msra.mxu0 0.0
        %2601 = vmatpush.xpose.msra.mxu0 0.0
        %2602 = vmatpush.xpose.msra.mxu0 0.0
        %2603 = vmatpush.xpose.msra.mxu0 0.0
        %2604 = vmatpush.xpose.msra.mxu0 0.0
        %2605 = vmatpush.xpose.msra.mxu0 0.0
        %2606 = vmatpush.xpose.msra.mxu0 0.0
        %2607 = vmatpush.xpose.msra.mxu0 0.0
        %2608 = vmatpush.xpose.msra.mxu0 0.0
        %2609 = vmatpush.xpose.msra.mxu0 0.0
        %2610 = vmatpush.xpose.msra.mxu0 0.0
        %2611 = vmatpush.xpose.msra.mxu0 0.0
        %2612 = vmatpush.xpose.msra.mxu0 0.0
        %2613 = vmatpush.xpose.msra.mxu0 0.0
        %2614 = vmatpush.xpose.msra.mxu0 %v2597
        %2615 = vmatmul.f32.gmra.mxu0 %v2595
        %v2616 = vpop.f32.mrf.mxu0
        %v2617 = vadd.f32 0.0, %v2616
        %2618 = vdwg.mxu0
        %v2619 = vsel %vm1682, %v1345, 0
        %v2621 = vsel %vm1682, %v1473, 0
        %2623 = vmatpush.xpose.msra.mxu0 0.0
        %2624 = vmatpush.xpose.msra.mxu0 0.0
        %2625 = vmatpush.xpose.msra.mxu0 0.0
        %2626 = vmatpush.xpose.msra.mxu0 0.0
        %2627 = vmatpush.xpose.msra.mxu0 0.0
        %2628 = vmatpush.xpose.msra.mxu0 0.0
        %2629 = vmatpush.xpose.msra.mxu0 0.0
        %2630 = vmatpush.xpose.msra.mxu0 0.0
        %2631 = vmatpush.xpose.msra.mxu0 0.0
        %2632 = vmatpush.xpose.msra.mxu0 0.0
        %2633 = vmatpush.xpose.msra.mxu0 0.0
        %2634 = vmatpush.xpose.msra.mxu0 0.0
        %2635 = vmatpush.xpose.msra.mxu0 0.0
        %2636 = vmatpush.xpose.msra.mxu0 0.0
        %2637 = vmatpush.xpose.msra.mxu0 0.0
        %2638 = vmatpush.xpose.msra.mxu0 %v2621
        %2639 = vmatmul.f32.gmra.mxu0 %v2619
        %v2640 = vpop.f32.mrf.mxu0
        %v2641 = vadd.f32 0.0, %v2640
        %2642 = vdwg.mxu0
        %v2643 = vsel %vm1682, %v1347, 0
        %v2645 = vsel %vm1682, %v1475, 0
        %2647 = vmatpush.xpose.msra.mxu0 0.0
        %2648 = vmatpush.xpose.msra.mxu0 0.0
        %2649 = vmatpush.xpose.msra.mxu0 0.0
        %2650 = vmatpush.xpose.msra.mxu0 0.0
        %2651 = vmatpush.xpose.msra.mxu0 0.0
        %2652 = vmatpush.xpose.msra.mxu0 0.0
        %2653 = vmatpush.xpose.msra.mxu0 0.0
        %2654 = vmatpush.xpose.msra.mxu0 0.0
        %2655 = vmatpush.xpose.msra.mxu0 0.0
        %2656 = vmatpush.xpose.msra.mxu0 0.0
        %2657 = vmatpush.xpose.msra.mxu0 0.0
        %2658 = vmatpush.xpose.msra.mxu0 0.0
        %2659 = vmatpush.xpose.msra.mxu0 0.0
        %2660 = vmatpush.xpose.msra.mxu0 0.0
        %2661 = vmatpush.xpose.msra.mxu0 0.0
        %2662 = vmatpush.xpose.msra.mxu0 %v2645
        %2663 = vmatmul.f32.gmra.mxu0 %v2643
        %v2664 = vpop.f32.mrf.mxu0
        %v2665 = vadd.f32 0.0, %v2664
        %2666 = vdwg.mxu0
        %v2667 = vsel %vm1682, %v1349, 0
        %v2669 = vsel %vm1682, %v1477, 0
        %2671 = vmatpush.xpose.msra.mxu0 0.0
        %2672 = vmatpush.xpose.msra.mxu0 0.0
        %2673 = vmatpush.xpose.msra.mxu0 0.0
        %2674 = vmatpush.xpose.msra.mxu0 0.0
        %2675 = vmatpush.xpose.msra.mxu0 0.0
        %2676 = vmatpush.xpose.msra.mxu0 0.0
        %2677 = vmatpush.xpose.msra.mxu0 0.0
        %2678 = vmatpush.xpose.msra.mxu0 0.0
        %2679 = vmatpush.xpose.msra.mxu0 0.0
        %2680 = vmatpush.xpose.msra.mxu0 0.0
        %2681 = vmatpush.xpose.msra.mxu0 0.0
        %2682 = vmatpush.xpose.msra.mxu0 0.0
        %2683 = vmatpush.xpose.msra.mxu0 0.0
        %2684 = vmatpush.xpose.msra.mxu0 0.0
        %2685 = vmatpush.xpose.msra.mxu0 0.0
        %2686 = vmatpush.xpose.msra.mxu0 %v2669
        %2687 = vmatmul.f32.gmra.mxu0 %v2667
        %v2688 = vpop.f32.mrf.mxu0
        %v2689 = vadd.f32 0.0, %v2688
        %2690 = vdwg.mxu0
        %v2691 = vsel %vm1682, %v1351, 0
        %v2693 = vsel %vm1682, %v1479, 0
        %2695 = vmatpush.xpose.msra.mxu0 0.0
        %2696 = vmatpush.xpose.msra.mxu0 0.0
        %2697 = vmatpush.xpose.msra.mxu0 0.0
        %2698 = vmatpush.xpose.msra.mxu0 0.0
        %2699 = vmatpush.xpose.msra.mxu0 0.0
        %2700 = vmatpush.xpose.msra.mxu0 0.0
        %2701 = vmatpush.xpose.msra.mxu0 0.0
        %2702 = vmatpush.xpose.msra.mxu0 0.0
        %2703 = vmatpush.xpose.msra.mxu0 0.0
        %2704 = vmatpush.xpose.msra.mxu0 0.0
        %2705 = vmatpush.xpose.msra.mxu0 0.0
        %2706 = vmatpush.xpose.msra.mxu0 0.0
        %2707 = vmatpush.xpose.msra.mxu0 0.0
        %2708 = vmatpush.xpose.msra.mxu0 0.0
        %2709 = vmatpush.xpose.msra.mxu0 0.0
        %2710 = vmatpush.xpose.msra.mxu0 %v2693
        %2711 = vmatmul.f32.gmra.mxu0 %v2691
        %v2712 = vpop.f32.mrf.mxu0
        %v2713 = vadd.f32 0.0, %v2712
        %2714 = vdwg.mxu0
        %v2715 = vsel %vm1682, %v1353, 0
        %v2717 = vsel %vm1682, %v1481, 0
        %2719 = vmatpush.xpose.msra.mxu0 0.0
        %2720 = vmatpush.xpose.msra.mxu0 0.0
        %2721 = vmatpush.xpose.msra.mxu0 0.0
        %2722 = vmatpush.xpose.msra.mxu0 0.0
        %2723 = vmatpush.xpose.msra.mxu0 0.0
        %2724 = vmatpush.xpose.msra.mxu0 0.0
        %2725 = vmatpush.xpose.msra.mxu0 0.0
        %2726 = vmatpush.xpose.msra.mxu0 0.0
        %2727 = vmatpush.xpose.msra.mxu0 0.0
        %2728 = vmatpush.xpose.msra.mxu0 0.0
        %2729 = vmatpush.xpose.msra.mxu0 0.0
        %2730 = vmatpush.xpose.msra.mxu0 0.0
        %2731 = vmatpush.xpose.msra.mxu0 0.0
        %2732 = vmatpush.xpose.msra.mxu0 0.0
        %2733 = vmatpush.xpose.msra.mxu0 0.0
        %2734 = vmatpush.xpose.msra.mxu0 %v2717
        %2735 = vmatmul.f32.gmra.mxu0 %v2715
        %v2736 = vpop.f32.mrf.mxu0
        %v2737 = vadd.f32 0.0, %v2736
        %2738 = vdwg.mxu0
        %v2739 = vsel %vm1682, %v1355, 0
        %v2741 = vsel %vm1682, %v1483, 0
        %2743 = vmatpush.xpose.msra.mxu0 0.0
        %2744 = vmatpush.xpose.msra.mxu0 0.0
        %2745 = vmatpush.xpose.msra.mxu0 0.0
        %2746 = vmatpush.xpose.msra.mxu0 0.0
        %2747 = vmatpush.xpose.msra.mxu0 0.0
        %2748 = vmatpush.xpose.msra.mxu0 0.0
        %2749 = vmatpush.xpose.msra.mxu0 0.0
        %2750 = vmatpush.xpose.msra.mxu0 0.0
        %2751 = vmatpush.xpose.msra.mxu0 0.0
        %2752 = vmatpush.xpose.msra.mxu0 0.0
        %2753 = vmatpush.xpose.msra.mxu0 0.0
        %2754 = vmatpush.xpose.msra.mxu0 0.0
        %2755 = vmatpush.xpose.msra.mxu0 0.0
        %2756 = vmatpush.xpose.msra.mxu0 0.0
        %2757 = vmatpush.xpose.msra.mxu0 0.0
        %2758 = vmatpush.xpose.msra.mxu0 %v2741
        %2759 = vmatmul.f32.gmra.mxu0 %v2739
        %v2760 = vpop.f32.mrf.mxu0
        %v2761 = vadd.f32 0.0, %v2760
        %2762 = vdwg.mxu0
        %v2763 = vsel %vm1682, %v1357, 0
        %v2765 = vsel %vm1682, %v1485, 0
        %2767 = vmatpush.xpose.msra.mxu0 0.0
        %2768 = vmatpush.xpose.msra.mxu0 0.0
        %2769 = vmatpush.xpose.msra.mxu0 0.0
        %2770 = vmatpush.xpose.msra.mxu0 0.0
        %2771 = vmatpush.xpose.msra.mxu0 0.0
        %2772 = vmatpush.xpose.msra.mxu0 0.0
        %2773 = vmatpush.xpose.msra.mxu0 0.0
        %2774 = vmatpush.xpose.msra.mxu0 0.0
        %2775 = vmatpush.xpose.msra.mxu0 0.0
        %2776 = vmatpush.xpose.msra.mxu0 0.0
        %2777 = vmatpush.xpose.msra.mxu0 0.0
        %2778 = vmatpush.xpose.msra.mxu0 0.0
        %2779 = vmatpush.xpose.msra.mxu0 0.0
        %2780 = vmatpush.xpose.msra.mxu0 0.0
        %2781 = vmatpush.xpose.msra.mxu0 0.0
        %2782 = vmatpush.xpose.msra.mxu0 %v2765
        %2783 = vmatmul.f32.gmra.mxu0 %v2763
        %v2784 = vpop.f32.mrf.mxu0
        %v2785 = vadd.f32 0.0, %v2784
        %2786 = vdwg.mxu0
        %v2787 = vsel %vm1682, %v1359, 0
        %v2789 = vsel %vm1682, %v1487, 0
        %2791 = vmatpush.xpose.msra.mxu0 0.0
        %2792 = vmatpush.xpose.msra.mxu0 0.0
        %2793 = vmatpush.xpose.msra.mxu0 0.0
        %2794 = vmatpush.xpose.msra.mxu0 0.0
        %2795 = vmatpush.xpose.msra.mxu0 0.0
        %2796 = vmatpush.xpose.msra.mxu0 0.0
        %2797 = vmatpush.xpose.msra.mxu0 0.0
        %2798 = vmatpush.xpose.msra.mxu0 0.0
        %2799 = vmatpush.xpose.msra.mxu0 0.0
        %2800 = vmatpush.xpose.msra.mxu0 0.0
        %2801 = vmatpush.xpose.msra.mxu0 0.0
        %2802 = vmatpush.xpose.msra.mxu0 0.0
        %2803 = vmatpush.xpose.msra.mxu0 0.0
        %2804 = vmatpush.xpose.msra.mxu0 0.0
        %2805 = vmatpush.xpose.msra.mxu0 0.0
        %2806 = vmatpush.xpose.msra.mxu0 %v2789
        %2807 = vmatmul.f32.gmra.mxu0 %v2787
        %v2808 = vpop.f32.mrf.mxu0
        %v2809 = vadd.f32 0.0, %v2808
        %2810 = vdwg.mxu0
        %v2811 = vsel %vm1682, %v1361, 0
        %v2813 = vsel %vm1682, %v1489, 0
        %2815 = vmatpush.xpose.msra.mxu0 0.0
        %2816 = vmatpush.xpose.msra.mxu0 0.0
        %2817 = vmatpush.xpose.msra.mxu0 0.0
        %2818 = vmatpush.xpose.msra.mxu0 0.0
        %2819 = vmatpush.xpose.msra.mxu0 0.0
        %2820 = vmatpush.xpose.msra.mxu0 0.0
        %2821 = vmatpush.xpose.msra.mxu0 0.0
        %2822 = vmatpush.xpose.msra.mxu0 0.0
        %2823 = vmatpush.xpose.msra.mxu0 0.0
        %2824 = vmatpush.xpose.msra.mxu0 0.0
        %2825 = vmatpush.xpose.msra.mxu0 0.0
        %2826 = vmatpush.xpose.msra.mxu0 0.0
        %2827 = vmatpush.xpose.msra.mxu0 0.0
        %2828 = vmatpush.xpose.msra.mxu0 0.0
        %2829 = vmatpush.xpose.msra.mxu0 0.0
        %2830 = vmatpush.xpose.msra.mxu0 %v2813
        %2831 = vmatmul.f32.gmra.mxu0 %v2811
        %v2832 = vpop.f32.mrf.mxu0
        %v2833 = vadd.f32 0.0, %v2832
        %2834 = vdwg.mxu0
        %v2835 = vsel %vm1682, %v1363, 0
        %v2837 = vsel %vm1682, %v1491, 0
        %2839 = vmatpush.xpose.msra.mxu0 0.0
        %2840 = vmatpush.xpose.msra.mxu0 0.0
        %2841 = vmatpush.xpose.msra.mxu0 0.0
        %2842 = vmatpush.xpose.msra.mxu0 0.0
        %2843 = vmatpush.xpose.msra.mxu0 0.0
        %2844 = vmatpush.xpose.msra.mxu0 0.0
        %2845 = vmatpush.xpose.msra.mxu0 0.0
        %2846 = vmatpush.xpose.msra.mxu0 0.0
        %2847 = vmatpush.xpose.msra.mxu0 0.0
        %2848 = vmatpush.xpose.msra.mxu0 0.0
        %2849 = vmatpush.xpose.msra.mxu0 0.0
        %2850 = vmatpush.xpose.msra.mxu0 0.0
        %2851 = vmatpush.xpose.msra.mxu0 0.0
        %2852 = vmatpush.xpose.msra.mxu0 0.0
        %2853 = vmatpush.xpose.msra.mxu0 0.0
        %2854 = vmatpush.xpose.msra.mxu0 %v2837
        %2855 = vmatmul.f32.gmra.mxu0 %v2835
        %v2856 = vpop.f32.mrf.mxu0
        %v2857 = vadd.f32 0.0, %v2856
        %2858 = vdwg.mxu0
        %v2859 = vsel %vm1682, %v1365, 0
        %v2861 = vsel %vm1682, %v1493, 0
        %2863 = vmatpush.xpose.msra.mxu0 0.0
        %2864 = vmatpush.xpose.msra.mxu0 0.0
        %2865 = vmatpush.xpose.msra.mxu0 0.0
        %2866 = vmatpush.xpose.msra.mxu0 0.0
        %2867 = vmatpush.xpose.msra.mxu0 0.0
        %2868 = vmatpush.xpose.msra.mxu0 0.0
        %2869 = vmatpush.xpose.msra.mxu0 0.0
        %2870 = vmatpush.xpose.msra.mxu0 0.0
        %2871 = vmatpush.xpose.msra.mxu0 0.0
        %2872 = vmatpush.xpose.msra.mxu0 0.0
        %2873 = vmatpush.xpose.msra.mxu0 0.0
        %2874 = vmatpush.xpose.msra.mxu0 0.0
        %2875 = vmatpush.xpose.msra.mxu0 0.0
        %2876 = vmatpush.xpose.msra.mxu0 0.0
        %2877 = vmatpush.xpose.msra.mxu0 0.0
        %2878 = vmatpush.xpose.msra.mxu0 %v2861
        %2879 = vmatmul.f32.gmra.mxu0 %v2859
        %v2880 = vpop.f32.mrf.mxu0
        %v2881 = vadd.f32 0.0, %v2880
        %2882 = vdwg.mxu0
        %v2883 = vsel %vm1682, %v1367, 0
        %v2885 = vsel %vm1682, %v1495, 0
        %2887 = vmatpush.xpose.msra.mxu0 0.0
        %2888 = vmatpush.xpose.msra.mxu0 0.0
        %2889 = vmatpush.xpose.msra.mxu0 0.0
        %2890 = vmatpush.xpose.msra.mxu0 0.0
        %2891 = vmatpush.xpose.msra.mxu0 0.0
        %2892 = vmatpush.xpose.msra.mxu0 0.0
        %2893 = vmatpush.xpose.msra.mxu0 0.0
        %2894 = vmatpush.xpose.msra.mxu0 0.0
        %2895 = vmatpush.xpose.msra.mxu0 0.0
        %2896 = vmatpush.xpose.msra.mxu0 0.0
        %2897 = vmatpush.xpose.msra.mxu0 0.0
        %2898 = vmatpush.xpose.msra.mxu0 0.0
        %2899 = vmatpush.xpose.msra.mxu0 0.0
        %2900 = vmatpush.xpose.msra.mxu0 0.0
        %2901 = vmatpush.xpose.msra.mxu0 0.0
        %2902 = vmatpush.xpose.msra.mxu0 %v2885
        %2903 = vmatmul.f32.gmra.mxu0 %v2883
        %v2904 = vpop.f32.mrf.mxu0
        %v2905 = vadd.f32 0.0, %v2904
        %2906 = vdwg.mxu0
        %v2907 = vsel %vm1682, %v1369, 0
        %v2909 = vsel %vm1682, %v1497, 0
        %2911 = vmatpush.xpose.msra.mxu0 0.0
        %2912 = vmatpush.xpose.msra.mxu0 0.0
        %2913 = vmatpush.xpose.msra.mxu0 0.0
        %2914 = vmatpush.xpose.msra.mxu0 0.0
        %2915 = vmatpush.xpose.msra.mxu0 0.0
        %2916 = vmatpush.xpose.msra.mxu0 0.0
        %2917 = vmatpush.xpose.msra.mxu0 0.0
        %2918 = vmatpush.xpose.msra.mxu0 0.0
        %2919 = vmatpush.xpose.msra.mxu0 0.0
        %2920 = vmatpush.xpose.msra.mxu0 0.0
        %2921 = vmatpush.xpose.msra.mxu0 0.0
        %2922 = vmatpush.xpose.msra.mxu0 0.0
        %2923 = vmatpush.xpose.msra.mxu0 0.0
        %2924 = vmatpush.xpose.msra.mxu0 0.0
        %2925 = vmatpush.xpose.msra.mxu0 0.0
        %2926 = vmatpush.xpose.msra.mxu0 %v2909
        %2927 = vmatmul.f32.gmra.mxu0 %v2907
        %v2928 = vpop.f32.mrf.mxu0
        %v2929 = vadd.f32 0.0, %v2928
        %2930 = vdwg.mxu0
        %v2931 = vsel %vm1682, %v1371, 0
        %v2933 = vsel %vm1682, %v1499, 0
        %2935 = vmatpush.xpose.msra.mxu0 0.0
        %2936 = vmatpush.xpose.msra.mxu0 0.0
        %2937 = vmatpush.xpose.msra.mxu0 0.0
        %2938 = vmatpush.xpose.msra.mxu0 0.0
        %2939 = vmatpush.xpose.msra.mxu0 0.0
        %2940 = vmatpush.xpose.msra.mxu0 0.0
        %2941 = vmatpush.xpose.msra.mxu0 0.0
        %2942 = vmatpush.xpose.msra.mxu0 0.0
        %2943 = vmatpush.xpose.msra.mxu0 0.0
        %2944 = vmatpush.xpose.msra.mxu0 0.0
        %2945 = vmatpush.xpose.msra.mxu0 0.0
        %2946 = vmatpush.xpose.msra.mxu0 0.0
        %2947 = vmatpush.xpose.msra.mxu0 0.0
        %2948 = vmatpush.xpose.msra.mxu0 0.0
        %2949 = vmatpush.xpose.msra.mxu0 0.0
        %2950 = vmatpush.xpose.msra.mxu0 %v2933
        %2951 = vmatmul.f32.gmra.mxu0 %v2931
        %v2952 = vpop.f32.mrf.mxu0
        %v2953 = vadd.f32 0.0, %v2952
        %2954 = vdwg.mxu0
        %v2955 = vsel %vm1682, %v1373, 0
        %v2957 = vsel %vm1682, %v1501, 0
        %2959 = vmatpush.xpose.msra.mxu0 0.0
        %2960 = vmatpush.xpose.msra.mxu0 0.0
        %2961 = vmatpush.xpose.msra.mxu0 0.0
        %2962 = vmatpush.xpose.msra.mxu0 0.0
        %2963 = vmatpush.xpose.msra.mxu0 0.0
        %2964 = vmatpush.xpose.msra.mxu0 0.0
        %2965 = vmatpush.xpose.msra.mxu0 0.0
        %2966 = vmatpush.xpose.msra.mxu0 0.0
        %2967 = vmatpush.xpose.msra.mxu0 0.0
        %2968 = vmatpush.xpose.msra.mxu0 0.0
        %2969 = vmatpush.xpose.msra.mxu0 0.0
        %2970 = vmatpush.xpose.msra.mxu0 0.0
        %2971 = vmatpush.xpose.msra.mxu0 0.0
        %2972 = vmatpush.xpose.msra.mxu0 0.0
        %2973 = vmatpush.xpose.msra.mxu0 0.0
        %2974 = vmatpush.xpose.msra.mxu0 %v2957
        %2975 = vmatmul.f32.gmra.mxu0 %v2955
        %v2976 = vpop.f32.mrf.mxu0
        %v2977 = vadd.f32 0.0, %v2976
        %2978 = vdwg.mxu0
        %v2979 = vsel %vm1682, %v1375, 0
        %v2981 = vsel %vm1682, %v1503, 0
        %2983 = vmatpush.xpose.msra.mxu0 0.0
        %2984 = vmatpush.xpose.msra.mxu0 0.0
        %2985 = vmatpush.xpose.msra.mxu0 0.0
        %2986 = vmatpush.xpose.msra.mxu0 0.0
        %2987 = vmatpush.xpose.msra.mxu0 0.0
        %2988 = vmatpush.xpose.msra.mxu0 0.0
        %2989 = vmatpush.xpose.msra.mxu0 0.0
        %2990 = vmatpush.xpose.msra.mxu0 0.0
        %2991 = vmatpush.xpose.msra.mxu0 0.0
        %2992 = vmatpush.xpose.msra.mxu0 0.0
        %2993 = vmatpush.xpose.msra.mxu0 0.0
        %2994 = vmatpush.xpose.msra.mxu0 0.0
        %2995 = vmatpush.xpose.msra.mxu0 0.0
        %2996 = vmatpush.xpose.msra.mxu0 0.0
        %2997 = vmatpush.xpose.msra.mxu0 0.0
        %2998 = vmatpush.xpose.msra.mxu0 %v2981
        %2999 = vmatmul.f32.gmra.mxu0 %v2979
        %v3000 = vpop.f32.mrf.mxu0
        %v3001 = vadd.f32 0.0, %v3000
        %3002 = vdwg.mxu0
        %v3003 = vsel %vm1682, %v1377, 0
        %v3005 = vsel %vm1682, %v1505, 0
        %3007 = vmatpush.xpose.msra.mxu0 0.0
        %3008 = vmatpush.xpose.msra.mxu0 0.0
        %3009 = vmatpush.xpose.msra.mxu0 0.0
        %3010 = vmatpush.xpose.msra.mxu0 0.0
        %3011 = vmatpush.xpose.msra.mxu0 0.0
        %3012 = vmatpush.xpose.msra.mxu0 0.0
        %3013 = vmatpush.xpose.msra.mxu0 0.0
        %3014 = vmatpush.xpose.msra.mxu0 0.0
        %3015 = vmatpush.xpose.msra.mxu0 0.0
        %3016 = vmatpush.xpose.msra.mxu0 0.0
        %3017 = vmatpush.xpose.msra.mxu0 0.0
        %3018 = vmatpush.xpose.msra.mxu0 0.0
        %3019 = vmatpush.xpose.msra.mxu0 0.0
        %3020 = vmatpush.xpose.msra.mxu0 0.0
        %3021 = vmatpush.xpose.msra.mxu0 0.0
        %3022 = vmatpush.xpose.msra.mxu0 %v3005
        %3023 = vmatmul.f32.gmra.mxu0 %v3003
        %v3024 = vpop.f32.mrf.mxu0
        %v3025 = vadd.f32 0.0, %v3024
        %3026 = vdwg.mxu0
        %v3027 = vsel %vm1682, %v1379, 0
        %v3029 = vsel %vm1682, %v1507, 0
        %3031 = vmatpush.xpose.msra.mxu0 0.0
        %3032 = vmatpush.xpose.msra.mxu0 0.0
        %3033 = vmatpush.xpose.msra.mxu0 0.0
        %3034 = vmatpush.xpose.msra.mxu0 0.0
        %3035 = vmatpush.xpose.msra.mxu0 0.0
        %3036 = vmatpush.xpose.msra.mxu0 0.0
        %3037 = vmatpush.xpose.msra.mxu0 0.0
        %3038 = vmatpush.xpose.msra.mxu0 0.0
        %3039 = vmatpush.xpose.msra.mxu0 0.0
        %3040 = vmatpush.xpose.msra.mxu0 0.0
        %3041 = vmatpush.xpose.msra.mxu0 0.0
        %3042 = vmatpush.xpose.msra.mxu0 0.0
        %3043 = vmatpush.xpose.msra.mxu0 0.0
        %3044 = vmatpush.xpose.msra.mxu0 0.0
        %3045 = vmatpush.xpose.msra.mxu0 0.0
        %3046 = vmatpush.xpose.msra.mxu0 %v3029
        %3047 = vmatmul.f32.gmra.mxu0 %v3027
        %v3048 = vpop.f32.mrf.mxu0
        %v3049 = vadd.f32 0.0, %v3048
        %3050 = vdwg.mxu0
        %v3051 = vsel %vm1682, %v1381, 0
        %v3053 = vsel %vm1682, %v1509, 0
        %3055 = vmatpush.xpose.msra.mxu0 0.0
        %3056 = vmatpush.xpose.msra.mxu0 0.0
        %3057 = vmatpush.xpose.msra.mxu0 0.0
        %3058 = vmatpush.xpose.msra.mxu0 0.0
        %3059 = vmatpush.xpose.msra.mxu0 0.0
        %3060 = vmatpush.xpose.msra.mxu0 0.0
        %3061 = vmatpush.xpose.msra.mxu0 0.0
        %3062 = vmatpush.xpose.msra.mxu0 0.0
        %3063 = vmatpush.xpose.msra.mxu0 0.0
        %3064 = vmatpush.xpose.msra.mxu0 0.0
        %3065 = vmatpush.xpose.msra.mxu0 0.0
        %3066 = vmatpush.xpose.msra.mxu0 0.0
        %3067 = vmatpush.xpose.msra.mxu0 0.0
        %3068 = vmatpush.xpose.msra.mxu0 0.0
        %3069 = vmatpush.xpose.msra.mxu0 0.0
        %3070 = vmatpush.xpose.msra.mxu0 %v3053
        %3071 = vmatmul.f32.gmra.mxu0 %v3051
        %v3072 = vpop.f32.mrf.mxu0
        %v3073 = vadd.f32 0.0, %v3072
        %3074 = vdwg.mxu0
        %v3075 = vsel %vm1682, %v1383, 0
        %v3077 = vsel %vm1682, %v1511, 0
        %3079 = vmatpush.xpose.msra.mxu0 0.0
        %3080 = vmatpush.xpose.msra.mxu0 0.0
        %3081 = vmatpush.xpose.msra.mxu0 0.0
        %3082 = vmatpush.xpose.msra.mxu0 0.0
        %3083 = vmatpush.xpose.msra.mxu0 0.0
        %3084 = vmatpush.xpose.msra.mxu0 0.0
        %3085 = vmatpush.xpose.msra.mxu0 0.0
        %3086 = vmatpush.xpose.msra.mxu0 0.0
        %3087 = vmatpush.xpose.msra.mxu0 0.0
        %3088 = vmatpush.xpose.msra.mxu0 0.0
        %3089 = vmatpush.xpose.msra.mxu0 0.0
        %3090 = vmatpush.xpose.msra.mxu0 0.0
        %3091 = vmatpush.xpose.msra.mxu0 0.0
        %3092 = vmatpush.xpose.msra.mxu0 0.0
        %3093 = vmatpush.xpose.msra.mxu0 0.0
        %3094 = vmatpush.xpose.msra.mxu0 %v3077
        %3095 = vmatmul.f32.gmra.mxu0 %v3075
        %v3096 = vpop.f32.mrf.mxu0
        %v3097 = vadd.f32 0.0, %v3096
        %3098 = vdwg.mxu0
        %v3099 = vsel %vm1682, %v1385, 0
        %v3101 = vsel %vm1682, %v1513, 0
        %3103 = vmatpush.xpose.msra.mxu0 0.0
        %3104 = vmatpush.xpose.msra.mxu0 0.0
        %3105 = vmatpush.xpose.msra.mxu0 0.0
        %3106 = vmatpush.xpose.msra.mxu0 0.0
        %3107 = vmatpush.xpose.msra.mxu0 0.0
        %3108 = vmatpush.xpose.msra.mxu0 0.0
        %3109 = vmatpush.xpose.msra.mxu0 0.0
        %3110 = vmatpush.xpose.msra.mxu0 0.0
        %3111 = vmatpush.xpose.msra.mxu0 0.0
        %3112 = vmatpush.xpose.msra.mxu0 0.0
        %3113 = vmatpush.xpose.msra.mxu0 0.0
        %3114 = vmatpush.xpose.msra.mxu0 0.0
        %3115 = vmatpush.xpose.msra.mxu0 0.0
        %3116 = vmatpush.xpose.msra.mxu0 0.0
        %3117 = vmatpush.xpose.msra.mxu0 0.0
        %3118 = vmatpush.xpose.msra.mxu0 %v3101
        %3119 = vmatmul.f32.gmra.mxu0 %v3099
        %v3120 = vpop.f32.mrf.mxu0
        %v3121 = vadd.f32 0.0, %v3120
        %3122 = vdwg.mxu0
        %v3123 = vsel %vm1682, %v1387, 0
        %v3125 = vsel %vm1682, %v1515, 0
        %3127 = vmatpush.xpose.msra.mxu0 0.0
        %3128 = vmatpush.xpose.msra.mxu0 0.0
        %3129 = vmatpush.xpose.msra.mxu0 0.0
        %3130 = vmatpush.xpose.msra.mxu0 0.0
        %3131 = vmatpush.xpose.msra.mxu0 0.0
        %3132 = vmatpush.xpose.msra.mxu0 0.0
        %3133 = vmatpush.xpose.msra.mxu0 0.0
        %3134 = vmatpush.xpose.msra.mxu0 0.0
        %3135 = vmatpush.xpose.msra.mxu0 0.0
        %3136 = vmatpush.xpose.msra.mxu0 0.0
        %3137 = vmatpush.xpose.msra.mxu0 0.0
        %3138 = vmatpush.xpose.msra.mxu0 0.0
        %3139 = vmatpush.xpose.msra.mxu0 0.0
        %3140 = vmatpush.xpose.msra.mxu0 0.0
        %3141 = vmatpush.xpose.msra.mxu0 0.0
        %3142 = vmatpush.xpose.msra.mxu0 %v3125
        %3143 = vmatmul.f32.gmra.mxu0 %v3123
        %v3144 = vpop.f32.mrf.mxu0
        %v3145 = vadd.f32 0.0, %v3144
        %3146 = vdwg.mxu0
        %v3147 = vsel %vm1682, %v1389, 0
        %v3149 = vsel %vm1682, %v1517, 0
        %3151 = vmatpush.xpose.msra.mxu0 0.0
        %3152 = vmatpush.xpose.msra.mxu0 0.0
        %3153 = vmatpush.xpose.msra.mxu0 0.0
        %3154 = vmatpush.xpose.msra.mxu0 0.0
        %3155 = vmatpush.xpose.msra.mxu0 0.0
        %3156 = vmatpush.xpose.msra.mxu0 0.0
        %3157 = vmatpush.xpose.msra.mxu0 0.0
        %3158 = vmatpush.xpose.msra.mxu0 0.0
        %3159 = vmatpush.xpose.msra.mxu0 0.0
        %3160 = vmatpush.xpose.msra.mxu0 0.0
        %3161 = vmatpush.xpose.msra.mxu0 0.0
        %3162 = vmatpush.xpose.msra.mxu0 0.0
        %3163 = vmatpush.xpose.msra.mxu0 0.0
        %3164 = vmatpush.xpose.msra.mxu0 0.0
        %3165 = vmatpush.xpose.msra.mxu0 0.0
        %3166 = vmatpush.xpose.msra.mxu0 %v3149
        %3167 = vmatmul.f32.gmra.mxu0 %v3147
        %v3168 = vpop.f32.mrf.mxu0
        %v3169 = vadd.f32 0.0, %v3168
        %3170 = vdwg.mxu0
        %v3171 = vsel %vm1682, %v1391, 0
        %v3173 = vsel %vm1682, %v1519, 0
        %3175 = vmatpush.xpose.msra.mxu0 0.0
        %3176 = vmatpush.xpose.msra.mxu0 0.0
        %3177 = vmatpush.xpose.msra.mxu0 0.0
        %3178 = vmatpush.xpose.msra.mxu0 0.0
        %3179 = vmatpush.xpose.msra.mxu0 0.0
        %3180 = vmatpush.xpose.msra.mxu0 0.0
        %3181 = vmatpush.xpose.msra.mxu0 0.0
        %3182 = vmatpush.xpose.msra.mxu0 0.0
        %3183 = vmatpush.xpose.msra.mxu0 0.0
        %3184 = vmatpush.xpose.msra.mxu0 0.0
        %3185 = vmatpush.xpose.msra.mxu0 0.0
        %3186 = vmatpush.xpose.msra.mxu0 0.0
        %3187 = vmatpush.xpose.msra.mxu0 0.0
        %3188 = vmatpush.xpose.msra.mxu0 0.0
        %3189 = vmatpush.xpose.msra.mxu0 0.0
        %3190 = vmatpush.xpose.msra.mxu0 %v3173
        %3191 = vmatmul.f32.gmra.mxu0 %v3171
        %v3192 = vpop.f32.mrf.mxu0
        %v3193 = vadd.f32 0.0, %v3192
        %3194 = vdwg.mxu0
        %v3195 = vsel %vm1682, %v1393, 0
        %v3197 = vsel %vm1682, %v1521, 0
        %3199 = vmatpush.xpose.msra.mxu0 0.0
        %3200 = vmatpush.xpose.msra.mxu0 0.0
        %3201 = vmatpush.xpose.msra.mxu0 0.0
        %3202 = vmatpush.xpose.msra.mxu0 0.0
        %3203 = vmatpush.xpose.msra.mxu0 0.0
        %3204 = vmatpush.xpose.msra.mxu0 0.0
        %3205 = vmatpush.xpose.msra.mxu0 0.0
        %3206 = vmatpush.xpose.msra.mxu0 0.0
        %3207 = vmatpush.xpose.msra.mxu0 0.0
        %3208 = vmatpush.xpose.msra.mxu0 0.0
        %3209 = vmatpush.xpose.msra.mxu0 0.0
        %3210 = vmatpush.xpose.msra.mxu0 0.0
        %3211 = vmatpush.xpose.msra.mxu0 0.0
        %3212 = vmatpush.xpose.msra.mxu0 0.0
        %3213 = vmatpush.xpose.msra.mxu0 0.0
        %3214 = vmatpush.xpose.msra.mxu0 %v3197
        %3215 = vmatmul.f32.gmra.mxu0 %v3195
        %v3216 = vpop.f32.mrf.mxu0
        %v3217 = vadd.f32 0.0, %v3216
        %3218 = vdwg.mxu0
        %v3219 = vmul.f32 %v1705, 0.25
        %v3220 = vmul.f32 %v1729, 0.25
        %v3221 = vmul.f32 %v1753, 0.25
        %v3222 = vmul.f32 %v1777, 0.25
        %v3223 = vmul.f32 %v1801, 0.25
        %v3224 = vmul.f32 %v1825, 0.25
        %v3225 = vmul.f32 %v1849, 0.25
        %v3226 = vmul.f32 %v1873, 0.25
        %v3227 = vmul.f32 %v1897, 0.25
        %v3228 = vmul.f32 %v1921, 0.25
        %v3229 = vmul.f32 %v1945, 0.25
        %v3230 = vmul.f32 %v1969, 0.25
        %v3231 = vmul.f32 %v1993, 0.25
        %v3232 = vmul.f32 %v2017, 0.25
        %v3233 = vmul.f32 %v2041, 0.25
        %v3234 = vmul.f32 %v2065, 0.25
        %v3235 = vmul.f32 %v2089, 0.25
        %v3236 = vmul.f32 %v2113, 0.25
        %v3237 = vmul.f32 %v2137, 0.25
        %v3238 = vmul.f32 %v2161, 0.25
        %v3239 = vmul.f32 %v2185, 0.25
        %v3240 = vmul.f32 %v2209, 0.25
        %v3241 = vmul.f32 %v2233, 0.25
        %v3242 = vmul.f32 %v2257, 0.25
        %v3243 = vmul.f32 %v2281, 0.25
        %v3244 = vmul.f32 %v2305, 0.25
        %v3245 = vmul.f32 %v2329, 0.25
        %v3246 = vmul.f32 %v2353, 0.25
        %v3247 = vmul.f32 %v2377, 0.25
        %v3248 = vmul.f32 %v2401, 0.25
        %v3249 = vmul.f32 %v2425, 0.25
        %v3250 = vmul.f32 %v2449, 0.25
        %v3251 = vmul.f32 %v2473, 0.25
        %v3252 = vmul.f32 %v2497, 0.25
        %v3253 = vmul.f32 %v2521, 0.25
        %v3254 = vmul.f32 %v2545, 0.25
        %v3255 = vmul.f32 %v2569, 0.25
        %v3256 = vmul.f32 %v2593, 0.25
        %v3257 = vmul.f32 %v2617, 0.25
        %v3258 = vmul.f32 %v2641, 0.25
        %v3259 = vmul.f32 %v2665, 0.25
        %v3260 = vmul.f32 %v2689, 0.25
        %v3261 = vmul.f32 %v2713, 0.25
        %v3262 = vmul.f32 %v2737, 0.25
        %v3263 = vmul.f32 %v2761, 0.25
        %v3264 = vmul.f32 %v2785, 0.25
        %v3265 = vmul.f32 %v2809, 0.25
        %v3266 = vmul.f32 %v2833, 0.25
        %v3267 = vmul.f32 %v2857, 0.25
        %v3268 = vmul.f32 %v2881, 0.25
        %v3269 = vmul.f32 %v2905, 0.25
        %v3270 = vmul.f32 %v2929, 0.25
        %v3271 = vmul.f32 %v2953, 0.25
        %v3272 = vmul.f32 %v2977, 0.25
        %v3273 = vmul.f32 %v3001, 0.25
        %v3274 = vmul.f32 %v3025, 0.25
        %v3275 = vmul.f32 %v3049, 0.25
        %v3276 = vmul.f32 %v3073, 0.25
        %v3277 = vmul.f32 %v3097, 0.25
        %v3278 = vmul.f32 %v3121, 0.25
        %v3279 = vmul.f32 %v3145, 0.25
        %v3280 = vmul.f32 %v3169, 0.25
        %v3281 = vmul.f32 %v3193, 0.25
        %v3282 = vmul.f32 %v3217, 0.25
        %vm3283 = vcmask 64512
        %v3284 = vsel %vm3283, %v3219, -inf
        %3285 = vmax.xlane.f32.xlu0 %v3284
        %v3286 = vpop.xlane.xlu0 %3285
        %v3287 = vsel %vm3283, %v3220, -inf
        %3288 = vmax.xlane.f32.xlu0 %v3287
        %v3289 = vpop.xlane.xlu0 %3288
        %v3290 = vsel %vm3283, %v3221, -inf
        %3291 = vmax.xlane.f32.xlu0 %v3290
        %v3292 = vpop.xlane.xlu0 %3291
        %v3293 = vsel %vm3283, %v3222, -inf
        %3294 = vmax.xlane.f32.xlu0 %v3293
        %v3295 = vpop.xlane.xlu0 %3294
        %v3296 = vsel %vm3283, %v3223, -inf
        %3297 = vmax.xlane.f32.xlu0 %v3296
        %v3298 = vpop.xlane.xlu0 %3297
        %v3299 = vsel %vm3283, %v3224, -inf
        %3300 = vmax.xlane.f32.xlu0 %v3299
        %v3301 = vpop.xlane.xlu0 %3300
        %v3302 = vsel %vm3283, %v3225, -inf
        %3303 = vmax.xlane.f32.xlu0 %v3302
        %v3304 = vpop.xlane.xlu0 %3303
        %v3305 = vsel %vm3283, %v3226, -inf
        %3306 = vmax.xlane.f32.xlu0 %v3305
        %v3307 = vpop.xlane.xlu0 %3306
        %v3308 = vsel %vm3283, %v3227, -inf
        %3309 = vmax.xlane.f32.xlu0 %v3308
        %v3310 = vpop.xlane.xlu0 %3309
        %v3311 = vsel %vm3283, %v3228, -inf
        %3312 = vmax.xlane.f32.xlu0 %v3311
        %v3313 = vpop.xlane.xlu0 %3312
        %v3314 = vsel %vm3283, %v3229, -inf
        %3315 = vmax.xlane.f32.xlu0 %v3314
        %v3316 = vpop.xlane.xlu0 %3315
        %v3317 = vsel %vm3283, %v3230, -inf
        %3318 = vmax.xlane.f32.xlu0 %v3317
        %v3319 = vpop.xlane.xlu0 %3318
        %v3320 = vsel %vm3283, %v3231, -inf
        %3321 = vmax.xlane.f32.xlu0 %v3320
        %v3322 = vpop.xlane.xlu0 %3321
        %v3323 = vsel %vm3283, %v3232, -inf
        %3324 = vmax.xlane.f32.xlu0 %v3323
        %v3325 = vpop.xlane.xlu0 %3324
        %v3326 = vsel %vm3283, %v3233, -inf
        %3327 = vmax.xlane.f32.xlu0 %v3326
        %v3328 = vpop.xlane.xlu0 %3327
        %v3329 = vsel %vm3283, %v3234, -inf
        %3330 = vmax.xlane.f32.xlu0 %v3329
        %v3331 = vpop.xlane.xlu0 %3330
        %v3332 = vsel %vm3283, %v3235, -inf
        %3333 = vmax.xlane.f32.xlu0 %v3332
        %v3334 = vpop.xlane.xlu0 %3333
        %v3335 = vsel %vm3283, %v3236, -inf
        %3336 = vmax.xlane.f32.xlu0 %v3335
        %v3337 = vpop.xlane.xlu0 %3336
        %v3338 = vsel %vm3283, %v3237, -inf
        %3339 = vmax.xlane.f32.xlu0 %v3338
        %v3340 = vpop.xlane.xlu0 %3339
        %v3341 = vsel %vm3283, %v3238, -inf
        %3342 = vmax.xlane.f32.xlu0 %v3341
        %v3343 = vpop.xlane.xlu0 %3342
        %v3344 = vsel %vm3283, %v3239, -inf
        %3345 = vmax.xlane.f32.xlu0 %v3344
        %v3346 = vpop.xlane.xlu0 %3345
        %v3347 = vsel %vm3283, %v3240, -inf
        %3348 = vmax.xlane.f32.xlu0 %v3347
        %v3349 = vpop.xlane.xlu0 %3348
        %v3350 = vsel %vm3283, %v3241, -inf
        %3351 = vmax.xlane.f32.xlu0 %v3350
        %v3352 = vpop.xlane.xlu0 %3351
        %v3353 = vsel %vm3283, %v3242, -inf
        %3354 = vmax.xlane.f32.xlu0 %v3353
        %v3355 = vpop.xlane.xlu0 %3354
        %v3356 = vsel %vm3283, %v3243, -inf
        %3357 = vmax.xlane.f32.xlu0 %v3356
        %v3358 = vpop.xlane.xlu0 %3357
        %v3359 = vsel %vm3283, %v3244, -inf
        %3360 = vmax.xlane.f32.xlu0 %v3359
        %v3361 = vpop.xlane.xlu0 %3360
        %v3362 = vsel %vm3283, %v3245, -inf
        %3363 = vmax.xlane.f32.xlu0 %v3362
        %v3364 = vpop.xlane.xlu0 %3363
        %v3365 = vsel %vm3283, %v3246, -inf
        %3366 = vmax.xlane.f32.xlu0 %v3365
        %v3367 = vpop.xlane.xlu0 %3366
        %v3368 = vsel %vm3283, %v3247, -inf
        %3369 = vmax.xlane.f32.xlu0 %v3368
        %v3370 = vpop.xlane.xlu0 %3369
        %v3371 = vsel %vm3283, %v3248, -inf
        %3372 = vmax.xlane.f32.xlu0 %v3371
        %v3373 = vpop.xlane.xlu0 %3372
        %v3374 = vsel %vm3283, %v3249, -inf
        %3375 = vmax.xlane.f32.xlu0 %v3374
        %v3376 = vpop.xlane.xlu0 %3375
        %v3377 = vsel %vm3283, %v3250, -inf
        %3378 = vmax.xlane.f32.xlu0 %v3377
        %v3379 = vpop.xlane.xlu0 %3378
        %v3380 = vsel %vm3283, %v3251, -inf
        %3381 = vmax.xlane.f32.xlu0 %v3380
        %v3382 = vpop.xlane.xlu0 %3381
        %v3383 = vsel %vm3283, %v3252, -inf
        %3384 = vmax.xlane.f32.xlu0 %v3383
        %v3385 = vpop.xlane.xlu0 %3384
        %v3386 = vsel %vm3283, %v3253, -inf
        %3387 = vmax.xlane.f32.xlu0 %v3386
        %v3388 = vpop.xlane.xlu0 %3387
        %v3389 = vsel %vm3283, %v3254, -inf
        %3390 = vmax.xlane.f32.xlu0 %v3389
        %v3391 = vpop.xlane.xlu0 %3390
        %v3392 = vsel %vm3283, %v3255, -inf
        %3393 = vmax.xlane.f32.xlu0 %v3392
        %v3394 = vpop.xlane.xlu0 %3393
        %v3395 = vsel %vm3283, %v3256, -inf
        %3396 = vmax.xlane.f32.xlu0 %v3395
        %v3397 = vpop.xlane.xlu0 %3396
        %v3398 = vsel %vm3283, %v3257, -inf
        %3399 = vmax.xlane.f32.xlu0 %v3398
        %v3400 = vpop.xlane.xlu0 %3399
        %v3401 = vsel %vm3283, %v3258, -inf
        %3402 = vmax.xlane.f32.xlu0 %v3401
        %v3403 = vpop.xlane.xlu0 %3402
        %v3404 = vsel %vm3283, %v3259, -inf
        %3405 = vmax.xlane.f32.xlu0 %v3404
        %v3406 = vpop.xlane.xlu0 %3405
        %v3407 = vsel %vm3283, %v3260, -inf
        %3408 = vmax.xlane.f32.xlu0 %v3407
        %v3409 = vpop.xlane.xlu0 %3408
        %v3410 = vsel %vm3283, %v3261, -inf
        %3411 = vmax.xlane.f32.xlu0 %v3410
        %v3412 = vpop.xlane.xlu0 %3411
        %v3413 = vsel %vm3283, %v3262, -inf
        %3414 = vmax.xlane.f32.xlu0 %v3413
        %v3415 = vpop.xlane.xlu0 %3414
        %v3416 = vsel %vm3283, %v3263, -inf
        %3417 = vmax.xlane.f32.xlu0 %v3416
        %v3418 = vpop.xlane.xlu0 %3417
        %v3419 = vsel %vm3283, %v3264, -inf
        %3420 = vmax.xlane.f32.xlu0 %v3419
        %v3421 = vpop.xlane.xlu0 %3420
        %v3422 = vsel %vm3283, %v3265, -inf
        %3423 = vmax.xlane.f32.xlu0 %v3422
        %v3424 = vpop.xlane.xlu0 %3423
        %v3425 = vsel %vm3283, %v3266, -inf
        %3426 = vmax.xlane.f32.xlu0 %v3425
        %v3427 = vpop.xlane.xlu0 %3426
        %v3428 = vsel %vm3283, %v3267, -inf
        %3429 = vmax.xlane.f32.xlu0 %v3428
        %v3430 = vpop.xlane.xlu0 %3429
        %v3431 = vsel %vm3283, %v3268, -inf
        %3432 = vmax.xlane.f32.xlu0 %v3431
        %v3433 = vpop.xlane.xlu0 %3432
        %v3434 = vsel %vm3283, %v3269, -inf
        %3435 = vmax.xlane.f32.xlu0 %v3434
        %v3436 = vpop.xlane.xlu0 %3435
        %v3437 = vsel %vm3283, %v3270, -inf
        %3438 = vmax.xlane.f32.xlu0 %v3437
        %v3439 = vpop.xlane.xlu0 %3438
        %v3440 = vsel %vm3283, %v3271, -inf
        %3441 = vmax.xlane.f32.xlu0 %v3440
        %v3442 = vpop.xlane.xlu0 %3441
        %v3443 = vsel %vm3283, %v3272, -inf
        %3444 = vmax.xlane.f32.xlu0 %v3443
        %v3445 = vpop.xlane.xlu0 %3444
        %v3446 = vsel %vm3283, %v3273, -inf
        %3447 = vmax.xlane.f32.xlu0 %v3446
        %v3448 = vpop.xlane.xlu0 %3447
        %v3449 = vsel %vm3283, %v3274, -inf
        %3450 = vmax.xlane.f32.xlu0 %v3449
        %v3451 = vpop.xlane.xlu0 %3450
        %v3452 = vsel %vm3283, %v3275, -inf
        %3453 = vmax.xlane.f32.xlu0 %v3452
        %v3454 = vpop.xlane.xlu0 %3453
        %v3455 = vsel %vm3283, %v3276, -inf
        %3456 = vmax.xlane.f32.xlu0 %v3455
        %v3457 = vpop.xlane.xlu0 %3456
        %v3458 = vsel %vm3283, %v3277, -inf
        %3459 = vmax.xlane.f32.xlu0 %v3458
        %v3460 = vpop.xlane.xlu0 %3459
        %v3461 = vsel %vm3283, %v3278, -inf
        %3462 = vmax.xlane.f32.xlu0 %v3461
        %v3463 = vpop.xlane.xlu0 %3462
        %v3464 = vsel %vm3283, %v3279, -inf
        %3465 = vmax.xlane.f32.xlu0 %v3464
        %v3466 = vpop.xlane.xlu0 %3465
        %v3467 = vsel %vm3283, %v3280, -inf
        %3468 = vmax.xlane.f32.xlu0 %v3467
        %v3469 = vpop.xlane.xlu0 %3468
        %v3470 = vsel %vm3283, %v3281, -inf
        %3471 = vmax.xlane.f32.xlu0 %v3470
        %v3472 = vpop.xlane.xlu0 %3471
        %v3473 = vsel %vm3283, %v3282, -inf
        %3474 = vmax.xlane.f32.xlu0 %v3473
        %v3475 = vpop.xlane.xlu0 %3474
        %v3476 = vsub.f32 %v3219, %v3286
        %v3477 = vsub.f32 %v3220, %v3289
        %v3478 = vsub.f32 %v3221, %v3292
        %v3479 = vsub.f32 %v3222, %v3295
        %v3480 = vsub.f32 %v3223, %v3298
        %v3481 = vsub.f32 %v3224, %v3301
        %v3482 = vsub.f32 %v3225, %v3304
        %v3483 = vsub.f32 %v3226, %v3307
        %v3484 = vsub.f32 %v3227, %v3310
        %v3485 = vsub.f32 %v3228, %v3313
        %v3486 = vsub.f32 %v3229, %v3316
        %v3487 = vsub.f32 %v3230, %v3319
        %v3488 = vsub.f32 %v3231, %v3322
        %v3489 = vsub.f32 %v3232, %v3325
        %v3490 = vsub.f32 %v3233, %v3328
        %v3491 = vsub.f32 %v3234, %v3331
        %v3492 = vsub.f32 %v3235, %v3334
        %v3493 = vsub.f32 %v3236, %v3337
        %v3494 = vsub.f32 %v3237, %v3340
        %v3495 = vsub.f32 %v3238, %v3343
        %v3496 = vsub.f32 %v3239, %v3346
        %v3497 = vsub.f32 %v3240, %v3349
        %v3498 = vsub.f32 %v3241, %v3352
        %v3499 = vsub.f32 %v3242, %v3355
        %v3500 = vsub.f32 %v3243, %v3358
        %v3501 = vsub.f32 %v3244, %v3361
        %v3502 = vsub.f32 %v3245, %v3364
        %v3503 = vsub.f32 %v3246, %v3367
        %v3504 = vsub.f32 %v3247, %v3370
        %v3505 = vsub.f32 %v3248, %v3373
        %v3506 = vsub.f32 %v3249, %v3376
        %v3507 = vsub.f32 %v3250, %v3379
        %v3508 = vsub.f32 %v3251, %v3382
        %v3509 = vsub.f32 %v3252, %v3385
        %v3510 = vsub.f32 %v3253, %v3388
        %v3511 = vsub.f32 %v3254, %v3391
        %v3512 = vsub.f32 %v3255, %v3394
        %v3513 = vsub.f32 %v3256, %v3397
        %v3514 = vsub.f32 %v3257, %v3400
        %v3515 = vsub.f32 %v3258, %v3403
        %v3516 = vsub.f32 %v3259, %v3406
        %v3517 = vsub.f32 %v3260, %v3409
        %v3518 = vsub.f32 %v3261, %v3412
        %v3519 = vsub.f32 %v3262, %v3415
        %v3520 = vsub.f32 %v3263, %v3418
        %v3521 = vsub.f32 %v3264, %v3421
        %v3522 = vsub.f32 %v3265, %v3424
        %v3523 = vsub.f32 %v3266, %v3427
        %v3524 = vsub.f32 %v3267, %v3430
        %v3525 = vsub.f32 %v3268, %v3433
        %v3526 = vsub.f32 %v3269, %v3436
        %v3527 = vsub.f32 %v3270, %v3439
        %v3528 = vsub.f32 %v3271, %v3442
        %v3529 = vsub.f32 %v3272, %v3445
        %v3530 = vsub.f32 %v3273, %v3448
        %v3531 = vsub.f32 %v3274, %v3451
        %v3532 = vsub.f32 %v3275, %v3454
        %v3533 = vsub.f32 %v3276, %v3457
        %v3534 = vsub.f32 %v3277, %v3460
        %v3535 = vsub.f32 %v3278, %v3463
        %v3536 = vsub.f32 %v3279, %v3466
        %v3537 = vsub.f32 %v3280, %v3469
        %v3538 = vsub.f32 %v3281, %v3472
        %v3539 = vsub.f32 %v3282, %v3475
        %v3540 = vmul.f32 %v3476, 1.442695
        %v3541 = vpow.pop %v3540
        %v3542 = vmul.f32 %v3477, 1.442695
        %v3543 = vpow.pop %v3542
        %v3544 = vmul.f32 %v3478, 1.442695
        %v3545 = vpow.pop %v3544
        %v3546 = vmul.f32 %v3479, 1.442695
        %v3547 = vpow.pop %v3546
        %v3548 = vmul.f32 %v3480, 1.442695
        %v3549 = vpow.pop %v3548
        %v3550 = vmul.f32 %v3481, 1.442695
        %v3551 = vpow.pop %v3550
        %v3552 = vmul.f32 %v3482, 1.442695
        %v3553 = vpow.pop %v3552
        %v3554 = vmul.f32 %v3483, 1.442695
        %v3555 = vpow.pop %v3554
        %v3556 = vmul.f32 %v3484, 1.442695
        %v3557 = vpow.pop %v3556
        %v3558 = vmul.f32 %v3485, 1.442695
        %v3559 = vpow.pop %v3558
        %v3560 = vmul.f32 %v3486, 1.442695
        %v3561 = vpow.pop %v3560
        %v3562 = vmul.f32 %v3487, 1.442695
        %v3563 = vpow.pop %v3562
        %v3564 = vmul.f32 %v3488, 1.442695
        %v3565 = vpow.pop %v3564
        %v3566 = vmul.f32 %v3489, 1.442695
        %v3567 = vpow.pop %v3566
        %v3568 = vmul.f32 %v3490, 1.442695
        %v3569 = vpow.pop %v3568
        %v3570 = vmul.f32 %v3491, 1.442695
        %v3571 = vpow.pop %v3570
        %v3572 = vmul.f32 %v3492, 1.442695
        %v3573 = vpow.pop %v3572
        %v3574 = vmul.f32 %v3493, 1.442695
        %v3575 = vpow.pop %v3574
        %v3576 = vmul.f32 %v3494, 1.442695
        %v3577 = vpow.pop %v3576
        %v3578 = vmul.f32 %v3495, 1.442695
        %v3579 = vpow.pop %v3578
        %v3580 = vmul.f32 %v3496, 1.442695
        %v3581 = vpow.pop %v3580
        %v3582 = vmul.f32 %v3497, 1.442695
        %v3583 = vpow.pop %v3582
        %v3584 = vmul.f32 %v3498, 1.442695
        %v3585 = vpow.pop %v3584
        %v3586 = vmul.f32 %v3499, 1.442695
        %v3587 = vpow.pop %v3586
        %v3588 = vmul.f32 %v3500, 1.442695
        %v3589 = vpow.pop %v3588
        %v3590 = vmul.f32 %v3501, 1.442695
        %v3591 = vpow.pop %v3590
        %v3592 = vmul.f32 %v3502, 1.442695
        %v3593 = vpow.pop %v3592
        %v3594 = vmul.f32 %v3503, 1.442695
        %v3595 = vpow.pop %v3594
        %v3596 = vmul.f32 %v3504, 1.442695
        %v3597 = vpow.pop %v3596
        %v3598 = vmul.f32 %v3505, 1.442695
        %v3599 = vpow.pop %v3598
        %v3600 = vmul.f32 %v3506, 1.442695
        %v3601 = vpow.pop %v3600
        %v3602 = vmul.f32 %v3507, 1.442695
        %v3603 = vpow.pop %v3602
        %v3604 = vmul.f32 %v3508, 1.442695
        %v3605 = vpow.pop %v3604
        %v3606 = vmul.f32 %v3509, 1.442695
        %v3607 = vpow.pop %v3606
        %v3608 = vmul.f32 %v3510, 1.442695
        %v3609 = vpow.pop %v3608
        %v3610 = vmul.f32 %v3511, 1.442695
        %v3611 = vpow.pop %v3610
        %v3612 = vmul.f32 %v3512, 1.442695
        %v3613 = vpow.pop %v3612
        %v3614 = vmul.f32 %v3513, 1.442695
        %v3615 = vpow.pop %v3614
        %v3616 = vmul.f32 %v3514, 1.442695
        %v3617 = vpow.pop %v3616
        %v3618 = vmul.f32 %v3515, 1.442695
        %v3619 = vpow.pop %v3618
        %v3620 = vmul.f32 %v3516, 1.442695
        %v3621 = vpow.pop %v3620
        %v3622 = vmul.f32 %v3517, 1.442695
        %v3623 = vpow.pop %v3622
        %v3624 = vmul.f32 %v3518, 1.442695
        %v3625 = vpow.pop %v3624
        %v3626 = vmul.f32 %v3519, 1.442695
        %v3627 = vpow.pop %v3626
        %v3628 = vmul.f32 %v3520, 1.442695
        %v3629 = vpow.pop %v3628
        %v3630 = vmul.f32 %v3521, 1.442695
        %v3631 = vpow.pop %v3630
        %v3632 = vmul.f32 %v3522, 1.442695
        %v3633 = vpow.pop %v3632
        %v3634 = vmul.f32 %v3523, 1.442695
        %v3635 = vpow.pop %v3634
        %v3636 = vmul.f32 %v3524, 1.442695
        %v3637 = vpow.pop %v3636
        %v3638 = vmul.f32 %v3525, 1.442695
        %v3639 = vpow.pop %v3638
        %v3640 = vmul.f32 %v3526, 1.442695
        %v3641 = vpow.pop %v3640
        %v3642 = vmul.f32 %v3527, 1.442695
        %v3643 = vpow.pop %v3642
        %v3644 = vmul.f32 %v3528, 1.442695
        %v3645 = vpow.pop %v3644
        %v3646 = vmul.f32 %v3529, 1.442695
        %v3647 = vpow.pop %v3646
        %v3648 = vmul.f32 %v3530, 1.442695
        %v3649 = vpow.pop %v3648
        %v3650 = vmul.f32 %v3531, 1.442695
        %v3651 = vpow.pop %v3650
        %v3652 = vmul.f32 %v3532, 1.442695
        %v3653 = vpow.pop %v3652
        %v3654 = vmul.f32 %v3533, 1.442695
        %v3655 = vpow.pop %v3654
        %v3656 = vmul.f32 %v3534, 1.442695
        %v3657 = vpow.pop %v3656
        %v3658 = vmul.f32 %v3535, 1.442695
        %v3659 = vpow.pop %v3658
        %v3660 = vmul.f32 %v3536, 1.442695
        %v3661 = vpow.pop %v3660
        %v3662 = vmul.f32 %v3537, 1.442695
        %v3663 = vpow.pop %v3662
        %v3664 = vmul.f32 %v3538, 1.442695
        %v3665 = vpow.pop %v3664
        %v3666 = vmul.f32 %v3539, 1.442695
        %v3667 = vpow.pop %v3666
        %v3668 = vsel %vm3283, %v3541, 0.0
        %3669 = vadd.xlane.f32.xlu0 %v3668
        %v3670 = vpop.xlane.xlu0 %3669
        %v3671 = vsel %vm3283, %v3543, 0.0
        %3672 = vadd.xlane.f32.xlu0 %v3671
        %v3673 = vpop.xlane.xlu0 %3672
        %v3674 = vsel %vm3283, %v3545, 0.0
        %3675 = vadd.xlane.f32.xlu0 %v3674
        %v3676 = vpop.xlane.xlu0 %3675
        %v3677 = vsel %vm3283, %v3547, 0.0
        %3678 = vadd.xlane.f32.xlu0 %v3677
        %v3679 = vpop.xlane.xlu0 %3678
        %v3680 = vsel %vm3283, %v3549, 0.0
        %3681 = vadd.xlane.f32.xlu0 %v3680
        %v3682 = vpop.xlane.xlu0 %3681
        %v3683 = vsel %vm3283, %v3551, 0.0
        %3684 = vadd.xlane.f32.xlu0 %v3683
        %v3685 = vpop.xlane.xlu0 %3684
        %v3686 = vsel %vm3283, %v3553, 0.0
        %3687 = vadd.xlane.f32.xlu0 %v3686
        %v3688 = vpop.xlane.xlu0 %3687
        %v3689 = vsel %vm3283, %v3555, 0.0
        %3690 = vadd.xlane.f32.xlu0 %v3689
        %v3691 = vpop.xlane.xlu0 %3690
        %v3692 = vsel %vm3283, %v3557, 0.0
        %3693 = vadd.xlane.f32.xlu0 %v3692
        %v3694 = vpop.xlane.xlu0 %3693
        %v3695 = vsel %vm3283, %v3559, 0.0
        %3696 = vadd.xlane.f32.xlu0 %v3695
        %v3697 = vpop.xlane.xlu0 %3696
        %v3698 = vsel %vm3283, %v3561, 0.0
        %3699 = vadd.xlane.f32.xlu0 %v3698
        %v3700 = vpop.xlane.xlu0 %3699
        %v3701 = vsel %vm3283, %v3563, 0.0
        %3702 = vadd.xlane.f32.xlu0 %v3701
        %v3703 = vpop.xlane.xlu0 %3702
        %v3704 = vsel %vm3283, %v3565, 0.0
        %3705 = vadd.xlane.f32.xlu0 %v3704
        %v3706 = vpop.xlane.xlu0 %3705
        %v3707 = vsel %vm3283, %v3567, 0.0
        %3708 = vadd.xlane.f32.xlu0 %v3707
        %v3709 = vpop.xlane.xlu0 %3708
        %v3710 = vsel %vm3283, %v3569, 0.0
        %3711 = vadd.xlane.f32.xlu0 %v3710
        %v3712 = vpop.xlane.xlu0 %3711
        %v3713 = vsel %vm3283, %v3571, 0.0
        %3714 = vadd.xlane.f32.xlu0 %v3713
        %v3715 = vpop.xlane.xlu0 %3714
        %v3716 = vsel %vm3283, %v3573, 0.0
        %3717 = vadd.xlane.f32.xlu0 %v3716
        %v3718 = vpop.xlane.xlu0 %3717
        %v3719 = vsel %vm3283, %v3575, 0.0
        %3720 = vadd.xlane.f32.xlu0 %v3719
        %v3721 = vpop.xlane.xlu0 %3720
        %v3722 = vsel %vm3283, %v3577, 0.0
        %3723 = vadd.xlane.f32.xlu0 %v3722
        %v3724 = vpop.xlane.xlu0 %3723
        %v3725 = vsel %vm3283, %v3579, 0.0
        %3726 = vadd.xlane.f32.xlu0 %v3725
        %v3727 = vpop.xlane.xlu0 %3726
        %v3728 = vsel %vm3283, %v3581, 0.0
        %3729 = vadd.xlane.f32.xlu0 %v3728
        %v3730 = vpop.xlane.xlu0 %3729
        %v3731 = vsel %vm3283, %v3583, 0.0
        %3732 = vadd.xlane.f32.xlu0 %v3731
        %v3733 = vpop.xlane.xlu0 %3732
        %v3734 = vsel %vm3283, %v3585, 0.0
        %3735 = vadd.xlane.f32.xlu0 %v3734
        %v3736 = vpop.xlane.xlu0 %3735
        %v3737 = vsel %vm3283, %v3587, 0.0
        %3738 = vadd.xlane.f32.xlu0 %v3737
        %v3739 = vpop.xlane.xlu0 %3738
        %v3740 = vsel %vm3283, %v3589, 0.0
        %3741 = vadd.xlane.f32.xlu0 %v3740
        %v3742 = vpop.xlane.xlu0 %3741
        %v3743 = vsel %vm3283, %v3591, 0.0
        %3744 = vadd.xlane.f32.xlu0 %v3743
        %v3745 = vpop.xlane.xlu0 %3744
        %v3746 = vsel %vm3283, %v3593, 0.0
        %3747 = vadd.xlane.f32.xlu0 %v3746
        %v3748 = vpop.xlane.xlu0 %3747
        %v3749 = vsel %vm3283, %v3595, 0.0
        %3750 = vadd.xlane.f32.xlu0 %v3749
        %v3751 = vpop.xlane.xlu0 %3750
        %v3752 = vsel %vm3283, %v3597, 0.0
        %3753 = vadd.xlane.f32.xlu0 %v3752
        %v3754 = vpop.xlane.xlu0 %3753
        %v3755 = vsel %vm3283, %v3599, 0.0
        %3756 = vadd.xlane.f32.xlu0 %v3755
        %v3757 = vpop.xlane.xlu0 %3756
        %v3758 = vsel %vm3283, %v3601, 0.0
        %3759 = vadd.xlane.f32.xlu0 %v3758
        %v3760 = vpop.xlane.xlu0 %3759
        %v3761 = vsel %vm3283, %v3603, 0.0
        %3762 = vadd.xlane.f32.xlu0 %v3761
        %v3763 = vpop.xlane.xlu0 %3762
        %v3764 = vsel %vm3283, %v3605, 0.0
        %3765 = vadd.xlane.f32.xlu0 %v3764
        %v3766 = vpop.xlane.xlu0 %3765
        %v3767 = vsel %vm3283, %v3607, 0.0
        %3768 = vadd.xlane.f32.xlu0 %v3767
        %v3769 = vpop.xlane.xlu0 %3768
        %v3770 = vsel %vm3283, %v3609, 0.0
        %3771 = vadd.xlane.f32.xlu0 %v3770
        %v3772 = vpop.xlane.xlu0 %3771
        %v3773 = vsel %vm3283, %v3611, 0.0
        %3774 = vadd.xlane.f32.xlu0 %v3773
        %v3775 = vpop.xlane.xlu0 %3774
        %v3776 = vsel %vm3283, %v3613, 0.0
        %3777 = vadd.xlane.f32.xlu0 %v3776
        %v3778 = vpop.xlane.xlu0 %3777
        %v3779 = vsel %vm3283, %v3615, 0.0
        %3780 = vadd.xlane.f32.xlu0 %v3779
        %v3781 = vpop.xlane.xlu0 %3780
        %v3782 = vsel %vm3283, %v3617, 0.0
        %3783 = vadd.xlane.f32.xlu0 %v3782
        %v3784 = vpop.xlane.xlu0 %3783
        %v3785 = vsel %vm3283, %v3619, 0.0
        %3786 = vadd.xlane.f32.xlu0 %v3785
        %v3787 = vpop.xlane.xlu0 %3786
        %v3788 = vsel %vm3283, %v3621, 0.0
        %3789 = vadd.xlane.f32.xlu0 %v3788
        %v3790 = vpop.xlane.xlu0 %3789
        %v3791 = vsel %vm3283, %v3623, 0.0
        %3792 = vadd.xlane.f32.xlu0 %v3791
        %v3793 = vpop.xlane.xlu0 %3792
        %v3794 = vsel %vm3283, %v3625, 0.0
        %3795 = vadd.xlane.f32.xlu0 %v3794
        %v3796 = vpop.xlane.xlu0 %3795
        %v3797 = vsel %vm3283, %v3627, 0.0
        %3798 = vadd.xlane.f32.xlu0 %v3797
        %v3799 = vpop.xlane.xlu0 %3798
        %v3800 = vsel %vm3283, %v3629, 0.0
        %3801 = vadd.xlane.f32.xlu0 %v3800
        %v3802 = vpop.xlane.xlu0 %3801
        %v3803 = vsel %vm3283, %v3631, 0.0
        %3804 = vadd.xlane.f32.xlu0 %v3803
        %v3805 = vpop.xlane.xlu0 %3804
        %v3806 = vsel %vm3283, %v3633, 0.0
        %3807 = vadd.xlane.f32.xlu0 %v3806
        %v3808 = vpop.xlane.xlu0 %3807
        %v3809 = vsel %vm3283, %v3635, 0.0
        %3810 = vadd.xlane.f32.xlu0 %v3809
        %v3811 = vpop.xlane.xlu0 %3810
        %v3812 = vsel %vm3283, %v3637, 0.0
        %3813 = vadd.xlane.f32.xlu0 %v3812
        %v3814 = vpop.xlane.xlu0 %3813
        %v3815 = vsel %vm3283, %v3639, 0.0
        %3816 = vadd.xlane.f32.xlu0 %v3815
        %v3817 = vpop.xlane.xlu0 %3816
        %v3818 = vsel %vm3283, %v3641, 0.0
        %3819 = vadd.xlane.f32.xlu0 %v3818
        %v3820 = vpop.xlane.xlu0 %3819
        %v3821 = vsel %vm3283, %v3643, 0.0
        %3822 = vadd.xlane.f32.xlu0 %v3821
        %v3823 = vpop.xlane.xlu0 %3822
        %v3824 = vsel %vm3283, %v3645, 0.0
        %3825 = vadd.xlane.f32.xlu0 %v3824
        %v3826 = vpop.xlane.xlu0 %3825
        %v3827 = vsel %vm3283, %v3647, 0.0
        %3828 = vadd.xlane.f32.xlu0 %v3827
        %v3829 = vpop.xlane.xlu0 %3828
        %v3830 = vsel %vm3283, %v3649, 0.0
        %3831 = vadd.xlane.f32.xlu0 %v3830
        %v3832 = vpop.xlane.xlu0 %3831
        %v3833 = vsel %vm3283, %v3651, 0.0
        %3834 = vadd.xlane.f32.xlu0 %v3833
        %v3835 = vpop.xlane.xlu0 %3834
        %v3836 = vsel %vm3283, %v3653, 0.0
        %3837 = vadd.xlane.f32.xlu0 %v3836
        %v3838 = vpop.xlane.xlu0 %3837
        %v3839 = vsel %vm3283, %v3655, 0.0
        %3840 = vadd.xlane.f32.xlu0 %v3839
        %v3841 = vpop.xlane.xlu0 %3840
        %v3842 = vsel %vm3283, %v3657, 0.0
        %3843 = vadd.xlane.f32.xlu0 %v3842
        %v3844 = vpop.xlane.xlu0 %3843
        %v3845 = vsel %vm3283, %v3659, 0.0
        %3846 = vadd.xlane.f32.xlu0 %v3845
        %v3847 = vpop.xlane.xlu0 %3846
        %v3848 = vsel %vm3283, %v3661, 0.0
        %3849 = vadd.xlane.f32.xlu0 %v3848
        %v3850 = vpop.xlane.xlu0 %3849
        %v3851 = vsel %vm3283, %v3663, 0.0
        %3852 = vadd.xlane.f32.xlu0 %v3851
        %v3853 = vpop.xlane.xlu0 %3852
        %v3854 = vsel %vm3283, %v3665, 0.0
        %3855 = vadd.xlane.f32.xlu0 %v3854
        %v3856 = vpop.xlane.xlu0 %3855
        %v3857 = vsel %vm3283, %v3667, 0.0
        %3858 = vadd.xlane.f32.xlu0 %v3857
        %v3859 = vpop.xlane.xlu0 %3858
        %v3860 = vrcp.pop %v3670
        %v3861 = vmul.f32 %v3670, %v3860
        %v3862 = vsub.f32 1.0, %v3861
        %v3863 = vmul.f32 %v3860, %v3862
        %v3864 = vadd.f32 %v3860, %v3863
        %vm3865 = vweird.f32 %v3670
        %vm3866 = vweird.f32 %v3860
        %vm3867 = vmor %vm3865, %vm3866
        %v3868 = vsel %vm3867, %v3860, %v3864
        %v3869 = vand.u32 2147483647, %v3670
        %vm3870 = vcmp.eq.f32.partialorder %v3869, 8.507059e+37
        %v3871 = vand.u32 %v3670, 2147483648
        %v3872 = vor.u32 1.1754944e-38, %v3871
        %v3873 = vsel %vm3870, %v3872, %v3868
        %v3874 = vmul.f32 %v3541, %v3873
        %v3875 = vrcp.pop %v3673
        %v3876 = vmul.f32 %v3673, %v3875
        %v3877 = vsub.f32 1.0, %v3876
        %v3878 = vmul.f32 %v3875, %v3877
        %v3879 = vadd.f32 %v3875, %v3878
        %vm3880 = vweird.f32 %v3673
        %vm3881 = vweird.f32 %v3875
        %vm3882 = vmor %vm3880, %vm3881
        %v3883 = vsel %vm3882, %v3875, %v3879
        %v3884 = vand.u32 2147483647, %v3673
        %vm3885 = vcmp.eq.f32.partialorder %v3884, 8.507059e+37
        %v3886 = vand.u32 %v3673, 2147483648
        %v3887 = vor.u32 1.1754944e-38, %v3886
        %v3888 = vsel %vm3885, %v3887, %v3883
        %v3889 = vmul.f32 %v3543, %v3888
        %v3890 = vrcp.pop %v3676
        %v3891 = vmul.f32 %v3676, %v3890
        %v3892 = vsub.f32 1.0, %v3891
        %v3893 = vmul.f32 %v3890, %v3892
        %v3894 = vadd.f32 %v3890, %v3893
        %vm3895 = vweird.f32 %v3676
        %vm3896 = vweird.f32 %v3890
        %vm3897 = vmor %vm3895, %vm3896
        %v3898 = vsel %vm3897, %v3890, %v3894
        %v3899 = vand.u32 2147483647, %v3676
        %vm3900 = vcmp.eq.f32.partialorder %v3899, 8.507059e+37
        %v3901 = vand.u32 %v3676, 2147483648
        %v3902 = vor.u32 1.1754944e-38, %v3901
        %v3903 = vsel %vm3900, %v3902, %v3898
        %v3904 = vmul.f32 %v3545, %v3903
        %v3905 = vrcp.pop %v3679
        %v3906 = vmul.f32 %v3679, %v3905
        %v3907 = vsub.f32 1.0, %v3906
        %v3908 = vmul.f32 %v3905, %v3907
        %v3909 = vadd.f32 %v3905, %v3908
        %vm3910 = vweird.f32 %v3679
        %vm3911 = vweird.f32 %v3905
        %vm3912 = vmor %vm3910, %vm3911
        %v3913 = vsel %vm3912, %v3905, %v3909
        %v3914 = vand.u32 2147483647, %v3679
        %vm3915 = vcmp.eq.f32.partialorder %v3914, 8.507059e+37
        %v3916 = vand.u32 %v3679, 2147483648
        %v3917 = vor.u32 1.1754944e-38, %v3916
        %v3918 = vsel %vm3915, %v3917, %v3913
        %v3919 = vmul.f32 %v3547, %v3918
        %v3920 = vrcp.pop %v3682
        %v3921 = vmul.f32 %v3682, %v3920
        %v3922 = vsub.f32 1.0, %v3921
        %v3923 = vmul.f32 %v3920, %v3922
        %v3924 = vadd.f32 %v3920, %v3923
        %vm3925 = vweird.f32 %v3682
        %vm3926 = vweird.f32 %v3920
        %vm3927 = vmor %vm3925, %vm3926
        %v3928 = vsel %vm3927, %v3920, %v3924
        %v3929 = vand.u32 2147483647, %v3682
        %vm3930 = vcmp.eq.f32.partialorder %v3929, 8.507059e+37
        %v3931 = vand.u32 %v3682, 2147483648
        %v3932 = vor.u32 1.1754944e-38, %v3931
        %v3933 = vsel %vm3930, %v3932, %v3928
        %v3934 = vmul.f32 %v3549, %v3933
        %v3935 = vrcp.pop %v3685
        %v3936 = vmul.f32 %v3685, %v3935
        %v3937 = vsub.f32 1.0, %v3936
        %v3938 = vmul.f32 %v3935, %v3937
        %v3939 = vadd.f32 %v3935, %v3938
        %vm3940 = vweird.f32 %v3685
        %vm3941 = vweird.f32 %v3935
        %vm3942 = vmor %vm3940, %vm3941
        %v3943 = vsel %vm3942, %v3935, %v3939
        %v3944 = vand.u32 2147483647, %v3685
        %vm3945 = vcmp.eq.f32.partialorder %v3944, 8.507059e+37
        %v3946 = vand.u32 %v3685, 2147483648
        %v3947 = vor.u32 1.1754944e-38, %v3946
        %v3948 = vsel %vm3945, %v3947, %v3943
        %v3949 = vmul.f32 %v3551, %v3948
        %v3950 = vrcp.pop %v3688
        %v3951 = vmul.f32 %v3688, %v3950
        %v3952 = vsub.f32 1.0, %v3951
        %v3953 = vmul.f32 %v3950, %v3952
        %v3954 = vadd.f32 %v3950, %v3953
        %vm3955 = vweird.f32 %v3688
        %vm3956 = vweird.f32 %v3950
        %vm3957 = vmor %vm3955, %vm3956
        %v3958 = vsel %vm3957, %v3950, %v3954
        %v3959 = vand.u32 2147483647, %v3688
        %vm3960 = vcmp.eq.f32.partialorder %v3959, 8.507059e+37
        %v3961 = vand.u32 %v3688, 2147483648
        %v3962 = vor.u32 1.1754944e-38, %v3961
        %v3963 = vsel %vm3960, %v3962, %v3958
        %v3964 = vmul.f32 %v3553, %v3963
        %v3965 = vrcp.pop %v3691
        %v3966 = vmul.f32 %v3691, %v3965
        %v3967 = vsub.f32 1.0, %v3966
        %v3968 = vmul.f32 %v3965, %v3967
        %v3969 = vadd.f32 %v3965, %v3968
        %vm3970 = vweird.f32 %v3691
        %vm3971 = vweird.f32 %v3965
        %vm3972 = vmor %vm3970, %vm3971
        %v3973 = vsel %vm3972, %v3965, %v3969
        %v3974 = vand.u32 2147483647, %v3691
        %vm3975 = vcmp.eq.f32.partialorder %v3974, 8.507059e+37
        %v3976 = vand.u32 %v3691, 2147483648
        %v3977 = vor.u32 1.1754944e-38, %v3976
        %v3978 = vsel %vm3975, %v3977, %v3973
        %v3979 = vmul.f32 %v3555, %v3978
        %v3980 = vrcp.pop %v3694
        %v3981 = vmul.f32 %v3694, %v3980
        %v3982 = vsub.f32 1.0, %v3981
        %v3983 = vmul.f32 %v3980, %v3982
        %v3984 = vadd.f32 %v3980, %v3983
        %vm3985 = vweird.f32 %v3694
        %vm3986 = vweird.f32 %v3980
        %vm3987 = vmor %vm3985, %vm3986
        %v3988 = vsel %vm3987, %v3980, %v3984
        %v3989 = vand.u32 2147483647, %v3694
        %vm3990 = vcmp.eq.f32.partialorder %v3989, 8.507059e+37
        %v3991 = vand.u32 %v3694, 2147483648
        %v3992 = vor.u32 1.1754944e-38, %v3991
        %v3993 = vsel %vm3990, %v3992, %v3988
        %v3994 = vmul.f32 %v3557, %v3993
        %v3995 = vrcp.pop %v3697
        %v3996 = vmul.f32 %v3697, %v3995
        %v3997 = vsub.f32 1.0, %v3996
        %v3998 = vmul.f32 %v3995, %v3997
        %v3999 = vadd.f32 %v3995, %v3998
        %vm4000 = vweird.f32 %v3697
        %vm4001 = vweird.f32 %v3995
        %vm4002 = vmor %vm4000, %vm4001
        %v4003 = vsel %vm4002, %v3995, %v3999
        %v4004 = vand.u32 2147483647, %v3697
        %vm4005 = vcmp.eq.f32.partialorder %v4004, 8.507059e+37
        %v4006 = vand.u32 %v3697, 2147483648
        %v4007 = vor.u32 1.1754944e-38, %v4006
        %v4008 = vsel %vm4005, %v4007, %v4003
        %v4009 = vmul.f32 %v3559, %v4008
        %v4010 = vrcp.pop %v3700
        %v4011 = vmul.f32 %v3700, %v4010
        %v4012 = vsub.f32 1.0, %v4011
        %v4013 = vmul.f32 %v4010, %v4012
        %v4014 = vadd.f32 %v4010, %v4013
        %vm4015 = vweird.f32 %v3700
        %vm4016 = vweird.f32 %v4010
        %vm4017 = vmor %vm4015, %vm4016
        %v4018 = vsel %vm4017, %v4010, %v4014
        %v4019 = vand.u32 2147483647, %v3700
        %vm4020 = vcmp.eq.f32.partialorder %v4019, 8.507059e+37
        %v4021 = vand.u32 %v3700, 2147483648
        %v4022 = vor.u32 1.1754944e-38, %v4021
        %v4023 = vsel %vm4020, %v4022, %v4018
        %v4024 = vmul.f32 %v3561, %v4023
        %v4025 = vrcp.pop %v3703
        %v4026 = vmul.f32 %v3703, %v4025
        %v4027 = vsub.f32 1.0, %v4026
        %v4028 = vmul.f32 %v4025, %v4027
        %v4029 = vadd.f32 %v4025, %v4028
        %vm4030 = vweird.f32 %v3703
        %vm4031 = vweird.f32 %v4025
        %vm4032 = vmor %vm4030, %vm4031
        %v4033 = vsel %vm4032, %v4025, %v4029
        %v4034 = vand.u32 2147483647, %v3703
        %vm4035 = vcmp.eq.f32.partialorder %v4034, 8.507059e+37
        %v4036 = vand.u32 %v3703, 2147483648
        %v4037 = vor.u32 1.1754944e-38, %v4036
        %v4038 = vsel %vm4035, %v4037, %v4033
        %v4039 = vmul.f32 %v3563, %v4038
        %v4040 = vrcp.pop %v3706
        %v4041 = vmul.f32 %v3706, %v4040
        %v4042 = vsub.f32 1.0, %v4041
        %v4043 = vmul.f32 %v4040, %v4042
        %v4044 = vadd.f32 %v4040, %v4043
        %vm4045 = vweird.f32 %v3706
        %vm4046 = vweird.f32 %v4040
        %vm4047 = vmor %vm4045, %vm4046
        %v4048 = vsel %vm4047, %v4040, %v4044
        %v4049 = vand.u32 2147483647, %v3706
        %vm4050 = vcmp.eq.f32.partialorder %v4049, 8.507059e+37
        %v4051 = vand.u32 %v3706, 2147483648
        %v4052 = vor.u32 1.1754944e-38, %v4051
        %v4053 = vsel %vm4050, %v4052, %v4048
        %v4054 = vmul.f32 %v3565, %v4053
        %v4055 = vrcp.pop %v3709
        %v4056 = vmul.f32 %v3709, %v4055
        %v4057 = vsub.f32 1.0, %v4056
        %v4058 = vmul.f32 %v4055, %v4057
        %v4059 = vadd.f32 %v4055, %v4058
        %vm4060 = vweird.f32 %v3709
        %vm4061 = vweird.f32 %v4055
        %vm4062 = vmor %vm4060, %vm4061
        %v4063 = vsel %vm4062, %v4055, %v4059
        %v4064 = vand.u32 2147483647, %v3709
        %vm4065 = vcmp.eq.f32.partialorder %v4064, 8.507059e+37
        %v4066 = vand.u32 %v3709, 2147483648
        %v4067 = vor.u32 1.1754944e-38, %v4066
        %v4068 = vsel %vm4065, %v4067, %v4063
        %v4069 = vmul.f32 %v3567, %v4068
        %v4070 = vrcp.pop %v3712
        %v4071 = vmul.f32 %v3712, %v4070
        %v4072 = vsub.f32 1.0, %v4071
        %v4073 = vmul.f32 %v4070, %v4072
        %v4074 = vadd.f32 %v4070, %v4073
        %vm4075 = vweird.f32 %v3712
        %vm4076 = vweird.f32 %v4070
        %vm4077 = vmor %vm4075, %vm4076
        %v4078 = vsel %vm4077, %v4070, %v4074
        %v4079 = vand.u32 2147483647, %v3712
        %vm4080 = vcmp.eq.f32.partialorder %v4079, 8.507059e+37
        %v4081 = vand.u32 %v3712, 2147483648
        %v4082 = vor.u32 1.1754944e-38, %v4081
        %v4083 = vsel %vm4080, %v4082, %v4078
        %v4084 = vmul.f32 %v3569, %v4083
        %v4085 = vrcp.pop %v3715
        %v4086 = vmul.f32 %v3715, %v4085
        %v4087 = vsub.f32 1.0, %v4086
        %v4088 = vmul.f32 %v4085, %v4087
        %v4089 = vadd.f32 %v4085, %v4088
        %vm4090 = vweird.f32 %v3715
        %vm4091 = vweird.f32 %v4085
        %vm4092 = vmor %vm4090, %vm4091
        %v4093 = vsel %vm4092, %v4085, %v4089
        %v4094 = vand.u32 2147483647, %v3715
        %vm4095 = vcmp.eq.f32.partialorder %v4094, 8.507059e+37
        %v4096 = vand.u32 %v3715, 2147483648
        %v4097 = vor.u32 1.1754944e-38, %v4096
        %v4098 = vsel %vm4095, %v4097, %v4093
        %v4099 = vmul.f32 %v3571, %v4098
        %v4100 = vrcp.pop %v3718
        %v4101 = vmul.f32 %v3718, %v4100
        %v4102 = vsub.f32 1.0, %v4101
        %v4103 = vmul.f32 %v4100, %v4102
        %v4104 = vadd.f32 %v4100, %v4103
        %vm4105 = vweird.f32 %v3718
        %vm4106 = vweird.f32 %v4100
        %vm4107 = vmor %vm4105, %vm4106
        %v4108 = vsel %vm4107, %v4100, %v4104
        %v4109 = vand.u32 2147483647, %v3718
        %vm4110 = vcmp.eq.f32.partialorder %v4109, 8.507059e+37
        %v4111 = vand.u32 %v3718, 2147483648
        %v4112 = vor.u32 1.1754944e-38, %v4111
        %v4113 = vsel %vm4110, %v4112, %v4108
        %v4114 = vmul.f32 %v3573, %v4113
        %v4115 = vrcp.pop %v3721
        %v4116 = vmul.f32 %v3721, %v4115
        %v4117 = vsub.f32 1.0, %v4116
        %v4118 = vmul.f32 %v4115, %v4117
        %v4119 = vadd.f32 %v4115, %v4118
        %vm4120 = vweird.f32 %v3721
        %vm4121 = vweird.f32 %v4115
        %vm4122 = vmor %vm4120, %vm4121
        %v4123 = vsel %vm4122, %v4115, %v4119
        %v4124 = vand.u32 2147483647, %v3721
        %vm4125 = vcmp.eq.f32.partialorder %v4124, 8.507059e+37
        %v4126 = vand.u32 %v3721, 2147483648
        %v4127 = vor.u32 1.1754944e-38, %v4126
        %v4128 = vsel %vm4125, %v4127, %v4123
        %v4129 = vmul.f32 %v3575, %v4128
        %v4130 = vrcp.pop %v3724
        %v4131 = vmul.f32 %v3724, %v4130
        %v4132 = vsub.f32 1.0, %v4131
        %v4133 = vmul.f32 %v4130, %v4132
        %v4134 = vadd.f32 %v4130, %v4133
        %vm4135 = vweird.f32 %v3724
        %vm4136 = vweird.f32 %v4130
        %vm4137 = vmor %vm4135, %vm4136
        %v4138 = vsel %vm4137, %v4130, %v4134
        %v4139 = vand.u32 2147483647, %v3724
        %vm4140 = vcmp.eq.f32.partialorder %v4139, 8.507059e+37
        %v4141 = vand.u32 %v3724, 2147483648
        %v4142 = vor.u32 1.1754944e-38, %v4141
        %v4143 = vsel %vm4140, %v4142, %v4138
        %v4144 = vmul.f32 %v3577, %v4143
        %v4145 = vrcp.pop %v3727
        %v4146 = vmul.f32 %v3727, %v4145
        %v4147 = vsub.f32 1.0, %v4146
        %v4148 = vmul.f32 %v4145, %v4147
        %v4149 = vadd.f32 %v4145, %v4148
        %vm4150 = vweird.f32 %v3727
        %vm4151 = vweird.f32 %v4145
        %vm4152 = vmor %vm4150, %vm4151
        %v4153 = vsel %vm4152, %v4145, %v4149
        %v4154 = vand.u32 2147483647, %v3727
        %vm4155 = vcmp.eq.f32.partialorder %v4154, 8.507059e+37
        %v4156 = vand.u32 %v3727, 2147483648
        %v4157 = vor.u32 1.1754944e-38, %v4156
        %v4158 = vsel %vm4155, %v4157, %v4153
        %v4159 = vmul.f32 %v3579, %v4158
        %v4160 = vrcp.pop %v3730
        %v4161 = vmul.f32 %v3730, %v4160
        %v4162 = vsub.f32 1.0, %v4161
        %v4163 = vmul.f32 %v4160, %v4162
        %v4164 = vadd.f32 %v4160, %v4163
        %vm4165 = vweird.f32 %v3730
        %vm4166 = vweird.f32 %v4160
        %vm4167 = vmor %vm4165, %vm4166
        %v4168 = vsel %vm4167, %v4160, %v4164
        %v4169 = vand.u32 2147483647, %v3730
        %vm4170 = vcmp.eq.f32.partialorder %v4169, 8.507059e+37
        %v4171 = vand.u32 %v3730, 2147483648
        %v4172 = vor.u32 1.1754944e-38, %v4171
        %v4173 = vsel %vm4170, %v4172, %v4168
        %v4174 = vmul.f32 %v3581, %v4173
        %v4175 = vrcp.pop %v3733
        %v4176 = vmul.f32 %v3733, %v4175
        %v4177 = vsub.f32 1.0, %v4176
        %v4178 = vmul.f32 %v4175, %v4177
        %v4179 = vadd.f32 %v4175, %v4178
        %vm4180 = vweird.f32 %v3733
        %vm4181 = vweird.f32 %v4175
        %vm4182 = vmor %vm4180, %vm4181
        %v4183 = vsel %vm4182, %v4175, %v4179
        %v4184 = vand.u32 2147483647, %v3733
        %vm4185 = vcmp.eq.f32.partialorder %v4184, 8.507059e+37
        %v4186 = vand.u32 %v3733, 2147483648
        %v4187 = vor.u32 1.1754944e-38, %v4186
        %v4188 = vsel %vm4185, %v4187, %v4183
        %v4189 = vmul.f32 %v3583, %v4188
        %v4190 = vrcp.pop %v3736
        %v4191 = vmul.f32 %v3736, %v4190
        %v4192 = vsub.f32 1.0, %v4191
        %v4193 = vmul.f32 %v4190, %v4192
        %v4194 = vadd.f32 %v4190, %v4193
        %vm4195 = vweird.f32 %v3736
        %vm4196 = vweird.f32 %v4190
        %vm4197 = vmor %vm4195, %vm4196
        %v4198 = vsel %vm4197, %v4190, %v4194
        %v4199 = vand.u32 2147483647, %v3736
        %vm4200 = vcmp.eq.f32.partialorder %v4199, 8.507059e+37
        %v4201 = vand.u32 %v3736, 2147483648
        %v4202 = vor.u32 1.1754944e-38, %v4201
        %v4203 = vsel %vm4200, %v4202, %v4198
        %v4204 = vmul.f32 %v3585, %v4203
        %v4205 = vrcp.pop %v3739
        %v4206 = vmul.f32 %v3739, %v4205
        %v4207 = vsub.f32 1.0, %v4206
        %v4208 = vmul.f32 %v4205, %v4207
        %v4209 = vadd.f32 %v4205, %v4208
        %vm4210 = vweird.f32 %v3739
        %vm4211 = vweird.f32 %v4205
        %vm4212 = vmor %vm4210, %vm4211
        %v4213 = vsel %vm4212, %v4205, %v4209
        %v4214 = vand.u32 2147483647, %v3739
        %vm4215 = vcmp.eq.f32.partialorder %v4214, 8.507059e+37
        %v4216 = vand.u32 %v3739, 2147483648
        %v4217 = vor.u32 1.1754944e-38, %v4216
        %v4218 = vsel %vm4215, %v4217, %v4213
        %v4219 = vmul.f32 %v3587, %v4218
        %v4220 = vrcp.pop %v3742
        %v4221 = vmul.f32 %v3742, %v4220
        %v4222 = vsub.f32 1.0, %v4221
        %v4223 = vmul.f32 %v4220, %v4222
        %v4224 = vadd.f32 %v4220, %v4223
        %vm4225 = vweird.f32 %v3742
        %vm4226 = vweird.f32 %v4220
        %vm4227 = vmor %vm4225, %vm4226
        %v4228 = vsel %vm4227, %v4220, %v4224
        %v4229 = vand.u32 2147483647, %v3742
        %vm4230 = vcmp.eq.f32.partialorder %v4229, 8.507059e+37
        %v4231 = vand.u32 %v3742, 2147483648
        %v4232 = vor.u32 1.1754944e-38, %v4231
        %v4233 = vsel %vm4230, %v4232, %v4228
        %v4234 = vmul.f32 %v3589, %v4233
        %v4235 = vrcp.pop %v3745
        %v4236 = vmul.f32 %v3745, %v4235
        %v4237 = vsub.f32 1.0, %v4236
        %v4238 = vmul.f32 %v4235, %v4237
        %v4239 = vadd.f32 %v4235, %v4238
        %vm4240 = vweird.f32 %v3745
        %vm4241 = vweird.f32 %v4235
        %vm4242 = vmor %vm4240, %vm4241
        %v4243 = vsel %vm4242, %v4235, %v4239
        %v4244 = vand.u32 2147483647, %v3745
        %vm4245 = vcmp.eq.f32.partialorder %v4244, 8.507059e+37
        %v4246 = vand.u32 %v3745, 2147483648
        %v4247 = vor.u32 1.1754944e-38, %v4246
        %v4248 = vsel %vm4245, %v4247, %v4243
        %v4249 = vmul.f32 %v3591, %v4248
        %v4250 = vrcp.pop %v3748
        %v4251 = vmul.f32 %v3748, %v4250
        %v4252 = vsub.f32 1.0, %v4251
        %v4253 = vmul.f32 %v4250, %v4252
        %v4254 = vadd.f32 %v4250, %v4253
        %vm4255 = vweird.f32 %v3748
        %vm4256 = vweird.f32 %v4250
        %vm4257 = vmor %vm4255, %vm4256
        %v4258 = vsel %vm4257, %v4250, %v4254
        %v4259 = vand.u32 2147483647, %v3748
        %vm4260 = vcmp.eq.f32.partialorder %v4259, 8.507059e+37
        %v4261 = vand.u32 %v3748, 2147483648
        %v4262 = vor.u32 1.1754944e-38, %v4261
        %v4263 = vsel %vm4260, %v4262, %v4258
        %v4264 = vmul.f32 %v3593, %v4263
        %v4265 = vrcp.pop %v3751
        %v4266 = vmul.f32 %v3751, %v4265
        %v4267 = vsub.f32 1.0, %v4266
        %v4268 = vmul.f32 %v4265, %v4267
        %v4269 = vadd.f32 %v4265, %v4268
        %vm4270 = vweird.f32 %v3751
        %vm4271 = vweird.f32 %v4265
        %vm4272 = vmor %vm4270, %vm4271
        %v4273 = vsel %vm4272, %v4265, %v4269
        %v4274 = vand.u32 2147483647, %v3751
        %vm4275 = vcmp.eq.f32.partialorder %v4274, 8.507059e+37
        %v4276 = vand.u32 %v3751, 2147483648
        %v4277 = vor.u32 1.1754944e-38, %v4276
        %v4278 = vsel %vm4275, %v4277, %v4273
        %v4279 = vmul.f32 %v3595, %v4278
        %v4280 = vrcp.pop %v3754
        %v4281 = vmul.f32 %v3754, %v4280
        %v4282 = vsub.f32 1.0, %v4281
        %v4283 = vmul.f32 %v4280, %v4282
        %v4284 = vadd.f32 %v4280, %v4283
        %vm4285 = vweird.f32 %v3754
        %vm4286 = vweird.f32 %v4280
        %vm4287 = vmor %vm4285, %vm4286
        %v4288 = vsel %vm4287, %v4280, %v4284
        %v4289 = vand.u32 2147483647, %v3754
        %vm4290 = vcmp.eq.f32.partialorder %v4289, 8.507059e+37
        %v4291 = vand.u32 %v3754, 2147483648
        %v4292 = vor.u32 1.1754944e-38, %v4291
        %v4293 = vsel %vm4290, %v4292, %v4288
        %v4294 = vmul.f32 %v3597, %v4293
        %v4295 = vrcp.pop %v3757
        %v4296 = vmul.f32 %v3757, %v4295
        %v4297 = vsub.f32 1.0, %v4296
        %v4298 = vmul.f32 %v4295, %v4297
        %v4299 = vadd.f32 %v4295, %v4298
        %vm4300 = vweird.f32 %v3757
        %vm4301 = vweird.f32 %v4295
        %vm4302 = vmor %vm4300, %vm4301
        %v4303 = vsel %vm4302, %v4295, %v4299
        %v4304 = vand.u32 2147483647, %v3757
        %vm4305 = vcmp.eq.f32.partialorder %v4304, 8.507059e+37
        %v4306 = vand.u32 %v3757, 2147483648
        %v4307 = vor.u32 1.1754944e-38, %v4306
        %v4308 = vsel %vm4305, %v4307, %v4303
        %v4309 = vmul.f32 %v3599, %v4308
        %v4310 = vrcp.pop %v3760
        %v4311 = vmul.f32 %v3760, %v4310
        %v4312 = vsub.f32 1.0, %v4311
        %v4313 = vmul.f32 %v4310, %v4312
        %v4314 = vadd.f32 %v4310, %v4313
        %vm4315 = vweird.f32 %v3760
        %vm4316 = vweird.f32 %v4310
        %vm4317 = vmor %vm4315, %vm4316
        %v4318 = vsel %vm4317, %v4310, %v4314
        %v4319 = vand.u32 2147483647, %v3760
        %vm4320 = vcmp.eq.f32.partialorder %v4319, 8.507059e+37
        %v4321 = vand.u32 %v3760, 2147483648
        %v4322 = vor.u32 1.1754944e-38, %v4321
        %v4323 = vsel %vm4320, %v4322, %v4318
        %v4324 = vmul.f32 %v3601, %v4323
        %v4325 = vrcp.pop %v3763
        %v4326 = vmul.f32 %v3763, %v4325
        %v4327 = vsub.f32 1.0, %v4326
        %v4328 = vmul.f32 %v4325, %v4327
        %v4329 = vadd.f32 %v4325, %v4328
        %vm4330 = vweird.f32 %v3763
        %vm4331 = vweird.f32 %v4325
        %vm4332 = vmor %vm4330, %vm4331
        %v4333 = vsel %vm4332, %v4325, %v4329
        %v4334 = vand.u32 2147483647, %v3763
        %vm4335 = vcmp.eq.f32.partialorder %v4334, 8.507059e+37
        %v4336 = vand.u32 %v3763, 2147483648
        %v4337 = vor.u32 1.1754944e-38, %v4336
        %v4338 = vsel %vm4335, %v4337, %v4333
        %v4339 = vmul.f32 %v3603, %v4338
        %v4340 = vrcp.pop %v3766
        %v4341 = vmul.f32 %v3766, %v4340
        %v4342 = vsub.f32 1.0, %v4341
        %v4343 = vmul.f32 %v4340, %v4342
        %v4344 = vadd.f32 %v4340, %v4343
        %vm4345 = vweird.f32 %v3766
        %vm4346 = vweird.f32 %v4340
        %vm4347 = vmor %vm4345, %vm4346
        %v4348 = vsel %vm4347, %v4340, %v4344
        %v4349 = vand.u32 2147483647, %v3766
        %vm4350 = vcmp.eq.f32.partialorder %v4349, 8.507059e+37
        %v4351 = vand.u32 %v3766, 2147483648
        %v4352 = vor.u32 1.1754944e-38, %v4351
        %v4353 = vsel %vm4350, %v4352, %v4348
        %v4354 = vmul.f32 %v3605, %v4353
        %v4355 = vrcp.pop %v3769
        %v4356 = vmul.f32 %v3769, %v4355
        %v4357 = vsub.f32 1.0, %v4356
        %v4358 = vmul.f32 %v4355, %v4357
        %v4359 = vadd.f32 %v4355, %v4358
        %vm4360 = vweird.f32 %v3769
        %vm4361 = vweird.f32 %v4355
        %vm4362 = vmor %vm4360, %vm4361
        %v4363 = vsel %vm4362, %v4355, %v4359
        %v4364 = vand.u32 2147483647, %v3769
        %vm4365 = vcmp.eq.f32.partialorder %v4364, 8.507059e+37
        %v4366 = vand.u32 %v3769, 2147483648
        %v4367 = vor.u32 1.1754944e-38, %v4366
        %v4368 = vsel %vm4365, %v4367, %v4363
        %v4369 = vmul.f32 %v3607, %v4368
        %v4370 = vrcp.pop %v3772
        %v4371 = vmul.f32 %v3772, %v4370
        %v4372 = vsub.f32 1.0, %v4371
        %v4373 = vmul.f32 %v4370, %v4372
        %v4374 = vadd.f32 %v4370, %v4373
        %vm4375 = vweird.f32 %v3772
        %vm4376 = vweird.f32 %v4370
        %vm4377 = vmor %vm4375, %vm4376
        %v4378 = vsel %vm4377, %v4370, %v4374
        %v4379 = vand.u32 2147483647, %v3772
        %vm4380 = vcmp.eq.f32.partialorder %v4379, 8.507059e+37
        %v4381 = vand.u32 %v3772, 2147483648
        %v4382 = vor.u32 1.1754944e-38, %v4381
        %v4383 = vsel %vm4380, %v4382, %v4378
        %v4384 = vmul.f32 %v3609, %v4383
        %v4385 = vrcp.pop %v3775
        %v4386 = vmul.f32 %v3775, %v4385
        %v4387 = vsub.f32 1.0, %v4386
        %v4388 = vmul.f32 %v4385, %v4387
        %v4389 = vadd.f32 %v4385, %v4388
        %vm4390 = vweird.f32 %v3775
        %vm4391 = vweird.f32 %v4385
        %vm4392 = vmor %vm4390, %vm4391
        %v4393 = vsel %vm4392, %v4385, %v4389
        %v4394 = vand.u32 2147483647, %v3775
        %vm4395 = vcmp.eq.f32.partialorder %v4394, 8.507059e+37
        %v4396 = vand.u32 %v3775, 2147483648
        %v4397 = vor.u32 1.1754944e-38, %v4396
        %v4398 = vsel %vm4395, %v4397, %v4393
        %v4399 = vmul.f32 %v3611, %v4398
        %v4400 = vrcp.pop %v3778
        %v4401 = vmul.f32 %v3778, %v4400
        %v4402 = vsub.f32 1.0, %v4401
        %v4403 = vmul.f32 %v4400, %v4402
        %v4404 = vadd.f32 %v4400, %v4403
        %vm4405 = vweird.f32 %v3778
        %vm4406 = vweird.f32 %v4400
        %vm4407 = vmor %vm4405, %vm4406
        %v4408 = vsel %vm4407, %v4400, %v4404
        %v4409 = vand.u32 2147483647, %v3778
        %vm4410 = vcmp.eq.f32.partialorder %v4409, 8.507059e+37
        %v4411 = vand.u32 %v3778, 2147483648
        %v4412 = vor.u32 1.1754944e-38, %v4411
        %v4413 = vsel %vm4410, %v4412, %v4408
        %v4414 = vmul.f32 %v3613, %v4413
        %v4415 = vrcp.pop %v3781
        %v4416 = vmul.f32 %v3781, %v4415
        %v4417 = vsub.f32 1.0, %v4416
        %v4418 = vmul.f32 %v4415, %v4417
        %v4419 = vadd.f32 %v4415, %v4418
        %vm4420 = vweird.f32 %v3781
        %vm4421 = vweird.f32 %v4415
        %vm4422 = vmor %vm4420, %vm4421
        %v4423 = vsel %vm4422, %v4415, %v4419
        %v4424 = vand.u32 2147483647, %v3781
        %vm4425 = vcmp.eq.f32.partialorder %v4424, 8.507059e+37
        %v4426 = vand.u32 %v3781, 2147483648
        %v4427 = vor.u32 1.1754944e-38, %v4426
        %v4428 = vsel %vm4425, %v4427, %v4423
        %v4429 = vmul.f32 %v3615, %v4428
        %v4430 = vrcp.pop %v3784
        %v4431 = vmul.f32 %v3784, %v4430
        %v4432 = vsub.f32 1.0, %v4431
        %v4433 = vmul.f32 %v4430, %v4432
        %v4434 = vadd.f32 %v4430, %v4433
        %vm4435 = vweird.f32 %v3784
        %vm4436 = vweird.f32 %v4430
        %vm4437 = vmor %vm4435, %vm4436
        %v4438 = vsel %vm4437, %v4430, %v4434
        %v4439 = vand.u32 2147483647, %v3784
        %vm4440 = vcmp.eq.f32.partialorder %v4439, 8.507059e+37
        %v4441 = vand.u32 %v3784, 2147483648
        %v4442 = vor.u32 1.1754944e-38, %v4441
        %v4443 = vsel %vm4440, %v4442, %v4438
        %v4444 = vmul.f32 %v3617, %v4443
        %v4445 = vrcp.pop %v3787
        %v4446 = vmul.f32 %v3787, %v4445
        %v4447 = vsub.f32 1.0, %v4446
        %v4448 = vmul.f32 %v4445, %v4447
        %v4449 = vadd.f32 %v4445, %v4448
        %vm4450 = vweird.f32 %v3787
        %vm4451 = vweird.f32 %v4445
        %vm4452 = vmor %vm4450, %vm4451
        %v4453 = vsel %vm4452, %v4445, %v4449
        %v4454 = vand.u32 2147483647, %v3787
        %vm4455 = vcmp.eq.f32.partialorder %v4454, 8.507059e+37
        %v4456 = vand.u32 %v3787, 2147483648
        %v4457 = vor.u32 1.1754944e-38, %v4456
        %v4458 = vsel %vm4455, %v4457, %v4453
        %v4459 = vmul.f32 %v3619, %v4458
        %v4460 = vrcp.pop %v3790
        %v4461 = vmul.f32 %v3790, %v4460
        %v4462 = vsub.f32 1.0, %v4461
        %v4463 = vmul.f32 %v4460, %v4462
        %v4464 = vadd.f32 %v4460, %v4463
        %vm4465 = vweird.f32 %v3790
        %vm4466 = vweird.f32 %v4460
        %vm4467 = vmor %vm4465, %vm4466
        %v4468 = vsel %vm4467, %v4460, %v4464
        %v4469 = vand.u32 2147483647, %v3790
        %vm4470 = vcmp.eq.f32.partialorder %v4469, 8.507059e+37
        %v4471 = vand.u32 %v3790, 2147483648
        %v4472 = vor.u32 1.1754944e-38, %v4471
        %v4473 = vsel %vm4470, %v4472, %v4468
        %v4474 = vmul.f32 %v3621, %v4473
        %v4475 = vrcp.pop %v3793
        %v4476 = vmul.f32 %v3793, %v4475
        %v4477 = vsub.f32 1.0, %v4476
        %v4478 = vmul.f32 %v4475, %v4477
        %v4479 = vadd.f32 %v4475, %v4478
        %vm4480 = vweird.f32 %v3793
        %vm4481 = vweird.f32 %v4475
        %vm4482 = vmor %vm4480, %vm4481
        %v4483 = vsel %vm4482, %v4475, %v4479
        %v4484 = vand.u32 2147483647, %v3793
        %vm4485 = vcmp.eq.f32.partialorder %v4484, 8.507059e+37
        %v4486 = vand.u32 %v3793, 2147483648
        %v4487 = vor.u32 1.1754944e-38, %v4486
        %v4488 = vsel %vm4485, %v4487, %v4483
        %v4489 = vmul.f32 %v3623, %v4488
        %v4490 = vrcp.pop %v3796
        %v4491 = vmul.f32 %v3796, %v4490
        %v4492 = vsub.f32 1.0, %v4491
        %v4493 = vmul.f32 %v4490, %v4492
        %v4494 = vadd.f32 %v4490, %v4493
        %vm4495 = vweird.f32 %v3796
        %vm4496 = vweird.f32 %v4490
        %vm4497 = vmor %vm4495, %vm4496
        %v4498 = vsel %vm4497, %v4490, %v4494
        %v4499 = vand.u32 2147483647, %v3796
        %vm4500 = vcmp.eq.f32.partialorder %v4499, 8.507059e+37
        %v4501 = vand.u32 %v3796, 2147483648
        %v4502 = vor.u32 1.1754944e-38, %v4501
        %v4503 = vsel %vm4500, %v4502, %v4498
        %v4504 = vmul.f32 %v3625, %v4503
        %v4505 = vrcp.pop %v3799
        %v4506 = vmul.f32 %v3799, %v4505
        %v4507 = vsub.f32 1.0, %v4506
        %v4508 = vmul.f32 %v4505, %v4507
        %v4509 = vadd.f32 %v4505, %v4508
        %vm4510 = vweird.f32 %v3799
        %vm4511 = vweird.f32 %v4505
        %vm4512 = vmor %vm4510, %vm4511
        %v4513 = vsel %vm4512, %v4505, %v4509
        %v4514 = vand.u32 2147483647, %v3799
        %vm4515 = vcmp.eq.f32.partialorder %v4514, 8.507059e+37
        %v4516 = vand.u32 %v3799, 2147483648
        %v4517 = vor.u32 1.1754944e-38, %v4516
        %v4518 = vsel %vm4515, %v4517, %v4513
        %v4519 = vmul.f32 %v3627, %v4518
        %v4520 = vrcp.pop %v3802
        %v4521 = vmul.f32 %v3802, %v4520
        %v4522 = vsub.f32 1.0, %v4521
        %v4523 = vmul.f32 %v4520, %v4522
        %v4524 = vadd.f32 %v4520, %v4523
        %vm4525 = vweird.f32 %v3802
        %vm4526 = vweird.f32 %v4520
        %vm4527 = vmor %vm4525, %vm4526
        %v4528 = vsel %vm4527, %v4520, %v4524
        %v4529 = vand.u32 2147483647, %v3802
        %vm4530 = vcmp.eq.f32.partialorder %v4529, 8.507059e+37
        %v4531 = vand.u32 %v3802, 2147483648
        %v4532 = vor.u32 1.1754944e-38, %v4531
        %v4533 = vsel %vm4530, %v4532, %v4528
        %v4534 = vmul.f32 %v3629, %v4533
        %v4535 = vrcp.pop %v3805
        %v4536 = vmul.f32 %v3805, %v4535
        %v4537 = vsub.f32 1.0, %v4536
        %v4538 = vmul.f32 %v4535, %v4537
        %v4539 = vadd.f32 %v4535, %v4538
        %vm4540 = vweird.f32 %v3805
        %vm4541 = vweird.f32 %v4535
        %vm4542 = vmor %vm4540, %vm4541
        %v4543 = vsel %vm4542, %v4535, %v4539
        %v4544 = vand.u32 2147483647, %v3805
        %vm4545 = vcmp.eq.f32.partialorder %v4544, 8.507059e+37
        %v4546 = vand.u32 %v3805, 2147483648
        %v4547 = vor.u32 1.1754944e-38, %v4546
        %v4548 = vsel %vm4545, %v4547, %v4543
        %v4549 = vmul.f32 %v3631, %v4548
        %v4550 = vrcp.pop %v3808
        %v4551 = vmul.f32 %v3808, %v4550
        %v4552 = vsub.f32 1.0, %v4551
        %v4553 = vmul.f32 %v4550, %v4552
        %v4554 = vadd.f32 %v4550, %v4553
        %vm4555 = vweird.f32 %v3808
        %vm4556 = vweird.f32 %v4550
        %vm4557 = vmor %vm4555, %vm4556
        %v4558 = vsel %vm4557, %v4550, %v4554
        %v4559 = vand.u32 2147483647, %v3808
        %vm4560 = vcmp.eq.f32.partialorder %v4559, 8.507059e+37
        %v4561 = vand.u32 %v3808, 2147483648
        %v4562 = vor.u32 1.1754944e-38, %v4561
        %v4563 = vsel %vm4560, %v4562, %v4558
        %v4564 = vmul.f32 %v3633, %v4563
        %v4565 = vrcp.pop %v3811
        %v4566 = vmul.f32 %v3811, %v4565
        %v4567 = vsub.f32 1.0, %v4566
        %v4568 = vmul.f32 %v4565, %v4567
        %v4569 = vadd.f32 %v4565, %v4568
        %vm4570 = vweird.f32 %v3811
        %vm4571 = vweird.f32 %v4565
        %vm4572 = vmor %vm4570, %vm4571
        %v4573 = vsel %vm4572, %v4565, %v4569
        %v4574 = vand.u32 2147483647, %v3811
        %vm4575 = vcmp.eq.f32.partialorder %v4574, 8.507059e+37
        %v4576 = vand.u32 %v3811, 2147483648
        %v4577 = vor.u32 1.1754944e-38, %v4576
        %v4578 = vsel %vm4575, %v4577, %v4573
        %v4579 = vmul.f32 %v3635, %v4578
        %v4580 = vrcp.pop %v3814
        %v4581 = vmul.f32 %v3814, %v4580
        %v4582 = vsub.f32 1.0, %v4581
        %v4583 = vmul.f32 %v4580, %v4582
        %v4584 = vadd.f32 %v4580, %v4583
        %vm4585 = vweird.f32 %v3814
        %vm4586 = vweird.f32 %v4580
        %vm4587 = vmor %vm4585, %vm4586
        %v4588 = vsel %vm4587, %v4580, %v4584
        %v4589 = vand.u32 2147483647, %v3814
        %vm4590 = vcmp.eq.f32.partialorder %v4589, 8.507059e+37
        %v4591 = vand.u32 %v3814, 2147483648
        %v4592 = vor.u32 1.1754944e-38, %v4591
        %v4593 = vsel %vm4590, %v4592, %v4588
        %v4594 = vmul.f32 %v3637, %v4593
        %v4595 = vrcp.pop %v3817
        %v4596 = vmul.f32 %v3817, %v4595
        %v4597 = vsub.f32 1.0, %v4596
        %v4598 = vmul.f32 %v4595, %v4597
        %v4599 = vadd.f32 %v4595, %v4598
        %vm4600 = vweird.f32 %v3817
        %vm4601 = vweird.f32 %v4595
        %vm4602 = vmor %vm4600, %vm4601
        %v4603 = vsel %vm4602, %v4595, %v4599
        %v4604 = vand.u32 2147483647, %v3817
        %vm4605 = vcmp.eq.f32.partialorder %v4604, 8.507059e+37
        %v4606 = vand.u32 %v3817, 2147483648
        %v4607 = vor.u32 1.1754944e-38, %v4606
        %v4608 = vsel %vm4605, %v4607, %v4603
        %v4609 = vmul.f32 %v3639, %v4608
        %v4610 = vrcp.pop %v3820
        %v4611 = vmul.f32 %v3820, %v4610
        %v4612 = vsub.f32 1.0, %v4611
        %v4613 = vmul.f32 %v4610, %v4612
        %v4614 = vadd.f32 %v4610, %v4613
        %vm4615 = vweird.f32 %v3820
        %vm4616 = vweird.f32 %v4610
        %vm4617 = vmor %vm4615, %vm4616
        %v4618 = vsel %vm4617, %v4610, %v4614
        %v4619 = vand.u32 2147483647, %v3820
        %vm4620 = vcmp.eq.f32.partialorder %v4619, 8.507059e+37
        %v4621 = vand.u32 %v3820, 2147483648
        %v4622 = vor.u32 1.1754944e-38, %v4621
        %v4623 = vsel %vm4620, %v4622, %v4618
        %v4624 = vmul.f32 %v3641, %v4623
        %v4625 = vrcp.pop %v3823
        %v4626 = vmul.f32 %v3823, %v4625
        %v4627 = vsub.f32 1.0, %v4626
        %v4628 = vmul.f32 %v4625, %v4627
        %v4629 = vadd.f32 %v4625, %v4628
        %vm4630 = vweird.f32 %v3823
        %vm4631 = vweird.f32 %v4625
        %vm4632 = vmor %vm4630, %vm4631
        %v4633 = vsel %vm4632, %v4625, %v4629
        %v4634 = vand.u32 2147483647, %v3823
        %vm4635 = vcmp.eq.f32.partialorder %v4634, 8.507059e+37
        %v4636 = vand.u32 %v3823, 2147483648
        %v4637 = vor.u32 1.1754944e-38, %v4636
        %v4638 = vsel %vm4635, %v4637, %v4633
        %v4639 = vmul.f32 %v3643, %v4638
        %v4640 = vrcp.pop %v3826
        %v4641 = vmul.f32 %v3826, %v4640
        %v4642 = vsub.f32 1.0, %v4641
        %v4643 = vmul.f32 %v4640, %v4642
        %v4644 = vadd.f32 %v4640, %v4643
        %vm4645 = vweird.f32 %v3826
        %vm4646 = vweird.f32 %v4640
        %vm4647 = vmor %vm4645, %vm4646
        %v4648 = vsel %vm4647, %v4640, %v4644
        %v4649 = vand.u32 2147483647, %v3826
        %vm4650 = vcmp.eq.f32.partialorder %v4649, 8.507059e+37
        %v4651 = vand.u32 %v3826, 2147483648
        %v4652 = vor.u32 1.1754944e-38, %v4651
        %v4653 = vsel %vm4650, %v4652, %v4648
        %v4654 = vmul.f32 %v3645, %v4653
        %v4655 = vrcp.pop %v3829
        %v4656 = vmul.f32 %v3829, %v4655
        %v4657 = vsub.f32 1.0, %v4656
        %v4658 = vmul.f32 %v4655, %v4657
        %v4659 = vadd.f32 %v4655, %v4658
        %vm4660 = vweird.f32 %v3829
        %vm4661 = vweird.f32 %v4655
        %vm4662 = vmor %vm4660, %vm4661
        %v4663 = vsel %vm4662, %v4655, %v4659
        %v4664 = vand.u32 2147483647, %v3829
        %vm4665 = vcmp.eq.f32.partialorder %v4664, 8.507059e+37
        %v4666 = vand.u32 %v3829, 2147483648
        %v4667 = vor.u32 1.1754944e-38, %v4666
        %v4668 = vsel %vm4665, %v4667, %v4663
        %v4669 = vmul.f32 %v3647, %v4668
        %v4670 = vrcp.pop %v3832
        %v4671 = vmul.f32 %v3832, %v4670
        %v4672 = vsub.f32 1.0, %v4671
        %v4673 = vmul.f32 %v4670, %v4672
        %v4674 = vadd.f32 %v4670, %v4673
        %vm4675 = vweird.f32 %v3832
        %vm4676 = vweird.f32 %v4670
        %vm4677 = vmor %vm4675, %vm4676
        %v4678 = vsel %vm4677, %v4670, %v4674
        %v4679 = vand.u32 2147483647, %v3832
        %vm4680 = vcmp.eq.f32.partialorder %v4679, 8.507059e+37
        %v4681 = vand.u32 %v3832, 2147483648
        %v4682 = vor.u32 1.1754944e-38, %v4681
        %v4683 = vsel %vm4680, %v4682, %v4678
        %v4684 = vmul.f32 %v3649, %v4683
        %v4685 = vrcp.pop %v3835
        %v4686 = vmul.f32 %v3835, %v4685
        %v4687 = vsub.f32 1.0, %v4686
        %v4688 = vmul.f32 %v4685, %v4687
        %v4689 = vadd.f32 %v4685, %v4688
        %vm4690 = vweird.f32 %v3835
        %vm4691 = vweird.f32 %v4685
        %vm4692 = vmor %vm4690, %vm4691
        %v4693 = vsel %vm4692, %v4685, %v4689
        %v4694 = vand.u32 2147483647, %v3835
        %vm4695 = vcmp.eq.f32.partialorder %v4694, 8.507059e+37
        %v4696 = vand.u32 %v3835, 2147483648
        %v4697 = vor.u32 1.1754944e-38, %v4696
        %v4698 = vsel %vm4695, %v4697, %v4693
        %v4699 = vmul.f32 %v3651, %v4698
        %v4700 = vrcp.pop %v3838
        %v4701 = vmul.f32 %v3838, %v4700
        %v4702 = vsub.f32 1.0, %v4701
        %v4703 = vmul.f32 %v4700, %v4702
        %v4704 = vadd.f32 %v4700, %v4703
        %vm4705 = vweird.f32 %v3838
        %vm4706 = vweird.f32 %v4700
        %vm4707 = vmor %vm4705, %vm4706
        %v4708 = vsel %vm4707, %v4700, %v4704
        %v4709 = vand.u32 2147483647, %v3838
        %vm4710 = vcmp.eq.f32.partialorder %v4709, 8.507059e+37
        %v4711 = vand.u32 %v3838, 2147483648
        %v4712 = vor.u32 1.1754944e-38, %v4711
        %v4713 = vsel %vm4710, %v4712, %v4708
        %v4714 = vmul.f32 %v3653, %v4713
        %v4715 = vrcp.pop %v3841
        %v4716 = vmul.f32 %v3841, %v4715
        %v4717 = vsub.f32 1.0, %v4716
        %v4718 = vmul.f32 %v4715, %v4717
        %v4719 = vadd.f32 %v4715, %v4718
        %vm4720 = vweird.f32 %v3841
        %vm4721 = vweird.f32 %v4715
        %vm4722 = vmor %vm4720, %vm4721
        %v4723 = vsel %vm4722, %v4715, %v4719
        %v4724 = vand.u32 2147483647, %v3841
        %vm4725 = vcmp.eq.f32.partialorder %v4724, 8.507059e+37
        %v4726 = vand.u32 %v3841, 2147483648
        %v4727 = vor.u32 1.1754944e-38, %v4726
        %v4728 = vsel %vm4725, %v4727, %v4723
        %v4729 = vmul.f32 %v3655, %v4728
        %v4730 = vrcp.pop %v3844
        %v4731 = vmul.f32 %v3844, %v4730
        %v4732 = vsub.f32 1.0, %v4731
        %v4733 = vmul.f32 %v4730, %v4732
        %v4734 = vadd.f32 %v4730, %v4733
        %vm4735 = vweird.f32 %v3844
        %vm4736 = vweird.f32 %v4730
        %vm4737 = vmor %vm4735, %vm4736
        %v4738 = vsel %vm4737, %v4730, %v4734
        %v4739 = vand.u32 2147483647, %v3844
        %vm4740 = vcmp.eq.f32.partialorder %v4739, 8.507059e+37
        %v4741 = vand.u32 %v3844, 2147483648
        %v4742 = vor.u32 1.1754944e-38, %v4741
        %v4743 = vsel %vm4740, %v4742, %v4738
        %v4744 = vmul.f32 %v3657, %v4743
        %v4745 = vrcp.pop %v3847
        %v4746 = vmul.f32 %v3847, %v4745
        %v4747 = vsub.f32 1.0, %v4746
        %v4748 = vmul.f32 %v4745, %v4747
        %v4749 = vadd.f32 %v4745, %v4748
        %vm4750 = vweird.f32 %v3847
        %vm4751 = vweird.f32 %v4745
        %vm4752 = vmor %vm4750, %vm4751
        %v4753 = vsel %vm4752, %v4745, %v4749
        %v4754 = vand.u32 2147483647, %v3847
        %vm4755 = vcmp.eq.f32.partialorder %v4754, 8.507059e+37
        %v4756 = vand.u32 %v3847, 2147483648
        %v4757 = vor.u32 1.1754944e-38, %v4756
        %v4758 = vsel %vm4755, %v4757, %v4753
        %v4759 = vmul.f32 %v3659, %v4758
        %v4760 = vrcp.pop %v3850
        %v4761 = vmul.f32 %v3850, %v4760
        %v4762 = vsub.f32 1.0, %v4761
        %v4763 = vmul.f32 %v4760, %v4762
        %v4764 = vadd.f32 %v4760, %v4763
        %vm4765 = vweird.f32 %v3850
        %vm4766 = vweird.f32 %v4760
        %vm4767 = vmor %vm4765, %vm4766
        %v4768 = vsel %vm4767, %v4760, %v4764
        %v4769 = vand.u32 2147483647, %v3850
        %vm4770 = vcmp.eq.f32.partialorder %v4769, 8.507059e+37
        %v4771 = vand.u32 %v3850, 2147483648
        %v4772 = vor.u32 1.1754944e-38, %v4771
        %v4773 = vsel %vm4770, %v4772, %v4768
        %v4774 = vmul.f32 %v3661, %v4773
        %v4775 = vrcp.pop %v3853
        %v4776 = vmul.f32 %v3853, %v4775
        %v4777 = vsub.f32 1.0, %v4776
        %v4778 = vmul.f32 %v4775, %v4777
        %v4779 = vadd.f32 %v4775, %v4778
        %vm4780 = vweird.f32 %v3853
        %vm4781 = vweird.f32 %v4775
        %vm4782 = vmor %vm4780, %vm4781
        %v4783 = vsel %vm4782, %v4775, %v4779
        %v4784 = vand.u32 2147483647, %v3853
        %vm4785 = vcmp.eq.f32.partialorder %v4784, 8.507059e+37
        %v4786 = vand.u32 %v3853, 2147483648
        %v4787 = vor.u32 1.1754944e-38, %v4786
        %v4788 = vsel %vm4785, %v4787, %v4783
        %v4789 = vmul.f32 %v3663, %v4788
        %v4790 = vrcp.pop %v3856
        %v4791 = vmul.f32 %v3856, %v4790
        %v4792 = vsub.f32 1.0, %v4791
        %v4793 = vmul.f32 %v4790, %v4792
        %v4794 = vadd.f32 %v4790, %v4793
        %vm4795 = vweird.f32 %v3856
        %vm4796 = vweird.f32 %v4790
        %vm4797 = vmor %vm4795, %vm4796
        %v4798 = vsel %vm4797, %v4790, %v4794
        %v4799 = vand.u32 2147483647, %v3856
        %vm4800 = vcmp.eq.f32.partialorder %v4799, 8.507059e+37
        %v4801 = vand.u32 %v3856, 2147483648
        %v4802 = vor.u32 1.1754944e-38, %v4801
        %v4803 = vsel %vm4800, %v4802, %v4798
        %v4804 = vmul.f32 %v3665, %v4803
        %v4805 = vrcp.pop %v3859
        %v4806 = vmul.f32 %v3859, %v4805
        %v4807 = vsub.f32 1.0, %v4806
        %v4808 = vmul.f32 %v4805, %v4807
        %v4809 = vadd.f32 %v4805, %v4808
        %vm4810 = vweird.f32 %v3859
        %vm4811 = vweird.f32 %v4805
        %vm4812 = vmor %vm4810, %vm4811
        %v4813 = vsel %vm4812, %v4805, %v4809
        %v4814 = vand.u32 2147483647, %v3859
        %vm4815 = vcmp.eq.f32.partialorder %v4814, 8.507059e+37
        %v4816 = vand.u32 %v3859, 2147483648
        %v4817 = vor.u32 1.1754944e-38, %v4816
        %v4818 = vsel %vm4815, %v4817, %v4813
        %v4819 = vmul.f32 %v3667, %v4818
        %v4821 = vsel %vm3283, %v3874, 0
        %4823 = vmatpush.msra.mxu0 0.0
        %4824 = vmatpush.msra.mxu0 0.0
        %4825 = vmatpush.msra.mxu0 0.0
        %4826 = vmatpush.msra.mxu0 0.0
        %4827 = vmatpush.msra.mxu0 0.0
        %4828 = vmatpush.msra.mxu0 0.0
        %4829 = vmatpush.msra.mxu0 0.0
        %4830 = vmatpush.msra.mxu0 0.0
        %4831 = vmatpush.msra.mxu0 0.0
        %4832 = vmatpush.msra.mxu0 0.0
        %4833 = vmatpush.msra.mxu0 0.0
        %4834 = vmatpush.msra.mxu0 0.0
        %4835 = vmatpush.msra.mxu0 0.0
        %4836 = vmatpush.msra.mxu0 0.0
        %4837 = vmatpush.msra.mxu0 0.0
        %4838 = vmatpush.msra.mxu0 %v1155
        %4839 = vmatmul.f32.gmra.mxu0 %v4821
        %v4840 = vpop.f32.mrf.mxu0
        %v4841 = vadd.f32 0.0, %v4840
        %4842 = vdwg.mxu0
        %v4844 = vsel %vm3283, %v3889, 0
        %4846 = vmatpush.msra.mxu0 0.0
        %4847 = vmatpush.msra.mxu0 0.0
        %4848 = vmatpush.msra.mxu0 0.0
        %4849 = vmatpush.msra.mxu0 0.0
        %4850 = vmatpush.msra.mxu0 0.0
        %4851 = vmatpush.msra.mxu0 0.0
        %4852 = vmatpush.msra.mxu0 0.0
        %4853 = vmatpush.msra.mxu0 0.0
        %4854 = vmatpush.msra.mxu0 0.0
        %4855 = vmatpush.msra.mxu0 0.0
        %4856 = vmatpush.msra.mxu0 0.0
        %4857 = vmatpush.msra.mxu0 0.0
        %4858 = vmatpush.msra.mxu0 0.0
        %4859 = vmatpush.msra.mxu0 0.0
        %4860 = vmatpush.msra.mxu0 0.0
        %4861 = vmatpush.msra.mxu0 %v1157
        %4862 = vmatmul.f32.gmra.mxu0 %v4844
        %v4863 = vpop.f32.mrf.mxu0
        %v4864 = vadd.f32 0.0, %v4863
        %4865 = vdwg.mxu0
        %v4867 = vsel %vm3283, %v3904, 0
        %4869 = vmatpush.msra.mxu0 0.0
        %4870 = vmatpush.msra.mxu0 0.0
        %4871 = vmatpush.msra.mxu0 0.0
        %4872 = vmatpush.msra.mxu0 0.0
        %4873 = vmatpush.msra.mxu0 0.0
        %4874 = vmatpush.msra.mxu0 0.0
        %4875 = vmatpush.msra.mxu0 0.0
        %4876 = vmatpush.msra.mxu0 0.0
        %4877 = vmatpush.msra.mxu0 0.0
        %4878 = vmatpush.msra.mxu0 0.0
        %4879 = vmatpush.msra.mxu0 0.0
        %4880 = vmatpush.msra.mxu0 0.0
        %4881 = vmatpush.msra.mxu0 0.0
        %4882 = vmatpush.msra.mxu0 0.0
        %4883 = vmatpush.msra.mxu0 0.0
        %4884 = vmatpush.msra.mxu0 %v1159
        %4885 = vmatmul.f32.gmra.mxu0 %v4867
        %v4886 = vpop.f32.mrf.mxu0
        %v4887 = vadd.f32 0.0, %v4886
        %4888 = vdwg.mxu0
        %v4890 = vsel %vm3283, %v3919, 0
        %4892 = vmatpush.msra.mxu0 0.0
        %4893 = vmatpush.msra.mxu0 0.0
        %4894 = vmatpush.msra.mxu0 0.0
        %4895 = vmatpush.msra.mxu0 0.0
        %4896 = vmatpush.msra.mxu0 0.0
        %4897 = vmatpush.msra.mxu0 0.0
        %4898 = vmatpush.msra.mxu0 0.0
        %4899 = vmatpush.msra.mxu0 0.0
        %4900 = vmatpush.msra.mxu0 0.0
        %4901 = vmatpush.msra.mxu0 0.0
        %4902 = vmatpush.msra.mxu0 0.0
        %4903 = vmatpush.msra.mxu0 0.0
        %4904 = vmatpush.msra.mxu0 0.0
        %4905 = vmatpush.msra.mxu0 0.0
        %4906 = vmatpush.msra.mxu0 0.0
        %4907 = vmatpush.msra.mxu0 %v1161
        %4908 = vmatmul.f32.gmra.mxu0 %v4890
        %v4909 = vpop.f32.mrf.mxu0
        %v4910 = vadd.f32 0.0, %v4909
        %4911 = vdwg.mxu0
        %v4913 = vsel %vm3283, %v3934, 0
        %4915 = vmatpush.msra.mxu0 0.0
        %4916 = vmatpush.msra.mxu0 0.0
        %4917 = vmatpush.msra.mxu0 0.0
        %4918 = vmatpush.msra.mxu0 0.0
        %4919 = vmatpush.msra.mxu0 0.0
        %4920 = vmatpush.msra.mxu0 0.0
        %4921 = vmatpush.msra.mxu0 0.0
        %4922 = vmatpush.msra.mxu0 0.0
        %4923 = vmatpush.msra.mxu0 0.0
        %4924 = vmatpush.msra.mxu0 0.0
        %4925 = vmatpush.msra.mxu0 0.0
        %4926 = vmatpush.msra.mxu0 0.0
        %4927 = vmatpush.msra.mxu0 0.0
        %4928 = vmatpush.msra.mxu0 0.0
        %4929 = vmatpush.msra.mxu0 0.0
        %4930 = vmatpush.msra.mxu0 %v1163
        %4931 = vmatmul.f32.gmra.mxu0 %v4913
        %v4932 = vpop.f32.mrf.mxu0
        %v4933 = vadd.f32 0.0, %v4932
        %4934 = vdwg.mxu0
        %v4936 = vsel %vm3283, %v3949, 0
        %4938 = vmatpush.msra.mxu0 0.0
        %4939 = vmatpush.msra.mxu0 0.0
        %4940 = vmatpush.msra.mxu0 0.0
        %4941 = vmatpush.msra.mxu0 0.0
        %4942 = vmatpush.msra.mxu0 0.0
        %4943 = vmatpush.msra.mxu0 0.0
        %4944 = vmatpush.msra.mxu0 0.0
        %4945 = vmatpush.msra.mxu0 0.0
        %4946 = vmatpush.msra.mxu0 0.0
        %4947 = vmatpush.msra.mxu0 0.0
        %4948 = vmatpush.msra.mxu0 0.0
        %4949 = vmatpush.msra.mxu0 0.0
        %4950 = vmatpush.msra.mxu0 0.0
        %4951 = vmatpush.msra.mxu0 0.0
        %4952 = vmatpush.msra.mxu0 0.0
        %4953 = vmatpush.msra.mxu0 %v1165
        %4954 = vmatmul.f32.gmra.mxu0 %v4936
        %v4955 = vpop.f32.mrf.mxu0
        %v4956 = vadd.f32 0.0, %v4955
        %4957 = vdwg.mxu0
        %v4959 = vsel %vm3283, %v3964, 0
        %4961 = vmatpush.msra.mxu0 0.0
        %4962 = vmatpush.msra.mxu0 0.0
        %4963 = vmatpush.msra.mxu0 0.0
        %4964 = vmatpush.msra.mxu0 0.0
        %4965 = vmatpush.msra.mxu0 0.0
        %4966 = vmatpush.msra.mxu0 0.0
        %4967 = vmatpush.msra.mxu0 0.0
        %4968 = vmatpush.msra.mxu0 0.0
        %4969 = vmatpush.msra.mxu0 0.0
        %4970 = vmatpush.msra.mxu0 0.0
        %4971 = vmatpush.msra.mxu0 0.0
        %4972 = vmatpush.msra.mxu0 0.0
        %4973 = vmatpush.msra.mxu0 0.0
        %4974 = vmatpush.msra.mxu0 0.0
        %4975 = vmatpush.msra.mxu0 0.0
        %4976 = vmatpush.msra.mxu0 %v1167
        %4977 = vmatmul.f32.gmra.mxu0 %v4959
        %v4978 = vpop.f32.mrf.mxu0
        %v4979 = vadd.f32 0.0, %v4978
        %4980 = vdwg.mxu0
        %v4982 = vsel %vm3283, %v3979, 0
        %4984 = vmatpush.msra.mxu0 0.0
        %4985 = vmatpush.msra.mxu0 0.0
        %4986 = vmatpush.msra.mxu0 0.0
        %4987 = vmatpush.msra.mxu0 0.0
        %4988 = vmatpush.msra.mxu0 0.0
        %4989 = vmatpush.msra.mxu0 0.0
        %4990 = vmatpush.msra.mxu0 0.0
        %4991 = vmatpush.msra.mxu0 0.0
        %4992 = vmatpush.msra.mxu0 0.0
        %4993 = vmatpush.msra.mxu0 0.0
        %4994 = vmatpush.msra.mxu0 0.0
        %4995 = vmatpush.msra.mxu0 0.0
        %4996 = vmatpush.msra.mxu0 0.0
        %4997 = vmatpush.msra.mxu0 0.0
        %4998 = vmatpush.msra.mxu0 0.0
        %4999 = vmatpush.msra.mxu0 %v1169
        %5000 = vmatmul.f32.gmra.mxu0 %v4982
        %v5001 = vpop.f32.mrf.mxu0
        %v5002 = vadd.f32 0.0, %v5001
        %5003 = vdwg.mxu0
        %v5005 = vsel %vm3283, %v3994, 0
        %5007 = vmatpush.msra.mxu0 0.0
        %5008 = vmatpush.msra.mxu0 0.0
        %5009 = vmatpush.msra.mxu0 0.0
        %5010 = vmatpush.msra.mxu0 0.0
        %5011 = vmatpush.msra.mxu0 0.0
        %5012 = vmatpush.msra.mxu0 0.0
        %5013 = vmatpush.msra.mxu0 0.0
        %5014 = vmatpush.msra.mxu0 0.0
        %5015 = vmatpush.msra.mxu0 0.0
        %5016 = vmatpush.msra.mxu0 0.0
        %5017 = vmatpush.msra.mxu0 0.0
        %5018 = vmatpush.msra.mxu0 0.0
        %5019 = vmatpush.msra.mxu0 0.0
        %5020 = vmatpush.msra.mxu0 0.0
        %5021 = vmatpush.msra.mxu0 0.0
        %5022 = vmatpush.msra.mxu0 %v1267
        %5023 = vmatmul.f32.gmra.mxu0 %v5005
        %v5024 = vpop.f32.mrf.mxu0
        %v5025 = vadd.f32 0.0, %v5024
        %5026 = vdwg.mxu0
        %v5028 = vsel %vm3283, %v4009, 0
        %5030 = vmatpush.msra.mxu0 0.0
        %5031 = vmatpush.msra.mxu0 0.0
        %5032 = vmatpush.msra.mxu0 0.0
        %5033 = vmatpush.msra.mxu0 0.0
        %5034 = vmatpush.msra.mxu0 0.0
        %5035 = vmatpush.msra.mxu0 0.0
        %5036 = vmatpush.msra.mxu0 0.0
        %5037 = vmatpush.msra.mxu0 0.0
        %5038 = vmatpush.msra.mxu0 0.0
        %5039 = vmatpush.msra.mxu0 0.0
        %5040 = vmatpush.msra.mxu0 0.0
        %5041 = vmatpush.msra.mxu0 0.0
        %5042 = vmatpush.msra.mxu0 0.0
        %5043 = vmatpush.msra.mxu0 0.0
        %5044 = vmatpush.msra.mxu0 0.0
        %5045 = vmatpush.msra.mxu0 %v1269
        %5046 = vmatmul.f32.gmra.mxu0 %v5028
        %v5047 = vpop.f32.mrf.mxu0
        %v5048 = vadd.f32 0.0, %v5047
        %5049 = vdwg.mxu0
        %v5051 = vsel %vm3283, %v4024, 0
        %5053 = vmatpush.msra.mxu0 0.0
        %5054 = vmatpush.msra.mxu0 0.0
        %5055 = vmatpush.msra.mxu0 0.0
        %5056 = vmatpush.msra.mxu0 0.0
        %5057 = vmatpush.msra.mxu0 0.0
        %5058 = vmatpush.msra.mxu0 0.0
        %5059 = vmatpush.msra.mxu0 0.0
        %5060 = vmatpush.msra.mxu0 0.0
        %5061 = vmatpush.msra.mxu0 0.0
        %5062 = vmatpush.msra.mxu0 0.0
        %5063 = vmatpush.msra.mxu0 0.0
        %5064 = vmatpush.msra.mxu0 0.0
        %5065 = vmatpush.msra.mxu0 0.0
        %5066 = vmatpush.msra.mxu0 0.0
        %5067 = vmatpush.msra.mxu0 0.0
        %5068 = vmatpush.msra.mxu0 %v1271
        %5069 = vmatmul.f32.gmra.mxu0 %v5051
        %v5070 = vpop.f32.mrf.mxu0
        %v5071 = vadd.f32 0.0, %v5070
        %5072 = vdwg.mxu0
        %v5074 = vsel %vm3283, %v4039, 0
        %5076 = vmatpush.msra.mxu0 0.0
        %5077 = vmatpush.msra.mxu0 0.0
        %5078 = vmatpush.msra.mxu0 0.0
        %5079 = vmatpush.msra.mxu0 0.0
        %5080 = vmatpush.msra.mxu0 0.0
        %5081 = vmatpush.msra.mxu0 0.0
        %5082 = vmatpush.msra.mxu0 0.0
        %5083 = vmatpush.msra.mxu0 0.0
        %5084 = vmatpush.msra.mxu0 0.0
        %5085 = vmatpush.msra.mxu0 0.0
        %5086 = vmatpush.msra.mxu0 0.0
        %5087 = vmatpush.msra.mxu0 0.0
        %5088 = vmatpush.msra.mxu0 0.0
        %5089 = vmatpush.msra.mxu0 0.0
        %5090 = vmatpush.msra.mxu0 0.0
        %5091 = vmatpush.msra.mxu0 %v1273
        %5092 = vmatmul.f32.gmra.mxu0 %v5074
        %v5093 = vpop.f32.mrf.mxu0
        %v5094 = vadd.f32 0.0, %v5093
        %5095 = vdwg.mxu0
        %v5097 = vsel %vm3283, %v4054, 0
        %5099 = vmatpush.msra.mxu0 0.0
        %5100 = vmatpush.msra.mxu0 0.0
        %5101 = vmatpush.msra.mxu0 0.0
        %5102 = vmatpush.msra.mxu0 0.0
        %5103 = vmatpush.msra.mxu0 0.0
        %5104 = vmatpush.msra.mxu0 0.0
        %5105 = vmatpush.msra.mxu0 0.0
        %5106 = vmatpush.msra.mxu0 0.0
        %5107 = vmatpush.msra.mxu0 0.0
        %5108 = vmatpush.msra.mxu0 0.0
        %5109 = vmatpush.msra.mxu0 0.0
        %5110 = vmatpush.msra.mxu0 0.0
        %5111 = vmatpush.msra.mxu0 0.0
        %5112 = vmatpush.msra.mxu0 0.0
        %5113 = vmatpush.msra.mxu0 0.0
        %5114 = vmatpush.msra.mxu0 %v1275
        %5115 = vmatmul.f32.gmra.mxu0 %v5097
        %v5116 = vpop.f32.mrf.mxu0
        %v5117 = vadd.f32 0.0, %v5116
        %5118 = vdwg.mxu0
        %v5120 = vsel %vm3283, %v4069, 0
        %5122 = vmatpush.msra.mxu0 0.0
        %5123 = vmatpush.msra.mxu0 0.0
        %5124 = vmatpush.msra.mxu0 0.0
        %5125 = vmatpush.msra.mxu0 0.0
        %5126 = vmatpush.msra.mxu0 0.0
        %5127 = vmatpush.msra.mxu0 0.0
        %5128 = vmatpush.msra.mxu0 0.0
        %5129 = vmatpush.msra.mxu0 0.0
        %5130 = vmatpush.msra.mxu0 0.0
        %5131 = vmatpush.msra.mxu0 0.0
        %5132 = vmatpush.msra.mxu0 0.0
        %5133 = vmatpush.msra.mxu0 0.0
        %5134 = vmatpush.msra.mxu0 0.0
        %5135 = vmatpush.msra.mxu0 0.0
        %5136 = vmatpush.msra.mxu0 0.0
        %5137 = vmatpush.msra.mxu0 %v1277
        %5138 = vmatmul.f32.gmra.mxu0 %v5120
        %v5139 = vpop.f32.mrf.mxu0
        %v5140 = vadd.f32 0.0, %v5139
        %5141 = vdwg.mxu0
        %v5143 = vsel %vm3283, %v4084, 0
        %5145 = vmatpush.msra.mxu0 0.0
        %5146 = vmatpush.msra.mxu0 0.0
        %5147 = vmatpush.msra.mxu0 0.0
        %5148 = vmatpush.msra.mxu0 0.0
        %5149 = vmatpush.msra.mxu0 0.0
        %5150 = vmatpush.msra.mxu0 0.0
        %5151 = vmatpush.msra.mxu0 0.0
        %5152 = vmatpush.msra.mxu0 0.0
        %5153 = vmatpush.msra.mxu0 0.0
        %5154 = vmatpush.msra.mxu0 0.0
        %5155 = vmatpush.msra.mxu0 0.0
        %5156 = vmatpush.msra.mxu0 0.0
        %5157 = vmatpush.msra.mxu0 0.0
        %5158 = vmatpush.msra.mxu0 0.0
        %5159 = vmatpush.msra.mxu0 0.0
        %5160 = vmatpush.msra.mxu0 %v1279
        %5161 = vmatmul.f32.gmra.mxu0 %v5143
        %v5162 = vpop.f32.mrf.mxu0
        %v5163 = vadd.f32 0.0, %v5162
        %5164 = vdwg.mxu0
        %v5166 = vsel %vm3283, %v4099, 0
        %5168 = vmatpush.msra.mxu0 0.0
        %5169 = vmatpush.msra.mxu0 0.0
        %5170 = vmatpush.msra.mxu0 0.0
        %5171 = vmatpush.msra.mxu0 0.0
        %5172 = vmatpush.msra.mxu0 0.0
        %5173 = vmatpush.msra.mxu0 0.0
        %5174 = vmatpush.msra.mxu0 0.0
        %5175 = vmatpush.msra.mxu0 0.0
        %5176 = vmatpush.msra.mxu0 0.0
        %5177 = vmatpush.msra.mxu0 0.0
        %5178 = vmatpush.msra.mxu0 0.0
        %5179 = vmatpush.msra.mxu0 0.0
        %5180 = vmatpush.msra.mxu0 0.0
        %5181 = vmatpush.msra.mxu0 0.0
        %5182 = vmatpush.msra.mxu0 0.0
        %5183 = vmatpush.msra.mxu0 %v1281
        %5184 = vmatmul.f32.gmra.mxu0 %v5166
        %v5185 = vpop.f32.mrf.mxu0
        %v5186 = vadd.f32 0.0, %v5185
        %5187 = vdwg.mxu0
        %v5189 = vsel %vm3283, %v4114, 0
        %5191 = vmatpush.msra.mxu0 0.0
        %5192 = vmatpush.msra.mxu0 0.0
        %5193 = vmatpush.msra.mxu0 0.0
        %5194 = vmatpush.msra.mxu0 0.0
        %5195 = vmatpush.msra.mxu0 0.0
        %5196 = vmatpush.msra.mxu0 0.0
        %5197 = vmatpush.msra.mxu0 0.0
        %5198 = vmatpush.msra.mxu0 0.0
        %5199 = vmatpush.msra.mxu0 0.0
        %5200 = vmatpush.msra.mxu0 0.0
        %5201 = vmatpush.msra.mxu0 0.0
        %5202 = vmatpush.msra.mxu0 0.0
        %5203 = vmatpush.msra.mxu0 0.0
        %5204 = vmatpush.msra.mxu0 0.0
        %5205 = vmatpush.msra.mxu0 0.0
        %5206 = vmatpush.msra.mxu0 %v1539
        %5207 = vmatmul.f32.gmra.mxu0 %v5189
        %v5208 = vpop.f32.mrf.mxu0
        %v5209 = vadd.f32 0.0, %v5208
        %5210 = vdwg.mxu0
        %v5212 = vsel %vm3283, %v4129, 0
        %5214 = vmatpush.msra.mxu0 0.0
        %5215 = vmatpush.msra.mxu0 0.0
        %5216 = vmatpush.msra.mxu0 0.0
        %5217 = vmatpush.msra.mxu0 0.0
        %5218 = vmatpush.msra.mxu0 0.0
        %5219 = vmatpush.msra.mxu0 0.0
        %5220 = vmatpush.msra.mxu0 0.0
        %5221 = vmatpush.msra.mxu0 0.0
        %5222 = vmatpush.msra.mxu0 0.0
        %5223 = vmatpush.msra.mxu0 0.0
        %5224 = vmatpush.msra.mxu0 0.0
        %5225 = vmatpush.msra.mxu0 0.0
        %5226 = vmatpush.msra.mxu0 0.0
        %5227 = vmatpush.msra.mxu0 0.0
        %5228 = vmatpush.msra.mxu0 0.0
        %5229 = vmatpush.msra.mxu0 %v1541
        %5230 = vmatmul.f32.gmra.mxu0 %v5212
        %v5231 = vpop.f32.mrf.mxu0
        %v5232 = vadd.f32 0.0, %v5231
        %5233 = vdwg.mxu0
        %v5235 = vsel %vm3283, %v4144, 0
        %5237 = vmatpush.msra.mxu0 0.0
        %5238 = vmatpush.msra.mxu0 0.0
        %5239 = vmatpush.msra.mxu0 0.0
        %5240 = vmatpush.msra.mxu0 0.0
        %5241 = vmatpush.msra.mxu0 0.0
        %5242 = vmatpush.msra.mxu0 0.0
        %5243 = vmatpush.msra.mxu0 0.0
        %5244 = vmatpush.msra.mxu0 0.0
        %5245 = vmatpush.msra.mxu0 0.0
        %5246 = vmatpush.msra.mxu0 0.0
        %5247 = vmatpush.msra.mxu0 0.0
        %5248 = vmatpush.msra.mxu0 0.0
        %5249 = vmatpush.msra.mxu0 0.0
        %5250 = vmatpush.msra.mxu0 0.0
        %5251 = vmatpush.msra.mxu0 0.0
        %5252 = vmatpush.msra.mxu0 %v1543
        %5253 = vmatmul.f32.gmra.mxu0 %v5235
        %v5254 = vpop.f32.mrf.mxu0
        %v5255 = vadd.f32 0.0, %v5254
        %5256 = vdwg.mxu0
        %v5258 = vsel %vm3283, %v4159, 0
        %5260 = vmatpush.msra.mxu0 0.0
        %5261 = vmatpush.msra.mxu0 0.0
        %5262 = vmatpush.msra.mxu0 0.0
        %5263 = vmatpush.msra.mxu0 0.0
        %5264 = vmatpush.msra.mxu0 0.0
        %5265 = vmatpush.msra.mxu0 0.0
        %5266 = vmatpush.msra.mxu0 0.0
        %5267 = vmatpush.msra.mxu0 0.0
        %5268 = vmatpush.msra.mxu0 0.0
        %5269 = vmatpush.msra.mxu0 0.0
        %5270 = vmatpush.msra.mxu0 0.0
        %5271 = vmatpush.msra.mxu0 0.0
        %5272 = vmatpush.msra.mxu0 0.0
        %5273 = vmatpush.msra.mxu0 0.0
        %5274 = vmatpush.msra.mxu0 0.0
        %5275 = vmatpush.msra.mxu0 %v1545
        %5276 = vmatmul.f32.gmra.mxu0 %v5258
        %v5277 = vpop.f32.mrf.mxu0
        %v5278 = vadd.f32 0.0, %v5277
        %5279 = vdwg.mxu0
        %v5281 = vsel %vm3283, %v4174, 0
        %5283 = vmatpush.msra.mxu0 0.0
        %5284 = vmatpush.msra.mxu0 0.0
        %5285 = vmatpush.msra.mxu0 0.0
        %5286 = vmatpush.msra.mxu0 0.0
        %5287 = vmatpush.msra.mxu0 0.0
        %5288 = vmatpush.msra.mxu0 0.0
        %5289 = vmatpush.msra.mxu0 0.0
        %5290 = vmatpush.msra.mxu0 0.0
        %5291 = vmatpush.msra.mxu0 0.0
        %5292 = vmatpush.msra.mxu0 0.0
        %5293 = vmatpush.msra.mxu0 0.0
        %5294 = vmatpush.msra.mxu0 0.0
        %5295 = vmatpush.msra.mxu0 0.0
        %5296 = vmatpush.msra.mxu0 0.0
        %5297 = vmatpush.msra.mxu0 0.0
        %5298 = vmatpush.msra.mxu0 %v1547
        %5299 = vmatmul.f32.gmra.mxu0 %v5281
        %v5300 = vpop.f32.mrf.mxu0
        %v5301 = vadd.f32 0.0, %v5300
        %5302 = vdwg.mxu0
        %v5304 = vsel %vm3283, %v4189, 0
        %5306 = vmatpush.msra.mxu0 0.0
        %5307 = vmatpush.msra.mxu0 0.0
        %5308 = vmatpush.msra.mxu0 0.0
        %5309 = vmatpush.msra.mxu0 0.0
        %5310 = vmatpush.msra.mxu0 0.0
        %5311 = vmatpush.msra.mxu0 0.0
        %5312 = vmatpush.msra.mxu0 0.0
        %5313 = vmatpush.msra.mxu0 0.0
        %5314 = vmatpush.msra.mxu0 0.0
        %5315 = vmatpush.msra.mxu0 0.0
        %5316 = vmatpush.msra.mxu0 0.0
        %5317 = vmatpush.msra.mxu0 0.0
        %5318 = vmatpush.msra.mxu0 0.0
        %5319 = vmatpush.msra.mxu0 0.0
        %5320 = vmatpush.msra.mxu0 0.0
        %5321 = vmatpush.msra.mxu0 %v1549
        %5322 = vmatmul.f32.gmra.mxu0 %v5304
        %v5323 = vpop.f32.mrf.mxu0
        %v5324 = vadd.f32 0.0, %v5323
        %5325 = vdwg.mxu0
        %v5327 = vsel %vm3283, %v4204, 0
        %5329 = vmatpush.msra.mxu0 0.0
        %5330 = vmatpush.msra.mxu0 0.0
        %5331 = vmatpush.msra.mxu0 0.0
        %5332 = vmatpush.msra.mxu0 0.0
        %5333 = vmatpush.msra.mxu0 0.0
        %5334 = vmatpush.msra.mxu0 0.0
        %5335 = vmatpush.msra.mxu0 0.0
        %5336 = vmatpush.msra.mxu0 0.0
        %5337 = vmatpush.msra.mxu0 0.0
        %5338 = vmatpush.msra.mxu0 0.0
        %5339 = vmatpush.msra.mxu0 0.0
        %5340 = vmatpush.msra.mxu0 0.0
        %5341 = vmatpush.msra.mxu0 0.0
        %5342 = vmatpush.msra.mxu0 0.0
        %5343 = vmatpush.msra.mxu0 0.0
        %5344 = vmatpush.msra.mxu0 %v1551
        %5345 = vmatmul.f32.gmra.mxu0 %v5327
        %v5346 = vpop.f32.mrf.mxu0
        %v5347 = vadd.f32 0.0, %v5346
        %5348 = vdwg.mxu0
        %v5350 = vsel %vm3283, %v4219, 0
        %5352 = vmatpush.msra.mxu0 0.0
        %5353 = vmatpush.msra.mxu0 0.0
        %5354 = vmatpush.msra.mxu0 0.0
        %5355 = vmatpush.msra.mxu0 0.0
        %5356 = vmatpush.msra.mxu0 0.0
        %5357 = vmatpush.msra.mxu0 0.0
        %5358 = vmatpush.msra.mxu0 0.0
        %5359 = vmatpush.msra.mxu0 0.0
        %5360 = vmatpush.msra.mxu0 0.0
        %5361 = vmatpush.msra.mxu0 0.0
        %5362 = vmatpush.msra.mxu0 0.0
        %5363 = vmatpush.msra.mxu0 0.0
        %5364 = vmatpush.msra.mxu0 0.0
        %5365 = vmatpush.msra.mxu0 0.0
        %5366 = vmatpush.msra.mxu0 0.0
        %5367 = vmatpush.msra.mxu0 %v1553
        %5368 = vmatmul.f32.gmra.mxu0 %v5350
        %v5369 = vpop.f32.mrf.mxu0
        %v5370 = vadd.f32 0.0, %v5369
        %5371 = vdwg.mxu0
        %v5373 = vsel %vm3283, %v4234, 0
        %5375 = vmatpush.msra.mxu0 0.0
        %5376 = vmatpush.msra.mxu0 0.0
        %5377 = vmatpush.msra.mxu0 0.0
        %5378 = vmatpush.msra.mxu0 0.0
        %5379 = vmatpush.msra.mxu0 0.0
        %5380 = vmatpush.msra.mxu0 0.0
        %5381 = vmatpush.msra.mxu0 0.0
        %5382 = vmatpush.msra.mxu0 0.0
        %5383 = vmatpush.msra.mxu0 0.0
        %5384 = vmatpush.msra.mxu0 0.0
        %5385 = vmatpush.msra.mxu0 0.0
        %5386 = vmatpush.msra.mxu0 0.0
        %5387 = vmatpush.msra.mxu0 0.0
        %5388 = vmatpush.msra.mxu0 0.0
        %5389 = vmatpush.msra.mxu0 0.0
        %5390 = vmatpush.msra.mxu0 %v1555
        %5391 = vmatmul.f32.gmra.mxu0 %v5373
        %v5392 = vpop.f32.mrf.mxu0
        %v5393 = vadd.f32 0.0, %v5392
        %5394 = vdwg.mxu0
        %v5396 = vsel %vm3283, %v4249, 0
        %5398 = vmatpush.msra.mxu0 0.0
        %5399 = vmatpush.msra.mxu0 0.0
        %5400 = vmatpush.msra.mxu0 0.0
        %5401 = vmatpush.msra.mxu0 0.0
        %5402 = vmatpush.msra.mxu0 0.0
        %5403 = vmatpush.msra.mxu0 0.0
        %5404 = vmatpush.msra.mxu0 0.0
        %5405 = vmatpush.msra.mxu0 0.0
        %5406 = vmatpush.msra.mxu0 0.0
        %5407 = vmatpush.msra.mxu0 0.0
        %5408 = vmatpush.msra.mxu0 0.0
        %5409 = vmatpush.msra.mxu0 0.0
        %5410 = vmatpush.msra.mxu0 0.0
        %5411 = vmatpush.msra.mxu0 0.0
        %5412 = vmatpush.msra.mxu0 0.0
        %5413 = vmatpush.msra.mxu0 %v1557
        %5414 = vmatmul.f32.gmra.mxu0 %v5396
        %v5415 = vpop.f32.mrf.mxu0
        %v5416 = vadd.f32 0.0, %v5415
        %5417 = vdwg.mxu0
        %v5419 = vsel %vm3283, %v4264, 0
        %5421 = vmatpush.msra.mxu0 0.0
        %5422 = vmatpush.msra.mxu0 0.0
        %5423 = vmatpush.msra.mxu0 0.0
        %5424 = vmatpush.msra.mxu0 0.0
        %5425 = vmatpush.msra.mxu0 0.0
        %5426 = vmatpush.msra.mxu0 0.0
        %5427 = vmatpush.msra.mxu0 0.0
        %5428 = vmatpush.msra.mxu0 0.0
        %5429 = vmatpush.msra.mxu0 0.0
        %5430 = vmatpush.msra.mxu0 0.0
        %5431 = vmatpush.msra.mxu0 0.0
        %5432 = vmatpush.msra.mxu0 0.0
        %5433 = vmatpush.msra.mxu0 0.0
        %5434 = vmatpush.msra.mxu0 0.0
        %5435 = vmatpush.msra.mxu0 0.0
        %5436 = vmatpush.msra.mxu0 %v1559
        %5437 = vmatmul.f32.gmra.mxu0 %v5419
        %v5438 = vpop.f32.mrf.mxu0
        %v5439 = vadd.f32 0.0, %v5438
        %5440 = vdwg.mxu0
        %v5442 = vsel %vm3283, %v4279, 0
        %5444 = vmatpush.msra.mxu0 0.0
        %5445 = vmatpush.msra.mxu0 0.0
        %5446 = vmatpush.msra.mxu0 0.0
        %5447 = vmatpush.msra.mxu0 0.0
        %5448 = vmatpush.msra.mxu0 0.0
        %5449 = vmatpush.msra.mxu0 0.0
        %5450 = vmatpush.msra.mxu0 0.0
        %5451 = vmatpush.msra.mxu0 0.0
        %5452 = vmatpush.msra.mxu0 0.0
        %5453 = vmatpush.msra.mxu0 0.0
        %5454 = vmatpush.msra.mxu0 0.0
        %5455 = vmatpush.msra.mxu0 0.0
        %5456 = vmatpush.msra.mxu0 0.0
        %5457 = vmatpush.msra.mxu0 0.0
        %5458 = vmatpush.msra.mxu0 0.0
        %5459 = vmatpush.msra.mxu0 %v1561
        %5460 = vmatmul.f32.gmra.mxu0 %v5442
        %v5461 = vpop.f32.mrf.mxu0
        %v5462 = vadd.f32 0.0, %v5461
        %5463 = vdwg.mxu0
        %v5465 = vsel %vm3283, %v4294, 0
        %5467 = vmatpush.msra.mxu0 0.0
        %5468 = vmatpush.msra.mxu0 0.0
        %5469 = vmatpush.msra.mxu0 0.0
        %5470 = vmatpush.msra.mxu0 0.0
        %5471 = vmatpush.msra.mxu0 0.0
        %5472 = vmatpush.msra.mxu0 0.0
        %5473 = vmatpush.msra.mxu0 0.0
        %5474 = vmatpush.msra.mxu0 0.0
        %5475 = vmatpush.msra.mxu0 0.0
        %5476 = vmatpush.msra.mxu0 0.0
        %5477 = vmatpush.msra.mxu0 0.0
        %5478 = vmatpush.msra.mxu0 0.0
        %5479 = vmatpush.msra.mxu0 0.0
        %5480 = vmatpush.msra.mxu0 0.0
        %5481 = vmatpush.msra.mxu0 0.0
        %5482 = vmatpush.msra.mxu0 %v1563
        %5483 = vmatmul.f32.gmra.mxu0 %v5465
        %v5484 = vpop.f32.mrf.mxu0
        %v5485 = vadd.f32 0.0, %v5484
        %5486 = vdwg.mxu0
        %v5488 = vsel %vm3283, %v4309, 0
        %5490 = vmatpush.msra.mxu0 0.0
        %5491 = vmatpush.msra.mxu0 0.0
        %5492 = vmatpush.msra.mxu0 0.0
        %5493 = vmatpush.msra.mxu0 0.0
        %5494 = vmatpush.msra.mxu0 0.0
        %5495 = vmatpush.msra.mxu0 0.0
        %5496 = vmatpush.msra.mxu0 0.0
        %5497 = vmatpush.msra.mxu0 0.0
        %5498 = vmatpush.msra.mxu0 0.0
        %5499 = vmatpush.msra.mxu0 0.0
        %5500 = vmatpush.msra.mxu0 0.0
        %5501 = vmatpush.msra.mxu0 0.0
        %5502 = vmatpush.msra.mxu0 0.0
        %5503 = vmatpush.msra.mxu0 0.0
        %5504 = vmatpush.msra.mxu0 0.0
        %5505 = vmatpush.msra.mxu0 %v1565
        %5506 = vmatmul.f32.gmra.mxu0 %v5488
        %v5507 = vpop.f32.mrf.mxu0
        %v5508 = vadd.f32 0.0, %v5507
        %5509 = vdwg.mxu0
        %v5511 = vsel %vm3283, %v4324, 0
        %5513 = vmatpush.msra.mxu0 0.0
        %5514 = vmatpush.msra.mxu0 0.0
        %5515 = vmatpush.msra.mxu0 0.0
        %5516 = vmatpush.msra.mxu0 0.0
        %5517 = vmatpush.msra.mxu0 0.0
        %5518 = vmatpush.msra.mxu0 0.0
        %5519 = vmatpush.msra.mxu0 0.0
        %5520 = vmatpush.msra.mxu0 0.0
        %5521 = vmatpush.msra.mxu0 0.0
        %5522 = vmatpush.msra.mxu0 0.0
        %5523 = vmatpush.msra.mxu0 0.0
        %5524 = vmatpush.msra.mxu0 0.0
        %5525 = vmatpush.msra.mxu0 0.0
        %5526 = vmatpush.msra.mxu0 0.0
        %5527 = vmatpush.msra.mxu0 0.0
        %5528 = vmatpush.msra.mxu0 %v1567
        %5529 = vmatmul.f32.gmra.mxu0 %v5511
        %v5530 = vpop.f32.mrf.mxu0
        %v5531 = vadd.f32 0.0, %v5530
        %5532 = vdwg.mxu0
        %v5534 = vsel %vm3283, %v4339, 0
        %5536 = vmatpush.msra.mxu0 0.0
        %5537 = vmatpush.msra.mxu0 0.0
        %5538 = vmatpush.msra.mxu0 0.0
        %5539 = vmatpush.msra.mxu0 0.0
        %5540 = vmatpush.msra.mxu0 0.0
        %5541 = vmatpush.msra.mxu0 0.0
        %5542 = vmatpush.msra.mxu0 0.0
        %5543 = vmatpush.msra.mxu0 0.0
        %5544 = vmatpush.msra.mxu0 0.0
        %5545 = vmatpush.msra.mxu0 0.0
        %5546 = vmatpush.msra.mxu0 0.0
        %5547 = vmatpush.msra.mxu0 0.0
        %5548 = vmatpush.msra.mxu0 0.0
        %5549 = vmatpush.msra.mxu0 0.0
        %5550 = vmatpush.msra.mxu0 0.0
        %5551 = vmatpush.msra.mxu0 %v1569
        %5552 = vmatmul.f32.gmra.mxu0 %v5534
        %v5553 = vpop.f32.mrf.mxu0
        %v5554 = vadd.f32 0.0, %v5553
        %5555 = vdwg.mxu0
        %v5557 = vsel %vm3283, %v4354, 0
        %5559 = vmatpush.msra.mxu0 0.0
        %5560 = vmatpush.msra.mxu0 0.0
        %5561 = vmatpush.msra.mxu0 0.0
        %5562 = vmatpush.msra.mxu0 0.0
        %5563 = vmatpush.msra.mxu0 0.0
        %5564 = vmatpush.msra.mxu0 0.0
        %5565 = vmatpush.msra.mxu0 0.0
        %5566 = vmatpush.msra.mxu0 0.0
        %5567 = vmatpush.msra.mxu0 0.0
        %5568 = vmatpush.msra.mxu0 0.0
        %5569 = vmatpush.msra.mxu0 0.0
        %5570 = vmatpush.msra.mxu0 0.0
        %5571 = vmatpush.msra.mxu0 0.0
        %5572 = vmatpush.msra.mxu0 0.0
        %5573 = vmatpush.msra.mxu0 0.0
        %5574 = vmatpush.msra.mxu0 %v1587
        %5575 = vmatmul.f32.gmra.mxu0 %v5557
        %v5576 = vpop.f32.mrf.mxu0
        %v5577 = vadd.f32 0.0, %v5576
        %5578 = vdwg.mxu0
        %v5580 = vsel %vm3283, %v4369, 0
        %5582 = vmatpush.msra.mxu0 0.0
        %5583 = vmatpush.msra.mxu0 0.0
        %5584 = vmatpush.msra.mxu0 0.0
        %5585 = vmatpush.msra.mxu0 0.0
        %5586 = vmatpush.msra.mxu0 0.0
        %5587 = vmatpush.msra.mxu0 0.0
        %5588 = vmatpush.msra.mxu0 0.0
        %5589 = vmatpush.msra.mxu0 0.0
        %5590 = vmatpush.msra.mxu0 0.0
        %5591 = vmatpush.msra.mxu0 0.0
        %5592 = vmatpush.msra.mxu0 0.0
        %5593 = vmatpush.msra.mxu0 0.0
        %5594 = vmatpush.msra.mxu0 0.0
        %5595 = vmatpush.msra.mxu0 0.0
        %5596 = vmatpush.msra.mxu0 0.0
        %5597 = vmatpush.msra.mxu0 %v1589
        %5598 = vmatmul.f32.gmra.mxu0 %v5580
        %v5599 = vpop.f32.mrf.mxu0
        %v5600 = vadd.f32 0.0, %v5599
        %5601 = vdwg.mxu0
        %v5603 = vsel %vm3283, %v4384, 0
        %5605 = vmatpush.msra.mxu0 0.0
        %5606 = vmatpush.msra.mxu0 0.0
        %5607 = vmatpush.msra.mxu0 0.0
        %5608 = vmatpush.msra.mxu0 0.0
        %5609 = vmatpush.msra.mxu0 0.0
        %5610 = vmatpush.msra.mxu0 0.0
        %5611 = vmatpush.msra.mxu0 0.0
        %5612 = vmatpush.msra.mxu0 0.0
        %5613 = vmatpush.msra.mxu0 0.0
        %5614 = vmatpush.msra.mxu0 0.0
        %5615 = vmatpush.msra.mxu0 0.0
        %5616 = vmatpush.msra.mxu0 0.0
        %5617 = vmatpush.msra.mxu0 0.0
        %5618 = vmatpush.msra.mxu0 0.0
        %5619 = vmatpush.msra.mxu0 0.0
        %5620 = vmatpush.msra.mxu0 %v1591
        %5621 = vmatmul.f32.gmra.mxu0 %v5603
        %v5622 = vpop.f32.mrf.mxu0
        %v5623 = vadd.f32 0.0, %v5622
        %5624 = vdwg.mxu0
        %v5626 = vsel %vm3283, %v4399, 0
        %5628 = vmatpush.msra.mxu0 0.0
        %5629 = vmatpush.msra.mxu0 0.0
        %5630 = vmatpush.msra.mxu0 0.0
        %5631 = vmatpush.msra.mxu0 0.0
        %5632 = vmatpush.msra.mxu0 0.0
        %5633 = vmatpush.msra.mxu0 0.0
        %5634 = vmatpush.msra.mxu0 0.0
        %5635 = vmatpush.msra.mxu0 0.0
        %5636 = vmatpush.msra.mxu0 0.0
        %5637 = vmatpush.msra.mxu0 0.0
        %5638 = vmatpush.msra.mxu0 0.0
        %5639 = vmatpush.msra.mxu0 0.0
        %5640 = vmatpush.msra.mxu0 0.0
        %5641 = vmatpush.msra.mxu0 0.0
        %5642 = vmatpush.msra.mxu0 0.0
        %5643 = vmatpush.msra.mxu0 %v1593
        %5644 = vmatmul.f32.gmra.mxu0 %v5626
        %v5645 = vpop.f32.mrf.mxu0
        %v5646 = vadd.f32 0.0, %v5645
        %5647 = vdwg.mxu0
        %v5649 = vsel %vm3283, %v4414, 0
        %5651 = vmatpush.msra.mxu0 0.0
        %5652 = vmatpush.msra.mxu0 0.0
        %5653 = vmatpush.msra.mxu0 0.0
        %5654 = vmatpush.msra.mxu0 0.0
        %5655 = vmatpush.msra.mxu0 0.0
        %5656 = vmatpush.msra.mxu0 0.0
        %5657 = vmatpush.msra.mxu0 0.0
        %5658 = vmatpush.msra.mxu0 0.0
        %5659 = vmatpush.msra.mxu0 0.0
        %5660 = vmatpush.msra.mxu0 0.0
        %5661 = vmatpush.msra.mxu0 0.0
        %5662 = vmatpush.msra.mxu0 0.0
        %5663 = vmatpush.msra.mxu0 0.0
        %5664 = vmatpush.msra.mxu0 0.0
        %5665 = vmatpush.msra.mxu0 0.0
        %5666 = vmatpush.msra.mxu0 %v1595
        %5667 = vmatmul.f32.gmra.mxu0 %v5649
        %v5668 = vpop.f32.mrf.mxu0
        %v5669 = vadd.f32 0.0, %v5668
        %5670 = vdwg.mxu0
        %v5672 = vsel %vm3283, %v4429, 0
        %5674 = vmatpush.msra.mxu0 0.0
        %5675 = vmatpush.msra.mxu0 0.0
        %5676 = vmatpush.msra.mxu0 0.0
        %5677 = vmatpush.msra.mxu0 0.0
        %5678 = vmatpush.msra.mxu0 0.0
        %5679 = vmatpush.msra.mxu0 0.0
        %5680 = vmatpush.msra.mxu0 0.0
        %5681 = vmatpush.msra.mxu0 0.0
        %5682 = vmatpush.msra.mxu0 0.0
        %5683 = vmatpush.msra.mxu0 0.0
        %5684 = vmatpush.msra.mxu0 0.0
        %5685 = vmatpush.msra.mxu0 0.0
        %5686 = vmatpush.msra.mxu0 0.0
        %5687 = vmatpush.msra.mxu0 0.0
        %5688 = vmatpush.msra.mxu0 0.0
        %5689 = vmatpush.msra.mxu0 %v1597
        %5690 = vmatmul.f32.gmra.mxu0 %v5672
        %v5691 = vpop.f32.mrf.mxu0
        %v5692 = vadd.f32 0.0, %v5691
        %5693 = vdwg.mxu0
        %v5695 = vsel %vm3283, %v4444, 0
        %5697 = vmatpush.msra.mxu0 0.0
        %5698 = vmatpush.msra.mxu0 0.0
        %5699 = vmatpush.msra.mxu0 0.0
        %5700 = vmatpush.msra.mxu0 0.0
        %5701 = vmatpush.msra.mxu0 0.0
        %5702 = vmatpush.msra.mxu0 0.0
        %5703 = vmatpush.msra.mxu0 0.0
        %5704 = vmatpush.msra.mxu0 0.0
        %5705 = vmatpush.msra.mxu0 0.0
        %5706 = vmatpush.msra.mxu0 0.0
        %5707 = vmatpush.msra.mxu0 0.0
        %5708 = vmatpush.msra.mxu0 0.0
        %5709 = vmatpush.msra.mxu0 0.0
        %5710 = vmatpush.msra.mxu0 0.0
        %5711 = vmatpush.msra.mxu0 0.0
        %5712 = vmatpush.msra.mxu0 %v1599
        %5713 = vmatmul.f32.gmra.mxu0 %v5695
        %v5714 = vpop.f32.mrf.mxu0
        %v5715 = vadd.f32 0.0, %v5714
        %5716 = vdwg.mxu0
        %v5718 = vsel %vm3283, %v4459, 0
        %5720 = vmatpush.msra.mxu0 0.0
        %5721 = vmatpush.msra.mxu0 0.0
        %5722 = vmatpush.msra.mxu0 0.0
        %5723 = vmatpush.msra.mxu0 0.0
        %5724 = vmatpush.msra.mxu0 0.0
        %5725 = vmatpush.msra.mxu0 0.0
        %5726 = vmatpush.msra.mxu0 0.0
        %5727 = vmatpush.msra.mxu0 0.0
        %5728 = vmatpush.msra.mxu0 0.0
        %5729 = vmatpush.msra.mxu0 0.0
        %5730 = vmatpush.msra.mxu0 0.0
        %5731 = vmatpush.msra.mxu0 0.0
        %5732 = vmatpush.msra.mxu0 0.0
        %5733 = vmatpush.msra.mxu0 0.0
        %5734 = vmatpush.msra.mxu0 0.0
        %5735 = vmatpush.msra.mxu0 %v1601
        %5736 = vmatmul.f32.gmra.mxu0 %v5718
        %v5737 = vpop.f32.mrf.mxu0
        %v5738 = vadd.f32 0.0, %v5737
        %5739 = vdwg.mxu0
        %v5741 = vsel %vm3283, %v4474, 0
        %5743 = vmatpush.msra.mxu0 0.0
        %5744 = vmatpush.msra.mxu0 0.0
        %5745 = vmatpush.msra.mxu0 0.0
        %5746 = vmatpush.msra.mxu0 0.0
        %5747 = vmatpush.msra.mxu0 0.0
        %5748 = vmatpush.msra.mxu0 0.0
        %5749 = vmatpush.msra.mxu0 0.0
        %5750 = vmatpush.msra.mxu0 0.0
        %5751 = vmatpush.msra.mxu0 0.0
        %5752 = vmatpush.msra.mxu0 0.0
        %5753 = vmatpush.msra.mxu0 0.0
        %5754 = vmatpush.msra.mxu0 0.0
        %5755 = vmatpush.msra.mxu0 0.0
        %5756 = vmatpush.msra.mxu0 0.0
        %5757 = vmatpush.msra.mxu0 0.0
        %5758 = vmatpush.msra.mxu0 %v1603
        %5759 = vmatmul.f32.gmra.mxu0 %v5741
        %v5760 = vpop.f32.mrf.mxu0
        %v5761 = vadd.f32 0.0, %v5760
        %5762 = vdwg.mxu0
        %v5764 = vsel %vm3283, %v4489, 0
        %5766 = vmatpush.msra.mxu0 0.0
        %5767 = vmatpush.msra.mxu0 0.0
        %5768 = vmatpush.msra.mxu0 0.0
        %5769 = vmatpush.msra.mxu0 0.0
        %5770 = vmatpush.msra.mxu0 0.0
        %5771 = vmatpush.msra.mxu0 0.0
        %5772 = vmatpush.msra.mxu0 0.0
        %5773 = vmatpush.msra.mxu0 0.0
        %5774 = vmatpush.msra.mxu0 0.0
        %5775 = vmatpush.msra.mxu0 0.0
        %5776 = vmatpush.msra.mxu0 0.0
        %5777 = vmatpush.msra.mxu0 0.0
        %5778 = vmatpush.msra.mxu0 0.0
        %5779 = vmatpush.msra.mxu0 0.0
        %5780 = vmatpush.msra.mxu0 0.0
        %5781 = vmatpush.msra.mxu0 %v1605
        %5782 = vmatmul.f32.gmra.mxu0 %v5764
        %v5783 = vpop.f32.mrf.mxu0
        %v5784 = vadd.f32 0.0, %v5783
        %5785 = vdwg.mxu0
        %v5787 = vsel %vm3283, %v4504, 0
        %5789 = vmatpush.msra.mxu0 0.0
        %5790 = vmatpush.msra.mxu0 0.0
        %5791 = vmatpush.msra.mxu0 0.0
        %5792 = vmatpush.msra.mxu0 0.0
        %5793 = vmatpush.msra.mxu0 0.0
        %5794 = vmatpush.msra.mxu0 0.0
        %5795 = vmatpush.msra.mxu0 0.0
        %5796 = vmatpush.msra.mxu0 0.0
        %5797 = vmatpush.msra.mxu0 0.0
        %5798 = vmatpush.msra.mxu0 0.0
        %5799 = vmatpush.msra.mxu0 0.0
        %5800 = vmatpush.msra.mxu0 0.0
        %5801 = vmatpush.msra.mxu0 0.0
        %5802 = vmatpush.msra.mxu0 0.0
        %5803 = vmatpush.msra.mxu0 0.0
        %5804 = vmatpush.msra.mxu0 %v1607
        %5805 = vmatmul.f32.gmra.mxu0 %v5787
        %v5806 = vpop.f32.mrf.mxu0
        %v5807 = vadd.f32 0.0, %v5806
        %5808 = vdwg.mxu0
        %v5810 = vsel %vm3283, %v4519, 0
        %5812 = vmatpush.msra.mxu0 0.0
        %5813 = vmatpush.msra.mxu0 0.0
        %5814 = vmatpush.msra.mxu0 0.0
        %5815 = vmatpush.msra.mxu0 0.0
        %5816 = vmatpush.msra.mxu0 0.0
        %5817 = vmatpush.msra.mxu0 0.0
        %5818 = vmatpush.msra.mxu0 0.0
        %5819 = vmatpush.msra.mxu0 0.0
        %5820 = vmatpush.msra.mxu0 0.0
        %5821 = vmatpush.msra.mxu0 0.0
        %5822 = vmatpush.msra.mxu0 0.0
        %5823 = vmatpush.msra.mxu0 0.0
        %5824 = vmatpush.msra.mxu0 0.0
        %5825 = vmatpush.msra.mxu0 0.0
        %5826 = vmatpush.msra.mxu0 0.0
        %5827 = vmatpush.msra.mxu0 %v1609
        %5828 = vmatmul.f32.gmra.mxu0 %v5810
        %v5829 = vpop.f32.mrf.mxu0
        %v5830 = vadd.f32 0.0, %v5829
        %5831 = vdwg.mxu0
        %v5833 = vsel %vm3283, %v4534, 0
        %5835 = vmatpush.msra.mxu0 0.0
        %5836 = vmatpush.msra.mxu0 0.0
        %5837 = vmatpush.msra.mxu0 0.0
        %5838 = vmatpush.msra.mxu0 0.0
        %5839 = vmatpush.msra.mxu0 0.0
        %5840 = vmatpush.msra.mxu0 0.0
        %5841 = vmatpush.msra.mxu0 0.0
        %5842 = vmatpush.msra.mxu0 0.0
        %5843 = vmatpush.msra.mxu0 0.0
        %5844 = vmatpush.msra.mxu0 0.0
        %5845 = vmatpush.msra.mxu0 0.0
        %5846 = vmatpush.msra.mxu0 0.0
        %5847 = vmatpush.msra.mxu0 0.0
        %5848 = vmatpush.msra.mxu0 0.0
        %5849 = vmatpush.msra.mxu0 0.0
        %5850 = vmatpush.msra.mxu0 %v1611
        %5851 = vmatmul.f32.gmra.mxu0 %v5833
        %v5852 = vpop.f32.mrf.mxu0
        %v5853 = vadd.f32 0.0, %v5852
        %5854 = vdwg.mxu0
        %v5856 = vsel %vm3283, %v4549, 0
        %5858 = vmatpush.msra.mxu0 0.0
        %5859 = vmatpush.msra.mxu0 0.0
        %5860 = vmatpush.msra.mxu0 0.0
        %5861 = vmatpush.msra.mxu0 0.0
        %5862 = vmatpush.msra.mxu0 0.0
        %5863 = vmatpush.msra.mxu0 0.0
        %5864 = vmatpush.msra.mxu0 0.0
        %5865 = vmatpush.msra.mxu0 0.0
        %5866 = vmatpush.msra.mxu0 0.0
        %5867 = vmatpush.msra.mxu0 0.0
        %5868 = vmatpush.msra.mxu0 0.0
        %5869 = vmatpush.msra.mxu0 0.0
        %5870 = vmatpush.msra.mxu0 0.0
        %5871 = vmatpush.msra.mxu0 0.0
        %5872 = vmatpush.msra.mxu0 0.0
        %5873 = vmatpush.msra.mxu0 %v1613
        %5874 = vmatmul.f32.gmra.mxu0 %v5856
        %v5875 = vpop.f32.mrf.mxu0
        %v5876 = vadd.f32 0.0, %v5875
        %5877 = vdwg.mxu0
        %v5879 = vsel %vm3283, %v4564, 0
        %5881 = vmatpush.msra.mxu0 0.0
        %5882 = vmatpush.msra.mxu0 0.0
        %5883 = vmatpush.msra.mxu0 0.0
        %5884 = vmatpush.msra.mxu0 0.0
        %5885 = vmatpush.msra.mxu0 0.0
        %5886 = vmatpush.msra.mxu0 0.0
        %5887 = vmatpush.msra.mxu0 0.0
        %5888 = vmatpush.msra.mxu0 0.0
        %5889 = vmatpush.msra.mxu0 0.0
        %5890 = vmatpush.msra.mxu0 0.0
        %5891 = vmatpush.msra.mxu0 0.0
        %5892 = vmatpush.msra.mxu0 0.0
        %5893 = vmatpush.msra.mxu0 0.0
        %5894 = vmatpush.msra.mxu0 0.0
        %5895 = vmatpush.msra.mxu0 0.0
        %5896 = vmatpush.msra.mxu0 %v1615
        %5897 = vmatmul.f32.gmra.mxu0 %v5879
        %v5898 = vpop.f32.mrf.mxu0
        %v5899 = vadd.f32 0.0, %v5898
        %5900 = vdwg.mxu0
        %v5902 = vsel %vm3283, %v4579, 0
        %5904 = vmatpush.msra.mxu0 0.0
        %5905 = vmatpush.msra.mxu0 0.0
        %5906 = vmatpush.msra.mxu0 0.0
        %5907 = vmatpush.msra.mxu0 0.0
        %5908 = vmatpush.msra.mxu0 0.0
        %5909 = vmatpush.msra.mxu0 0.0
        %5910 = vmatpush.msra.mxu0 0.0
        %5911 = vmatpush.msra.mxu0 0.0
        %5912 = vmatpush.msra.mxu0 0.0
        %5913 = vmatpush.msra.mxu0 0.0
        %5914 = vmatpush.msra.mxu0 0.0
        %5915 = vmatpush.msra.mxu0 0.0
        %5916 = vmatpush.msra.mxu0 0.0
        %5917 = vmatpush.msra.mxu0 0.0
        %5918 = vmatpush.msra.mxu0 0.0
        %5919 = vmatpush.msra.mxu0 %v1617
        %5920 = vmatmul.f32.gmra.mxu0 %v5902
        %v5921 = vpop.f32.mrf.mxu0
        %v5922 = vadd.f32 0.0, %v5921
        %5923 = vdwg.mxu0
        %v5925 = vsel %vm3283, %v4594, 0
        %5927 = vmatpush.msra.mxu0 0.0
        %5928 = vmatpush.msra.mxu0 0.0
        %5929 = vmatpush.msra.mxu0 0.0
        %5930 = vmatpush.msra.mxu0 0.0
        %5931 = vmatpush.msra.mxu0 0.0
        %5932 = vmatpush.msra.mxu0 0.0
        %5933 = vmatpush.msra.mxu0 0.0
        %5934 = vmatpush.msra.mxu0 0.0
        %5935 = vmatpush.msra.mxu0 0.0
        %5936 = vmatpush.msra.mxu0 0.0
        %5937 = vmatpush.msra.mxu0 0.0
        %5938 = vmatpush.msra.mxu0 0.0
        %5939 = vmatpush.msra.mxu0 0.0
        %5940 = vmatpush.msra.mxu0 0.0
        %5941 = vmatpush.msra.mxu0 0.0
        %5942 = vmatpush.msra.mxu0 %v1635
        %5943 = vmatmul.f32.gmra.mxu0 %v5925
        %v5944 = vpop.f32.mrf.mxu0
        %v5945 = vadd.f32 0.0, %v5944
        %5946 = vdwg.mxu0
        %v5948 = vsel %vm3283, %v4609, 0
        %5950 = vmatpush.msra.mxu0 0.0
        %5951 = vmatpush.msra.mxu0 0.0
        %5952 = vmatpush.msra.mxu0 0.0
        %5953 = vmatpush.msra.mxu0 0.0
        %5954 = vmatpush.msra.mxu0 0.0
        %5955 = vmatpush.msra.mxu0 0.0
        %5956 = vmatpush.msra.mxu0 0.0
        %5957 = vmatpush.msra.mxu0 0.0
        %5958 = vmatpush.msra.mxu0 0.0
        %5959 = vmatpush.msra.mxu0 0.0
        %5960 = vmatpush.msra.mxu0 0.0
        %5961 = vmatpush.msra.mxu0 0.0
        %5962 = vmatpush.msra.mxu0 0.0
        %5963 = vmatpush.msra.mxu0 0.0
        %5964 = vmatpush.msra.mxu0 0.0
        %5965 = vmatpush.msra.mxu0 %v1637
        %5966 = vmatmul.f32.gmra.mxu0 %v5948
        %v5967 = vpop.f32.mrf.mxu0
        %v5968 = vadd.f32 0.0, %v5967
        %5969 = vdwg.mxu0
        %v5971 = vsel %vm3283, %v4624, 0
        %5973 = vmatpush.msra.mxu0 0.0
        %5974 = vmatpush.msra.mxu0 0.0
        %5975 = vmatpush.msra.mxu0 0.0
        %5976 = vmatpush.msra.mxu0 0.0
        %5977 = vmatpush.msra.mxu0 0.0
        %5978 = vmatpush.msra.mxu0 0.0
        %5979 = vmatpush.msra.mxu0 0.0
        %5980 = vmatpush.msra.mxu0 0.0
        %5981 = vmatpush.msra.mxu0 0.0
        %5982 = vmatpush.msra.mxu0 0.0
        %5983 = vmatpush.msra.mxu0 0.0
        %5984 = vmatpush.msra.mxu0 0.0
        %5985 = vmatpush.msra.mxu0 0.0
        %5986 = vmatpush.msra.mxu0 0.0
        %5987 = vmatpush.msra.mxu0 0.0
        %5988 = vmatpush.msra.mxu0 %v1639
        %5989 = vmatmul.f32.gmra.mxu0 %v5971
        %v5990 = vpop.f32.mrf.mxu0
        %v5991 = vadd.f32 0.0, %v5990
        %5992 = vdwg.mxu0
        %v5994 = vsel %vm3283, %v4639, 0
        %5996 = vmatpush.msra.mxu0 0.0
        %5997 = vmatpush.msra.mxu0 0.0
        %5998 = vmatpush.msra.mxu0 0.0
        %5999 = vmatpush.msra.mxu0 0.0
        %6000 = vmatpush.msra.mxu0 0.0
        %6001 = vmatpush.msra.mxu0 0.0
        %6002 = vmatpush.msra.mxu0 0.0
        %6003 = vmatpush.msra.mxu0 0.0
        %6004 = vmatpush.msra.mxu0 0.0
        %6005 = vmatpush.msra.mxu0 0.0
        %6006 = vmatpush.msra.mxu0 0.0
        %6007 = vmatpush.msra.mxu0 0.0
        %6008 = vmatpush.msra.mxu0 0.0
        %6009 = vmatpush.msra.mxu0 0.0
        %6010 = vmatpush.msra.mxu0 0.0
        %6011 = vmatpush.msra.mxu0 %v1641
        %6012 = vmatmul.f32.gmra.mxu0 %v5994
        %v6013 = vpop.f32.mrf.mxu0
        %v6014 = vadd.f32 0.0, %v6013
        %6015 = vdwg.mxu0
        %v6017 = vsel %vm3283, %v4654, 0
        %6019 = vmatpush.msra.mxu0 0.0
        %6020 = vmatpush.msra.mxu0 0.0
        %6021 = vmatpush.msra.mxu0 0.0
        %6022 = vmatpush.msra.mxu0 0.0
        %6023 = vmatpush.msra.mxu0 0.0
        %6024 = vmatpush.msra.mxu0 0.0
        %6025 = vmatpush.msra.mxu0 0.0
        %6026 = vmatpush.msra.mxu0 0.0
        %6027 = vmatpush.msra.mxu0 0.0
        %6028 = vmatpush.msra.mxu0 0.0
        %6029 = vmatpush.msra.mxu0 0.0
        %6030 = vmatpush.msra.mxu0 0.0
        %6031 = vmatpush.msra.mxu0 0.0
        %6032 = vmatpush.msra.mxu0 0.0
        %6033 = vmatpush.msra.mxu0 0.0
        %6034 = vmatpush.msra.mxu0 %v1643
        %6035 = vmatmul.f32.gmra.mxu0 %v6017
        %v6036 = vpop.f32.mrf.mxu0
        %v6037 = vadd.f32 0.0, %v6036
        %6038 = vdwg.mxu0
        %v6040 = vsel %vm3283, %v4669, 0
        %6042 = vmatpush.msra.mxu0 0.0
        %6043 = vmatpush.msra.mxu0 0.0
        %6044 = vmatpush.msra.mxu0 0.0
        %6045 = vmatpush.msra.mxu0 0.0
        %6046 = vmatpush.msra.mxu0 0.0
        %6047 = vmatpush.msra.mxu0 0.0
        %6048 = vmatpush.msra.mxu0 0.0
        %6049 = vmatpush.msra.mxu0 0.0
        %6050 = vmatpush.msra.mxu0 0.0
        %6051 = vmatpush.msra.mxu0 0.0
        %6052 = vmatpush.msra.mxu0 0.0
        %6053 = vmatpush.msra.mxu0 0.0
        %6054 = vmatpush.msra.mxu0 0.0
        %6055 = vmatpush.msra.mxu0 0.0
        %6056 = vmatpush.msra.mxu0 0.0
        %6057 = vmatpush.msra.mxu0 %v1645
        %6058 = vmatmul.f32.gmra.mxu0 %v6040
        %v6059 = vpop.f32.mrf.mxu0
        %v6060 = vadd.f32 0.0, %v6059
        %6061 = vdwg.mxu0
        %v6063 = vsel %vm3283, %v4684, 0
        %6065 = vmatpush.msra.mxu0 0.0
        %6066 = vmatpush.msra.mxu0 0.0
        %6067 = vmatpush.msra.mxu0 0.0
        %6068 = vmatpush.msra.mxu0 0.0
        %6069 = vmatpush.msra.mxu0 0.0
        %6070 = vmatpush.msra.mxu0 0.0
        %6071 = vmatpush.msra.mxu0 0.0
        %6072 = vmatpush.msra.mxu0 0.0
        %6073 = vmatpush.msra.mxu0 0.0
        %6074 = vmatpush.msra.mxu0 0.0
        %6075 = vmatpush.msra.mxu0 0.0
        %6076 = vmatpush.msra.mxu0 0.0
        %6077 = vmatpush.msra.mxu0 0.0
        %6078 = vmatpush.msra.mxu0 0.0
        %6079 = vmatpush.msra.mxu0 0.0
        %6080 = vmatpush.msra.mxu0 %v1647
        %6081 = vmatmul.f32.gmra.mxu0 %v6063
        %v6082 = vpop.f32.mrf.mxu0
        %v6083 = vadd.f32 0.0, %v6082
        %6084 = vdwg.mxu0
        %v6086 = vsel %vm3283, %v4699, 0
        %6088 = vmatpush.msra.mxu0 0.0
        %6089 = vmatpush.msra.mxu0 0.0
        %6090 = vmatpush.msra.mxu0 0.0
        %6091 = vmatpush.msra.mxu0 0.0
        %6092 = vmatpush.msra.mxu0 0.0
        %6093 = vmatpush.msra.mxu0 0.0
        %6094 = vmatpush.msra.mxu0 0.0
        %6095 = vmatpush.msra.mxu0 0.0
        %6096 = vmatpush.msra.mxu0 0.0
        %6097 = vmatpush.msra.mxu0 0.0
        %6098 = vmatpush.msra.mxu0 0.0
        %6099 = vmatpush.msra.mxu0 0.0
        %6100 = vmatpush.msra.mxu0 0.0
        %6101 = vmatpush.msra.mxu0 0.0
        %6102 = vmatpush.msra.mxu0 0.0
        %6103 = vmatpush.msra.mxu0 %v1649
        %6104 = vmatmul.f32.gmra.mxu0 %v6086
        %v6105 = vpop.f32.mrf.mxu0
        %v6106 = vadd.f32 0.0, %v6105
        %6107 = vdwg.mxu0
        %v6109 = vsel %vm3283, %v4714, 0
        %6111 = vmatpush.msra.mxu0 0.0
        %6112 = vmatpush.msra.mxu0 0.0
        %6113 = vmatpush.msra.mxu0 0.0
        %6114 = vmatpush.msra.mxu0 0.0
        %6115 = vmatpush.msra.mxu0 0.0
        %6116 = vmatpush.msra.mxu0 0.0
        %6117 = vmatpush.msra.mxu0 0.0
        %6118 = vmatpush.msra.mxu0 0.0
        %6119 = vmatpush.msra.mxu0 0.0
        %6120 = vmatpush.msra.mxu0 0.0
        %6121 = vmatpush.msra.mxu0 0.0
        %6122 = vmatpush.msra.mxu0 0.0
        %6123 = vmatpush.msra.mxu0 0.0
        %6124 = vmatpush.msra.mxu0 0.0
        %6125 = vmatpush.msra.mxu0 0.0
        %6126 = vmatpush.msra.mxu0 %v1651
        %6127 = vmatmul.f32.gmra.mxu0 %v6109
        %v6128 = vpop.f32.mrf.mxu0
        %v6129 = vadd.f32 0.0, %v6128
        %6130 = vdwg.mxu0
        %v6132 = vsel %vm3283, %v4729, 0
        %6134 = vmatpush.msra.mxu0 0.0
        %6135 = vmatpush.msra.mxu0 0.0
        %6136 = vmatpush.msra.mxu0 0.0
        %6137 = vmatpush.msra.mxu0 0.0
        %6138 = vmatpush.msra.mxu0 0.0
        %6139 = vmatpush.msra.mxu0 0.0
        %6140 = vmatpush.msra.mxu0 0.0
        %6141 = vmatpush.msra.mxu0 0.0
        %6142 = vmatpush.msra.mxu0 0.0
        %6143 = vmatpush.msra.mxu0 0.0
        %6144 = vmatpush.msra.mxu0 0.0
        %6145 = vmatpush.msra.mxu0 0.0
        %6146 = vmatpush.msra.mxu0 0.0
        %6147 = vmatpush.msra.mxu0 0.0
        %6148 = vmatpush.msra.mxu0 0.0
        %6149 = vmatpush.msra.mxu0 %v1653
        %6150 = vmatmul.f32.gmra.mxu0 %v6132
        %v6151 = vpop.f32.mrf.mxu0
        %v6152 = vadd.f32 0.0, %v6151
        %6153 = vdwg.mxu0
        %v6155 = vsel %vm3283, %v4744, 0
        %6157 = vmatpush.msra.mxu0 0.0
        %6158 = vmatpush.msra.mxu0 0.0
        %6159 = vmatpush.msra.mxu0 0.0
        %6160 = vmatpush.msra.mxu0 0.0
        %6161 = vmatpush.msra.mxu0 0.0
        %6162 = vmatpush.msra.mxu0 0.0
        %6163 = vmatpush.msra.mxu0 0.0
        %6164 = vmatpush.msra.mxu0 0.0
        %6165 = vmatpush.msra.mxu0 0.0
        %6166 = vmatpush.msra.mxu0 0.0
        %6167 = vmatpush.msra.mxu0 0.0
        %6168 = vmatpush.msra.mxu0 0.0
        %6169 = vmatpush.msra.mxu0 0.0
        %6170 = vmatpush.msra.mxu0 0.0
        %6171 = vmatpush.msra.mxu0 0.0
        %6172 = vmatpush.msra.mxu0 %v1655
        %6173 = vmatmul.f32.gmra.mxu0 %v6155
        %v6174 = vpop.f32.mrf.mxu0
        %v6175 = vadd.f32 0.0, %v6174
        %6176 = vdwg.mxu0
        %v6178 = vsel %vm3283, %v4759, 0
        %6180 = vmatpush.msra.mxu0 0.0
        %6181 = vmatpush.msra.mxu0 0.0
        %6182 = vmatpush.msra.mxu0 0.0
        %6183 = vmatpush.msra.mxu0 0.0
        %6184 = vmatpush.msra.mxu0 0.0
        %6185 = vmatpush.msra.mxu0 0.0
        %6186 = vmatpush.msra.mxu0 0.0
        %6187 = vmatpush.msra.mxu0 0.0
        %6188 = vmatpush.msra.mxu0 0.0
        %6189 = vmatpush.msra.mxu0 0.0
        %6190 = vmatpush.msra.mxu0 0.0
        %6191 = vmatpush.msra.mxu0 0.0
        %6192 = vmatpush.msra.mxu0 0.0
        %6193 = vmatpush.msra.mxu0 0.0
        %6194 = vmatpush.msra.mxu0 0.0
        %6195 = vmatpush.msra.mxu0 %v1657
        %6196 = vmatmul.f32.gmra.mxu0 %v6178
        %v6197 = vpop.f32.mrf.mxu0
        %v6198 = vadd.f32 0.0, %v6197
        %6199 = vdwg.mxu0
        %v6201 = vsel %vm3283, %v4774, 0
        %6203 = vmatpush.msra.mxu0 0.0
        %6204 = vmatpush.msra.mxu0 0.0
        %6205 = vmatpush.msra.mxu0 0.0
        %6206 = vmatpush.msra.mxu0 0.0
        %6207 = vmatpush.msra.mxu0 0.0
        %6208 = vmatpush.msra.mxu0 0.0
        %6209 = vmatpush.msra.mxu0 0.0
        %6210 = vmatpush.msra.mxu0 0.0
        %6211 = vmatpush.msra.mxu0 0.0
        %6212 = vmatpush.msra.mxu0 0.0
        %6213 = vmatpush.msra.mxu0 0.0
        %6214 = vmatpush.msra.mxu0 0.0
        %6215 = vmatpush.msra.mxu0 0.0
        %6216 = vmatpush.msra.mxu0 0.0
        %6217 = vmatpush.msra.mxu0 0.0
        %6218 = vmatpush.msra.mxu0 %v1659
        %6219 = vmatmul.f32.gmra.mxu0 %v6201
        %v6220 = vpop.f32.mrf.mxu0
        %v6221 = vadd.f32 0.0, %v6220
        %6222 = vdwg.mxu0
        %v6224 = vsel %vm3283, %v4789, 0
        %6226 = vmatpush.msra.mxu0 0.0
        %6227 = vmatpush.msra.mxu0 0.0
        %6228 = vmatpush.msra.mxu0 0.0
        %6229 = vmatpush.msra.mxu0 0.0
        %6230 = vmatpush.msra.mxu0 0.0
        %6231 = vmatpush.msra.mxu0 0.0
        %6232 = vmatpush.msra.mxu0 0.0
        %6233 = vmatpush.msra.mxu0 0.0
        %6234 = vmatpush.msra.mxu0 0.0
        %6235 = vmatpush.msra.mxu0 0.0
        %6236 = vmatpush.msra.mxu0 0.0
        %6237 = vmatpush.msra.mxu0 0.0
        %6238 = vmatpush.msra.mxu0 0.0
        %6239 = vmatpush.msra.mxu0 0.0
        %6240 = vmatpush.msra.mxu0 0.0
        %6241 = vmatpush.msra.mxu0 %v1661
        %6242 = vmatmul.f32.gmra.mxu0 %v6224
        %v6243 = vpop.f32.mrf.mxu0
        %v6244 = vadd.f32 0.0, %v6243
        %6245 = vdwg.mxu0
        %v6247 = vsel %vm3283, %v4804, 0
        %6249 = vmatpush.msra.mxu0 0.0
        %6250 = vmatpush.msra.mxu0 0.0
        %6251 = vmatpush.msra.mxu0 0.0
        %6252 = vmatpush.msra.mxu0 0.0
        %6253 = vmatpush.msra.mxu0 0.0
        %6254 = vmatpush.msra.mxu0 0.0
        %6255 = vmatpush.msra.mxu0 0.0
        %6256 = vmatpush.msra.mxu0 0.0
        %6257 = vmatpush.msra.mxu0 0.0
        %6258 = vmatpush.msra.mxu0 0.0
        %6259 = vmatpush.msra.mxu0 0.0
        %6260 = vmatpush.msra.mxu0 0.0
        %6261 = vmatpush.msra.mxu0 0.0
        %6262 = vmatpush.msra.mxu0 0.0
        %6263 = vmatpush.msra.mxu0 0.0
        %6264 = vmatpush.msra.mxu0 %v1663
        %6265 = vmatmul.f32.gmra.mxu0 %v6247
        %v6266 = vpop.f32.mrf.mxu0
        %v6267 = vadd.f32 0.0, %v6266
        %6268 = vdwg.mxu0
        %v6270 = vsel %vm3283, %v4819, 0
        %6272 = vmatpush.msra.mxu0 0.0
        %6273 = vmatpush.msra.mxu0 0.0
        %6274 = vmatpush.msra.mxu0 0.0
        %6275 = vmatpush.msra.mxu0 0.0
        %6276 = vmatpush.msra.mxu0 0.0
        %6277 = vmatpush.msra.mxu0 0.0
        %6278 = vmatpush.msra.mxu0 0.0
        %6279 = vmatpush.msra.mxu0 0.0
        %6280 = vmatpush.msra.mxu0 0.0
        %6281 = vmatpush.msra.mxu0 0.0
        %6282 = vmatpush.msra.mxu0 0.0
        %6283 = vmatpush.msra.mxu0 0.0
        %6284 = vmatpush.msra.mxu0 0.0
        %6285 = vmatpush.msra.mxu0 0.0
        %6286 = vmatpush.msra.mxu0 0.0
        %6287 = vmatpush.msra.mxu0 %v1665
        %6288 = vmatmul.f32.gmra.mxu0 %v6270
        %v6289 = vpop.f32.mrf.mxu0
        %v6290 = vadd.f32 0.0, %v6289
        %6291 = vdwg.mxu0
        %6308 = vrot.lane.b32.xlu0 %v5209, 16
        %v6309 = vpop.permute.xlu0 %6308
        %6310 = vrot.lane.b32.xlu0 %v5232, 16
        %v6311 = vpop.permute.xlu0 %6310
        %6312 = vrot.lane.b32.xlu0 %v5255, 16
        %v6313 = vpop.permute.xlu0 %6312
        %6314 = vrot.lane.b32.xlu0 %v5278, 16
        %v6315 = vpop.permute.xlu0 %6314
        %6316 = vrot.lane.b32.xlu0 %v5301, 16
        %v6317 = vpop.permute.xlu0 %6316
        %6318 = vrot.lane.b32.xlu0 %v5324, 16
        %v6319 = vpop.permute.xlu0 %6318
        %6320 = vrot.lane.b32.xlu0 %v5347, 16
        %v6321 = vpop.permute.xlu0 %6320
        %6322 = vrot.lane.b32.xlu0 %v5370, 16
        %v6323 = vpop.permute.xlu0 %6322
        %6324 = vrot.lane.b32.xlu0 %v5393, 16
        %v6325 = vpop.permute.xlu0 %6324
        %6326 = vrot.lane.b32.xlu0 %v5416, 16
        %v6327 = vpop.permute.xlu0 %6326
        %6328 = vrot.lane.b32.xlu0 %v5439, 16
        %v6329 = vpop.permute.xlu0 %6328
        %6330 = vrot.lane.b32.xlu0 %v5462, 16
        %v6331 = vpop.permute.xlu0 %6330
        %6332 = vrot.lane.b32.xlu0 %v5485, 16
        %v6333 = vpop.permute.xlu0 %6332
        %6334 = vrot.lane.b32.xlu0 %v5508, 16
        %v6335 = vpop.permute.xlu0 %6334
        %6336 = vrot.lane.b32.xlu0 %v5531, 16
        %v6337 = vpop.permute.xlu0 %6336
        %6338 = vrot.lane.b32.xlu0 %v5554, 16
        %v6339 = vpop.permute.xlu0 %6338
        %6372 = vrot.lane.b32.xlu0 %v5577, 32
        %v6373 = vpop.permute.xlu0 %6372
        %6374 = vrot.lane.b32.xlu0 %v5600, 32
        %v6375 = vpop.permute.xlu0 %6374
        %6376 = vrot.lane.b32.xlu0 %v5623, 32
        %v6377 = vpop.permute.xlu0 %6376
        %6378 = vrot.lane.b32.xlu0 %v5646, 32
        %v6379 = vpop.permute.xlu0 %6378
        %6380 = vrot.lane.b32.xlu0 %v5669, 32
        %v6381 = vpop.permute.xlu0 %6380
        %6382 = vrot.lane.b32.xlu0 %v5692, 32
        %v6383 = vpop.permute.xlu0 %6382
        %6384 = vrot.lane.b32.xlu0 %v5715, 32
        %v6385 = vpop.permute.xlu0 %6384
        %6386 = vrot.lane.b32.xlu0 %v5738, 32
        %v6387 = vpop.permute.xlu0 %6386
        %6388 = vrot.lane.b32.xlu0 %v5761, 32
        %v6389 = vpop.permute.xlu0 %6388
        %6390 = vrot.lane.b32.xlu0 %v5784, 32
        %v6391 = vpop.permute.xlu0 %6390
        %6392 = vrot.lane.b32.xlu0 %v5807, 32
        %v6393 = vpop.permute.xlu0 %6392
        %6394 = vrot.lane.b32.xlu0 %v5830, 32
        %v6395 = vpop.permute.xlu0 %6394
        %6396 = vrot.lane.b32.xlu0 %v5853, 32
        %v6397 = vpop.permute.xlu0 %6396
        %6398 = vrot.lane.b32.xlu0 %v5876, 32
        %v6399 = vpop.permute.xlu0 %6398
        %6400 = vrot.lane.b32.xlu0 %v5899, 32
        %v6401 = vpop.permute.xlu0 %6400
        %6402 = vrot.lane.b32.xlu0 %v5922, 32
        %v6403 = vpop.permute.xlu0 %6402
        %6436 = vrot.lane.b32.xlu0 %v5945, 48
        %v6437 = vpop.permute.xlu0 %6436
        %6438 = vrot.lane.b32.xlu0 %v5968, 48
        %v6439 = vpop.permute.xlu0 %6438
        %6440 = vrot.lane.b32.xlu0 %v5991, 48
        %v6441 = vpop.permute.xlu0 %6440
        %6442 = vrot.lane.b32.xlu0 %v6014, 48
        %v6443 = vpop.permute.xlu0 %6442
        %6444 = vrot.lane.b32.xlu0 %v6037, 48
        %v6445 = vpop.permute.xlu0 %6444
        %6446 = vrot.lane.b32.xlu0 %v6060, 48
        %v6447 = vpop.permute.xlu0 %6446
        %6448 = vrot.lane.b32.xlu0 %v6083, 48
        %v6449 = vpop.permute.xlu0 %6448
        %6450 = vrot.lane.b32.xlu0 %v6106, 48
        %v6451 = vpop.permute.xlu0 %6450
        %6452 = vrot.lane.b32.xlu0 %v6129, 48
        %v6453 = vpop.permute.xlu0 %6452
        %6454 = vrot.lane.b32.xlu0 %v6152, 48
        %v6455 = vpop.permute.xlu0 %6454
        %6456 = vrot.lane.b32.xlu0 %v6175, 48
        %v6457 = vpop.permute.xlu0 %6456
        %6458 = vrot.lane.b32.xlu0 %v6198, 48
        %v6459 = vpop.permute.xlu0 %6458
        %6460 = vrot.lane.b32.xlu0 %v6221, 48
        %v6461 = vpop.permute.xlu0 %6460
        %6462 = vrot.lane.b32.xlu0 %v6244, 48
        %v6463 = vpop.permute.xlu0 %6462
        %6464 = vrot.lane.b32.xlu0 %v6267, 48
        %v6465 = vpop.permute.xlu0 %6464
        %6466 = vrot.lane.b32.xlu0 %v6290, 48
        %v6467 = vpop.permute.xlu0 %6466
        %v6484 = vsel %vm1682, %v4841, %v6309
        %v6485 = vsel %vm1682, %v4864, %v6311
        %v6486 = vsel %vm1682, %v4887, %v6313
        %v6487 = vsel %vm1682, %v4910, %v6315
        %v6488 = vsel %vm1682, %v4933, %v6317
        %v6489 = vsel %vm1682, %v4956, %v6319
        %v6490 = vsel %vm1682, %v4979, %v6321
        %v6491 = vsel %vm1682, %v5002, %v6323
        %v6492 = vsel %vm1682, %v5025, %v6325
        %v6493 = vsel %vm1682, %v5048, %v6327
        %v6494 = vsel %vm1682, %v5071, %v6329
        %v6495 = vsel %vm1682, %v5094, %v6331
        %v6496 = vsel %vm1682, %v5117, %v6333
        %v6497 = vsel %vm1682, %v5140, %v6335
        %v6498 = vsel %vm1682, %v5163, %v6337
        %v6499 = vsel %vm1682, %v5186, %v6339
        %v6500 = vsel %vm615, %v6484, %v6373
        %v6501 = vsel %vm615, %v6485, %v6375
        %v6502 = vsel %vm615, %v6486, %v6377
        %v6503 = vsel %vm615, %v6487, %v6379
        %v6504 = vsel %vm615, %v6488, %v6381
        %v6505 = vsel %vm615, %v6489, %v6383
        %v6506 = vsel %vm615, %v6490, %v6385
        %v6507 = vsel %vm615, %v6491, %v6387
        %v6508 = vsel %vm615, %v6492, %v6389
        %v6509 = vsel %vm615, %v6493, %v6391
        %v6510 = vsel %vm615, %v6494, %v6393
        %v6511 = vsel %vm615, %v6495, %v6395
        %v6512 = vsel %vm615, %v6496, %v6397
        %v6513 = vsel %vm615, %v6497, %v6399
        %v6514 = vsel %vm615, %v6498, %v6401
        %v6515 = vsel %vm615, %v6499, %v6403
        %vm6516 = vcmask 392192
        %v6517 = vsel %vm6516, %v6500, %v6437
        %v6518 = vsel %vm6516, %v6501, %v6439
        %v6519 = vsel %vm6516, %v6502, %v6441
        %v6520 = vsel %vm6516, %v6503, %v6443
        %v6521 = vsel %vm6516, %v6504, %v6445
        %v6522 = vsel %vm6516, %v6505, %v6447
        %v6523 = vsel %vm6516, %v6506, %v6449
        %v6524 = vsel %vm6516, %v6507, %v6451
        %v6525 = vsel %vm6516, %v6508, %v6453
        %v6526 = vsel %vm6516, %v6509, %v6455
        %v6527 = vsel %vm6516, %v6510, %v6457
        %v6528 = vsel %vm6516, %v6511, %v6459
        %v6529 = vsel %vm6516, %v6512, %v6461
        %v6530 = vsel %vm6516, %v6513, %v6463
        %v6531 = vsel %vm6516, %v6514, %v6465
        %v6532 = vsel %vm6516, %v6515, %v6467
        %v6533 = vrot.slane %v6519, 4
        %v6534 = vsel %vm834, %v6533, %v6517
        %v6535 = vrot.slane %v6517, 4
        %v6536 = vsel %vm834, %v6519, %v6535
        %v6538 = vunpack.c.l.s4 1983009808
        %v6539 = vunpack.c.0.s8 %v6538
        %v6540 = vperm.slane %v6534, %v6539
        %v6542 = vunpack.c.l.s4 1983009808
        %v6543 = vunpack.c.0.s8 %v6542
        %v6544 = vperm.slane %v6536, %v6543
        %v6545 = vrot.slane %v6520, 4
        %v6546 = vsel %vm834, %v6545, %v6518
        %v6547 = vrot.slane %v6518, 4
        %v6548 = vsel %vm834, %v6520, %v6547
        %v6550 = vunpack.c.l.s4 1983009808
        %v6551 = vunpack.c.0.s8 %v6550
        %v6552 = vperm.slane %v6546, %v6551
        %v6554 = vunpack.c.l.s4 1983009808
        %v6555 = vunpack.c.0.s8 %v6554
        %v6556 = vperm.slane %v6548, %v6555
        %v6557 = vrot.slane %v6523, 4
        %v6558 = vsel %vm834, %v6557, %v6521
        %v6559 = vrot.slane %v6521, 4
        %v6560 = vsel %vm834, %v6523, %v6559
        %v6562 = vunpack.c.l.s4 1983009808
        %v6563 = vunpack.c.0.s8 %v6562
        %v6564 = vperm.slane %v6558, %v6563
        %v6566 = vunpack.c.l.s4 1983009808
        %v6567 = vunpack.c.0.s8 %v6566
        %v6568 = vperm.slane %v6560, %v6567
        %v6569 = vrot.slane %v6524, 4
        %v6570 = vsel %vm834, %v6569, %v6522
        %v6571 = vrot.slane %v6522, 4
        %v6572 = vsel %vm834, %v6524, %v6571
        %v6574 = vunpack.c.l.s4 1983009808
        %v6575 = vunpack.c.0.s8 %v6574
        %v6576 = vperm.slane %v6570, %v6575
        %v6578 = vunpack.c.l.s4 1983009808
        %v6579 = vunpack.c.0.s8 %v6578
        %v6580 = vperm.slane %v6572, %v6579
        %v6581 = vrot.slane %v6552, 4
        %v6582 = vsel %vm834, %v6581, %v6540
        %v6583 = vrot.slane %v6540, 4
        %v6584 = vsel %vm834, %v6552, %v6583
        %v6586 = vunpack.c.l.s4 1934713408
        %v6587 = vunpack.c.0.s8 %v6586
        %v6588 = vperm.slane %v6582, %v6587
        %v6590 = vunpack.c.l.s4 1934713408
        %v6591 = vunpack.c.0.s8 %v6590
        %v6592 = vperm.slane %v6584, %v6591
        %v6593 = vrot.slane %v6556, 4
        %v6594 = vsel %vm834, %v6593, %v6544
        %v6595 = vrot.slane %v6544, 4
        %v6596 = vsel %vm834, %v6556, %v6595
        %v6598 = vunpack.c.l.s4 1934713408
        %v6599 = vunpack.c.0.s8 %v6598
        %v6600 = vperm.slane %v6594, %v6599
        %v6602 = vunpack.c.l.s4 1934713408
        %v6603 = vunpack.c.0.s8 %v6602
        %v6604 = vperm.slane %v6596, %v6603
        %v6605 = vrot.slane %v6576, 4
        %v6606 = vsel %vm834, %v6605, %v6564
        %v6607 = vrot.slane %v6564, 4
        %v6608 = vsel %vm834, %v6576, %v6607
        %v6610 = vunpack.c.l.s4 1934713408
        %v6611 = vunpack.c.0.s8 %v6610
        %v6612 = vperm.slane %v6606, %v6611
        %v6614 = vunpack.c.l.s4 1934713408
        %v6615 = vunpack.c.0.s8 %v6614
        %v6616 = vperm.slane %v6608, %v6615
        %v6617 = vrot.slane %v6580, 4
        %v6618 = vsel %vm834, %v6617, %v6568
        %v6619 = vrot.slane %v6568, 4
        %v6620 = vsel %vm834, %v6580, %v6619
        %v6622 = vunpack.c.l.s4 1934713408
        %v6623 = vunpack.c.0.s8 %v6622
        %v6624 = vperm.slane %v6618, %v6623
        %v6626 = vunpack.c.l.s4 1934713408
        %v6627 = vunpack.c.0.s8 %v6626
        %v6628 = vperm.slane %v6620, %v6627
        %v6629 = vrot.slane %v6612, 4
        %v6630 = vsel %vm834, %v6629, %v6588
        %v6631 = vrot.slane %v6588, 4
        %v6632 = vsel %vm834, %v6612, %v6631
        %v6633 = vrot.slane %v6616, 4
        %v6634 = vsel %vm834, %v6633, %v6592
        %v6635 = vrot.slane %v6592, 4
        %v6636 = vsel %vm834, %v6616, %v6635
        %v6637 = vrot.slane %v6624, 4
        %v6638 = vsel %vm834, %v6637, %v6600
        %v6639 = vrot.slane %v6600, 4
        %v6640 = vsel %vm834, %v6624, %v6639
        %v6641 = vrot.slane %v6628, 4
        %v6642 = vsel %vm834, %v6641, %v6604
        %v6643 = vrot.slane %v6604, 4
        %v6644 = vsel %vm834, %v6628, %v6643
        %v6645 = vrot.slane %v6527, 4
        %v6646 = vsel %vm834, %v6645, %v6525
        %v6647 = vrot.slane %v6525, 4
        %v6648 = vsel %vm834, %v6527, %v6647
        %v6650 = vunpack.c.l.s4 1983009808
        %v6651 = vunpack.c.0.s8 %v6650
        %v6652 = vperm.slane %v6646, %v6651
        %v6654 = vunpack.c.l.s4 1983009808
        %v6655 = vunpack.c.0.s8 %v6654
        %v6656 = vperm.slane %v6648, %v6655
        %v6657 = vrot.slane %v6528, 4
        %v6658 = vsel %vm834, %v6657, %v6526
        %v6659 = vrot.slane %v6526, 4
        %v6660 = vsel %vm834, %v6528, %v6659
        %v6662 = vunpack.c.l.s4 1983009808
        %v6663 = vunpack.c.0.s8 %v6662
        %v6664 = vperm.slane %v6658, %v6663
        %v6666 = vunpack.c.l.s4 1983009808
        %v6667 = vunpack.c.0.s8 %v6666
        %v6668 = vperm.slane %v6660, %v6667
        %v6669 = vrot.slane %v6531, 4
        %v6670 = vsel %vm834, %v6669, %v6529
        %v6671 = vrot.slane %v6529, 4
        %v6672 = vsel %vm834, %v6531, %v6671
        %v6674 = vunpack.c.l.s4 1983009808
        %v6675 = vunpack.c.0.s8 %v6674
        %v6676 = vperm.slane %v6670, %v6675
        %v6678 = vunpack.c.l.s4 1983009808
        %v6679 = vunpack.c.0.s8 %v6678
        %v6680 = vperm.slane %v6672, %v6679
        %v6681 = vrot.slane %v6532, 4
        %v6682 = vsel %vm834, %v6681, %v6530
        %v6683 = vrot.slane %v6530, 4
        %v6684 = vsel %vm834, %v6532, %v6683
        %v6686 = vunpack.c.l.s4 1983009808
        %v6687 = vunpack.c.0.s8 %v6686
        %v6688 = vperm.slane %v6682, %v6687
        %v6690 = vunpack.c.l.s4 1983009808
        %v6691 = vunpack.c.0.s8 %v6690
        %v6692 = vperm.slane %v6684, %v6691
        %v6693 = vrot.slane %v6664, 4
        %v6694 = vsel %vm834, %v6693, %v6652
        %v6695 = vrot.slane %v6652, 4
        %v6696 = vsel %vm834, %v6664, %v6695
        %v6698 = vunpack.c.l.s4 1934713408
        %v6699 = vunpack.c.0.s8 %v6698
        %v6700 = vperm.slane %v6694, %v6699
        %v6702 = vunpack.c.l.s4 1934713408
        %v6703 = vunpack.c.0.s8 %v6702
        %v6704 = vperm.slane %v6696, %v6703
        %v6705 = vrot.slane %v6668, 4
        %v6706 = vsel %vm834, %v6705, %v6656
        %v6707 = vrot.slane %v6656, 4
        %v6708 = vsel %vm834, %v6668, %v6707
        %v6710 = vunpack.c.l.s4 1934713408
        %v6711 = vunpack.c.0.s8 %v6710
        %v6712 = vperm.slane %v6706, %v6711
        %v6714 = vunpack.c.l.s4 1934713408
        %v6715 = vunpack.c.0.s8 %v6714
        %v6716 = vperm.slane %v6708, %v6715
        %v6717 = vrot.slane %v6688, 4
        %v6718 = vsel %vm834, %v6717, %v6676
        %v6719 = vrot.slane %v6676, 4
        %v6720 = vsel %vm834, %v6688, %v6719
        %v6722 = vunpack.c.l.s4 1934713408
        %v6723 = vunpack.c.0.s8 %v6722
        %v6724 = vperm.slane %v6718, %v6723
        %v6726 = vunpack.c.l.s4 1934713408
        %v6727 = vunpack.c.0.s8 %v6726
        %v6728 = vperm.slane %v6720, %v6727
        %v6729 = vrot.slane %v6692, 4
        %v6730 = vsel %vm834, %v6729, %v6680
        %v6731 = vrot.slane %v6680, 4
        %v6732 = vsel %vm834, %v6692, %v6731
        %v6734 = vunpack.c.l.s4 1934713408
        %v6735 = vunpack.c.0.s8 %v6734
        %v6736 = vperm.slane %v6730, %v6735
        %v6738 = vunpack.c.l.s4 1934713408
        %v6739 = vunpack.c.0.s8 %v6738
        %v6740 = vperm.slane %v6732, %v6739
        %v6741 = vrot.slane %v6724, 4
        %v6742 = vsel %vm834, %v6741, %v6700
        %v6743 = vrot.slane %v6700, 4
        %v6744 = vsel %vm834, %v6724, %v6743
        %v6745 = vrot.slane %v6728, 4
        %v6746 = vsel %vm834, %v6745, %v6704
        %v6747 = vrot.slane %v6704, 4
        %v6748 = vsel %vm834, %v6728, %v6747
        %v6749 = vrot.slane %v6736, 4
        %v6750 = vsel %vm834, %v6749, %v6712
        %v6751 = vrot.slane %v6712, 4
        %v6752 = vsel %vm834, %v6736, %v6751
        %v6753 = vrot.slane %v6740, 4
        %v6754 = vsel %vm834, %v6753, %v6716
        %v6755 = vrot.slane %v6716, 4
        %v6756 = vsel %vm834, %v6740, %v6755
        %v6757 = vadd.f32 %v6630, %v616
        %v6758 = vadd.f32 %v6742, %v617
        %v6759 = vadd.f32 %v6632, %v618
        %v6760 = vadd.f32 %v6744, %v619
        %v6761 = vadd.f32 %v6634, %v620
        %v6762 = vadd.f32 %v6746, %v621
        %v6763 = vadd.f32 %v6636, %v622
        %v6764 = vadd.f32 %v6748, %v623
        %v6765 = vadd.f32 %v6638, %v624
        %v6766 = vadd.f32 %v6750, %v625
        %v6767 = vadd.f32 %v6640, %v626
        %v6768 = vadd.f32 %v6752, %v627
        %v6769 = vadd.f32 %v6642, %v628
        %v6770 = vadd.f32 %v6754, %v629
        %v6771 = vadd.f32 %v6644, %v630
        %v6772 = vadd.f32 %v6756, %v631
        %v6773 = vsel %vm654, %v6757, 0.0
        %6774 = vadd.xlane.f32.xlu0 %v6773
        %v6775 = vpop.xlane.xlu0 %6774
        %v6776 = vsel %vm654, %v6758, 0.0
        %6777 = vadd.xlane.f32.xlu0 %v6776
        %v6778 = vpop.xlane.xlu0 %6777
        %v6779 = vsel %vm654, %v6759, 0.0
        %6780 = vadd.xlane.f32.xlu0 %v6779
        %v6781 = vpop.xlane.xlu0 %6780
        %v6782 = vsel %vm654, %v6760, 0.0
        %6783 = vadd.xlane.f32.xlu0 %v6782
        %v6784 = vpop.xlane.xlu0 %6783
        %v6785 = vsel %vm654, %v6761, 0.0
        %6786 = vadd.xlane.f32.xlu0 %v6785
        %v6787 = vpop.xlane.xlu0 %6786
        %v6788 = vsel %vm654, %v6762, 0.0
        %6789 = vadd.xlane.f32.xlu0 %v6788
        %v6790 = vpop.xlane.xlu0 %6789
        %v6791 = vsel %vm654, %v6763, 0.0
        %6792 = vadd.xlane.f32.xlu0 %v6791
        %v6793 = vpop.xlane.xlu0 %6792
        %v6794 = vsel %vm654, %v6764, 0.0
        %6795 = vadd.xlane.f32.xlu0 %v6794
        %v6796 = vpop.xlane.xlu0 %6795
        %v6797 = vsel %vm654, %v6765, 0.0
        %6798 = vadd.xlane.f32.xlu0 %v6797
        %v6799 = vpop.xlane.xlu0 %6798
        %v6800 = vsel %vm654, %v6766, 0.0
        %6801 = vadd.xlane.f32.xlu0 %v6800
        %v6802 = vpop.xlane.xlu0 %6801
        %v6803 = vsel %vm654, %v6767, 0.0
        %6804 = vadd.xlane.f32.xlu0 %v6803
        %v6805 = vpop.xlane.xlu0 %6804
        %v6806 = vsel %vm654, %v6768, 0.0
        %6807 = vadd.xlane.f32.xlu0 %v6806
        %v6808 = vpop.xlane.xlu0 %6807
        %v6809 = vsel %vm654, %v6769, 0.0
        %6810 = vadd.xlane.f32.xlu0 %v6809
        %v6811 = vpop.xlane.xlu0 %6810
        %v6812 = vsel %vm654, %v6770, 0.0
        %6813 = vadd.xlane.f32.xlu0 %v6812
        %v6814 = vpop.xlane.xlu0 %6813
        %v6815 = vsel %vm654, %v6771, 0.0
        %6816 = vadd.xlane.f32.xlu0 %v6815
        %v6817 = vpop.xlane.xlu0 %6816
        %v6818 = vsel %vm654, %v6772, 0.0
        %6819 = vadd.xlane.f32.xlu0 %v6818
        %v6820 = vpop.xlane.xlu0 %6819
        %v6821 = vrcp.pop 64.0
        %v6822 = vmul.f32 64.0, %v6821
        %v6823 = vsub.f32 1.0, %v6822
        %v6824 = vmul.f32 %v6821, %v6823
        %v6825 = vadd.f32 %v6821, %v6824
        %vm6826 = vweird.f32 %v6821
        %v6827 = vsel %vm6826, %v6821, %v6825
        %v6828 = vmul.f32 %v6775, %v6827
        %v6829 = vmul.f32 %v6778, %v6827
        %v6830 = vmul.f32 %v6781, %v6827
        %v6831 = vmul.f32 %v6784, %v6827
        %v6832 = vmul.f32 %v6787, %v6827
        %v6833 = vmul.f32 %v6790, %v6827
        %v6834 = vmul.f32 %v6793, %v6827
        %v6835 = vmul.f32 %v6796, %v6827
        %v6836 = vmul.f32 %v6799, %v6827
        %v6837 = vmul.f32 %v6802, %v6827
        %v6838 = vmul.f32 %v6805, %v6827
        %v6839 = vmul.f32 %v6808, %v6827
        %v6840 = vmul.f32 %v6811, %v6827
        %v6841 = vmul.f32 %v6814, %v6827
        %v6842 = vmul.f32 %v6817, %v6827
        %v6843 = vmul.f32 %v6820, %v6827
        %v6844 = vsub.f32 %v6757, %v6828
        %v6845 = vsub.f32 %v6758, %v6829
        %v6846 = vsub.f32 %v6759, %v6830
        %v6847 = vsub.f32 %v6760, %v6831
        %v6848 = vsub.f32 %v6761, %v6832
        %v6849 = vsub.f32 %v6762, %v6833
        %v6850 = vsub.f32 %v6763, %v6834
        %v6851 = vsub.f32 %v6764, %v6835
        %v6852 = vsub.f32 %v6765, %v6836
        %v6853 = vsub.f32 %v6766, %v6837
        %v6854 = vsub.f32 %v6767, %v6838
        %v6855 = vsub.f32 %v6768, %v6839
        %v6856 = vsub.f32 %v6769, %v6840
        %v6857 = vsub.f32 %v6770, %v6841
        %v6858 = vsub.f32 %v6771, %v6842
        %v6859 = vsub.f32 %v6772, %v6843
        %v6860 = vmul.f32 %v6844, %v6844
        %v6861 = vmul.f32 %v6845, %v6845
        %v6862 = vmul.f32 %v6846, %v6846
        %v6863 = vmul.f32 %v6847, %v6847
        %v6864 = vmul.f32 %v6848, %v6848
        %v6865 = vmul.f32 %v6849, %v6849
        %v6866 = vmul.f32 %v6850, %v6850
        %v6867 = vmul.f32 %v6851, %v6851
        %v6868 = vmul.f32 %v6852, %v6852
        %v6869 = vmul.f32 %v6853, %v6853
        %v6870 = vmul.f32 %v6854, %v6854
        %v6871 = vmul.f32 %v6855, %v6855
        %v6872 = vmul.f32 %v6856, %v6856
        %v6873 = vmul.f32 %v6857, %v6857
        %v6874 = vmul.f32 %v6858, %v6858
        %v6875 = vmul.f32 %v6859, %v6859
        %v6876 = vsel %vm654, %v6860, 0.0
        %6877 = vadd.xlane.f32.xlu0 %v6876
        %v6878 = vpop.xlane.xlu0 %6877
        %v6879 = vsel %vm654, %v6861, 0.0
        %6880 = vadd.xlane.f32.xlu0 %v6879
        %v6881 = vpop.xlane.xlu0 %6880
        %v6882 = vsel %vm654, %v6862, 0.0
        %6883 = vadd.xlane.f32.xlu0 %v6882
        %v6884 = vpop.xlane.xlu0 %6883
        %v6885 = vsel %vm654, %v6863, 0.0
        %6886 = vadd.xlane.f32.xlu0 %v6885
        %v6887 = vpop.xlane.xlu0 %6886
        %v6888 = vsel %vm654, %v6864, 0.0
        %6889 = vadd.xlane.f32.xlu0 %v6888
        %v6890 = vpop.xlane.xlu0 %6889
        %v6891 = vsel %vm654, %v6865, 0.0
        %6892 = vadd.xlane.f32.xlu0 %v6891
        %v6893 = vpop.xlane.xlu0 %6892
        %v6894 = vsel %vm654, %v6866, 0.0
        %6895 = vadd.xlane.f32.xlu0 %v6894
        %v6896 = vpop.xlane.xlu0 %6895
        %v6897 = vsel %vm654, %v6867, 0.0
        %6898 = vadd.xlane.f32.xlu0 %v6897
        %v6899 = vpop.xlane.xlu0 %6898
        %v6900 = vsel %vm654, %v6868, 0.0
        %6901 = vadd.xlane.f32.xlu0 %v6900
        %v6902 = vpop.xlane.xlu0 %6901
        %v6903 = vsel %vm654, %v6869, 0.0
        %6904 = vadd.xlane.f32.xlu0 %v6903
        %v6905 = vpop.xlane.xlu0 %6904
        %v6906 = vsel %vm654, %v6870, 0.0
        %6907 = vadd.xlane.f32.xlu0 %v6906
        %v6908 = vpop.xlane.xlu0 %6907
        %v6909 = vsel %vm654, %v6871, 0.0
        %6910 = vadd.xlane.f32.xlu0 %v6909
        %v6911 = vpop.xlane.xlu0 %6910
        %v6912 = vsel %vm654, %v6872, 0.0
        %6913 = vadd.xlane.f32.xlu0 %v6912
        %v6914 = vpop.xlane.xlu0 %6913
        %v6915 = vsel %vm654, %v6873, 0.0
        %6916 = vadd.xlane.f32.xlu0 %v6915
        %v6917 = vpop.xlane.xlu0 %6916
        %v6918 = vsel %vm654, %v6874, 0.0
        %6919 = vadd.xlane.f32.xlu0 %v6918
        %v6920 = vpop.xlane.xlu0 %6919
        %v6921 = vsel %vm654, %v6875, 0.0
        %6922 = vadd.xlane.f32.xlu0 %v6921
        %v6923 = vpop.xlane.xlu0 %6922
        %v6924 = vmul.f32 %v6878, %v6827
        %v6925 = vmul.f32 %v6881, %v6827
        %v6926 = vmul.f32 %v6884, %v6827
        %v6927 = vmul.f32 %v6887, %v6827
        %v6928 = vmul.f32 %v6890, %v6827
        %v6929 = vmul.f32 %v6893, %v6827
        %v6930 = vmul.f32 %v6896, %v6827
        %v6931 = vmul.f32 %v6899, %v6827
        %v6932 = vmul.f32 %v6902, %v6827
        %v6933 = vmul.f32 %v6905, %v6827
        %v6934 = vmul.f32 %v6908, %v6827
        %v6935 = vmul.f32 %v6911, %v6827
        %v6936 = vmul.f32 %v6914, %v6827
        %v6937 = vmul.f32 %v6917, %v6827
        %v6938 = vmul.f32 %v6920, %v6827
        %v6939 = vmul.f32 %v6923, %v6827
        %v6940 = vadd.f32 %v6924, 1e-05
        %v6941 = vadd.f32 %v6925, 1e-05
        %v6942 = vadd.f32 %v6926, 1e-05
        %v6943 = vadd.f32 %v6927, 1e-05
        %v6944 = vadd.f32 %v6928, 1e-05
        %v6945 = vadd.f32 %v6929, 1e-05
        %v6946 = vadd.f32 %v6930, 1e-05
        %v6947 = vadd.f32 %v6931, 1e-05
        %v6948 = vadd.f32 %v6932, 1e-05
        %v6949 = vadd.f32 %v6933, 1e-05
        %v6950 = vadd.f32 %v6934, 1e-05
        %v6951 = vadd.f32 %v6935, 1e-05
        %v6952 = vadd.f32 %v6936, 1e-05
        %v6953 = vadd.f32 %v6937, 1e-05
        %v6954 = vadd.f32 %v6938, 1e-05
        %v6955 = vadd.f32 %v6939, 1e-05
        %v6956 = vrsqrt.pop %v6940
        %v6957 = vmul.f32 %v6956, %v6940
        %v6958 = vmul.f32 %v6957, %v6956
        %v6959 = vmul.f32 0.5, %v6958
        %v6960 = vsub.f32 1.5, %v6959
        %v6961 = vmul.f32 %v6956, %v6960
        %vm6962 = vweird.f32 %v6940
        %vm6963 = vweird.f32 %v6956
        %vm6964 = vmor %vm6962, %vm6963
        %v6965 = vsel %vm6964, %v6956, %v6961
        %v6966 = vrsqrt.pop %v6941
        %v6967 = vmul.f32 %v6966, %v6941
        %v6968 = vmul.f32 %v6967, %v6966
        %v6969 = vmul.f32 0.5, %v6968
        %v6970 = vsub.f32 1.5, %v6969
        %v6971 = vmul.f32 %v6966, %v6970
        %vm6972 = vweird.f32 %v6941
        %vm6973 = vweird.f32 %v6966
        %vm6974 = vmor %vm6972, %vm6973
        %v6975 = vsel %vm6974, %v6966, %v6971
        %v6976 = vrsqrt.pop %v6942
        %v6977 = vmul.f32 %v6976, %v6942
        %v6978 = vmul.f32 %v6977, %v6976
        %v6979 = vmul.f32 0.5, %v6978
        %v6980 = vsub.f32 1.5, %v6979
        %v6981 = vmul.f32 %v6976, %v6980
        %vm6982 = vweird.f32 %v6942
        %vm6983 = vweird.f32 %v6976
        %vm6984 = vmor %vm6982, %vm6983
        %v6985 = vsel %vm6984, %v6976, %v6981
        %v6986 = vrsqrt.pop %v6943
        %v6987 = vmul.f32 %v6986, %v6943
        %v6988 = vmul.f32 %v6987, %v6986
        %v6989 = vmul.f32 0.5, %v6988
        %v6990 = vsub.f32 1.5, %v6989
        %v6991 = vmul.f32 %v6986, %v6990
        %vm6992 = vweird.f32 %v6943
        %vm6993 = vweird.f32 %v6986
        %vm6994 = vmor %vm6992, %vm6993
        %v6995 = vsel %vm6994, %v6986, %v6991
        %v6996 = vrsqrt.pop %v6944
        %v6997 = vmul.f32 %v6996, %v6944
        %v6998 = vmul.f32 %v6997, %v6996
        %v6999 = vmul.f32 0.5, %v6998
        %v7000 = vsub.f32 1.5, %v6999
        %v7001 = vmul.f32 %v6996, %v7000
        %vm7002 = vweird.f32 %v6944
        %vm7003 = vweird.f32 %v6996
        %vm7004 = vmor %vm7002, %vm7003
        %v7005 = vsel %vm7004, %v6996, %v7001
        %v7006 = vrsqrt.pop %v6945
        %v7007 = vmul.f32 %v7006, %v6945
        %v7008 = vmul.f32 %v7007, %v7006
        %v7009 = vmul.f32 0.5, %v7008
        %v7010 = vsub.f32 1.5, %v7009
        %v7011 = vmul.f32 %v7006, %v7010
        %vm7012 = vweird.f32 %v6945
        %vm7013 = vweird.f32 %v7006
        %vm7014 = vmor %vm7012, %vm7013
        %v7015 = vsel %vm7014, %v7006, %v7011
        %v7016 = vrsqrt.pop %v6946
        %v7017 = vmul.f32 %v7016, %v6946
        %v7018 = vmul.f32 %v7017, %v7016
        %v7019 = vmul.f32 0.5, %v7018
        %v7020 = vsub.f32 1.5, %v7019
        %v7021 = vmul.f32 %v7016, %v7020
        %vm7022 = vweird.f32 %v6946
        %vm7023 = vweird.f32 %v7016
        %vm7024 = vmor %vm7022, %vm7023
        %v7025 = vsel %vm7024, %v7016, %v7021
        %v7026 = vrsqrt.pop %v6947
        %v7027 = vmul.f32 %v7026, %v6947
        %v7028 = vmul.f32 %v7027, %v7026
        %v7029 = vmul.f32 0.5, %v7028
        %v7030 = vsub.f32 1.5, %v7029
        %v7031 = vmul.f32 %v7026, %v7030
        %vm7032 = vweird.f32 %v6947
        %vm7033 = vweird.f32 %v7026
        %vm7034 = vmor %vm7032, %vm7033
        %v7035 = vsel %vm7034, %v7026, %v7031
        %v7036 = vrsqrt.pop %v6948
        %v7037 = vmul.f32 %v7036, %v6948
        %v7038 = vmul.f32 %v7037, %v7036
        %v7039 = vmul.f32 0.5, %v7038
        %v7040 = vsub.f32 1.5, %v7039
        %v7041 = vmul.f32 %v7036, %v7040
        %vm7042 = vweird.f32 %v6948
        %vm7043 = vweird.f32 %v7036
        %vm7044 = vmor %vm7042, %vm7043
        %v7045 = vsel %vm7044, %v7036, %v7041
        %v7046 = vrsqrt.pop %v6949
        %v7047 = vmul.f32 %v7046, %v6949
        %v7048 = vmul.f32 %v7047, %v7046
        %v7049 = vmul.f32 0.5, %v7048
        %v7050 = vsub.f32 1.5, %v7049
        %v7051 = vmul.f32 %v7046, %v7050
        %vm7052 = vweird.f32 %v6949
        %vm7053 = vweird.f32 %v7046
        %vm7054 = vmor %vm7052, %vm7053
        %v7055 = vsel %vm7054, %v7046, %v7051
        %v7056 = vrsqrt.pop %v6950
        %v7057 = vmul.f32 %v7056, %v6950
        %v7058 = vmul.f32 %v7057, %v7056
        %v7059 = vmul.f32 0.5, %v7058
        %v7060 = vsub.f32 1.5, %v7059
        %v7061 = vmul.f32 %v7056, %v7060
        %vm7062 = vweird.f32 %v6950
        %vm7063 = vweird.f32 %v7056
        %vm7064 = vmor %vm7062, %vm7063
        %v7065 = vsel %vm7064, %v7056, %v7061
        %v7066 = vrsqrt.pop %v6951
        %v7067 = vmul.f32 %v7066, %v6951
        %v7068 = vmul.f32 %v7067, %v7066
        %v7069 = vmul.f32 0.5, %v7068
        %v7070 = vsub.f32 1.5, %v7069
        %v7071 = vmul.f32 %v7066, %v7070
        %vm7072 = vweird.f32 %v6951
        %vm7073 = vweird.f32 %v7066
        %vm7074 = vmor %vm7072, %vm7073
        %v7075 = vsel %vm7074, %v7066, %v7071
        %v7076 = vrsqrt.pop %v6952
        %v7077 = vmul.f32 %v7076, %v6952
        %v7078 = vmul.f32 %v7077, %v7076
        %v7079 = vmul.f32 0.5, %v7078
        %v7080 = vsub.f32 1.5, %v7079
        %v7081 = vmul.f32 %v7076, %v7080
        %vm7082 = vweird.f32 %v6952
        %vm7083 = vweird.f32 %v7076
        %vm7084 = vmor %vm7082, %vm7083
        %v7085 = vsel %vm7084, %v7076, %v7081
        %v7086 = vrsqrt.pop %v6953
        %v7087 = vmul.f32 %v7086, %v6953
        %v7088 = vmul.f32 %v7087, %v7086
        %v7089 = vmul.f32 0.5, %v7088
        %v7090 = vsub.f32 1.5, %v7089
        %v7091 = vmul.f32 %v7086, %v7090
        %vm7092 = vweird.f32 %v6953
        %vm7093 = vweird.f32 %v7086
        %vm7094 = vmor %vm7092, %vm7093
        %v7095 = vsel %vm7094, %v7086, %v7091
        %v7096 = vrsqrt.pop %v6954
        %v7097 = vmul.f32 %v7096, %v6954
        %v7098 = vmul.f32 %v7097, %v7096
        %v7099 = vmul.f32 0.5, %v7098
        %v7100 = vsub.f32 1.5, %v7099
        %v7101 = vmul.f32 %v7096, %v7100
        %vm7102 = vweird.f32 %v6954
        %vm7103 = vweird.f32 %v7096
        %vm7104 = vmor %vm7102, %vm7103
        %v7105 = vsel %vm7104, %v7096, %v7101
        %v7106 = vrsqrt.pop %v6955
        %v7107 = vmul.f32 %v7106, %v6955
        %v7108 = vmul.f32 %v7107, %v7106
        %v7109 = vmul.f32 0.5, %v7108
        %v7110 = vsub.f32 1.5, %v7109
        %v7111 = vmul.f32 %v7106, %v7110
        %vm7112 = vweird.f32 %v6955
        %vm7113 = vweird.f32 %v7106
        %vm7114 = vmor %vm7112, %vm7113
        %v7115 = vsel %vm7114, %v7106, %v7111
        %v7116 = vmul.f32 %v6844, %v6965
        %v7117 = vmul.f32 %v6845, %v6975
        %v7118 = vmul.f32 %v6846, %v6985
        %v7119 = vmul.f32 %v6847, %v6995
        %v7120 = vmul.f32 %v6848, %v7005
        %v7121 = vmul.f32 %v6849, %v7015
        %v7122 = vmul.f32 %v6850, %v7025
        %v7123 = vmul.f32 %v6851, %v7035
        %v7124 = vmul.f32 %v6852, %v7045
        %v7125 = vmul.f32 %v6853, %v7055
        %v7126 = vmul.f32 %v6854, %v7065
        %v7127 = vmul.f32 %v6855, %v7075
        %v7128 = vmul.f32 %v6856, %v7085
        %v7129 = vmul.f32 %v6857, %v7095
        %v7130 = vmul.f32 %v6858, %v7105
        %v7131 = vmul.f32 %v6859, %v7115
        %v7132 = vld [vmem:[%s4] sm:$0x1]
        %v7134 = vperm.slane %v7132, 0
        %v7136 = vmul.f32 %v7116, %v7134
        %v7137 = vmul.f32 %v7117, %v7134
        %v7138 = vmul.f32 %v7118, %v7134
        %v7139 = vmul.f32 %v7119, %v7134
        %v7140 = vmul.f32 %v7120, %v7134
        %v7141 = vmul.f32 %v7121, %v7134
        %v7142 = vmul.f32 %v7122, %v7134
        %v7143 = vmul.f32 %v7123, %v7134
        %v7144 = vmul.f32 %v7124, %v7134
        %v7145 = vmul.f32 %v7125, %v7134
        %v7146 = vmul.f32 %v7126, %v7134
        %v7147 = vmul.f32 %v7127, %v7134
        %v7148 = vmul.f32 %v7128, %v7134
        %v7149 = vmul.f32 %v7129, %v7134
        %v7150 = vmul.f32 %v7130, %v7134
        %v7151 = vmul.f32 %v7131, %v7134
        %v7152 = vld [vmem:[%s5] sm:$0x1]
        %v7154 = vperm.slane %v7152, 0
        %v7156 = vadd.f32 %v7136, %v7154
        %v7157 = vadd.f32 %v7137, %v7154
        %v7158 = vadd.f32 %v7138, %v7154
        %v7159 = vadd.f32 %v7139, %v7154
        %v7160 = vadd.f32 %v7140, %v7154
        %v7161 = vadd.f32 %v7141, %v7154
        %v7162 = vadd.f32 %v7142, %v7154
        %v7163 = vadd.f32 %v7143, %v7154
        %v7164 = vadd.f32 %v7144, %v7154
        %v7165 = vadd.f32 %v7145, %v7154
        %v7166 = vadd.f32 %v7146, %v7154
        %v7167 = vadd.f32 %v7147, %v7154
        %v7168 = vadd.f32 %v7148, %v7154
        %v7169 = vadd.f32 %v7149, %v7154
        %v7170 = vadd.f32 %v7150, %v7154
        %v7171 = vadd.f32 %v7151, %v7154
        %v7172 = vrot.slane %v7160, 4
        %v7173 = vsel %vm834, %v7172, %v7156
        %v7174 = vrot.slane %v7156, 4
        %v7175 = vsel %vm834, %v7160, %v7174
        %v7177 = vunpack.c.l.s4 1983009808
        %v7178 = vunpack.c.0.s8 %v7177
        %v7179 = vperm.slane %v7173, %v7178
        %v7181 = vunpack.c.l.s4 1983009808
        %v7182 = vunpack.c.0.s8 %v7181
        %v7183 = vperm.slane %v7175, %v7182
        %v7184 = vrot.slane %v7162, 4
        %v7185 = vsel %vm834, %v7184, %v7158
        %v7186 = vrot.slane %v7158, 4
        %v7187 = vsel %vm834, %v7162, %v7186
        %v7189 = vunpack.c.l.s4 1983009808
        %v7190 = vunpack.c.0.s8 %v7189
        %v7191 = vperm.slane %v7185, %v7190
        %v7193 = vunpack.c.l.s4 1983009808
        %v7194 = vunpack.c.0.s8 %v7193
        %v7195 = vperm.slane %v7187, %v7194
        %v7196 = vrot.slane %v7168, 4
        %v7197 = vsel %vm834, %v7196, %v7164
        %v7198 = vrot.slane %v7164, 4
        %v7199 = vsel %vm834, %v7168, %v7198
        %v7201 = vunpack.c.l.s4 1983009808
        %v7202 = vunpack.c.0.s8 %v7201
        %v7203 = vperm.slane %v7197, %v7202
        %v7205 = vunpack.c.l.s4 1983009808
        %v7206 = vunpack.c.0.s8 %v7205
        %v7207 = vperm.slane %v7199, %v7206
        %v7208 = vrot.slane %v7170, 4
        %v7209 = vsel %vm834, %v7208, %v7166
        %v7210 = vrot.slane %v7166, 4
        %v7211 = vsel %vm834, %v7170, %v7210
        %v7213 = vunpack.c.l.s4 1983009808
        %v7214 = vunpack.c.0.s8 %v7213
        %v7215 = vperm.slane %v7209, %v7214
        %v7217 = vunpack.c.l.s4 1983009808
        %v7218 = vunpack.c.0.s8 %v7217
        %v7219 = vperm.slane %v7211, %v7218
        %v7220 = vrot.slane %v7191, 4
        %v7221 = vsel %vm834, %v7220, %v7179
        %v7222 = vrot.slane %v7179, 4
        %v7223 = vsel %vm834, %v7191, %v7222
        %v7225 = vunpack.c.l.s4 1934713408
        %v7226 = vunpack.c.0.s8 %v7225
        %v7227 = vperm.slane %v7221, %v7226
        %v7229 = vunpack.c.l.s4 1934713408
        %v7230 = vunpack.c.0.s8 %v7229
        %v7231 = vperm.slane %v7223, %v7230
        %v7232 = vrot.slane %v7195, 4
        %v7233 = vsel %vm834, %v7232, %v7183
        %v7234 = vrot.slane %v7183, 4
        %v7235 = vsel %vm834, %v7195, %v7234
        %v7237 = vunpack.c.l.s4 1934713408
        %v7238 = vunpack.c.0.s8 %v7237
        %v7239 = vperm.slane %v7233, %v7238
        %v7241 = vunpack.c.l.s4 1934713408
        %v7242 = vunpack.c.0.s8 %v7241
        %v7243 = vperm.slane %v7235, %v7242
        %v7244 = vrot.slane %v7215, 4
        %v7245 = vsel %vm834, %v7244, %v7203
        %v7246 = vrot.slane %v7203, 4
        %v7247 = vsel %vm834, %v7215, %v7246
        %v7249 = vunpack.c.l.s4 1934713408
        %v7250 = vunpack.c.0.s8 %v7249
        %v7251 = vperm.slane %v7245, %v7250
        %v7253 = vunpack.c.l.s4 1934713408
        %v7254 = vunpack.c.0.s8 %v7253
        %v7255 = vperm.slane %v7247, %v7254
        %v7256 = vrot.slane %v7219, 4
        %v7257 = vsel %vm834, %v7256, %v7207
        %v7258 = vrot.slane %v7207, 4
        %v7259 = vsel %vm834, %v7219, %v7258
        %v7261 = vunpack.c.l.s4 1934713408
        %v7262 = vunpack.c.0.s8 %v7261
        %v7263 = vperm.slane %v7257, %v7262
        %v7265 = vunpack.c.l.s4 1934713408
        %v7266 = vunpack.c.0.s8 %v7265
        %v7267 = vperm.slane %v7259, %v7266
        %v7268 = vrot.slane %v7251, 4
        %v7269 = vsel %vm834, %v7268, %v7227
        %v7270 = vrot.slane %v7227, 4
        %v7271 = vsel %vm834, %v7251, %v7270
        %v7272 = vrot.slane %v7255, 4
        %v7273 = vsel %vm834, %v7272, %v7231
        %v7274 = vrot.slane %v7231, 4
        %v7275 = vsel %vm834, %v7255, %v7274
        %v7276 = vrot.slane %v7263, 4
        %v7277 = vsel %vm834, %v7276, %v7239
        %v7278 = vrot.slane %v7239, 4
        %v7279 = vsel %vm834, %v7263, %v7278
        %v7280 = vrot.slane %v7267, 4
        %v7281 = vsel %vm834, %v7280, %v7243
        %v7282 = vrot.slane %v7243, 4
        %v7283 = vsel %vm834, %v7267, %v7282
        %v7284 = vrot.slane %v7161, 4
        %v7285 = vsel %vm834, %v7284, %v7157
        %v7286 = vrot.slane %v7157, 4
        %v7287 = vsel %vm834, %v7161, %v7286
        %v7289 = vunpack.c.l.s4 1983009808
        %v7290 = vunpack.c.0.s8 %v7289
        %v7291 = vperm.slane %v7285, %v7290
        %v7293 = vunpack.c.l.s4 1983009808
        %v7294 = vunpack.c.0.s8 %v7293
        %v7295 = vperm.slane %v7287, %v7294
        %v7296 = vrot.slane %v7163, 4
        %v7297 = vsel %vm834, %v7296, %v7159
        %v7298 = vrot.slane %v7159, 4
        %v7299 = vsel %vm834, %v7163, %v7298
        %v7301 = vunpack.c.l.s4 1983009808
        %v7302 = vunpack.c.0.s8 %v7301
        %v7303 = vperm.slane %v7297, %v7302
        %v7305 = vunpack.c.l.s4 1983009808
        %v7306 = vunpack.c.0.s8 %v7305
        %v7307 = vperm.slane %v7299, %v7306
        %v7308 = vrot.slane %v7169, 4
        %v7309 = vsel %vm834, %v7308, %v7165
        %v7310 = vrot.slane %v7165, 4
        %v7311 = vsel %vm834, %v7169, %v7310
        %v7313 = vunpack.c.l.s4 1983009808
        %v7314 = vunpack.c.0.s8 %v7313
        %v7315 = vperm.slane %v7309, %v7314
        %v7317 = vunpack.c.l.s4 1983009808
        %v7318 = vunpack.c.0.s8 %v7317
        %v7319 = vperm.slane %v7311, %v7318
        %v7320 = vrot.slane %v7171, 4
        %v7321 = vsel %vm834, %v7320, %v7167
        %v7322 = vrot.slane %v7167, 4
        %v7323 = vsel %vm834, %v7171, %v7322
        %v7325 = vunpack.c.l.s4 1983009808
        %v7326 = vunpack.c.0.s8 %v7325
        %v7327 = vperm.slane %v7321, %v7326
        %v7329 = vunpack.c.l.s4 1983009808
        %v7330 = vunpack.c.0.s8 %v7329
        %v7331 = vperm.slane %v7323, %v7330
        %v7332 = vrot.slane %v7303, 4
        %v7333 = vsel %vm834, %v7332, %v7291
        %v7334 = vrot.slane %v7291, 4
        %v7335 = vsel %vm834, %v7303, %v7334
        %v7337 = vunpack.c.l.s4 1934713408
        %v7338 = vunpack.c.0.s8 %v7337
        %v7339 = vperm.slane %v7333, %v7338
        %v7341 = vunpack.c.l.s4 1934713408
        %v7342 = vunpack.c.0.s8 %v7341
        %v7343 = vperm.slane %v7335, %v7342
        %v7344 = vrot.slane %v7307, 4
        %v7345 = vsel %vm834, %v7344, %v7295
        %v7346 = vrot.slane %v7295, 4
        %v7347 = vsel %vm834, %v7307, %v7346
        %v7349 = vunpack.c.l.s4 1934713408
        %v7350 = vunpack.c.0.s8 %v7349
        %v7351 = vperm.slane %v7345, %v7350
        %v7353 = vunpack.c.l.s4 1934713408
        %v7354 = vunpack.c.0.s8 %v7353
        %v7355 = vperm.slane %v7347, %v7354
        %v7356 = vrot.slane %v7327, 4
        %v7357 = vsel %vm834, %v7356, %v7315
        %v7358 = vrot.slane %v7315, 4
        %v7359 = vsel %vm834, %v7327, %v7358
        %v7361 = vunpack.c.l.s4 1934713408
        %v7362 = vunpack.c.0.s8 %v7361
        %v7363 = vperm.slane %v7357, %v7362
        %v7365 = vunpack.c.l.s4 1934713408
        %v7366 = vunpack.c.0.s8 %v7365
        %v7367 = vperm.slane %v7359, %v7366
        %v7368 = vrot.slane %v7331, 4
        %v7369 = vsel %vm834, %v7368, %v7319
        %v7370 = vrot.slane %v7319, 4
        %v7371 = vsel %vm834, %v7331, %v7370
        %v7373 = vunpack.c.l.s4 1934713408
        %v7374 = vunpack.c.0.s8 %v7373
        %v7375 = vperm.slane %v7369, %v7374
        %v7377 = vunpack.c.l.s4 1934713408
        %v7378 = vunpack.c.0.s8 %v7377
        %v7379 = vperm.slane %v7371, %v7378
        %v7380 = vrot.slane %v7363, 4
        %v7381 = vsel %vm834, %v7380, %v7339
        %v7382 = vrot.slane %v7339, 4
        %v7383 = vsel %vm834, %v7363, %v7382
        %v7384 = vrot.slane %v7367, 4
        %v7385 = vsel %vm834, %v7384, %v7343
        %v7386 = vrot.slane %v7343, 4
        %v7387 = vsel %vm834, %v7367, %v7386
        %v7388 = vrot.slane %v7375, 4
        %v7389 = vsel %vm834, %v7388, %v7351
        %v7390 = vrot.slane %v7351, 4
        %v7391 = vsel %vm834, %v7375, %v7390
        %v7392 = vrot.slane %v7379, 4
        %v7393 = vsel %vm834, %v7392, %v7355
        %v7394 = vrot.slane %v7355, 4
        %v7395 = vsel %vm834, %v7379, %v7394
        %v7396 = vld [vmem:[%s6] sm:$0xff]
        %v7397 = vld [vmem:[%s6 + $0x8] sm:$0xff]
        %v7398 = vld [vmem:[%s6 + $0x10] sm:$0xff]
        %v7399 = vld [vmem:[%s6 + $0x18] sm:$0xff]
        %v7400 = vld [vmem:[%s6 + $0x20] sm:$0xff]
        %v7401 = vld [vmem:[%s6 + $0x28] sm:$0xff]
        %v7402 = vld [vmem:[%s6 + $0x30] sm:$0xff]
        %v7403 = vld [vmem:[%s6 + $0x38] sm:$0xff]
        %v7404 = vld [vmem:[%s7] sm:$0x1]
        %v7406 = vperm.slane %v7404, 0
        %v7409 = vsel %vm654, %v7269, 0
        %v7412 = vsel %vm654, %v7271, 0
        %v7415 = vsel %vm654, %v7273, 0
        %v7418 = vsel %vm654, %v7275, 0
        %v7421 = vsel %vm654, %v7277, 0
        %v7424 = vsel %vm654, %v7279, 0
        %v7427 = vsel %vm654, %v7281, 0
        %v7430 = vsel %vm654, %v7283, 0
        %v7433 = vsel %vm654, %v7381, 0
        %v7436 = vsel %vm654, %v7383, 0
        %v7439 = vsel %vm654, %v7385, 0
        %v7442 = vsel %vm654, %v7387, 0
        %v7445 = vsel %vm654, %v7389, 0
        %v7448 = vsel %vm654, %v7391, 0
        %v7451 = vsel %vm654, %v7393, 0
        %v7454 = vsel %vm654, %v7395, 0
        %7456 = vmatpush.msra.mxu0 0.0
        %7457 = vmatpush.msra.mxu0 0.0
        %7458 = vmatpush.msra.mxu0 0.0
        %7459 = vmatpush.msra.mxu0 0.0
        %7460 = vmatpush.msra.mxu0 0.0
        %7461 = vmatpush.msra.mxu0 0.0
        %7462 = vmatpush.msra.mxu0 0.0
        %7463 = vmatpush.msra.mxu0 0.0
        %7464 = vmatpush.msra.mxu0 %v7403
        %7465 = vmatpush.msra.mxu0 %v7402
        %7466 = vmatpush.msra.mxu0 %v7401
        %7467 = vmatpush.msra.mxu0 %v7400
        %7468 = vmatpush.msra.mxu0 %v7399
        %7469 = vmatpush.msra.mxu0 %v7398
        %7470 = vmatpush.msra.mxu0 %v7397
        %7471 = vmatpush.msra.mxu0 %v7396
        %7472 = vmatmul.f32.gmra.mxu0 %v7409
        %v7473 = vpop.f32.mrf.mxu0
        %v7474 = vadd.f32 %v7406, %v7473
        %7475 = vmatmul.f32.gmra.mxu0 %v7412
        %v7476 = vpop.f32.mrf.mxu0
        %v7477 = vadd.f32 %v7406, %v7476
        %7478 = vmatmul.f32.gmra.mxu0 %v7415
        %v7479 = vpop.f32.mrf.mxu0
        %v7480 = vadd.f32 %v7406, %v7479
        %7481 = vmatmul.f32.gmra.mxu0 %v7418
        %v7482 = vpop.f32.mrf.mxu0
        %v7483 = vadd.f32 %v7406, %v7482
        %7484 = vmatmul.f32.gmra.mxu0 %v7421
        %v7485 = vpop.f32.mrf.mxu0
        %v7486 = vadd.f32 %v7406, %v7485
        %7487 = vmatmul.f32.gmra.mxu0 %v7424
        %v7488 = vpop.f32.mrf.mxu0
        %v7489 = vadd.f32 %v7406, %v7488
        %7490 = vmatmul.f32.gmra.mxu0 %v7427
        %v7491 = vpop.f32.mrf.mxu0
        %v7492 = vadd.f32 %v7406, %v7491
        %7493 = vmatmul.f32.gmra.mxu0 %v7430
        %v7494 = vpop.f32.mrf.mxu0
        %v7495 = vadd.f32 %v7406, %v7494
        %7496 = vmatmul.f32.gmra.mxu0 %v7433
        %v7497 = vpop.f32.mrf.mxu0
        %v7498 = vadd.f32 %v7406, %v7497
        %7499 = vmatmul.f32.gmra.mxu0 %v7436
        %v7500 = vpop.f32.mrf.mxu0
        %v7501 = vadd.f32 %v7406, %v7500
        %7502 = vmatmul.f32.gmra.mxu0 %v7439
        %v7503 = vpop.f32.mrf.mxu0
        %v7504 = vadd.f32 %v7406, %v7503
        %7505 = vmatmul.f32.gmra.mxu0 %v7442
        %v7506 = vpop.f32.mrf.mxu0
        %v7507 = vadd.f32 %v7406, %v7506
        %7508 = vmatmul.f32.gmra.mxu0 %v7445
        %v7509 = vpop.f32.mrf.mxu0
        %v7510 = vadd.f32 %v7406, %v7509
        %7511 = vmatmul.f32.gmra.mxu0 %v7448
        %v7512 = vpop.f32.mrf.mxu0
        %v7513 = vadd.f32 %v7406, %v7512
        %7514 = vmatmul.f32.gmra.mxu0 %v7451
        %v7515 = vpop.f32.mrf.mxu0
        %v7516 = vadd.f32 %v7406, %v7515
        %7517 = vmatmul.f32.gmra.mxu0 %v7454
        %v7518 = vpop.f32.mrf.mxu0
        %v7519 = vadd.f32 %v7406, %v7518
        %7520 = vdwg.mxu0
        %vm7521 = vcmask 15360
        %7522 = vst.msk [vmem:[%s518] sm:$0xff] %vm7521, %v7474
        %7523 = vst.msk [vmem:[%s518 + $0x8] sm:$0xff] %vm7521, %v7477
        %7524 = vst.msk [vmem:[%s518 + $0x10] sm:$0xff] %vm7521, %v7480
        %7525 = vst.msk [vmem:[%s518 + $0x18] sm:$0xff] %vm7521, %v7483
        %7526 = vst.msk [vmem:[%s518 + $0x20] sm:$0xff] %vm7521, %v7486
        %7527 = vst.msk [vmem:[%s518 + $0x28] sm:$0xff] %vm7521, %v7489
        %7528 = vst.msk [vmem:[%s518 + $0x30] sm:$0xff] %vm7521, %v7492
        %7529 = vst.msk [vmem:[%s518 + $0x38] sm:$0xff] %vm7521, %v7495
        %7530 = vst.msk [vmem:[%s518 + $0x40] sm:$0xff] %vm7521, %v7498
        %7531 = vst.msk [vmem:[%s518 + $0x48] sm:$0xff] %vm7521, %v7501
        %7532 = vst.msk [vmem:[%s518 + $0x50] sm:$0xff] %vm7521, %v7504
        %7533 = vst.msk [vmem:[%s518 + $0x58] sm:$0xff] %vm7521, %v7507
        %7534 = vst.msk [vmem:[%s518 + $0x60] sm:$0xff] %vm7521, %v7510
        %7535 = vst.msk [vmem:[%s518 + $0x68] sm:$0xff] %vm7521, %v7513
        %7536 = vst.msk [vmem:[%s518 + $0x70] sm:$0xff] %vm7521, %v7516
        %7537 = vst.msk [vmem:[%s518 + $0x78] sm:$0xff] %vm7521, %v7519
        %p7538 = scmp.lt.s32.totalorder %s19, 1
        %s7539 = scalar_select %p7538, %s19, 1
        %s7540 = smul.addr %s7539, 16
        %s7541 = smul.addr %s7540, 8
        %s7542 = scalar_lea.vmem %s8, %s7541
        // Predicated region
        $region129: #{_lambda_.3} parent=119 // pred_check
          %p7543 = pneg %p215
        $region130: #{_lambda_.3} parent=119 // pred_check_branch
          %7545 = sbr.rel (%p7543) target = $region132
        $region131: #{_lambda_.3} parent=119 // pred_region
          _
        $region132: #{_lambda_.3} parent=119 // pred_fallthru
          _
      $region120: #{_lambda_.3} parent=5 // pred_fallthru
        _
      %p7546 = scmp.le.s32.totalorder 2, %s14
      // Predicated region
      $region133: #{_lambda_.3} parent=5 // pred_check
        %p7547 = pneg %p7546
      $region134: #{_lambda_.3} parent=5 // pred_check_branch
        %7549 = sbr.rel (%p7547) target = $region136
      $region135: #{_lambda_.3} parent=5 // pred_region
        %s7550 = ssub.s32 %s14, 2
        // Predicated region
        $region137: #{_lambda_.3} parent=135 // pred_check
          %p7551 = pneg %p221
        $region138: #{_lambda_.3} parent=135 // pred_check_branch
          %7553 = sbr.rel (%p7551) target = $region140
        $region139: #{_lambda_.3} parent=135 // pred_region
          %p7554 = scmp.lt.s32.totalorder %s20, 1
          %s7555 = scalar_select %p7554, %s20, 1
          %s7556 = smul.addr %s7555, 16
          %s7557 = smul.addr %s7556, 8
          %s7558 = scalar_lea.vmem %s8, %s7557
        $region140: #{_lambda_.3} parent=135 // pred_fallthru
          _
      $region136: #{_lambda_.3} parent=5 // pred_fallthru
        _
    $region6: #{_lambda_.3} parent=1 // loop_footer
      %s18 = sadd.s32 1, %s14
    $region7: #{_lambda_.3} parent=1 // loop_footer_branch
      %13 = sbr.rel target = $region3
    $region8: #{_lambda_.3} parent=1 // loop_exit
      _

</llo_original>
